<compile_context>
chip_gen: v6e
topology: v6e:2x2x1
jax: 0.10.0
libtpu: 0.0.40
codegen_flags: <defaults>
</compile_context>

<pallas_src>
import math

import jax
import jax.numpy as jnp
import numpy as np
from jax.experimental import pallas as pl
from jax.experimental.pallas import tpu as pltpu

# ---------------- configuration ----------------
DIM = 32                      # C
WIN = 8                       # win_size
NUM_HEADS = 4
HEAD_DIM = DIM // NUM_HEADS
SCALE = HEAD_DIM ** -0.5
MLP_RATIO = 4
HIDDEN = DIM * MLP_RATIO
N_TOK = WIN * WIN             # tokens per window
EPS = 1e-5


def _gelu_tanh(x):
    # tanh-form GELU: one EUP tanh + a handful of VALU ops (perf-review item);
    # max |err| vs the exact erf GELU is < ~5e-4.
    c = 0.7978845608028654  # sqrt(2/pi)
    return 0.5 * x * (1.0 + jnp.tanh(c * (x + 0.044715 * (x * x * x))))


# ---------------- the Pallas block (kernel + wrapper) ----------------
def lewin_block(x, p):
    B, L, C = x.shape
    H = W = int(math.sqrt(L))
    nwh, nww = H // WIN, W // WIN
    nW = nwh * nww
    assert C == DIM and H * W == L and H % WIN == 0 and W % WIN == 0
    # This kernel hard-codes the instantiated config: shift_size=0, mask=None,
    # modulator=None, cross_modulator=None, token_mlp='mlp', dropout/drop_path=0.
    # TODO(synk): other configs (shifted windows / attention masks / modulators) need kernel changes.

    # ---- fold LayerNorm affines and the attention q-scale into the weights (exact) ----
    g1, be1 = p["g1"][0], p["be1"][0]
    wqkv = p["wqkvT"] * g1[:, None]
    bqkv = p["bqkv"][0] + be1 @ p["wqkvT"]
    col_scale = jnp.concatenate(
        [jnp.full((DIM,), SCALE, jnp.float32), jnp.ones((2 * DIM,), jnp.float32)])
    wqkv = wqkv * col_scale[None, :]              # scale the q columns
    bqkv = (bqkv * col_scale)[None, :]
    g2, be2 = p["g2"][0], p["be2"][0]
    w1 = p["w1T"] * g2[:, None]
    b1 = (p["b1"][0] + be2 @ p["w1T"])[None, :]

    # bf16 MXU operands (weights cast once here, activations cast in-kernel); f32 accumulation.
    wqkv_bf = wqkv.astype(jnp.bfloat16)
    wproj_bf = p["wprojT"].astype(jnp.bfloat16)
    w1_bf = w1.astype(jnp.bfloat16)
    w2_bf = p["w2T"].astype(jnp.bfloat16)

    def kernel(x_ref, wqkv_ref, bqkv_ref, bias_ref, wproj_ref, bproj_ref,
               w1_ref, b1_ref, w2_ref, b2_ref, o_ref):
        xs = x_ref[...]                                           # (H, W, C) f32, one image

        # ---- fused window_partition: 4 aligned (8,8,C) slices -> (nW*N_TOK, C) window order
        x_win = jnp.concatenate(
            [xs[wi * WIN:(wi + 1) * WIN, wj * WIN:(wj + 1) * WIN, :].reshape(N_TOK, DIM)
             for wi in range(nwh) for wj in range(nww)], axis=0)   # (256, 32)

        # ---- LayerNorm 1 (single-pass stats; affine folded into wqkv/bqkv) ----
        mu = jnp.mean(x_win, axis=-1, keepdims=True)
        ms = jnp.mean(x_win * x_win, axis=-1, keepdims=True)
        xn = (x_win - mu) * jax.lax.rsqrt(ms - mu * mu + EPS)

        # ---- QKV for all tokens of all windows: one (256,32)x(32,96) bf16 MXU matmul ----
        qkv = jnp.dot(xn.astype(jnp.bfloat16), wqkv_ref[...],
                      preferred_element_type=jnp.float32) + bqkv_ref[0]
        qkv_w = qkv.astype(jnp.bfloat16).reshape(nW, N_TOK, 3 * DIM)   # (4, 64, 96)

        # ---- batched (head, window) q / k / v : (NUM_HEADS*nW, N_TOK, HEAD_DIM) ----
        def head_stack(off):
            return jnp.stack(
                [qkv_w[:, :, off + h * HEAD_DIM: off + (h + 1) * HEAD_DIM]
                 for h in range(NUM_HEADS)], axis=0
            ).reshape(NUM_HEADS * nW, N_TOK, HEAD_DIM)

        q_b = head_stack(0)                       # q-scale already folded into wqkv
        k_b = head_stack(DIM)
        v_b = head_stack(2 * DIM)

        # ---- ONE batched QK^T (contract last dims, no transposes) + ONE softmax pass ----
        logits = jnp.einsum("bqd,bkd->bqk", q_b, k_b,
                            preferred_element_type=jnp.float32)        # (16, 64, 64) f32
        bias = jnp.broadcast_to(bias_ref[...][:, None, :, :],
                                (NUM_HEADS, nW, N_TOK, N_TOK)
                                ).reshape(NUM_HEADS * nW, N_TOK, N_TOK)
        logits = logits + bias
        m = jnp.max(logits, axis=-1, keepdims=True)
        e = jnp.exp(logits - m)
        pr = e * pl.reciprocal(jnp.sum(e, axis=-1, keepdims=True), approx=True)

        # ---- ONE batched PV matmul ----
        out_b = jnp.einsum("bqk,bkd->bqd", pr.astype(jnp.bfloat16), v_b,
                           preferred_element_type=jnp.float32)          # (16, 64, 8) f32

        # ---- merge heads (single lane concat) and apply ONE output projection (per-token,
        #      so it commutes with window_reverse) ----
        out_h = out_b.reshape(NUM_HEADS, nW, N_TOK, HEAD_DIM)
        attn = jnp.concatenate([out_h[h] for h in range(NUM_HEADS)], axis=-1)  # (4, 64, 32)
        attn = attn.reshape(nW * N_TOK, DIM)
        x1 = x_win + jnp.dot(attn.astype(jnp.bfloat16), wproj_ref[...],
                             preferred_element_type=jnp.float32) + bproj_ref[0]

        # ---- LayerNorm 2 (affine folded into w1/b1) + MLP (bf16 matmuls, tanh GELU) ----
        mu2 = jnp.mean(x1, axis=-1, keepdims=True)
        ms2 = jnp.mean(x1 * x1, axis=-1, keepdims=True)
        xn2 = (x1 - mu2) * jax.lax.rsqrt(ms2 - mu2 * mu2 + EPS)
        hid = _gelu_tanh(jnp.dot(xn2.astype(jnp.bfloat16), w1_ref[...],
                                 preferred_element_type=jnp.float32) + b1_ref[0])
        mlp = jnp.dot(hid.astype(jnp.bfloat16), w2_ref[...],
                      preferred_element_type=jnp.float32) + b2_ref[0]
        y_win = x1 + mlp                                                # (256, 32) window order

        # ---- fused window_reverse: 4 aligned (8,8,C) stores straight into the output block ----
        for wi in range(nwh):
            for wj in range(nww):
                n = wi * nww + wj
                o_ref[wi * WIN:(wi + 1) * WIN, wj * WIN:(wj + 1) * WIN, :] = (
                    y_win[n * N_TOK:(n + 1) * N_TOK, :].reshape(WIN, WIN, DIM))

    grid_spec = pltpu.PrefetchScalarGridSpec(
        num_scalar_prefetch=0,
        # One image per step: with B>=2 both v7x TensorCores stay busy; on single-TC
        # v5e/v6e the serial loop costs only ~0.35us/step (working set is tiny).
        grid=(B,),
        in_specs=[
            pl.BlockSpec((None, H, W, C), lambda b: (b, 0, 0, 0)),   # x, one full image
            pl.BlockSpec((C, 3 * C), lambda b: (0, 0)),              # Wqkv^T (LN1+scale folded, bf16)
            pl.BlockSpec((1, 3 * C), lambda b: (0, 0)),              # bqkv (folded, f32)
            pl.BlockSpec((NUM_HEADS, N_TOK, N_TOK), lambda b: (0, 0, 0)),  # rel-pos bias (f32)
            pl.BlockSpec((C, C), lambda b: (0, 0)),                  # Wproj^T (bf16)
            pl.BlockSpec((1, C), lambda b: (0, 0)),                  # bproj (f32)
            pl.BlockSpec((C, HIDDEN), lambda b: (0, 0)),             # W1^T (LN2 folded, bf16)
            pl.BlockSpec((1, HIDDEN), lambda b: (0, 0)),             # b1 (folded, f32)
            pl.BlockSpec((HIDDEN, C), lambda b: (0, 0)),             # W2^T (bf16)
            pl.BlockSpec((1, C), lambda b: (0, 0)),                  # b2 (f32)
        ],
        out_specs=pl.BlockSpec((None, H, W, C), lambda b: (b, 0, 0, 0)),
    )

    out4 = pl.pallas_call(
        kernel,
        out_shape=jax.ShapeDtypeStruct((B, H, W, C), jnp.float32),
        grid_spec=grid_spec,
        compiler_params=pltpu.CompilerParams(dimension_semantics=("parallel",)),
    )(x.reshape(B, H, W, C), wqkv_bf, bqkv, p["rel_bias"], wproj_bf, p["bproj"],
      w1_bf, b1, w2_bf, p["b2"])
    return out4.reshape(B, L, C)


# ---------------- JAX helpers (reference path only) ----------------
def window_partition(x, ws):                                  # x: (B, H, W, C)
    B, H, W, C = x.shape
    x = x.reshape(B, H // ws, ws, W // ws, ws, C)
    return x.transpose(0, 1, 3, 2, 4, 5).reshape(-1, ws, ws, C)


def window_reverse(windows, ws, H, W):                        # windows: (nW, ws, ws, C)
    B = windows.shape[0] // ((H // ws) * (W // ws))
    x = windows.reshape(B, H // ws, W // ws, ws, ws, -1)
    return x.transpose(0, 1, 3, 2, 4, 5).reshape(B, H, W, -1)


def _relative_position_index(ws):
    coords = np.stack(np.meshgrid(np.arange(ws), np.arange(ws), indexing="ij"))  # (2, ws, ws)
    flat = coords.reshape(2, -1)                                                  # (2, N)
    rel = flat[:, :, None] - flat[:, None, :]                                     # (2, N, N)
    rel = rel.transpose(1, 2, 0)
    rel[:, :, 0] += ws - 1
    rel[:, :, 1] += ws - 1
    rel[:, :, 0] *= 2 * ws - 1
    return rel.sum(-1)                                                            # (N, N)


def init_params(keys):
    ws = 0.05
    table = 0.02 * jax.random.normal(keys[0], ((2 * WIN - 1) ** 2, NUM_HEADS), jnp.float32)
    rel_idx = _relative_position_index(WIN)
    rel_bias = jnp.transpose(
        table[rel_idx.reshape(-1)].reshape(N_TOK, N_TOK, NUM_HEADS), (2, 0, 1))   # (nh, N, N)
    return dict(
        g1=jnp.ones((1, DIM), jnp.float32),
        be1=jnp.zeros((1, DIM), jnp.float32),
        wqkvT=ws * jax.random.normal(keys[1], (DIM, 3 * DIM), jnp.float32),
        bqkv=ws * jax.random.normal(keys[2], (1, 3 * DIM), jnp.float32),
        rel_bias=rel_bias.astype(jnp.float32),
        wprojT=ws * jax.random.normal(keys[3], (DIM, DIM), jnp.float32),
        bproj=ws * jax.random.normal(keys[4], (1, DIM), jnp.float32),
        g2=jnp.ones((1, DIM), jnp.float32),
        be2=jnp.zeros((1, DIM), jnp.float32),
        w1T=ws * jax.random.normal(keys[5], (DIM, HIDDEN), jnp.float32),
        b1=ws * jax.random.normal(keys[6], (1, HIDDEN), jnp.float32),
        w2T=ws * jax.random.normal(keys[7], (HIDDEN, DIM), jnp.float32),
        b2=ws * jax.random.normal(keys[8], (1, DIM), jnp.float32),
    )


# ---------------- pure-JAX reference (exact f32, for correctness check) ----------------
def reference_block(x, p):
    B, L, C = x.shape
    H = W = int(math.sqrt(L))

    def ln(z, g, b):
        mu = z.mean(-1, keepdims=True)
        v = ((z - mu) ** 2).mean(-1, keepdims=True)
        return (z - mu) / jnp.sqrt(v + EPS) * g + b

    shortcut = x
    xn = ln(x, p["g1"], p["be1"])
    xw = window_partition(xn.reshape(B, H, W, C), WIN).reshape(-1, N_TOK, C)
    nW = xw.shape[0]

    qkv = xw @ p["wqkvT"] + p["bqkv"][0]
    q, k, v = qkv[..., :C], qkv[..., C:2 * C], qkv[..., 2 * C:]

    def heads(t):
        return t.reshape(nW, N_TOK, NUM_HEADS, HEAD_DIM).transpose(0, 2, 1, 3)

    q, k, v = heads(q), heads(k), heads(v)
    attn = (q * SCALE) @ k.transpose(0, 1, 3, 2) + p["rel_bias"][None]
    attn = jax.nn.softmax(attn, axis=-1)
    o = (attn @ v).transpose(0, 2, 1, 3).reshape(nW, N_TOK, C)
    o = o @ p["wprojT"] + p["bproj"][0]
    o = window_reverse(o.reshape(-1, WIN, WIN, C), WIN, H, W).reshape(B, L, C)

    x1 = shortcut + o
    h = jax.nn.gelu(ln(x1, p["g2"], p["be2"]) @ p["w1T"] + p["b1"][0], approximate=False)
    return x1 + (h @ p["w2T"] + p["b2"][0])


# ---------------- main ----------------
if __name__ == "__main__":
    key = jax.random.PRNGKey(0)
    keys = jax.random.split(key, 10)

    B, H, W = 2, 16, 16
    L = H * W
    x = jax.random.normal(keys[0], (B, L, DIM), jnp.float32)
    params = init_params(keys[1:])

    lewin_jit = jax.jit(lewin_block)
    out = lewin_jit(x, params)
    out = jax.block_until_ready(out)

    ref = reference_block(x, params)
    err = float(jnp.max(jnp.abs(out - ref)))
    assert out.shape == (B, L, DIM)
    # tolerance intentionally relaxed to 1e-2: bf16 MXU operands + tanh GELU + EUP
    # approximate reciprocal (perf-review items) add ~1e-3-level deviation vs exact f32.
    assert err < 1e-2, f"max abs err = {err}"
    print("KERNEL_OK")
</pallas_src>

<mosaic_0001>
module attributes {stable_mosaic.version = 11 : i64} {
  func.func @kernel(%arg0: i32, %arg1: memref<1x16x16x32xf32, #tpu.memory_space<vmem>>, %arg2: memref<32x96xbf16, #tpu.memory_space<vmem>>, %arg3: memref<1x96xf32, #tpu.memory_space<vmem>>, %arg4: memref<4x64x64xf32, #tpu.memory_space<vmem>>, %arg5: memref<32x32xbf16, #tpu.memory_space<vmem>>, %arg6: memref<1x32xf32, #tpu.memory_space<vmem>>, %arg7: memref<32x128xbf16, #tpu.memory_space<vmem>>, %arg8: memref<1x128xf32, #tpu.memory_space<vmem>>, %arg9: memref<128x32xbf16, #tpu.memory_space<vmem>>, %arg10: memref<1x32xf32, #tpu.memory_space<vmem>>, %arg11: memref<1x16x16x32xf32, #tpu.memory_space<vmem>>) attributes {dimension_semantics = [#tpu.dimension_semantics<parallel>], iteration_bounds = array<i64: 2>, scalar_prefetch = 0 : i64, scratch_operands = 0 : i64, tpu.core_type = #tpu.core_type<tc>, window_params = [{transform_indices = @transform_0, window_bounds = array<i64: 1, 16, 16, 32>}, {pipeline_mode = #tpu.pipeline_mode<synchronous>, transform_indices = @transform_1, window_bounds = array<i64: 32, 96>}, {pipeline_mode = #tpu.pipeline_mode<synchronous>, transform_indices = @transform_2, window_bounds = array<i64: 1, 96>}, {pipeline_mode = #tpu.pipeline_mode<synchronous>, transform_indices = @transform_3, window_bounds = array<i64: 4, 64, 64>}, {pipeline_mode = #tpu.pipeline_mode<synchronous>, transform_indices = @transform_4, window_bounds = array<i64: 32, 32>}, {pipeline_mode = #tpu.pipeline_mode<synchronous>, transform_indices = @transform_5, window_bounds = array<i64: 1, 32>}, {pipeline_mode = #tpu.pipeline_mode<synchronous>, transform_indices = @transform_6, window_bounds = array<i64: 32, 128>}, {pipeline_mode = #tpu.pipeline_mode<synchronous>, transform_indices = @transform_7, window_bounds = array<i64: 1, 128>}, {pipeline_mode = #tpu.pipeline_mode<synchronous>, transform_indices = @transform_8, window_bounds = array<i64: 128, 32>}, {pipeline_mode = #tpu.pipeline_mode<synchronous>, transform_indices = @transform_9, window_bounds = array<i64: 1, 32>}, {transform_indices = @transform_10, window_bounds = array<i64: 1, 16, 16, 32>}]} {
    %c0 = arith.constant 0 : index
    %c0_0 = arith.constant 0 : index
    %c0_1 = arith.constant 0 : index
    %c0_2 = arith.constant 0 : index
    %0 = vector.load %arg1[%c0, %c0_0, %c0_1, %c0_2] : memref<1x16x16x32xf32, #tpu.memory_space<vmem>>, vector<1x16x16x32xf32>
    %1 = vector.shape_cast %0 : vector<1x16x16x32xf32> to vector<16x16x32xf32>
    %2 = vector.extract_strided_slice %1 {offsets = [0, 0, 0], sizes = [8, 8, 32], strides = [1, 1, 1]} : vector<16x16x32xf32> to vector<8x8x32xf32>
    %3 = vector.shape_cast %2 : vector<8x8x32xf32> to vector<64x32xf32>
    %4 = vector.extract_strided_slice %1 {offsets = [0, 8, 0], sizes = [8, 8, 32], strides = [1, 1, 1]} : vector<16x16x32xf32> to vector<8x8x32xf32>
    %5 = vector.shape_cast %4 : vector<8x8x32xf32> to vector<64x32xf32>
    %6 = vector.extract_strided_slice %1 {offsets = [8, 0, 0], sizes = [8, 8, 32], strides = [1, 1, 1]} : vector<16x16x32xf32> to vector<8x8x32xf32>
    %7 = vector.shape_cast %6 : vector<8x8x32xf32> to vector<64x32xf32>
    %8 = vector.extract_strided_slice %1 {offsets = [8, 8, 0], sizes = [8, 8, 32], strides = [1, 1, 1]} : vector<16x16x32xf32> to vector<8x8x32xf32>
    %9 = vector.shape_cast %8 : vector<8x8x32xf32> to vector<64x32xf32>
    %10 = tpu.concatenate %3, %5, %7, %9 in 0 : vector<64x32xf32>, vector<64x32xf32>, vector<64x32xf32>, vector<64x32xf32> -> vector<256x32xf32>
    %cst = arith.constant dense<0.000000e+00> : vector<256xf32>
    %11 = vector.multi_reduction <add>, %10, %cst [1] : vector<256x32xf32> to vector<256xf32>
    %12 = vector.shape_cast %11 : vector<256xf32> to vector<256x1xf32>
    %cst_3 = arith.constant 3.200000e+01 : f32
    %13 = vector.broadcast %cst_3 : f32 to vector<256x1xf32>
    %14 = arith.divf %12, %13 : vector<256x1xf32>
    %15 = arith.mulf %10, %10 : vector<256x32xf32>
    %cst_4 = arith.constant dense<0.000000e+00> : vector<256xf32>
    %16 = vector.multi_reduction <add>, %15, %cst_4 [1] : vector<256x32xf32> to vector<256xf32>
    %17 = vector.shape_cast %16 : vector<256xf32> to vector<256x1xf32>
    %cst_5 = arith.constant 3.200000e+01 : f32
    %18 = vector.broadcast %cst_5 : f32 to vector<256x1xf32>
    %19 = arith.divf %17, %18 : vector<256x1xf32>
    %20 = vector.broadcast %14 : vector<256x1xf32> to vector<256x32xf32>
    %21 = arith.subf %10, %20 : vector<256x32xf32>
    %22 = arith.mulf %14, %14 : vector<256x1xf32>
    %23 = arith.subf %19, %22 : vector<256x1xf32>
    %cst_6 = arith.constant 9.99999974E-6 : f32
    %24 = vector.broadcast %cst_6 : f32 to vector<256x1xf32>
    %25 = arith.addf %23, %24 : vector<256x1xf32>
    %26 = math.rsqrt %25 : vector<256x1xf32>
    %27 = vector.broadcast %26 : vector<256x1xf32> to vector<256x32xf32>
    %28 = arith.mulf %21, %27 : vector<256x32xf32>
    %29 = arith.truncf %28 : vector<256x32xf32> to vector<256x32xbf16>
    %c0_7 = arith.constant 0 : index
    %c0_8 = arith.constant 0 : index
    %30 = vector.load %arg2[%c0_7, %c0_8] : memref<32x96xbf16, #tpu.memory_space<vmem>>, vector<32x96xbf16>
    %cst_9 = arith.constant dense<0.000000e+00> : vector<256x96xf32>
    %31 = tpu.matmul %29, %30, %cst_9 {dimension_numbers = #tpu.dot_dimension_numbers<[1], [0], [0], [1], [0, 0, 1, 1], [], []>} : vector<256x32xbf16>, vector<32x96xbf16>, vector<256x96xf32> -> vector<256x96xf32>
    %c0_10 = arith.constant 0 : index
    %c0_11 = arith.constant 0 : index
    %32 = vector.load %arg3[%c0_10, %c0_11] : memref<1x96xf32, #tpu.memory_space<vmem>>, vector<1x96xf32>
    %33 = vector.shape_cast %32 : vector<1x96xf32> to vector<96xf32>
    %34 = vector.shape_cast %33 : vector<96xf32> to vector<1x96xf32>
    %35 = vector.broadcast %34 : vector<1x96xf32> to vector<256x96xf32>
    %36 = arith.addf %31, %35 : vector<256x96xf32>
    %37 = arith.truncf %36 : vector<256x96xf32> to vector<256x96xbf16>
    %38 = vector.shape_cast %37 : vector<256x96xbf16> to vector<4x64x96xbf16>
    %39 = vector.extract_strided_slice %38 {offsets = [0, 0, 0], sizes = [4, 64, 8], strides = [1, 1, 1]} : vector<4x64x96xbf16> to vector<4x64x8xbf16>
    %40 = vector.extract_strided_slice %38 {offsets = [0, 0, 8], sizes = [4, 64, 8], strides = [1, 1, 1]} : vector<4x64x96xbf16> to vector<4x64x8xbf16>
    %41 = vector.extract_strided_slice %38 {offsets = [0, 0, 16], sizes = [4, 64, 8], strides = [1, 1, 1]} : vector<4x64x96xbf16> to vector<4x64x8xbf16>
    %42 = vector.extract_strided_slice %38 {offsets = [0, 0, 24], sizes = [4, 64, 8], strides = [1, 1, 1]} : vector<4x64x96xbf16> to vector<4x64x8xbf16>
    %43 = vector.shape_cast %39 : vector<4x64x8xbf16> to vector<1x4x64x8xbf16>
    %44 = vector.shape_cast %40 : vector<4x64x8xbf16> to vector<1x4x64x8xbf16>
    %45 = vector.shape_cast %41 : vector<4x64x8xbf16> to vector<1x4x64x8xbf16>
    %46 = vector.shape_cast %42 : vector<4x64x8xbf16> to vector<1x4x64x8xbf16>
    %47 = tpu.concatenate %43, %44, %45, %46 in 0 : vector<1x4x64x8xbf16>, vector<1x4x64x8xbf16>, vector<1x4x64x8xbf16>, vector<1x4x64x8xbf16> -> vector<4x4x64x8xbf16>
    %48 = vector.shape_cast %47 : vector<4x4x64x8xbf16> to vector<16x64x8xbf16>
    %49 = vector.extract_strided_slice %38 {offsets = [0, 0, 32], sizes = [4, 64, 8], strides = [1, 1, 1]} : vector<4x64x96xbf16> to vector<4x64x8xbf16>
    %50 = vector.extract_strided_slice %38 {offsets = [0, 0, 40], sizes = [4, 64, 8], strides = [1, 1, 1]} : vector<4x64x96xbf16> to vector<4x64x8xbf16>
    %51 = vector.extract_strided_slice %38 {offsets = [0, 0, 48], sizes = [4, 64, 8], strides = [1, 1, 1]} : vector<4x64x96xbf16> to vector<4x64x8xbf16>
    %52 = vector.extract_strided_slice %38 {offsets = [0, 0, 56], sizes = [4, 64, 8], strides = [1, 1, 1]} : vector<4x64x96xbf16> to vector<4x64x8xbf16>
    %53 = vector.shape_cast %49 : vector<4x64x8xbf16> to vector<1x4x64x8xbf16>
    %54 = vector.shape_cast %50 : vector<4x64x8xbf16> to vector<1x4x64x8xbf16>
    %55 = vector.shape_cast %51 : vector<4x64x8xbf16> to vector<1x4x64x8xbf16>
    %56 = vector.shape_cast %52 : vector<4x64x8xbf16> to vector<1x4x64x8xbf16>
    %57 = tpu.concatenate %53, %54, %55, %56 in 0 : vector<1x4x64x8xbf16>, vector<1x4x64x8xbf16>, vector<1x4x64x8xbf16>, vector<1x4x64x8xbf16> -> vector<4x4x64x8xbf16>
    %58 = vector.shape_cast %57 : vector<4x4x64x8xbf16> to vector<16x64x8xbf16>
    %59 = vector.extract_strided_slice %38 {offsets = [0, 0, 64], sizes = [4, 64, 8], strides = [1, 1, 1]} : vector<4x64x96xbf16> to vector<4x64x8xbf16>
    %60 = vector.extract_strided_slice %38 {offsets = [0, 0, 72], sizes = [4, 64, 8], strides = [1, 1, 1]} : vector<4x64x96xbf16> to vector<4x64x8xbf16>
    %61 = vector.extract_strided_slice %38 {offsets = [0, 0, 80], sizes = [4, 64, 8], strides = [1, 1, 1]} : vector<4x64x96xbf16> to vector<4x64x8xbf16>
    %62 = vector.extract_strided_slice %38 {offsets = [0, 0, 88], sizes = [4, 64, 8], strides = [1, 1, 1]} : vector<4x64x96xbf16> to vector<4x64x8xbf16>
    %63 = vector.shape_cast %59 : vector<4x64x8xbf16> to vector<1x4x64x8xbf16>
    %64 = vector.shape_cast %60 : vector<4x64x8xbf16> to vector<1x4x64x8xbf16>
    %65 = vector.shape_cast %61 : vector<4x64x8xbf16> to vector<1x4x64x8xbf16>
    %66 = vector.shape_cast %62 : vector<4x64x8xbf16> to vector<1x4x64x8xbf16>
    %67 = tpu.concatenate %63, %64, %65, %66 in 0 : vector<1x4x64x8xbf16>, vector<1x4x64x8xbf16>, vector<1x4x64x8xbf16>, vector<1x4x64x8xbf16> -> vector<4x4x64x8xbf16>
    %68 = vector.shape_cast %67 : vector<4x4x64x8xbf16> to vector<16x64x8xbf16>
    "tpu.trace_start"() <{level = 10 : i32, message = "bqd,bkd->bqk"}> : () -> ()
    %cst_12 = arith.constant dense<0.000000e+00> : vector<16x64x64xf32>
    %69 = tpu.matmul %48, %58, %cst_12 {dimension_numbers = #tpu.dot_dimension_numbers<[2], [2], [1], [1], [0, 0, 0, 1, 1, 1], [0], [0]>} : vector<16x64x8xbf16>, vector<16x64x8xbf16>, vector<16x64x64xf32> -> vector<16x64x64xf32>
    "tpu.trace_stop"() : () -> ()
    %c0_13 = arith.constant 0 : index
    %c0_14 = arith.constant 0 : index
    %c0_15 = arith.constant 0 : index
    %70 = vector.load %arg4[%c0_13, %c0_14, %c0_15] : memref<4x64x64xf32, #tpu.memory_space<vmem>>, vector<4x64x64xf32>
    %71 = vector.shape_cast %70 : vector<4x64x64xf32> to vector<4x1x64x64xf32>
    %72 = vector.shape_cast %71 : vector<4x1x64x64xf32> to vector<4x1x64x64xf32>
    %73 = vector.broadcast %72 : vector<4x1x64x64xf32> to vector<4x4x64x64xf32>
    %74 = vector.shape_cast %73 : vector<4x4x64x64xf32> to vector<16x64x64xf32>
    %75 = arith.addf %69, %74 : vector<16x64x64xf32>
    %cst_16 = arith.constant dense<0xFF800000> : vector<16x64xf32>
    %76 = vector.multi_reduction <maximumf>, %75, %cst_16 [2] : vector<16x64x64xf32> to vector<16x64xf32>
    %77 = vector.shape_cast %76 : vector<16x64xf32> to vector<16x64x1xf32>
    %78 = vector.broadcast %77 : vector<16x64x1xf32> to vector<16x64x64xf32>
    %79 = arith.subf %75, %78 : vector<16x64x64xf32>
    %80 = math.exp %79 : vector<16x64x64xf32>
    %cst_17 = arith.constant dense<0.000000e+00> : vector<16x64xf32>
    %81 = vector.multi_reduction <add>, %80, %cst_17 [2] : vector<16x64x64xf32> to vector<16x64xf32>
    %82 = vector.shape_cast %81 : vector<16x64xf32> to vector<16x64x1xf32>
    %83 = tpu.reciprocal %82 {approx = true} : vector<16x64x1xf32> -> vector<16x64x1xf32>
    %84 = vector.broadcast %83 : vector<16x64x1xf32> to vector<16x64x64xf32>
    %85 = arith.mulf %80, %84 : vector<16x64x64xf32>
    %86 = arith.truncf %85 : vector<16x64x64xf32> to vector<16x64x64xbf16>
    "tpu.trace_start"() <{level = 10 : i32, message = "bqk,bkd->bqd"}> : () -> ()
    %cst_18 = arith.constant dense<0.000000e+00> : vector<16x64x8xf32>
    %87 = tpu.matmul %86, %68, %cst_18 {dimension_numbers = #tpu.dot_dimension_numbers<[2], [1], [1], [2], [0, 0, 0, 1, 1, 2], [0], [0]>} : vector<16x64x64xbf16>, vector<16x64x8xbf16>, vector<16x64x8xf32> -> vector<16x64x8xf32>
    "tpu.trace_stop"() : () -> ()
    %88 = vector.shape_cast %87 : vector<16x64x8xf32> to vector<4x4x64x8xf32>
    %89 = vector.extract_strided_slice %88 {offsets = [0, 0, 0, 0], sizes = [1, 4, 64, 8], strides = [1, 1, 1, 1]} : vector<4x4x64x8xf32> to vector<1x4x64x8xf32>
    %90 = vector.shape_cast %89 : vector<1x4x64x8xf32> to vector<4x64x8xf32>
    %91 = vector.extract_strided_slice %88 {offsets = [1, 0, 0, 0], sizes = [1, 4, 64, 8], strides = [1, 1, 1, 1]} : vector<4x4x64x8xf32> to vector<1x4x64x8xf32>
    %92 = vector.shape_cast %91 : vector<1x4x64x8xf32> to vector<4x64x8xf32>
    %93 = vector.extract_strided_slice %88 {offsets = [2, 0, 0, 0], sizes = [1, 4, 64, 8], strides = [1, 1, 1, 1]} : vector<4x4x64x8xf32> to vector<1x4x64x8xf32>
    %94 = vector.shape_cast %93 : vector<1x4x64x8xf32> to vector<4x64x8xf32>
    %95 = vector.extract_strided_slice %88 {offsets = [3, 0, 0, 0], sizes = [1, 4, 64, 8], strides = [1, 1, 1, 1]} : vector<4x4x64x8xf32> to vector<1x4x64x8xf32>
    %96 = vector.shape_cast %95 : vector<1x4x64x8xf32> to vector<4x64x8xf32>
    %97 = tpu.concatenate %90, %92, %94, %96 in 2 : vector<4x64x8xf32>, vector<4x64x8xf32>, vector<4x64x8xf32>, vector<4x64x8xf32> -> vector<4x64x32xf32>
    %98 = vector.shape_cast %97 : vector<4x64x32xf32> to vector<256x32xf32>
    %99 = arith.truncf %98 : vector<256x32xf32> to vector<256x32xbf16>
    %c0_19 = arith.constant 0 : index
    %c0_20 = arith.constant 0 : index
    %100 = vector.load %arg5[%c0_19, %c0_20] : memref<32x32xbf16, #tpu.memory_space<vmem>>, vector<32x32xbf16>
    %cst_21 = arith.constant dense<0.000000e+00> : vector<256x32xf32>
    %101 = tpu.matmul %99, %100, %cst_21 {dimension_numbers = #tpu.dot_dimension_numbers<[1], [0], [0], [1], [0, 0, 1, 1], [], []>} : vector<256x32xbf16>, vector<32x32xbf16>, vector<256x32xf32> -> vector<256x32xf32>
    %102 = arith.addf %10, %101 : vector<256x32xf32>
    %c0_22 = arith.constant 0 : index
    %c0_23 = arith.constant 0 : index
    %103 = vector.load %arg6[%c0_22, %c0_23] : memref<1x32xf32, #tpu.memory_space<vmem>>, vector<1x32xf32>
    %104 = vector.shape_cast %103 : vector<1x32xf32> to vector<32xf32>
    %105 = vector.shape_cast %104 : vector<32xf32> to vector<1x32xf32>
    %106 = vector.broadcast %105 : vector<1x32xf32> to vector<256x32xf32>
    %107 = arith.addf %102, %106 : vector<256x32xf32>
    %cst_24 = arith.constant dense<0.000000e+00> : vector<256xf32>
    %108 = vector.multi_reduction <add>, %107, %cst_24 [1] : vector<256x32xf32> to vector<256xf32>
    %109 = vector.shape_cast %108 : vector<256xf32> to vector<256x1xf32>
    %cst_25 = arith.constant 3.200000e+01 : f32
    %110 = vector.broadcast %cst_25 : f32 to vector<256x1xf32>
    %111 = arith.divf %109, %110 : vector<256x1xf32>
    %112 = arith.mulf %107, %107 : vector<256x32xf32>
    %cst_26 = arith.constant dense<0.000000e+00> : vector<256xf32>
    %113 = vector.multi_reduction <add>, %112, %cst_26 [1] : vector<256x32xf32> to vector<256xf32>
    %114 = vector.shape_cast %113 : vector<256xf32> to vector<256x1xf32>
    %cst_27 = arith.constant 3.200000e+01 : f32
    %115 = vector.broadcast %cst_27 : f32 to vector<256x1xf32>
    %116 = arith.divf %114, %115 : vector<256x1xf32>
    %117 = vector.broadcast %111 : vector<256x1xf32> to vector<256x32xf32>
    %118 = arith.subf %107, %117 : vector<256x32xf32>
    %119 = arith.mulf %111, %111 : vector<256x1xf32>
    %120 = arith.subf %116, %119 : vector<256x1xf32>
    %cst_28 = arith.constant 9.99999974E-6 : f32
    %121 = vector.broadcast %cst_28 : f32 to vector<256x1xf32>
    %122 = arith.addf %120, %121 : vector<256x1xf32>
    %123 = math.rsqrt %122 : vector<256x1xf32>
    %124 = vector.broadcast %123 : vector<256x1xf32> to vector<256x32xf32>
    %125 = arith.mulf %118, %124 : vector<256x32xf32>
    %126 = arith.truncf %125 : vector<256x32xf32> to vector<256x32xbf16>
    %c0_29 = arith.constant 0 : index
    %c0_30 = arith.constant 0 : index
    %127 = vector.load %arg7[%c0_29, %c0_30] : memref<32x128xbf16, #tpu.memory_space<vmem>>, vector<32x128xbf16>
    %cst_31 = arith.constant dense<0.000000e+00> : vector<256x128xf32>
    %128 = tpu.matmul %126, %127, %cst_31 {dimension_numbers = #tpu.dot_dimension_numbers<[1], [0], [0], [1], [0, 0, 1, 1], [], []>} : vector<256x32xbf16>, vector<32x128xbf16>, vector<256x128xf32> -> vector<256x128xf32>
    %c0_32 = arith.constant 0 : index
    %c0_33 = arith.constant 0 : index
    %129 = vector.load %arg8[%c0_32, %c0_33] : memref<1x128xf32, #tpu.memory_space<vmem>>, vector<1x128xf32>
    %130 = vector.shape_cast %129 : vector<1x128xf32> to vector<128xf32>
    %131 = vector.shape_cast %130 : vector<128xf32> to vector<1x128xf32>
    %132 = vector.broadcast %131 : vector<1x128xf32> to vector<256x128xf32>
    %133 = arith.addf %128, %132 : vector<256x128xf32>
    %cst_34 = arith.constant 5.000000e-01 : f32
    %134 = vector.broadcast %cst_34 : f32 to vector<256x128xf32>
    %135 = arith.mulf %134, %133 : vector<256x128xf32>
    %136 = arith.mulf %133, %133 : vector<256x128xf32>
    %137 = arith.mulf %136, %133 : vector<256x128xf32>
    %cst_35 = arith.constant 4.471500e-02 : f32
    %138 = vector.broadcast %cst_35 : f32 to vector<256x128xf32>
    %139 = arith.mulf %138, %137 : vector<256x128xf32>
    %140 = arith.addf %133, %139 : vector<256x128xf32>
    %cst_36 = arith.constant 0.797884583 : f32
    %141 = vector.broadcast %cst_36 : f32 to vector<256x128xf32>
    %142 = arith.mulf %141, %140 : vector<256x128xf32>
    %143 = math.tanh %142 : vector<256x128xf32>
    %cst_37 = arith.constant 1.000000e+00 : f32
    %144 = vector.broadcast %cst_37 : f32 to vector<256x128xf32>
    %145 = arith.addf %144, %143 : vector<256x128xf32>
    %146 = arith.mulf %135, %145 : vector<256x128xf32>
    %147 = arith.truncf %146 : vector<256x128xf32> to vector<256x128xbf16>
    %c0_38 = arith.constant 0 : index
    %c0_39 = arith.constant 0 : index
    %148 = vector.load %arg9[%c0_38, %c0_39] : memref<128x32xbf16, #tpu.memory_space<vmem>>, vector<128x32xbf16>
    %cst_40 = arith.constant dense<0.000000e+00> : vector<256x32xf32>
    %149 = tpu.matmul %147, %148, %cst_40 {dimension_numbers = #tpu.dot_dimension_numbers<[1], [0], [0], [1], [0, 0, 1, 1], [], []>} : vector<256x128xbf16>, vector<128x32xbf16>, vector<256x32xf32> -> vector<256x32xf32>
    %c0_41 = arith.constant 0 : index
    %c0_42 = arith.constant 0 : index
    %150 = vector.load %arg10[%c0_41, %c0_42] : memref<1x32xf32, #tpu.memory_space<vmem>>, vector<1x32xf32>
    %151 = vector.shape_cast %150 : vector<1x32xf32> to vector<32xf32>
    %152 = vector.shape_cast %151 : vector<32xf32> to vector<1x32xf32>
    %153 = vector.broadcast %152 : vector<1x32xf32> to vector<256x32xf32>
    %154 = arith.addf %149, %153 : vector<256x32xf32>
    %155 = arith.addf %107, %154 : vector<256x32xf32>
    %156 = vector.extract_strided_slice %155 {offsets = [0, 0], sizes = [64, 32], strides = [1, 1]} : vector<256x32xf32> to vector<64x32xf32>
    %157 = vector.shape_cast %156 : vector<64x32xf32> to vector<8x8x32xf32>
    %c0_43 = arith.constant 0 : index
    %c0_44 = arith.constant 0 : index
    %c0_45 = arith.constant 0 : index
    %c0_46 = arith.constant 0 : index
    %158 = vector.load %arg11[%c0_43, %c0_44, %c0_45, %c0_46] : memref<1x16x16x32xf32, #tpu.memory_space<vmem>>, vector<1x8x8x32xf32>
    %159 = vector.shape_cast %158 : vector<1x8x8x32xf32> to vector<8x8x32xf32>
    %160 = vector.shape_cast %157 : vector<8x8x32xf32> to vector<1x8x8x32xf32>
    tpu.vector_store %arg11[%c0_43, %c0_44, %c0_45, %c0_46], %160 {strides = array<i32>} : memref<1x16x16x32xf32, #tpu.memory_space<vmem>>, vector<1x8x8x32xf32>,
    %161 = vector.extract_strided_slice %155 {offsets = [64, 0], sizes = [64, 32], strides = [1, 1]} : vector<256x32xf32> to vector<64x32xf32>
    %162 = vector.shape_cast %161 : vector<64x32xf32> to vector<8x8x32xf32>
    %c0_47 = arith.constant 0 : index
    %c0_48 = arith.constant 0 : index
    %c8 = arith.constant 8 : index
    %c0_49 = arith.constant 0 : index
    %163 = vector.load %arg11[%c0_47, %c0_48, %c8, %c0_49] : memref<1x16x16x32xf32, #tpu.memory_space<vmem>>, vector<1x8x8x32xf32>
    %164 = vector.shape_cast %163 : vector<1x8x8x32xf32> to vector<8x8x32xf32>
    %165 = vector.shape_cast %162 : vector<8x8x32xf32> to vector<1x8x8x32xf32>
    tpu.vector_store %arg11[%c0_47, %c0_48, %c8, %c0_49], %165 {strides = array<i32>} : memref<1x16x16x32xf32, #tpu.memory_space<vmem>>, vector<1x8x8x32xf32>,
    %166 = vector.extract_strided_slice %155 {offsets = [128, 0], sizes = [64, 32], strides = [1, 1]} : vector<256x32xf32> to vector<64x32xf32>
    %167 = vector.shape_cast %166 : vector<64x32xf32> to vector<8x8x32xf32>
    %c0_50 = arith.constant 0 : index
    %c8_51 = arith.constant 8 : index
    %c0_52 = arith.constant 0 : index
    %c0_53 = arith.constant 0 : index
    %168 = vector.load %arg11[%c0_50, %c8_51, %c0_52, %c0_53] : memref<1x16x16x32xf32, #tpu.memory_space<vmem>>, vector<1x8x8x32xf32>
    %169 = vector.shape_cast %168 : vector<1x8x8x32xf32> to vector<8x8x32xf32>
    %170 = vector.shape_cast %167 : vector<8x8x32xf32> to vector<1x8x8x32xf32>
    tpu.vector_store %arg11[%c0_50, %c8_51, %c0_52, %c0_53], %170 {strides = array<i32>} : memref<1x16x16x32xf32, #tpu.memory_space<vmem>>, vector<1x8x8x32xf32>,
    %171 = vector.extract_strided_slice %155 {offsets = [192, 0], sizes = [64, 32], strides = [1, 1]} : vector<256x32xf32> to vector<64x32xf32>
    %172 = vector.shape_cast %171 : vector<64x32xf32> to vector<8x8x32xf32>
    %c0_54 = arith.constant 0 : index
    %c8_55 = arith.constant 8 : index
    %c8_56 = arith.constant 8 : index
    %c0_57 = arith.constant 0 : index
    %173 = vector.load %arg11[%c0_54, %c8_55, %c8_56, %c0_57] : memref<1x16x16x32xf32, #tpu.memory_space<vmem>>, vector<1x8x8x32xf32>
    %174 = vector.shape_cast %173 : vector<1x8x8x32xf32> to vector<8x8x32xf32>
    %175 = vector.shape_cast %172 : vector<8x8x32xf32> to vector<1x8x8x32xf32>
    tpu.vector_store %arg11[%c0_54, %c8_55, %c8_56, %c0_57], %175 {strides = array<i32>} : memref<1x16x16x32xf32, #tpu.memory_space<vmem>>, vector<1x8x8x32xf32>,
    return
  }
  func.func @transform_0(%arg0: i32) -> (i32, i32, i32, i32) {
    %c0_i32 = arith.constant 0 : i32
    %c0_i32_0 = arith.constant 0 : i32
    %c0_i32_1 = arith.constant 0 : i32
    %c0_i32_2 = arith.constant 0 : i32
    return %arg0, %c0_i32, %c0_i32_0, %c0_i32_1 : i32, i32, i32, i32
  }
  func.func @transform_1(%arg0: i32) -> (i32, i32) {
    %c0_i32 = arith.constant 0 : i32
    %c0_i32_0 = arith.constant 0 : i32
    %c0_i32_1 = arith.constant 0 : i32
    return %c0_i32, %c0_i32_0 : i32, i32
  }
  func.func @transform_2(%arg0: i32) -> (i32, i32) {
    %c0_i32 = arith.constant 0 : i32
    %c0_i32_0 = arith.constant 0 : i32
    %c0_i32_1 = arith.constant 0 : i32
    return %c0_i32, %c0_i32_0 : i32, i32
  }
  func.func @transform_3(%arg0: i32) -> (i32, i32, i32) {
    %c0_i32 = arith.constant 0 : i32
    %c0_i32_0 = arith.constant 0 : i32
    %c0_i32_1 = arith.constant 0 : i32
    %c0_i32_2 = arith.constant 0 : i32
    return %c0_i32, %c0_i32_0, %c0_i32_1 : i32, i32, i32
  }
  func.func @transform_4(%arg0: i32) -> (i32, i32) {
    %c0_i32 = arith.constant 0 : i32
    %c0_i32_0 = arith.constant 0 : i32
    %c0_i32_1 = arith.constant 0 : i32
    return %c0_i32, %c0_i32_0 : i32, i32
  }
  func.func @transform_5(%arg0: i32) -> (i32, i32) {
    %c0_i32 = arith.constant 0 : i32
    %c0_i32_0 = arith.constant 0 : i32
    %c0_i32_1 = arith.constant 0 : i32
    return %c0_i32, %c0_i32_0 : i32, i32
  }
  func.func @transform_6(%arg0: i32) -> (i32, i32) {
    %c0_i32 = arith.constant 0 : i32
    %c0_i32_0 = arith.constant 0 : i32
    %c0_i32_1 = arith.constant 0 : i32
    return %c0_i32, %c0_i32_0 : i32, i32
  }
  func.func @transform_7(%arg0: i32) -> (i32, i32) {
    %c0_i32 = arith.constant 0 : i32
    %c0_i32_0 = arith.constant 0 : i32
    %c0_i32_1 = arith.constant 0 : i32
    return %c0_i32, %c0_i32_0 : i32, i32
  }
  func.func @transform_8(%arg0: i32) -> (i32, i32) {
    %c0_i32 = arith.constant 0 : i32
    %c0_i32_0 = arith.constant 0 : i32
    %c0_i32_1 = arith.constant 0 : i32
    return %c0_i32, %c0_i32_0 : i32, i32
  }
  func.func @transform_9(%arg0: i32) -> (i32, i32) {
    %c0_i32 = arith.constant 0 : i32
    %c0_i32_0 = arith.constant 0 : i32
    %c0_i32_1 = arith.constant 0 : i32
    return %c0_i32, %c0_i32_0 : i32, i32
  }
  func.func @transform_10(%arg0: i32) -> (i32, i32, i32, i32) {
    %c0_i32 = arith.constant 0 : i32
    %c0_i32_0 = arith.constant 0 : i32
    %c0_i32_1 = arith.constant 0 : i32
    %c0_i32_2 = arith.constant 0 : i32
    return %arg0, %c0_i32, %c0_i32_0, %c0_i32_1 : i32, i32, i32, i32
  }
}

</mosaic_0001>

<llo_original>
// kernel: lewin_block.1
$region0: #{lewin_block.1}
  #allocation0 [shape = 'u32[]', space=smem, size = 0x4, offset = 0x4, fixed_abs, tag = 'smem constant byte address 0x4 - core index']
  #allocation1 [shape = 'u32[144,128]{1,0:T(1,128)}', space=vmem, size = 0x12000, scoped, tag = 'internal scratch']
  %s0 = inlined_call_operand.vmem [shape: f32[2,16,16,32], index: 0, kind: input, shape index: {}]
  %s1 = inlined_call_operand.vmem [shape: bf16[32,96], index: 1, kind: input, shape index: {}]
  %s2 = inlined_call_operand.vmem [shape: f32[1,96], index: 2, kind: input, shape index: {}]
  %s3 = inlined_call_operand.vmem [shape: f32[4,64,64], index: 3, kind: input, shape index: {}]
  %s4 = inlined_call_operand.vmem [shape: bf16[32,32], index: 4, kind: input, shape index: {}]
  %s5 = inlined_call_operand.vmem [shape: f32[1,32], index: 5, kind: input, shape index: {}]
  %s6 = inlined_call_operand.vmem [shape: bf16[32,128], index: 6, kind: input, shape index: {}]
  %s7 = inlined_call_operand.vmem [shape: f32[1,128], index: 7, kind: input, shape index: {}]
  %s8 = inlined_call_operand.vmem [shape: bf16[128,32], index: 8, kind: input, shape index: {}]
  %s9 = inlined_call_operand.vmem [shape: f32[1,32], index: 9, kind: input, shape index: {}]
  %s10 = inlined_call_operand.vmem [shape: f32[2,16,16,32], index: 10, kind: output, shape index: {}]
  %s11 = sld [smem:[#allocation0]]
  $region73: #{lewin_block.1} parent=0
    _
  %s13 = ssub.s32 1, %s11
  %s14 = scalar_select 0, %s13, %s11
  loop: start=0, step=1, limit=4
  $region2: #{lewin_block.1} parent=0 // loop_pre_header
    _
  $region3: #{lewin_block.1} parent=0 // loop_header
    %s16 = sphi 0, %s20
    %p17 = scmp.ge.s32.totalorder %s16, 4
    %s26 = sphi 0, %s28
    %s29 = sphi 0, %s26
    %s30 = sphi 0, %s29
    %s46 = sphi 0, %s30
    %s50 = sphi 0, %s50
    %s52 = sphi 0, %s50
    %s53 = sphi 0, %s52
    %s67 = sphi 0, %s53
    %s71 = sphi 0, %s71
    %s73 = sphi 0, %s71
    %s74 = sphi 0, %s73
    %s88 = sphi 0, %s74
    %s92 = sphi 0, %s92
    %s94 = sphi 0, %s92
    %s95 = sphi 0, %s94
    %s109 = sphi 0, %s95
    %s113 = sphi 0, %s113
    %s115 = sphi 0, %s113
    %s116 = sphi 0, %s115
    %s130 = sphi 0, %s116
    %s134 = sphi 0, %s134
    %s136 = sphi 0, %s134
    %s137 = sphi 0, %s136
    %s151 = sphi 0, %s137
    %s155 = sphi 0, %s155
    %s157 = sphi 0, %s155
    %s158 = sphi 0, %s157
    %s172 = sphi 0, %s158
    %s176 = sphi 0, %s176
    %s178 = sphi 0, %s176
    %s179 = sphi 0, %s178
    %s193 = sphi 0, %s179
    %s197 = sphi 0, %s197
    %s199 = sphi 0, %s197
    %s200 = sphi 0, %s199
    %s214 = sphi 0, %s200
    %s218 = sphi 0, %s218
    %s220 = sphi 0, %s218
    %s221 = sphi 0, %s220
    %s235 = sphi 0, %s221
    %s241 = sphi 0, %s243
    %s244 = sphi 0, %s241
    %s245 = sphi 0, %s244
    %s261 = sphi 0, %s245
  $region4: #{lewin_block.1} parent=0 // loop_header_branch
    %19 = sbr.rel (%p17) target = $region8
  $region5: #{lewin_block.1} parent=0 // loop_body
    %s21 = ssub.s32 %s16, 1
    %s22 = ssub.s32 %s16, 2
    %s23 = sadd.s32 %s16, 1
    %s24 = ssub.s32 %s16, %s23
    %p25 = scmp.eq.s32.totalorder %s24, 0
    %s27 = sadd.s32 %s26, 1
    %s28 = scalar_select %p25, %s26, %s27
    %p31 = pneg %p25
    %p32 = scmp.eq.s32.totalorder %s16, 1
    %p33 = por %p31, %p32
    %p34 = scmp.ne.s32.totalorder %s26, %s29
    %p35 = scmp.eq.s32.totalorder %s16, 0
    %p36 = por %p34, %p35
    %p37 = scmp.ne.s32.totalorder %s26, %s29
    %p38 = scmp.eq.s32.totalorder %s21, 1
    %p39 = por %p37, %p38
    %p40 = scmp.ne.s32.totalorder %s29, %s30
    %p41 = scmp.eq.s32.totalorder %s21, 0
    %p42 = por %p40, %p41
    %p43 = scmp.ne.s32.totalorder %s29, %s30
    %p44 = scmp.eq.s32.totalorder %s22, 1
    %p45 = por %p43, %p44
    %p47 = scmp.ne.s32.totalorder %s30, %s46
    %p48 = scmp.eq.s32.totalorder %s22, 0
    %p49 = por %p47, %p48
    %s51 = sadd.s32 %s50, 1
    %p54 = scmp.eq.s32.totalorder %s16, 1
    %p55 = scmp.ne.s32.totalorder %s50, %s52
    %p56 = scmp.eq.s32.totalorder %s16, 0
    %p57 = por %p55, %p56
    %p58 = scmp.ne.s32.totalorder %s50, %s52
    %p59 = scmp.eq.s32.totalorder %s21, 1
    %p60 = por %p58, %p59
    %p61 = scmp.ne.s32.totalorder %s52, %s53
    %p62 = scmp.eq.s32.totalorder %s21, 0
    %p63 = por %p61, %p62
    %p64 = scmp.ne.s32.totalorder %s52, %s53
    %p65 = scmp.eq.s32.totalorder %s22, 1
    %p66 = por %p64, %p65
    %p68 = scmp.ne.s32.totalorder %s53, %s67
    %p69 = scmp.eq.s32.totalorder %s22, 0
    %p70 = por %p68, %p69
    %s72 = sadd.s32 %s71, 1
    %p75 = scmp.eq.s32.totalorder %s16, 1
    %p76 = scmp.ne.s32.totalorder %s71, %s73
    %p77 = scmp.eq.s32.totalorder %s16, 0
    %p78 = por %p76, %p77
    %p79 = scmp.ne.s32.totalorder %s71, %s73
    %p80 = scmp.eq.s32.totalorder %s21, 1
    %p81 = por %p79, %p80
    %p82 = scmp.ne.s32.totalorder %s73, %s74
    %p83 = scmp.eq.s32.totalorder %s21, 0
    %p84 = por %p82, %p83
    %p85 = scmp.ne.s32.totalorder %s73, %s74
    %p86 = scmp.eq.s32.totalorder %s22, 1
    %p87 = por %p85, %p86
    %p89 = scmp.ne.s32.totalorder %s74, %s88
    %p90 = scmp.eq.s32.totalorder %s22, 0
    %p91 = por %p89, %p90
    %s93 = sadd.s32 %s92, 1
    %p96 = scmp.eq.s32.totalorder %s16, 1
    %p97 = scmp.ne.s32.totalorder %s92, %s94
    %p98 = scmp.eq.s32.totalorder %s16, 0
    %p99 = por %p97, %p98
    %p100 = scmp.ne.s32.totalorder %s92, %s94
    %p101 = scmp.eq.s32.totalorder %s21, 1
    %p102 = por %p100, %p101
    %p103 = scmp.ne.s32.totalorder %s94, %s95
    %p104 = scmp.eq.s32.totalorder %s21, 0
    %p105 = por %p103, %p104
    %p106 = scmp.ne.s32.totalorder %s94, %s95
    %p107 = scmp.eq.s32.totalorder %s22, 1
    %p108 = por %p106, %p107
    %p110 = scmp.ne.s32.totalorder %s95, %s109
    %p111 = scmp.eq.s32.totalorder %s22, 0
    %p112 = por %p110, %p111
    %s114 = sadd.s32 %s113, 1
    %p117 = scmp.eq.s32.totalorder %s16, 1
    %p118 = scmp.ne.s32.totalorder %s113, %s115
    %p119 = scmp.eq.s32.totalorder %s16, 0
    %p120 = por %p118, %p119
    %p121 = scmp.ne.s32.totalorder %s113, %s115
    %p122 = scmp.eq.s32.totalorder %s21, 1
    %p123 = por %p121, %p122
    %p124 = scmp.ne.s32.totalorder %s115, %s116
    %p125 = scmp.eq.s32.totalorder %s21, 0
    %p126 = por %p124, %p125
    %p127 = scmp.ne.s32.totalorder %s115, %s116
    %p128 = scmp.eq.s32.totalorder %s22, 1
    %p129 = por %p127, %p128
    %p131 = scmp.ne.s32.totalorder %s116, %s130
    %p132 = scmp.eq.s32.totalorder %s22, 0
    %p133 = por %p131, %p132
    %s135 = sadd.s32 %s134, 1
    %p138 = scmp.eq.s32.totalorder %s16, 1
    %p139 = scmp.ne.s32.totalorder %s134, %s136
    %p140 = scmp.eq.s32.totalorder %s16, 0
    %p141 = por %p139, %p140
    %p142 = scmp.ne.s32.totalorder %s134, %s136
    %p143 = scmp.eq.s32.totalorder %s21, 1
    %p144 = por %p142, %p143
    %p145 = scmp.ne.s32.totalorder %s136, %s137
    %p146 = scmp.eq.s32.totalorder %s21, 0
    %p147 = por %p145, %p146
    %p148 = scmp.ne.s32.totalorder %s136, %s137
    %p149 = scmp.eq.s32.totalorder %s22, 1
    %p150 = por %p148, %p149
    %p152 = scmp.ne.s32.totalorder %s137, %s151
    %p153 = scmp.eq.s32.totalorder %s22, 0
    %p154 = por %p152, %p153
    %s156 = sadd.s32 %s155, 1
    %p159 = scmp.eq.s32.totalorder %s16, 1
    %p160 = scmp.ne.s32.totalorder %s155, %s157
    %p161 = scmp.eq.s32.totalorder %s16, 0
    %p162 = por %p160, %p161
    %p163 = scmp.ne.s32.totalorder %s155, %s157
    %p164 = scmp.eq.s32.totalorder %s21, 1
    %p165 = por %p163, %p164
    %p166 = scmp.ne.s32.totalorder %s157, %s158
    %p167 = scmp.eq.s32.totalorder %s21, 0
    %p168 = por %p166, %p167
    %p169 = scmp.ne.s32.totalorder %s157, %s158
    %p170 = scmp.eq.s32.totalorder %s22, 1
    %p171 = por %p169, %p170
    %p173 = scmp.ne.s32.totalorder %s158, %s172
    %p174 = scmp.eq.s32.totalorder %s22, 0
    %p175 = por %p173, %p174
    %s177 = sadd.s32 %s176, 1
    %p180 = scmp.eq.s32.totalorder %s16, 1
    %p181 = scmp.ne.s32.totalorder %s176, %s178
    %p182 = scmp.eq.s32.totalorder %s16, 0
    %p183 = por %p181, %p182
    %p184 = scmp.ne.s32.totalorder %s176, %s178
    %p185 = scmp.eq.s32.totalorder %s21, 1
    %p186 = por %p184, %p185
    %p187 = scmp.ne.s32.totalorder %s178, %s179
    %p188 = scmp.eq.s32.totalorder %s21, 0
    %p189 = por %p187, %p188
    %p190 = scmp.ne.s32.totalorder %s178, %s179
    %p191 = scmp.eq.s32.totalorder %s22, 1
    %p192 = por %p190, %p191
    %p194 = scmp.ne.s32.totalorder %s179, %s193
    %p195 = scmp.eq.s32.totalorder %s22, 0
    %p196 = por %p194, %p195
    %s198 = sadd.s32 %s197, 1
    %p201 = scmp.eq.s32.totalorder %s16, 1
    %p202 = scmp.ne.s32.totalorder %s197, %s199
    %p203 = scmp.eq.s32.totalorder %s16, 0
    %p204 = por %p202, %p203
    %p205 = scmp.ne.s32.totalorder %s197, %s199
    %p206 = scmp.eq.s32.totalorder %s21, 1
    %p207 = por %p205, %p206
    %p208 = scmp.ne.s32.totalorder %s199, %s200
    %p209 = scmp.eq.s32.totalorder %s21, 0
    %p210 = por %p208, %p209
    %p211 = scmp.ne.s32.totalorder %s199, %s200
    %p212 = scmp.eq.s32.totalorder %s22, 1
    %p213 = por %p211, %p212
    %p215 = scmp.ne.s32.totalorder %s200, %s214
    %p216 = scmp.eq.s32.totalorder %s22, 0
    %p217 = por %p215, %p216
    %s219 = sadd.s32 %s218, 1
    %p222 = scmp.eq.s32.totalorder %s16, 1
    %p223 = scmp.ne.s32.totalorder %s218, %s220
    %p224 = scmp.eq.s32.totalorder %s16, 0
    %p225 = por %p223, %p224
    %p226 = scmp.ne.s32.totalorder %s218, %s220
    %p227 = scmp.eq.s32.totalorder %s21, 1
    %p228 = por %p226, %p227
    %p229 = scmp.ne.s32.totalorder %s220, %s221
    %p230 = scmp.eq.s32.totalorder %s21, 0
    %p231 = por %p229, %p230
    %p232 = scmp.ne.s32.totalorder %s220, %s221
    %p233 = scmp.eq.s32.totalorder %s22, 1
    %p234 = por %p232, %p233
    %p236 = scmp.ne.s32.totalorder %s221, %s235
    %p237 = scmp.eq.s32.totalorder %s22, 0
    %p238 = por %p236, %p237
    %s239 = ssub.s32 %s16, %s23
    %p240 = scmp.eq.s32.totalorder %s239, 0
    %s242 = sadd.s32 %s241, 1
    %s243 = scalar_select %p240, %s241, %s242
    %p246 = pneg %p240
    %p247 = scmp.eq.s32.totalorder %s16, 1
    %p248 = por %p246, %p247
    %p249 = scmp.ne.s32.totalorder %s241, %s244
    %p250 = scmp.eq.s32.totalorder %s16, 0
    %p251 = por %p249, %p250
    %p252 = scmp.ne.s32.totalorder %s241, %s244
    %p253 = scmp.eq.s32.totalorder %s21, 1
    %p254 = por %p252, %p253
    %p255 = scmp.ne.s32.totalorder %s244, %s245
    %p256 = scmp.eq.s32.totalorder %s21, 0
    %p257 = por %p255, %p256
    %p258 = scmp.ne.s32.totalorder %s244, %s245
    %p259 = scmp.eq.s32.totalorder %s22, 1
    %p260 = por %p258, %p259
    %p262 = scmp.ne.s32.totalorder %s245, %s261
    %p263 = scmp.eq.s32.totalorder %s22, 0
    %p264 = por %p262, %p263
    %p265 = scmp.le.s32.totalorder 1, %s16
    %p266 = scmp.lt.s32.totalorder %s16, 3
    %p267 = pnand %p265, %p266
    %p268 = pneg %p267
    // Predicated region
    $region9: #{lewin_block.1} parent=5 // pred_check
      _
    $region10: #{lewin_block.1} parent=5 // pred_check_branch
      %270 = sbr.rel (%p267) target = $region12
    $region11: #{lewin_block.1} parent=5 // pred_region
      %s271 = ssub.s32 %s16, 1
      // Predicated region
      $region13: #{lewin_block.1} parent=11 // pred_check
        %p272 = pneg %p63
      $region14: #{lewin_block.1} parent=11 // pred_check_branch
        %274 = sbr.rel (%p272) target = $region16
      $region15: #{lewin_block.1} parent=11 // pred_region
        _
      $region16: #{lewin_block.1} parent=11 // pred_fallthru
        _
      // Predicated region
      $region17: #{lewin_block.1} parent=11 // pred_check
        %p275 = pneg %p84
      $region18: #{lewin_block.1} parent=11 // pred_check_branch
        %277 = sbr.rel (%p275) target = $region20
      $region19: #{lewin_block.1} parent=11 // pred_region
        _
      $region20: #{lewin_block.1} parent=11 // pred_fallthru
        _
      // Predicated region
      $region21: #{lewin_block.1} parent=11 // pred_check
        %p278 = pneg %p105
      $region22: #{lewin_block.1} parent=11 // pred_check_branch
        %280 = sbr.rel (%p278) target = $region24
      $region23: #{lewin_block.1} parent=11 // pred_region
        _
      $region24: #{lewin_block.1} parent=11 // pred_fallthru
        _
      // Predicated region
      $region25: #{lewin_block.1} parent=11 // pred_check
        %p281 = pneg %p126
      $region26: #{lewin_block.1} parent=11 // pred_check_branch
        %283 = sbr.rel (%p281) target = $region28
      $region27: #{lewin_block.1} parent=11 // pred_region
        _
      $region28: #{lewin_block.1} parent=11 // pred_fallthru
        _
      // Predicated region
      $region29: #{lewin_block.1} parent=11 // pred_check
        %p284 = pneg %p147
      $region30: #{lewin_block.1} parent=11 // pred_check_branch
        %286 = sbr.rel (%p284) target = $region32
      $region31: #{lewin_block.1} parent=11 // pred_region
        _
      $region32: #{lewin_block.1} parent=11 // pred_fallthru
        _
      // Predicated region
      $region33: #{lewin_block.1} parent=11 // pred_check
        %p287 = pneg %p168
      $region34: #{lewin_block.1} parent=11 // pred_check_branch
        %289 = sbr.rel (%p287) target = $region36
      $region35: #{lewin_block.1} parent=11 // pred_region
        _
      $region36: #{lewin_block.1} parent=11 // pred_fallthru
        _
      // Predicated region
      $region37: #{lewin_block.1} parent=11 // pred_check
        %p290 = pneg %p189
      $region38: #{lewin_block.1} parent=11 // pred_check_branch
        %292 = sbr.rel (%p290) target = $region40
      $region39: #{lewin_block.1} parent=11 // pred_region
        _
      $region40: #{lewin_block.1} parent=11 // pred_fallthru
        _
      // Predicated region
      $region41: #{lewin_block.1} parent=11 // pred_check
        %p293 = pneg %p210
      $region42: #{lewin_block.1} parent=11 // pred_check_branch
        %295 = sbr.rel (%p293) target = $region44
      $region43: #{lewin_block.1} parent=11 // pred_region
        _
      $region44: #{lewin_block.1} parent=11 // pred_fallthru
        _
      // Predicated region
      $region45: #{lewin_block.1} parent=11 // pred_check
        %p296 = pneg %p231
      $region46: #{lewin_block.1} parent=11 // pred_check_branch
        %298 = sbr.rel (%p296) target = $region48
      $region47: #{lewin_block.1} parent=11 // pred_region
        _
      $region48: #{lewin_block.1} parent=11 // pred_fallthru
        _
    $region12: #{lewin_block.1} parent=5 // pred_fallthru
      _
    %p299 = scmp.lt.s32.totalorder %s16, 2
    // Predicated region
    $region49: #{lewin_block.1} parent=5 // pred_check
      %p300 = pneg %p299
    $region50: #{lewin_block.1} parent=5 // pred_check_branch
      %302 = sbr.rel (%p300) target = $region52
    $region51: #{lewin_block.1} parent=5 // pred_region
      // Predicated region
      $region53: #{lewin_block.1} parent=51 // pred_check
        %p303 = pneg %p36
      $region54: #{lewin_block.1} parent=51 // pred_check_branch
        %305 = sbr.rel (%p303) target = $region56
      $region55: #{lewin_block.1} parent=51 // pred_region
        %p306 = scmp.lt.s32.totalorder %s16, 1
        %s307 = scalar_select %p306, %s16, 1
        %s308 = smul.addr %s307, 32
        %s309 = smul.addr %s308, 8
        %s310 = scalar_lea.vmem %s0, %s309
      $region56: #{lewin_block.1} parent=51 // pred_fallthru
        _
    $region52: #{lewin_block.1} parent=5 // pred_fallthru
      _
    %p311 = scmp.le.s32.totalorder 1, %s16
    %p312 = scmp.lt.s32.totalorder %s16, 3
    %p313 = pnand %p311, %p312
    %p314 = pneg %p313
    // Predicated region
    $region57: #{lewin_block.1} parent=5 // pred_check
      _
    $region58: #{lewin_block.1} parent=5 // pred_check_branch
      %316 = sbr.rel (%p313) target = $region60
    $region59: #{lewin_block.1} parent=5 // pred_region
      %s317 = ssub.s32 %s16, 1
      %p318 = scmp.lt.s32.totalorder %s21, 1
      %s319 = scalar_select %p318, %s21, 1
      %s320 = smul.addr %s319, 32
      %s321 = smul.addr %s320, 8
      %s322 = scalar_lea.vmem %s0, %s321
      %p323 = pneg %p42
      %p324 = pneg %p39
      %p325 = pneg %p63
      %p326 = pneg %p60
      %p327 = pneg %p84
      %p328 = pneg %p81
      %p329 = pneg %p105
      %p330 = pneg %p102
      %p331 = pneg %p126
      %p332 = pneg %p123
      %p333 = pneg %p147
      %p334 = pneg %p144
      %p335 = pneg %p168
      %p336 = pneg %p165
      %p337 = pneg %p189
      %p338 = pneg %p186
      %p339 = pneg %p210
      %p340 = pneg %p207
      %p341 = pneg %p231
      %p342 = pneg %p228
      %p343 = pneg %p257
      %p344 = pneg %p254
      %p345 = scmp.lt.s32.totalorder %s21, 1
      %s346 = scalar_select %p345, %s21, 1
      %s347 = smul.addr %s346, 32
      %s348 = smul.addr %s347, 8
      %s349 = scalar_lea.vmem %s10, %s348
      %p350 = scmp.lt.s32.totalorder %s21, 1
      %s351 = scalar_select %p350, %s21, 1
      %s352 = smul.addr %s351, 32
      %s353 = smul.addr %s352, 8
      %s354 = scalar_lea.vmem %s0, %s353
      %p355 = scmp.lt.s32.totalorder %s21, 1
      %s356 = scalar_select %p355, %s21, 1
      %s357 = smul.addr %s356, 32
      %s358 = smul.addr %s357, 8
      %s359 = scalar_lea.vmem %s10, %s358
      %v361 = vld [vmem:[%s354] sm:$0xff]
      %v362 = vld [vmem:[%s354 + $0x8] sm:$0xff]
      %v363 = vld [vmem:[%s354 + $0x10] sm:$0xff]
      %v364 = vld [vmem:[%s354 + $0x18] sm:$0xff]
      %v365 = vld [vmem:[%s354 + $0x20] sm:$0xff]
      %v366 = vld [vmem:[%s354 + $0x28] sm:$0xff]
      %v367 = vld [vmem:[%s354 + $0x30] sm:$0xff]
      %v368 = vld [vmem:[%s354 + $0x38] sm:$0xff]
      %v369 = vld [vmem:[%s354 + $0x40] sm:$0xff]
      %v370 = vld [vmem:[%s354 + $0x48] sm:$0xff]
      %v371 = vld [vmem:[%s354 + $0x50] sm:$0xff]
      %v372 = vld [vmem:[%s354 + $0x58] sm:$0xff]
      %v373 = vld [vmem:[%s354 + $0x60] sm:$0xff]
      %v374 = vld [vmem:[%s354 + $0x68] sm:$0xff]
      %v375 = vld [vmem:[%s354 + $0x70] sm:$0xff]
      %v376 = vld [vmem:[%s354 + $0x78] sm:$0xff]
      %v377 = vld [vmem:[%s354 + $0x80] sm:$0xff]
      %v378 = vld [vmem:[%s354 + $0x88] sm:$0xff]
      %v379 = vld [vmem:[%s354 + $0x90] sm:$0xff]
      %v380 = vld [vmem:[%s354 + $0x98] sm:$0xff]
      %v381 = vld [vmem:[%s354 + $0xa0] sm:$0xff]
      %v382 = vld [vmem:[%s354 + $0xa8] sm:$0xff]
      %v383 = vld [vmem:[%s354 + $0xb0] sm:$0xff]
      %v384 = vld [vmem:[%s354 + $0xb8] sm:$0xff]
      %v385 = vld [vmem:[%s354 + $0xc0] sm:$0xff]
      %v386 = vld [vmem:[%s354 + $0xc8] sm:$0xff]
      %v387 = vld [vmem:[%s354 + $0xd0] sm:$0xff]
      %v388 = vld [vmem:[%s354 + $0xd8] sm:$0xff]
      %v389 = vld [vmem:[%s354 + $0xe0] sm:$0xff]
      %v390 = vld [vmem:[%s354 + $0xe8] sm:$0xff]
      %v391 = vld [vmem:[%s354 + $0xf0] sm:$0xff]
      %v392 = vld [vmem:[%s354 + $0xf8] sm:$0xff]
      %vm393 = vcmask 261120
      %v394 = vsel %vm393, %v361, 0.0
      %395 = vadd.xlane.f32.xlu0 %v394
      %v396 = vpop.xlane.xlu0 %395
      %v397 = vsel %vm393, %v363, 0.0
      %398 = vadd.xlane.f32.xlu0 %v397
      %v399 = vpop.xlane.xlu0 %398
      %v400 = vsel %vm393, %v365, 0.0
      %401 = vadd.xlane.f32.xlu0 %v400
      %v402 = vpop.xlane.xlu0 %401
      %v403 = vsel %vm393, %v367, 0.0
      %404 = vadd.xlane.f32.xlu0 %v403
      %v405 = vpop.xlane.xlu0 %404
      %v406 = vsel %vm393, %v369, 0.0
      %407 = vadd.xlane.f32.xlu0 %v406
      %v408 = vpop.xlane.xlu0 %407
      %v409 = vsel %vm393, %v371, 0.0
      %410 = vadd.xlane.f32.xlu0 %v409
      %v411 = vpop.xlane.xlu0 %410
      %v412 = vsel %vm393, %v373, 0.0
      %413 = vadd.xlane.f32.xlu0 %v412
      %v414 = vpop.xlane.xlu0 %413
      %v415 = vsel %vm393, %v375, 0.0
      %416 = vadd.xlane.f32.xlu0 %v415
      %v417 = vpop.xlane.xlu0 %416
      %v418 = vsel %vm393, %v362, 0.0
      %419 = vadd.xlane.f32.xlu0 %v418
      %v420 = vpop.xlane.xlu0 %419
      %v421 = vsel %vm393, %v364, 0.0
      %422 = vadd.xlane.f32.xlu0 %v421
      %v423 = vpop.xlane.xlu0 %422
      %v424 = vsel %vm393, %v366, 0.0
      %425 = vadd.xlane.f32.xlu0 %v424
      %v426 = vpop.xlane.xlu0 %425
      %v427 = vsel %vm393, %v368, 0.0
      %428 = vadd.xlane.f32.xlu0 %v427
      %v429 = vpop.xlane.xlu0 %428
      %v430 = vsel %vm393, %v370, 0.0
      %431 = vadd.xlane.f32.xlu0 %v430
      %v432 = vpop.xlane.xlu0 %431
      %v433 = vsel %vm393, %v372, 0.0
      %434 = vadd.xlane.f32.xlu0 %v433
      %v435 = vpop.xlane.xlu0 %434
      %v436 = vsel %vm393, %v374, 0.0
      %437 = vadd.xlane.f32.xlu0 %v436
      %v438 = vpop.xlane.xlu0 %437
      %v439 = vsel %vm393, %v376, 0.0
      %440 = vadd.xlane.f32.xlu0 %v439
      %v441 = vpop.xlane.xlu0 %440
      %v442 = vsel %vm393, %v377, 0.0
      %443 = vadd.xlane.f32.xlu0 %v442
      %v444 = vpop.xlane.xlu0 %443
      %v445 = vsel %vm393, %v379, 0.0
      %446 = vadd.xlane.f32.xlu0 %v445
      %v447 = vpop.xlane.xlu0 %446
      %v448 = vsel %vm393, %v381, 0.0
      %449 = vadd.xlane.f32.xlu0 %v448
      %v450 = vpop.xlane.xlu0 %449
      %v451 = vsel %vm393, %v383, 0.0
      %452 = vadd.xlane.f32.xlu0 %v451
      %v453 = vpop.xlane.xlu0 %452
      %v454 = vsel %vm393, %v385, 0.0
      %455 = vadd.xlane.f32.xlu0 %v454
      %v456 = vpop.xlane.xlu0 %455
      %v457 = vsel %vm393, %v387, 0.0
      %458 = vadd.xlane.f32.xlu0 %v457
      %v459 = vpop.xlane.xlu0 %458
      %v460 = vsel %vm393, %v389, 0.0
      %461 = vadd.xlane.f32.xlu0 %v460
      %v462 = vpop.xlane.xlu0 %461
      %v463 = vsel %vm393, %v391, 0.0
      %464 = vadd.xlane.f32.xlu0 %v463
      %v465 = vpop.xlane.xlu0 %464
      %v466 = vsel %vm393, %v378, 0.0
      %467 = vadd.xlane.f32.xlu0 %v466
      %v468 = vpop.xlane.xlu0 %467
      %v469 = vsel %vm393, %v380, 0.0
      %470 = vadd.xlane.f32.xlu0 %v469
      %v471 = vpop.xlane.xlu0 %470
      %v472 = vsel %vm393, %v382, 0.0
      %473 = vadd.xlane.f32.xlu0 %v472
      %v474 = vpop.xlane.xlu0 %473
      %v475 = vsel %vm393, %v384, 0.0
      %476 = vadd.xlane.f32.xlu0 %v475
      %v477 = vpop.xlane.xlu0 %476
      %v478 = vsel %vm393, %v386, 0.0
      %479 = vadd.xlane.f32.xlu0 %v478
      %v480 = vpop.xlane.xlu0 %479
      %v481 = vsel %vm393, %v388, 0.0
      %482 = vadd.xlane.f32.xlu0 %v481
      %v483 = vpop.xlane.xlu0 %482
      %v484 = vsel %vm393, %v390, 0.0
      %485 = vadd.xlane.f32.xlu0 %v484
      %v486 = vpop.xlane.xlu0 %485
      %v487 = vsel %vm393, %v392, 0.0
      %488 = vadd.xlane.f32.xlu0 %v487
      %v489 = vpop.xlane.xlu0 %488
      %v490 = vrcp.pop 32.0
      %v491 = vmul.f32 %v396, %v490
      %v492 = vmul.f32 %v399, %v490
      %v493 = vmul.f32 %v402, %v490
      %v494 = vmul.f32 %v405, %v490
      %v495 = vmul.f32 %v408, %v490
      %v496 = vmul.f32 %v411, %v490
      %v497 = vmul.f32 %v414, %v490
      %v498 = vmul.f32 %v417, %v490
      %v499 = vmul.f32 %v420, %v490
      %v500 = vmul.f32 %v423, %v490
      %v501 = vmul.f32 %v426, %v490
      %v502 = vmul.f32 %v429, %v490
      %v503 = vmul.f32 %v432, %v490
      %v504 = vmul.f32 %v435, %v490
      %v505 = vmul.f32 %v438, %v490
      %v506 = vmul.f32 %v441, %v490
      %v507 = vmul.f32 %v444, %v490
      %v508 = vmul.f32 %v447, %v490
      %v509 = vmul.f32 %v450, %v490
      %v510 = vmul.f32 %v453, %v490
      %v511 = vmul.f32 %v456, %v490
      %v512 = vmul.f32 %v459, %v490
      %v513 = vmul.f32 %v462, %v490
      %v514 = vmul.f32 %v465, %v490
      %v515 = vmul.f32 %v468, %v490
      %v516 = vmul.f32 %v471, %v490
      %v517 = vmul.f32 %v474, %v490
      %v518 = vmul.f32 %v477, %v490
      %v519 = vmul.f32 %v480, %v490
      %v520 = vmul.f32 %v483, %v490
      %v521 = vmul.f32 %v486, %v490
      %v522 = vmul.f32 %v489, %v490
      %v523 = vmul.f32 %v361, %v361
      %v524 = vmul.f32 %v363, %v363
      %v525 = vmul.f32 %v365, %v365
      %v526 = vmul.f32 %v367, %v367
      %v527 = vmul.f32 %v369, %v369
      %v528 = vmul.f32 %v371, %v371
      %v529 = vmul.f32 %v373, %v373
      %v530 = vmul.f32 %v375, %v375
      %v531 = vmul.f32 %v362, %v362
      %v532 = vmul.f32 %v364, %v364
      %v533 = vmul.f32 %v366, %v366
      %v534 = vmul.f32 %v368, %v368
      %v535 = vmul.f32 %v370, %v370
      %v536 = vmul.f32 %v372, %v372
      %v537 = vmul.f32 %v374, %v374
      %v538 = vmul.f32 %v376, %v376
      %v539 = vmul.f32 %v377, %v377
      %v540 = vmul.f32 %v379, %v379
      %v541 = vmul.f32 %v381, %v381
      %v542 = vmul.f32 %v383, %v383
      %v543 = vmul.f32 %v385, %v385
      %v544 = vmul.f32 %v387, %v387
      %v545 = vmul.f32 %v389, %v389
      %v546 = vmul.f32 %v391, %v391
      %v547 = vmul.f32 %v378, %v378
      %v548 = vmul.f32 %v380, %v380
      %v549 = vmul.f32 %v382, %v382
      %v550 = vmul.f32 %v384, %v384
      %v551 = vmul.f32 %v386, %v386
      %v552 = vmul.f32 %v388, %v388
      %v553 = vmul.f32 %v390, %v390
      %v554 = vmul.f32 %v392, %v392
      %v555 = vsel %vm393, %v523, 0.0
      %556 = vadd.xlane.f32.xlu0 %v555
      %v557 = vpop.xlane.xlu0 %556
      %v558 = vsel %vm393, %v524, 0.0
      %559 = vadd.xlane.f32.xlu0 %v558
      %v560 = vpop.xlane.xlu0 %559
      %v561 = vsel %vm393, %v525, 0.0
      %562 = vadd.xlane.f32.xlu0 %v561
      %v563 = vpop.xlane.xlu0 %562
      %v564 = vsel %vm393, %v526, 0.0
      %565 = vadd.xlane.f32.xlu0 %v564
      %v566 = vpop.xlane.xlu0 %565
      %v567 = vsel %vm393, %v527, 0.0
      %568 = vadd.xlane.f32.xlu0 %v567
      %v569 = vpop.xlane.xlu0 %568
      %v570 = vsel %vm393, %v528, 0.0
      %571 = vadd.xlane.f32.xlu0 %v570
      %v572 = vpop.xlane.xlu0 %571
      %v573 = vsel %vm393, %v529, 0.0
      %574 = vadd.xlane.f32.xlu0 %v573
      %v575 = vpop.xlane.xlu0 %574
      %v576 = vsel %vm393, %v530, 0.0
      %577 = vadd.xlane.f32.xlu0 %v576
      %v578 = vpop.xlane.xlu0 %577
      %v579 = vsel %vm393, %v531, 0.0
      %580 = vadd.xlane.f32.xlu0 %v579
      %v581 = vpop.xlane.xlu0 %580
      %v582 = vsel %vm393, %v532, 0.0
      %583 = vadd.xlane.f32.xlu0 %v582
      %v584 = vpop.xlane.xlu0 %583
      %v585 = vsel %vm393, %v533, 0.0
      %586 = vadd.xlane.f32.xlu0 %v585
      %v587 = vpop.xlane.xlu0 %586
      %v588 = vsel %vm393, %v534, 0.0
      %589 = vadd.xlane.f32.xlu0 %v588
      %v590 = vpop.xlane.xlu0 %589
      %v591 = vsel %vm393, %v535, 0.0
      %592 = vadd.xlane.f32.xlu0 %v591
      %v593 = vpop.xlane.xlu0 %592
      %v594 = vsel %vm393, %v536, 0.0
      %595 = vadd.xlane.f32.xlu0 %v594
      %v596 = vpop.xlane.xlu0 %595
      %v597 = vsel %vm393, %v537, 0.0
      %598 = vadd.xlane.f32.xlu0 %v597
      %v599 = vpop.xlane.xlu0 %598
      %v600 = vsel %vm393, %v538, 0.0
      %601 = vadd.xlane.f32.xlu0 %v600
      %v602 = vpop.xlane.xlu0 %601
      %v603 = vsel %vm393, %v539, 0.0
      %604 = vadd.xlane.f32.xlu0 %v603
      %v605 = vpop.xlane.xlu0 %604
      %v606 = vsel %vm393, %v540, 0.0
      %607 = vadd.xlane.f32.xlu0 %v606
      %v608 = vpop.xlane.xlu0 %607
      %v609 = vsel %vm393, %v541, 0.0
      %610 = vadd.xlane.f32.xlu0 %v609
      %v611 = vpop.xlane.xlu0 %610
      %v612 = vsel %vm393, %v542, 0.0
      %613 = vadd.xlane.f32.xlu0 %v612
      %v614 = vpop.xlane.xlu0 %613
      %v615 = vsel %vm393, %v543, 0.0
      %616 = vadd.xlane.f32.xlu0 %v615
      %v617 = vpop.xlane.xlu0 %616
      %v618 = vsel %vm393, %v544, 0.0
      %619 = vadd.xlane.f32.xlu0 %v618
      %v620 = vpop.xlane.xlu0 %619
      %v621 = vsel %vm393, %v545, 0.0
      %622 = vadd.xlane.f32.xlu0 %v621
      %v623 = vpop.xlane.xlu0 %622
      %v624 = vsel %vm393, %v546, 0.0
      %625 = vadd.xlane.f32.xlu0 %v624
      %v626 = vpop.xlane.xlu0 %625
      %v627 = vsel %vm393, %v547, 0.0
      %628 = vadd.xlane.f32.xlu0 %v627
      %v629 = vpop.xlane.xlu0 %628
      %v630 = vsel %vm393, %v548, 0.0
      %631 = vadd.xlane.f32.xlu0 %v630
      %v632 = vpop.xlane.xlu0 %631
      %v633 = vsel %vm393, %v549, 0.0
      %634 = vadd.xlane.f32.xlu0 %v633
      %v635 = vpop.xlane.xlu0 %634
      %v636 = vsel %vm393, %v550, 0.0
      %637 = vadd.xlane.f32.xlu0 %v636
      %v638 = vpop.xlane.xlu0 %637
      %v639 = vsel %vm393, %v551, 0.0
      %640 = vadd.xlane.f32.xlu0 %v639
      %v641 = vpop.xlane.xlu0 %640
      %v642 = vsel %vm393, %v552, 0.0
      %643 = vadd.xlane.f32.xlu0 %v642
      %v644 = vpop.xlane.xlu0 %643
      %v645 = vsel %vm393, %v553, 0.0
      %646 = vadd.xlane.f32.xlu0 %v645
      %v647 = vpop.xlane.xlu0 %646
      %v648 = vsel %vm393, %v554, 0.0
      %649 = vadd.xlane.f32.xlu0 %v648
      %v650 = vpop.xlane.xlu0 %649
      %v651 = vmul.f32 %v557, %v490
      %v652 = vmul.f32 %v560, %v490
      %v653 = vmul.f32 %v563, %v490
      %v654 = vmul.f32 %v566, %v490
      %v655 = vmul.f32 %v569, %v490
      %v656 = vmul.f32 %v572, %v490
      %v657 = vmul.f32 %v575, %v490
      %v658 = vmul.f32 %v578, %v490
      %v659 = vmul.f32 %v581, %v490
      %v660 = vmul.f32 %v584, %v490
      %v661 = vmul.f32 %v587, %v490
      %v662 = vmul.f32 %v590, %v490
      %v663 = vmul.f32 %v593, %v490
      %v664 = vmul.f32 %v596, %v490
      %v665 = vmul.f32 %v599, %v490
      %v666 = vmul.f32 %v602, %v490
      %v667 = vmul.f32 %v605, %v490
      %v668 = vmul.f32 %v608, %v490
      %v669 = vmul.f32 %v611, %v490
      %v670 = vmul.f32 %v614, %v490
      %v671 = vmul.f32 %v617, %v490
      %v672 = vmul.f32 %v620, %v490
      %v673 = vmul.f32 %v623, %v490
      %v674 = vmul.f32 %v626, %v490
      %v675 = vmul.f32 %v629, %v490
      %v676 = vmul.f32 %v632, %v490
      %v677 = vmul.f32 %v635, %v490
      %v678 = vmul.f32 %v638, %v490
      %v679 = vmul.f32 %v641, %v490
      %v680 = vmul.f32 %v644, %v490
      %v681 = vmul.f32 %v647, %v490
      %v682 = vmul.f32 %v650, %v490
      %v683 = vsub.f32 %v361, %v491
      %v684 = vsub.f32 %v363, %v492
      %v685 = vsub.f32 %v365, %v493
      %v686 = vsub.f32 %v367, %v494
      %v687 = vsub.f32 %v369, %v495
      %v688 = vsub.f32 %v371, %v496
      %v689 = vsub.f32 %v373, %v497
      %v690 = vsub.f32 %v375, %v498
      %v691 = vsub.f32 %v362, %v499
      %v692 = vsub.f32 %v364, %v500
      %v693 = vsub.f32 %v366, %v501
      %v694 = vsub.f32 %v368, %v502
      %v695 = vsub.f32 %v370, %v503
      %v696 = vsub.f32 %v372, %v504
      %v697 = vsub.f32 %v374, %v505
      %v698 = vsub.f32 %v376, %v506
      %v699 = vsub.f32 %v377, %v507
      %v700 = vsub.f32 %v379, %v508
      %v701 = vsub.f32 %v381, %v509
      %v702 = vsub.f32 %v383, %v510
      %v703 = vsub.f32 %v385, %v511
      %v704 = vsub.f32 %v387, %v512
      %v705 = vsub.f32 %v389, %v513
      %v706 = vsub.f32 %v391, %v514
      %v707 = vsub.f32 %v378, %v515
      %v708 = vsub.f32 %v380, %v516
      %v709 = vsub.f32 %v382, %v517
      %v710 = vsub.f32 %v384, %v518
      %v711 = vsub.f32 %v386, %v519
      %v712 = vsub.f32 %v388, %v520
      %v713 = vsub.f32 %v390, %v521
      %v714 = vsub.f32 %v392, %v522
      %v715 = vmul.f32 %v491, %v491
      %v716 = vmul.f32 %v492, %v492
      %v717 = vmul.f32 %v493, %v493
      %v718 = vmul.f32 %v494, %v494
      %v719 = vmul.f32 %v495, %v495
      %v720 = vmul.f32 %v496, %v496
      %v721 = vmul.f32 %v497, %v497
      %v722 = vmul.f32 %v498, %v498
      %v723 = vmul.f32 %v499, %v499
      %v724 = vmul.f32 %v500, %v500
      %v725 = vmul.f32 %v501, %v501
      %v726 = vmul.f32 %v502, %v502
      %v727 = vmul.f32 %v503, %v503
      %v728 = vmul.f32 %v504, %v504
      %v729 = vmul.f32 %v505, %v505
      %v730 = vmul.f32 %v506, %v506
      %v731 = vmul.f32 %v507, %v507
      %v732 = vmul.f32 %v508, %v508
      %v733 = vmul.f32 %v509, %v509
      %v734 = vmul.f32 %v510, %v510
      %v735 = vmul.f32 %v511, %v511
      %v736 = vmul.f32 %v512, %v512
      %v737 = vmul.f32 %v513, %v513
      %v738 = vmul.f32 %v514, %v514
      %v739 = vmul.f32 %v515, %v515
      %v740 = vmul.f32 %v516, %v516
      %v741 = vmul.f32 %v517, %v517
      %v742 = vmul.f32 %v518, %v518
      %v743 = vmul.f32 %v519, %v519
      %v744 = vmul.f32 %v520, %v520
      %v745 = vmul.f32 %v521, %v521
      %v746 = vmul.f32 %v522, %v522
      %v747 = vsub.f32 %v651, %v715
      %v748 = vsub.f32 %v652, %v716
      %v749 = vsub.f32 %v653, %v717
      %v750 = vsub.f32 %v654, %v718
      %v751 = vsub.f32 %v655, %v719
      %v752 = vsub.f32 %v656, %v720
      %v753 = vsub.f32 %v657, %v721
      %v754 = vsub.f32 %v658, %v722
      %v755 = vsub.f32 %v659, %v723
      %v756 = vsub.f32 %v660, %v724
      %v757 = vsub.f32 %v661, %v725
      %v758 = vsub.f32 %v662, %v726
      %v759 = vsub.f32 %v663, %v727
      %v760 = vsub.f32 %v664, %v728
      %v761 = vsub.f32 %v665, %v729
      %v762 = vsub.f32 %v666, %v730
      %v763 = vsub.f32 %v667, %v731
      %v764 = vsub.f32 %v668, %v732
      %v765 = vsub.f32 %v669, %v733
      %v766 = vsub.f32 %v670, %v734
      %v767 = vsub.f32 %v671, %v735
      %v768 = vsub.f32 %v672, %v736
      %v769 = vsub.f32 %v673, %v737
      %v770 = vsub.f32 %v674, %v738
      %v771 = vsub.f32 %v675, %v739
      %v772 = vsub.f32 %v676, %v740
      %v773 = vsub.f32 %v677, %v741
      %v774 = vsub.f32 %v678, %v742
      %v775 = vsub.f32 %v679, %v743
      %v776 = vsub.f32 %v680, %v744
      %v777 = vsub.f32 %v681, %v745
      %v778 = vsub.f32 %v682, %v746
      %v779 = vadd.f32 %v747, 1e-05
      %v780 = vadd.f32 %v748, 1e-05
      %v781 = vadd.f32 %v749, 1e-05
      %v782 = vadd.f32 %v750, 1e-05
      %v783 = vadd.f32 %v751, 1e-05
      %v784 = vadd.f32 %v752, 1e-05
      %v785 = vadd.f32 %v753, 1e-05
      %v786 = vadd.f32 %v754, 1e-05
      %v787 = vadd.f32 %v755, 1e-05
      %v788 = vadd.f32 %v756, 1e-05
      %v789 = vadd.f32 %v757, 1e-05
      %v790 = vadd.f32 %v758, 1e-05
      %v791 = vadd.f32 %v759, 1e-05
      %v792 = vadd.f32 %v760, 1e-05
      %v793 = vadd.f32 %v761, 1e-05
      %v794 = vadd.f32 %v762, 1e-05
      %v795 = vadd.f32 %v763, 1e-05
      %v796 = vadd.f32 %v764, 1e-05
      %v797 = vadd.f32 %v765, 1e-05
      %v798 = vadd.f32 %v766, 1e-05
      %v799 = vadd.f32 %v767, 1e-05
      %v800 = vadd.f32 %v768, 1e-05
      %v801 = vadd.f32 %v769, 1e-05
      %v802 = vadd.f32 %v770, 1e-05
      %v803 = vadd.f32 %v771, 1e-05
      %v804 = vadd.f32 %v772, 1e-05
      %v805 = vadd.f32 %v773, 1e-05
      %v806 = vadd.f32 %v774, 1e-05
      %v807 = vadd.f32 %v775, 1e-05
      %v808 = vadd.f32 %v776, 1e-05
      %v809 = vadd.f32 %v777, 1e-05
      %v810 = vadd.f32 %v778, 1e-05
      %v811 = vrsqrt.pop %v779
      %v812 = vrsqrt.pop %v780
      %v813 = vrsqrt.pop %v781
      %v814 = vrsqrt.pop %v782
      %v815 = vrsqrt.pop %v783
      %v816 = vrsqrt.pop %v784
      %v817 = vrsqrt.pop %v785
      %v818 = vrsqrt.pop %v786
      %v819 = vrsqrt.pop %v787
      %v820 = vrsqrt.pop %v788
      %v821 = vrsqrt.pop %v789
      %v822 = vrsqrt.pop %v790
      %v823 = vrsqrt.pop %v791
      %v824 = vrsqrt.pop %v792
      %v825 = vrsqrt.pop %v793
      %v826 = vrsqrt.pop %v794
      %v827 = vrsqrt.pop %v795
      %v828 = vrsqrt.pop %v796
      %v829 = vrsqrt.pop %v797
      %v830 = vrsqrt.pop %v798
      %v831 = vrsqrt.pop %v799
      %v832 = vrsqrt.pop %v800
      %v833 = vrsqrt.pop %v801
      %v834 = vrsqrt.pop %v802
      %v835 = vrsqrt.pop %v803
      %v836 = vrsqrt.pop %v804
      %v837 = vrsqrt.pop %v805
      %v838 = vrsqrt.pop %v806
      %v839 = vrsqrt.pop %v807
      %v840 = vrsqrt.pop %v808
      %v841 = vrsqrt.pop %v809
      %v842 = vrsqrt.pop %v810
      %v843 = vmul.f32 %v683, %v811
      %v844 = vmul.f32 %v684, %v812
      %v845 = vmul.f32 %v685, %v813
      %v846 = vmul.f32 %v686, %v814
      %v847 = vmul.f32 %v687, %v815
      %v848 = vmul.f32 %v688, %v816
      %v849 = vmul.f32 %v689, %v817
      %v850 = vmul.f32 %v690, %v818
      %v851 = vmul.f32 %v691, %v819
      %v852 = vmul.f32 %v692, %v820
      %v853 = vmul.f32 %v693, %v821
      %v854 = vmul.f32 %v694, %v822
      %v855 = vmul.f32 %v695, %v823
      %v856 = vmul.f32 %v696, %v824
      %v857 = vmul.f32 %v697, %v825
      %v858 = vmul.f32 %v698, %v826
      %v859 = vmul.f32 %v699, %v827
      %v860 = vmul.f32 %v700, %v828
      %v861 = vmul.f32 %v701, %v829
      %v862 = vmul.f32 %v702, %v830
      %v863 = vmul.f32 %v703, %v831
      %v864 = vmul.f32 %v704, %v832
      %v865 = vmul.f32 %v705, %v833
      %v866 = vmul.f32 %v706, %v834
      %v867 = vmul.f32 %v707, %v835
      %v868 = vmul.f32 %v708, %v836
      %v869 = vmul.f32 %v709, %v837
      %v870 = vmul.f32 %v710, %v838
      %v871 = vmul.f32 %v711, %v839
      %v872 = vmul.f32 %v712, %v840
      %v873 = vmul.f32 %v713, %v841
      %v874 = vmul.f32 %v714, %v842
      %v875 = vpack.c.bf16 %v844, %v843
      %v876 = vpack.c.bf16 %v846, %v845
      %v877 = vpack.c.bf16 %v848, %v847
      %v878 = vpack.c.bf16 %v850, %v849
      %v879 = vpack.c.bf16 %v852, %v851
      %v880 = vpack.c.bf16 %v854, %v853
      %v881 = vpack.c.bf16 %v856, %v855
      %v882 = vpack.c.bf16 %v858, %v857
      %v883 = vpack.c.bf16 %v860, %v859
      %v884 = vpack.c.bf16 %v862, %v861
      %v885 = vpack.c.bf16 %v864, %v863
      %v886 = vpack.c.bf16 %v866, %v865
      %v887 = vpack.c.bf16 %v868, %v867
      %v888 = vpack.c.bf16 %v870, %v869
      %v889 = vpack.c.bf16 %v872, %v871
      %v890 = vpack.c.bf16 %v874, %v873
      %v891 = vld [vmem:[%s1] sm:$0xf]
      %v892 = vld [vmem:[%s1 + $0x4] sm:$0xf]
      %v893 = vld [vmem:[%s1 + $0x8] sm:$0xf]
      %v894 = vld [vmem:[%s1 + $0xc] sm:$0xf]
      %v895 = vld [vmem:[%s2] sm:$0x1]
      %v897 = vlaneseq
      %v898 = vshrl.u32 %v897, 7
      %v899 = vsub.s32 0, %v898
      %v900 = vrot.slane %v895, %v899
      %v906 = vunpack.c.l.b16 %v891
      %v907 = vunpack.c.l.b16 %v892
      %v908 = vunpack.c.l.b16 %v893
      %v909 = vunpack.c.l.b16 %v894
      %v910 = vpack.c.b16 %v907, %v906
      %v911 = vpack.c.b16 %v909, %v908
      %v915 = vsel %vm393, %v875, 0
      %v918 = vsel %vm393, %v876, 0
      %v921 = vsel %vm393, %v877, 0
      %v924 = vsel %vm393, %v878, 0
      %v927 = vsel %vm393, %v879, 0
      %v930 = vsel %vm393, %v880, 0
      %v933 = vsel %vm393, %v881, 0
      %v936 = vsel %vm393, %v882, 0
      %v939 = vsel %vm393, %v883, 0
      %v942 = vsel %vm393, %v884, 0
      %v945 = vsel %vm393, %v885, 0
      %v948 = vsel %vm393, %v886, 0
      %v951 = vsel %vm393, %v887, 0
      %v954 = vsel %vm393, %v888, 0
      %v957 = vsel %vm393, %v889, 0
      %v960 = vsel %vm393, %v890, 0
      %962 = vmatprep.subr.bf16.mxu0 0
      %963 = vmatpush1.bf16.msra.mxu0 0
      %964 = vmatprep.subr.bf16.mxu0 0
      %965 = vmatpush1.bf16.msra.mxu0 0
      %966 = vmatprep.subr.bf16.mxu0 0
      %967 = vmatpush1.bf16.msra.mxu0 0
      %968 = vmatprep.subr.bf16.mxu0 0
      %969 = vmatpush1.bf16.msra.mxu0 0
      %970 = vmatprep.subr.bf16.mxu0 0
      %971 = vmatpush1.bf16.msra.mxu0 0
      %972 = vmatprep.subr.bf16.mxu0 0
      %973 = vmatpush1.bf16.msra.mxu0 0
      %974 = vmatprep.subr.bf16.mxu0 0
      %975 = vmatpush1.bf16.msra.mxu0 %v911
      %976 = vmatprep.subr.bf16.mxu0 0
      %977 = vmatpush1.bf16.msra.mxu0 %v910
      %978 = vmatprep.subr.bf16.mxu0 0
      %979 = vmatpush2.bf16.msra.mxu0 0
      %980 = vmatprep.subr.bf16.mxu0 0
      %981 = vmatpush2.bf16.msra.mxu0 0
      %982 = vmatprep.subr.bf16.mxu0 0
      %983 = vmatpush2.bf16.msra.mxu0 0
      %984 = vmatprep.subr.bf16.mxu0 0
      %985 = vmatpush2.bf16.msra.mxu0 0
      %986 = vmatprep.subr.bf16.mxu0 0
      %987 = vmatpush2.bf16.msra.mxu0 0
      %988 = vmatprep.subr.bf16.mxu0 0
      %989 = vmatpush2.bf16.msra.mxu0 0
      %990 = vmatprep.subr.bf16.mxu0 0
      %991 = vmatpush2.bf16.msra.mxu0 0
      %992 = vmatprep.subr.bf16.mxu0 0
      %993 = vmatpush2.bf16.msra.mxu0 0
      %994 = vmatprep.mubr.bf16.mxu0 0
      %995 = vmatmul.mubr.bf16.gmra.mxu0 %v915
      %v996 = vpop.f32.mrf.mxu0
      %v997 = vadd.f32 %v900, %v996
      %v998 = vpop.f32.mrf.mxu0
      %v999 = vpop.f32.mrf.mxu0
      %v1000 = vadd.f32 %v900, %v999
      %v1001 = vpop.f32.mrf.mxu0
      %1002 = vmatprep.mubr.bf16.mxu0 0
      %1003 = vmatmul.mubr.bf16.gmra.mxu0 %v918
      %v1004 = vpop.f32.mrf.mxu0
      %v1005 = vadd.f32 %v900, %v1004
      %v1006 = vpop.f32.mrf.mxu0
      %v1007 = vpop.f32.mrf.mxu0
      %v1008 = vadd.f32 %v900, %v1007
      %v1009 = vpop.f32.mrf.mxu0
      %1010 = vmatprep.mubr.bf16.mxu0 0
      %1011 = vmatmul.mubr.bf16.gmra.mxu0 %v921
      %v1012 = vpop.f32.mrf.mxu0
      %v1013 = vadd.f32 %v900, %v1012
      %v1014 = vpop.f32.mrf.mxu0
      %v1015 = vpop.f32.mrf.mxu0
      %v1016 = vadd.f32 %v900, %v1015
      %v1017 = vpop.f32.mrf.mxu0
      %1018 = vmatprep.mubr.bf16.mxu0 0
      %1019 = vmatmul.mubr.bf16.gmra.mxu0 %v924
      %v1020 = vpop.f32.mrf.mxu0
      %v1021 = vadd.f32 %v900, %v1020
      %v1022 = vpop.f32.mrf.mxu0
      %v1023 = vpop.f32.mrf.mxu0
      %v1024 = vadd.f32 %v900, %v1023
      %v1025 = vpop.f32.mrf.mxu0
      %1026 = vmatprep.mubr.bf16.mxu0 0
      %1027 = vmatmul.mubr.bf16.gmra.mxu0 %v927
      %v1028 = vpop.f32.mrf.mxu0
      %v1029 = vadd.f32 %v900, %v1028
      %v1030 = vpop.f32.mrf.mxu0
      %v1031 = vpop.f32.mrf.mxu0
      %v1032 = vadd.f32 %v900, %v1031
      %v1033 = vpop.f32.mrf.mxu0
      %1034 = vmatprep.mubr.bf16.mxu0 0
      %1035 = vmatmul.mubr.bf16.gmra.mxu0 %v930
      %v1036 = vpop.f32.mrf.mxu0
      %v1037 = vadd.f32 %v900, %v1036
      %v1038 = vpop.f32.mrf.mxu0
      %v1039 = vpop.f32.mrf.mxu0
      %v1040 = vadd.f32 %v900, %v1039
      %v1041 = vpop.f32.mrf.mxu0
      %1042 = vmatprep.mubr.bf16.mxu0 0
      %1043 = vmatmul.mubr.bf16.gmra.mxu0 %v933
      %v1044 = vpop.f32.mrf.mxu0
      %v1045 = vadd.f32 %v900, %v1044
      %v1046 = vpop.f32.mrf.mxu0
      %v1047 = vpop.f32.mrf.mxu0
      %v1048 = vadd.f32 %v900, %v1047
      %v1049 = vpop.f32.mrf.mxu0
      %1050 = vmatprep.mubr.bf16.mxu0 0
      %1051 = vmatmul.mubr.bf16.gmra.mxu0 %v936
      %v1052 = vpop.f32.mrf.mxu0
      %v1053 = vadd.f32 %v900, %v1052
      %v1054 = vpop.f32.mrf.mxu0
      %v1055 = vpop.f32.mrf.mxu0
      %v1056 = vadd.f32 %v900, %v1055
      %v1057 = vpop.f32.mrf.mxu0
      %1058 = vmatprep.mubr.bf16.mxu0 0
      %1059 = vmatmul.mubr.bf16.gmra.mxu0 %v939
      %v1060 = vpop.f32.mrf.mxu0
      %v1061 = vadd.f32 %v900, %v1060
      %v1062 = vpop.f32.mrf.mxu0
      %v1063 = vpop.f32.mrf.mxu0
      %v1064 = vadd.f32 %v900, %v1063
      %v1065 = vpop.f32.mrf.mxu0
      %1066 = vmatprep.mubr.bf16.mxu0 0
      %1067 = vmatmul.mubr.bf16.gmra.mxu0 %v942
      %v1068 = vpop.f32.mrf.mxu0
      %v1069 = vadd.f32 %v900, %v1068
      %v1070 = vpop.f32.mrf.mxu0
      %v1071 = vpop.f32.mrf.mxu0
      %v1072 = vadd.f32 %v900, %v1071
      %v1073 = vpop.f32.mrf.mxu0
      %1074 = vmatprep.mubr.bf16.mxu0 0
      %1075 = vmatmul.mubr.bf16.gmra.mxu0 %v945
      %v1076 = vpop.f32.mrf.mxu0
      %v1077 = vadd.f32 %v900, %v1076
      %v1078 = vpop.f32.mrf.mxu0
      %v1079 = vpop.f32.mrf.mxu0
      %v1080 = vadd.f32 %v900, %v1079
      %v1081 = vpop.f32.mrf.mxu0
      %1082 = vmatprep.mubr.bf16.mxu0 0
      %1083 = vmatmul.mubr.bf16.gmra.mxu0 %v948
      %v1084 = vpop.f32.mrf.mxu0
      %v1085 = vadd.f32 %v900, %v1084
      %v1086 = vpop.f32.mrf.mxu0
      %v1087 = vpop.f32.mrf.mxu0
      %v1088 = vadd.f32 %v900, %v1087
      %v1089 = vpop.f32.mrf.mxu0
      %1090 = vmatprep.mubr.bf16.mxu0 0
      %1091 = vmatmul.mubr.bf16.gmra.mxu0 %v951
      %v1092 = vpop.f32.mrf.mxu0
      %v1093 = vadd.f32 %v900, %v1092
      %v1094 = vpop.f32.mrf.mxu0
      %v1095 = vpop.f32.mrf.mxu0
      %v1096 = vadd.f32 %v900, %v1095
      %v1097 = vpop.f32.mrf.mxu0
      %1098 = vmatprep.mubr.bf16.mxu0 0
      %1099 = vmatmul.mubr.bf16.gmra.mxu0 %v954
      %v1100 = vpop.f32.mrf.mxu0
      %v1101 = vadd.f32 %v900, %v1100
      %v1102 = vpop.f32.mrf.mxu0
      %v1103 = vpop.f32.mrf.mxu0
      %v1104 = vadd.f32 %v900, %v1103
      %v1105 = vpop.f32.mrf.mxu0
      %1106 = vmatprep.mubr.bf16.mxu0 0
      %1107 = vmatmul.mubr.bf16.gmra.mxu0 %v957
      %v1108 = vpop.f32.mrf.mxu0
      %v1109 = vadd.f32 %v900, %v1108
      %v1110 = vpop.f32.mrf.mxu0
      %v1111 = vpop.f32.mrf.mxu0
      %v1112 = vadd.f32 %v900, %v1111
      %v1113 = vpop.f32.mrf.mxu0
      %1114 = vmatprep.mubr.bf16.mxu0 0
      %1115 = vmatmul.mubr.bf16.gmra.mxu0 %v960
      %v1116 = vpop.f32.mrf.mxu0
      %v1117 = vadd.f32 %v900, %v1116
      %v1118 = vpop.f32.mrf.mxu0
      %v1119 = vpop.f32.mrf.mxu0
      %v1120 = vadd.f32 %v900, %v1119
      %v1121 = vpop.f32.mrf.mxu0
      %1122 = vdwg.mxu0
      %v1123 = vpack.c.bf16 %v1000, %v997
      %v1124 = vpack.c.bf16 %v1008, %v1005
      %v1125 = vpack.c.bf16 %v1016, %v1013
      %v1126 = vpack.c.bf16 %v1024, %v1021
      %v1127 = vpack.c.bf16 %v1032, %v1029
      %v1128 = vpack.c.bf16 %v1040, %v1037
      %v1129 = vpack.c.bf16 %v1048, %v1045
      %v1130 = vpack.c.bf16 %v1056, %v1053
      %v1131 = vpack.c.bf16 %v1064, %v1061
      %v1132 = vpack.c.bf16 %v1072, %v1069
      %v1133 = vpack.c.bf16 %v1080, %v1077
      %v1134 = vpack.c.bf16 %v1088, %v1085
      %v1135 = vpack.c.bf16 %v1096, %v1093
      %v1136 = vpack.c.bf16 %v1104, %v1101
      %v1137 = vpack.c.bf16 %v1112, %v1109
      %v1138 = vpack.c.bf16 %v1120, %v1117
      %1155 = vrot.lane.b32.xlu0 %v1123, 120
      %v1156 = vpop.permute.xlu0 %1155
      %1157 = vrot.lane.b32.xlu0 %v1124, 120
      %v1158 = vpop.permute.xlu0 %1157
      %1159 = vrot.lane.b32.xlu0 %v1125, 120
      %v1160 = vpop.permute.xlu0 %1159
      %1161 = vrot.lane.b32.xlu0 %v1126, 120
      %v1162 = vpop.permute.xlu0 %1161
      %1163 = vrot.lane.b32.xlu0 %v1127, 120
      %v1164 = vpop.permute.xlu0 %1163
      %1165 = vrot.lane.b32.xlu0 %v1128, 120
      %v1166 = vpop.permute.xlu0 %1165
      %1167 = vrot.lane.b32.xlu0 %v1129, 120
      %v1168 = vpop.permute.xlu0 %1167
      %1169 = vrot.lane.b32.xlu0 %v1130, 120
      %v1170 = vpop.permute.xlu0 %1169
      %1171 = vrot.lane.b32.xlu0 %v1131, 120
      %v1172 = vpop.permute.xlu0 %1171
      %1173 = vrot.lane.b32.xlu0 %v1132, 120
      %v1174 = vpop.permute.xlu0 %1173
      %1175 = vrot.lane.b32.xlu0 %v1133, 120
      %v1176 = vpop.permute.xlu0 %1175
      %1177 = vrot.lane.b32.xlu0 %v1134, 120
      %v1178 = vpop.permute.xlu0 %1177
      %1179 = vrot.lane.b32.xlu0 %v1135, 120
      %v1180 = vpop.permute.xlu0 %1179
      %1181 = vrot.lane.b32.xlu0 %v1136, 120
      %v1182 = vpop.permute.xlu0 %1181
      %1183 = vrot.lane.b32.xlu0 %v1137, 120
      %v1184 = vpop.permute.xlu0 %1183
      %1185 = vrot.lane.b32.xlu0 %v1138, 120
      %v1186 = vpop.permute.xlu0 %1185
      %1187 = vrot.lane.b32.xlu0 %v1123, 112
      %v1188 = vpop.permute.xlu0 %1187
      %1189 = vrot.lane.b32.xlu0 %v1124, 112
      %v1190 = vpop.permute.xlu0 %1189
      %1191 = vrot.lane.b32.xlu0 %v1125, 112
      %v1192 = vpop.permute.xlu0 %1191
      %1193 = vrot.lane.b32.xlu0 %v1126, 112
      %v1194 = vpop.permute.xlu0 %1193
      %1195 = vrot.lane.b32.xlu0 %v1127, 112
      %v1196 = vpop.permute.xlu0 %1195
      %1197 = vrot.lane.b32.xlu0 %v1128, 112
      %v1198 = vpop.permute.xlu0 %1197
      %1199 = vrot.lane.b32.xlu0 %v1129, 112
      %v1200 = vpop.permute.xlu0 %1199
      %1201 = vrot.lane.b32.xlu0 %v1130, 112
      %v1202 = vpop.permute.xlu0 %1201
      %1203 = vrot.lane.b32.xlu0 %v1131, 112
      %v1204 = vpop.permute.xlu0 %1203
      %1205 = vrot.lane.b32.xlu0 %v1132, 112
      %v1206 = vpop.permute.xlu0 %1205
      %1207 = vrot.lane.b32.xlu0 %v1133, 112
      %v1208 = vpop.permute.xlu0 %1207
      %1209 = vrot.lane.b32.xlu0 %v1134, 112
      %v1210 = vpop.permute.xlu0 %1209
      %1211 = vrot.lane.b32.xlu0 %v1135, 112
      %v1212 = vpop.permute.xlu0 %1211
      %1213 = vrot.lane.b32.xlu0 %v1136, 112
      %v1214 = vpop.permute.xlu0 %1213
      %1215 = vrot.lane.b32.xlu0 %v1137, 112
      %v1216 = vpop.permute.xlu0 %1215
      %1217 = vrot.lane.b32.xlu0 %v1138, 112
      %v1218 = vpop.permute.xlu0 %1217
      %1219 = vrot.lane.b32.xlu0 %v1123, 104
      %v1220 = vpop.permute.xlu0 %1219
      %1221 = vrot.lane.b32.xlu0 %v1124, 104
      %v1222 = vpop.permute.xlu0 %1221
      %1223 = vrot.lane.b32.xlu0 %v1125, 104
      %v1224 = vpop.permute.xlu0 %1223
      %1225 = vrot.lane.b32.xlu0 %v1126, 104
      %v1226 = vpop.permute.xlu0 %1225
      %1227 = vrot.lane.b32.xlu0 %v1127, 104
      %v1228 = vpop.permute.xlu0 %1227
      %1229 = vrot.lane.b32.xlu0 %v1128, 104
      %v1230 = vpop.permute.xlu0 %1229
      %1231 = vrot.lane.b32.xlu0 %v1129, 104
      %v1232 = vpop.permute.xlu0 %1231
      %1233 = vrot.lane.b32.xlu0 %v1130, 104
      %v1234 = vpop.permute.xlu0 %1233
      %1235 = vrot.lane.b32.xlu0 %v1131, 104
      %v1236 = vpop.permute.xlu0 %1235
      %1237 = vrot.lane.b32.xlu0 %v1132, 104
      %v1238 = vpop.permute.xlu0 %1237
      %1239 = vrot.lane.b32.xlu0 %v1133, 104
      %v1240 = vpop.permute.xlu0 %1239
      %1241 = vrot.lane.b32.xlu0 %v1134, 104
      %v1242 = vpop.permute.xlu0 %1241
      %1243 = vrot.lane.b32.xlu0 %v1135, 104
      %v1244 = vpop.permute.xlu0 %1243
      %1245 = vrot.lane.b32.xlu0 %v1136, 104
      %v1246 = vpop.permute.xlu0 %1245
      %1247 = vrot.lane.b32.xlu0 %v1137, 104
      %v1248 = vpop.permute.xlu0 %1247
      %1249 = vrot.lane.b32.xlu0 %v1138, 104
      %v1250 = vpop.permute.xlu0 %1249
      %v1251 = vld [vmem:[%s3] sm:$0xff]
      %v1252 = vld [vmem:[%s3 + $0x8] sm:$0xff]
      %v1253 = vld [vmem:[%s3 + $0x10] sm:$0xff]
      %v1254 = vld [vmem:[%s3 + $0x18] sm:$0xff]
      %v1255 = vld [vmem:[%s3 + $0x20] sm:$0xff]
      %v1256 = vld [vmem:[%s3 + $0x28] sm:$0xff]
      %v1257 = vld [vmem:[%s3 + $0x30] sm:$0xff]
      %v1258 = vld [vmem:[%s3 + $0x38] sm:$0xff]
      %v1259 = vld [vmem:[%s3 + $0x40] sm:$0xff]
      %v1260 = vld [vmem:[%s3 + $0x48] sm:$0xff]
      %v1261 = vld [vmem:[%s3 + $0x50] sm:$0xff]
      %v1262 = vld [vmem:[%s3 + $0x58] sm:$0xff]
      %v1263 = vld [vmem:[%s3 + $0x60] sm:$0xff]
      %v1264 = vld [vmem:[%s3 + $0x68] sm:$0xff]
      %v1265 = vld [vmem:[%s3 + $0x70] sm:$0xff]
      %v1266 = vld [vmem:[%s3 + $0x78] sm:$0xff]
      %v1267 = vld [vmem:[%s3 + $0x80] sm:$0xff]
      %v1268 = vld [vmem:[%s3 + $0x88] sm:$0xff]
      %v1269 = vld [vmem:[%s3 + $0x90] sm:$0xff]
      %v1270 = vld [vmem:[%s3 + $0x98] sm:$0xff]
      %v1271 = vld [vmem:[%s3 + $0xa0] sm:$0xff]
      %v1272 = vld [vmem:[%s3 + $0xa8] sm:$0xff]
      %v1273 = vld [vmem:[%s3 + $0xb0] sm:$0xff]
      %v1274 = vld [vmem:[%s3 + $0xb8] sm:$0xff]
      %v1275 = vld [vmem:[%s3 + $0xc0] sm:$0xff]
      %v1276 = vld [vmem:[%s3 + $0xc8] sm:$0xff]
      %v1277 = vld [vmem:[%s3 + $0xd0] sm:$0xff]
      %v1278 = vld [vmem:[%s3 + $0xd8] sm:$0xff]
      %v1279 = vld [vmem:[%s3 + $0xe0] sm:$0xff]
      %v1280 = vld [vmem:[%s3 + $0xe8] sm:$0xff]
      %v1281 = vld [vmem:[%s3 + $0xf0] sm:$0xff]
      %v1282 = vld [vmem:[%s3 + $0xf8] sm:$0xff]
      %1283 = vrot.lane.b32.xlu0 %v1123, 96
      %v1284 = vpop.permute.xlu0 %1283
      %1285 = vrot.lane.b32.xlu0 %v1124, 96
      %v1286 = vpop.permute.xlu0 %1285
      %1287 = vrot.lane.b32.xlu0 %v1125, 96
      %v1288 = vpop.permute.xlu0 %1287
      %1289 = vrot.lane.b32.xlu0 %v1126, 96
      %v1290 = vpop.permute.xlu0 %1289
      %vm1291 = vcmask 64512
      %v1293 = vsel %vm1291, %v1123, 0
      %v1296 = vsel %vm1291, %v1124, 0
      %v1299 = vsel %vm1291, %v1125, 0
      %v1302 = vsel %vm1291, %v1126, 0
      %v1305 = vsel %vm1291, %v1284, 0
      %v1308 = vsel %vm1291, %v1286, 0
      %v1311 = vsel %vm1291, %v1288, 0
      %v1314 = vsel %vm1291, %v1290, 0
      %1316 = vmatprep.subr.bf16.mxu0 0
      %1317 = vmatpush1.bf16.xpose.msra.mxu0 0
      %1318 = vmatprep.subr.bf16.mxu0 0
      %1319 = vmatpush1.bf16.xpose.msra.mxu0 0
      %1320 = vmatprep.subr.bf16.mxu0 0
      %1321 = vmatpush1.bf16.xpose.msra.mxu0 0
      %1322 = vmatprep.subr.bf16.mxu0 0
      %1323 = vmatpush1.bf16.xpose.msra.mxu0 0
      %1324 = vmatprep.subr.bf16.mxu0 0
      %1325 = vmatpush1.bf16.xpose.msra.mxu0 %v1314
      %1326 = vmatprep.subr.bf16.mxu0 0
      %1327 = vmatpush1.bf16.xpose.msra.mxu0 %v1311
      %1328 = vmatprep.subr.bf16.mxu0 0
      %1329 = vmatpush1.bf16.xpose.msra.mxu0 %v1308
      %1330 = vmatprep.subr.bf16.mxu0 0
      %1331 = vmatpush1.bf16.xpose.msra.mxu0 %v1305
      %1332 = vmatprep.subr.bf16.mxu0 0
      %1333 = vmatpush2.bf16.xpose.msra.mxu0 0
      %1334 = vmatprep.subr.bf16.mxu0 0
      %1335 = vmatpush2.bf16.xpose.msra.mxu0 0
      %1336 = vmatprep.subr.bf16.mxu0 0
      %1337 = vmatpush2.bf16.xpose.msra.mxu0 0
      %1338 = vmatprep.subr.bf16.mxu0 0
      %1339 = vmatpush2.bf16.xpose.msra.mxu0 0
      %1340 = vmatprep.subr.bf16.mxu0 0
      %1341 = vmatpush2.bf16.xpose.msra.mxu0 0
      %1342 = vmatprep.subr.bf16.mxu0 0
      %1343 = vmatpush2.bf16.xpose.msra.mxu0 0
      %1344 = vmatprep.subr.bf16.mxu0 0
      %1345 = vmatpush2.bf16.xpose.msra.mxu0 0
      %1346 = vmatprep.subr.bf16.mxu0 0
      %1347 = vmatpush2.bf16.xpose.msra.mxu0 0
      %1348 = vmatprep.mubr.bf16.mxu0 0
      %1349 = vmatmul.mubr.bf16.gmra.mxu0 %v1293
      %v1350 = vpop.f32.mrf.mxu0
      %v1351 = vadd.f32 %v1251, %v1350
      %v1352 = vpop.f32.mrf.mxu0
      %v1353 = vpop.f32.mrf.mxu0
      %v1354 = vadd.f32 %v1252, %v1353
      %v1355 = vpop.f32.mrf.mxu0
      %1356 = vmatprep.mubr.bf16.mxu0 0
      %1357 = vmatmul.mubr.bf16.gmra.mxu0 %v1296
      %v1358 = vpop.f32.mrf.mxu0
      %v1359 = vadd.f32 %v1253, %v1358
      %v1360 = vpop.f32.mrf.mxu0
      %v1361 = vpop.f32.mrf.mxu0
      %v1362 = vadd.f32 %v1254, %v1361
      %v1363 = vpop.f32.mrf.mxu0
      %1364 = vmatprep.mubr.bf16.mxu0 0
      %1365 = vmatmul.mubr.bf16.gmra.mxu0 %v1299
      %v1366 = vpop.f32.mrf.mxu0
      %v1367 = vadd.f32 %v1255, %v1366
      %v1368 = vpop.f32.mrf.mxu0
      %v1369 = vpop.f32.mrf.mxu0
      %v1370 = vadd.f32 %v1256, %v1369
      %v1371 = vpop.f32.mrf.mxu0
      %1372 = vmatprep.mubr.bf16.mxu0 0
      %1373 = vmatmul.mubr.bf16.gmra.mxu0 %v1302
      %v1374 = vpop.f32.mrf.mxu0
      %v1375 = vadd.f32 %v1257, %v1374
      %v1376 = vpop.f32.mrf.mxu0
      %v1377 = vpop.f32.mrf.mxu0
      %v1378 = vadd.f32 %v1258, %v1377
      %v1379 = vpop.f32.mrf.mxu0
      %1380 = vdwg.mxu0
      %1381 = vrot.lane.b32.xlu0 %v1127, 96
      %v1382 = vpop.permute.xlu0 %1381
      %1383 = vrot.lane.b32.xlu0 %v1128, 96
      %v1384 = vpop.permute.xlu0 %1383
      %1385 = vrot.lane.b32.xlu0 %v1129, 96
      %v1386 = vpop.permute.xlu0 %1385
      %1387 = vrot.lane.b32.xlu0 %v1130, 96
      %v1388 = vpop.permute.xlu0 %1387
      %v1390 = vsel %vm1291, %v1127, 0
      %v1393 = vsel %vm1291, %v1128, 0
      %v1396 = vsel %vm1291, %v1129, 0
      %v1399 = vsel %vm1291, %v1130, 0
      %v1402 = vsel %vm1291, %v1382, 0
      %v1405 = vsel %vm1291, %v1384, 0
      %v1408 = vsel %vm1291, %v1386, 0
      %v1411 = vsel %vm1291, %v1388, 0
      %1413 = vmatprep.subr.bf16.mxu0 0
      %1414 = vmatpush1.bf16.xpose.msra.mxu0 0
      %1415 = vmatprep.subr.bf16.mxu0 0
      %1416 = vmatpush1.bf16.xpose.msra.mxu0 0
      %1417 = vmatprep.subr.bf16.mxu0 0
      %1418 = vmatpush1.bf16.xpose.msra.mxu0 0
      %1419 = vmatprep.subr.bf16.mxu0 0
      %1420 = vmatpush1.bf16.xpose.msra.mxu0 0
      %1421 = vmatprep.subr.bf16.mxu0 0
      %1422 = vmatpush1.bf16.xpose.msra.mxu0 %v1411
      %1423 = vmatprep.subr.bf16.mxu0 0
      %1424 = vmatpush1.bf16.xpose.msra.mxu0 %v1408
      %1425 = vmatprep.subr.bf16.mxu0 0
      %1426 = vmatpush1.bf16.xpose.msra.mxu0 %v1405
      %1427 = vmatprep.subr.bf16.mxu0 0
      %1428 = vmatpush1.bf16.xpose.msra.mxu0 %v1402
      %1429 = vmatprep.subr.bf16.mxu0 0
      %1430 = vmatpush2.bf16.xpose.msra.mxu0 0
      %1431 = vmatprep.subr.bf16.mxu0 0
      %1432 = vmatpush2.bf16.xpose.msra.mxu0 0
      %1433 = vmatprep.subr.bf16.mxu0 0
      %1434 = vmatpush2.bf16.xpose.msra.mxu0 0
      %1435 = vmatprep.subr.bf16.mxu0 0
      %1436 = vmatpush2.bf16.xpose.msra.mxu0 0
      %1437 = vmatprep.subr.bf16.mxu0 0
      %1438 = vmatpush2.bf16.xpose.msra.mxu0 0
      %1439 = vmatprep.subr.bf16.mxu0 0
      %1440 = vmatpush2.bf16.xpose.msra.mxu0 0
      %1441 = vmatprep.subr.bf16.mxu0 0
      %1442 = vmatpush2.bf16.xpose.msra.mxu0 0
      %1443 = vmatprep.subr.bf16.mxu0 0
      %1444 = vmatpush2.bf16.xpose.msra.mxu0 0
      %1445 = vmatprep.mubr.bf16.mxu0 0
      %1446 = vmatmul.mubr.bf16.gmra.mxu0 %v1390
      %v1447 = vpop.f32.mrf.mxu0
      %v1448 = vadd.f32 %v1251, %v1447
      %v1449 = vpop.f32.mrf.mxu0
      %v1450 = vpop.f32.mrf.mxu0
      %v1451 = vadd.f32 %v1252, %v1450
      %v1452 = vpop.f32.mrf.mxu0
      %1453 = vmatprep.mubr.bf16.mxu0 0
      %1454 = vmatmul.mubr.bf16.gmra.mxu0 %v1393
      %v1455 = vpop.f32.mrf.mxu0
      %v1456 = vadd.f32 %v1253, %v1455
      %v1457 = vpop.f32.mrf.mxu0
      %v1458 = vpop.f32.mrf.mxu0
      %v1459 = vadd.f32 %v1254, %v1458
      %v1460 = vpop.f32.mrf.mxu0
      %1461 = vmatprep.mubr.bf16.mxu0 0
      %1462 = vmatmul.mubr.bf16.gmra.mxu0 %v1396
      %v1463 = vpop.f32.mrf.mxu0
      %v1464 = vadd.f32 %v1255, %v1463
      %v1465 = vpop.f32.mrf.mxu0
      %v1466 = vpop.f32.mrf.mxu0
      %v1467 = vadd.f32 %v1256, %v1466
      %v1468 = vpop.f32.mrf.mxu0
      %1469 = vmatprep.mubr.bf16.mxu0 0
      %1470 = vmatmul.mubr.bf16.gmra.mxu0 %v1399
      %v1471 = vpop.f32.mrf.mxu0
      %v1472 = vadd.f32 %v1257, %v1471
      %v1473 = vpop.f32.mrf.mxu0
      %v1474 = vpop.f32.mrf.mxu0
      %v1475 = vadd.f32 %v1258, %v1474
      %v1476 = vpop.f32.mrf.mxu0
      %1477 = vdwg.mxu0
      %1478 = vrot.lane.b32.xlu0 %v1131, 96
      %v1479 = vpop.permute.xlu0 %1478
      %1480 = vrot.lane.b32.xlu0 %v1132, 96
      %v1481 = vpop.permute.xlu0 %1480
      %1482 = vrot.lane.b32.xlu0 %v1133, 96
      %v1483 = vpop.permute.xlu0 %1482
      %1484 = vrot.lane.b32.xlu0 %v1134, 96
      %v1485 = vpop.permute.xlu0 %1484
      %v1487 = vsel %vm1291, %v1131, 0
      %v1490 = vsel %vm1291, %v1132, 0
      %v1493 = vsel %vm1291, %v1133, 0
      %v1496 = vsel %vm1291, %v1134, 0
      %v1499 = vsel %vm1291, %v1479, 0
      %v1502 = vsel %vm1291, %v1481, 0
      %v1505 = vsel %vm1291, %v1483, 0
      %v1508 = vsel %vm1291, %v1485, 0
      %1510 = vmatprep.subr.bf16.mxu0 0
      %1511 = vmatpush1.bf16.xpose.msra.mxu0 0
      %1512 = vmatprep.subr.bf16.mxu0 0
      %1513 = vmatpush1.bf16.xpose.msra.mxu0 0
      %1514 = vmatprep.subr.bf16.mxu0 0
      %1515 = vmatpush1.bf16.xpose.msra.mxu0 0
      %1516 = vmatprep.subr.bf16.mxu0 0
      %1517 = vmatpush1.bf16.xpose.msra.mxu0 0
      %1518 = vmatprep.subr.bf16.mxu0 0
      %1519 = vmatpush1.bf16.xpose.msra.mxu0 %v1508
      %1520 = vmatprep.subr.bf16.mxu0 0
      %1521 = vmatpush1.bf16.xpose.msra.mxu0 %v1505
      %1522 = vmatprep.subr.bf16.mxu0 0
      %1523 = vmatpush1.bf16.xpose.msra.mxu0 %v1502
      %1524 = vmatprep.subr.bf16.mxu0 0
      %1525 = vmatpush1.bf16.xpose.msra.mxu0 %v1499
      %1526 = vmatprep.subr.bf16.mxu0 0
      %1527 = vmatpush2.bf16.xpose.msra.mxu0 0
      %1528 = vmatprep.subr.bf16.mxu0 0
      %1529 = vmatpush2.bf16.xpose.msra.mxu0 0
      %1530 = vmatprep.subr.bf16.mxu0 0
      %1531 = vmatpush2.bf16.xpose.msra.mxu0 0
      %1532 = vmatprep.subr.bf16.mxu0 0
      %1533 = vmatpush2.bf16.xpose.msra.mxu0 0
      %1534 = vmatprep.subr.bf16.mxu0 0
      %1535 = vmatpush2.bf16.xpose.msra.mxu0 0
      %1536 = vmatprep.subr.bf16.mxu0 0
      %1537 = vmatpush2.bf16.xpose.msra.mxu0 0
      %1538 = vmatprep.subr.bf16.mxu0 0
      %1539 = vmatpush2.bf16.xpose.msra.mxu0 0
      %1540 = vmatprep.subr.bf16.mxu0 0
      %1541 = vmatpush2.bf16.xpose.msra.mxu0 0
      %1542 = vmatprep.mubr.bf16.mxu0 0
      %1543 = vmatmul.mubr.bf16.gmra.mxu0 %v1487
      %v1544 = vpop.f32.mrf.mxu0
      %v1545 = vadd.f32 %v1251, %v1544
      %v1546 = vpop.f32.mrf.mxu0
      %v1547 = vpop.f32.mrf.mxu0
      %v1548 = vadd.f32 %v1252, %v1547
      %v1549 = vpop.f32.mrf.mxu0
      %1550 = vmatprep.mubr.bf16.mxu0 0
      %1551 = vmatmul.mubr.bf16.gmra.mxu0 %v1490
      %v1552 = vpop.f32.mrf.mxu0
      %v1553 = vadd.f32 %v1253, %v1552
      %v1554 = vpop.f32.mrf.mxu0
      %v1555 = vpop.f32.mrf.mxu0
      %v1556 = vadd.f32 %v1254, %v1555
      %v1557 = vpop.f32.mrf.mxu0
      %1558 = vmatprep.mubr.bf16.mxu0 0
      %1559 = vmatmul.mubr.bf16.gmra.mxu0 %v1493
      %v1560 = vpop.f32.mrf.mxu0
      %v1561 = vadd.f32 %v1255, %v1560
      %v1562 = vpop.f32.mrf.mxu0
      %v1563 = vpop.f32.mrf.mxu0
      %v1564 = vadd.f32 %v1256, %v1563
      %v1565 = vpop.f32.mrf.mxu0
      %1566 = vmatprep.mubr.bf16.mxu0 0
      %1567 = vmatmul.mubr.bf16.gmra.mxu0 %v1496
      %v1568 = vpop.f32.mrf.mxu0
      %v1569 = vadd.f32 %v1257, %v1568
      %v1570 = vpop.f32.mrf.mxu0
      %v1571 = vpop.f32.mrf.mxu0
      %v1572 = vadd.f32 %v1258, %v1571
      %v1573 = vpop.f32.mrf.mxu0
      %1574 = vdwg.mxu0
      %1575 = vrot.lane.b32.xlu0 %v1135, 96
      %v1576 = vpop.permute.xlu0 %1575
      %1577 = vrot.lane.b32.xlu0 %v1136, 96
      %v1578 = vpop.permute.xlu0 %1577
      %1579 = vrot.lane.b32.xlu0 %v1137, 96
      %v1580 = vpop.permute.xlu0 %1579
      %1581 = vrot.lane.b32.xlu0 %v1138, 96
      %v1582 = vpop.permute.xlu0 %1581
      %v1584 = vsel %vm1291, %v1135, 0
      %v1587 = vsel %vm1291, %v1136, 0
      %v1590 = vsel %vm1291, %v1137, 0
      %v1593 = vsel %vm1291, %v1138, 0
      %v1596 = vsel %vm1291, %v1576, 0
      %v1599 = vsel %vm1291, %v1578, 0
      %v1602 = vsel %vm1291, %v1580, 0
      %v1605 = vsel %vm1291, %v1582, 0
      %1607 = vmatprep.subr.bf16.mxu0 0
      %1608 = vmatpush1.bf16.xpose.msra.mxu0 0
      %1609 = vmatprep.subr.bf16.mxu0 0
      %1610 = vmatpush1.bf16.xpose.msra.mxu0 0
      %1611 = vmatprep.subr.bf16.mxu0 0
      %1612 = vmatpush1.bf16.xpose.msra.mxu0 0
      %1613 = vmatprep.subr.bf16.mxu0 0
      %1614 = vmatpush1.bf16.xpose.msra.mxu0 0
      %1615 = vmatprep.subr.bf16.mxu0 0
      %1616 = vmatpush1.bf16.xpose.msra.mxu0 %v1605
      %1617 = vmatprep.subr.bf16.mxu0 0
      %1618 = vmatpush1.bf16.xpose.msra.mxu0 %v1602
      %1619 = vmatprep.subr.bf16.mxu0 0
      %1620 = vmatpush1.bf16.xpose.msra.mxu0 %v1599
      %1621 = vmatprep.subr.bf16.mxu0 0
      %1622 = vmatpush1.bf16.xpose.msra.mxu0 %v1596
      %1623 = vmatprep.subr.bf16.mxu0 0
      %1624 = vmatpush2.bf16.xpose.msra.mxu0 0
      %1625 = vmatprep.subr.bf16.mxu0 0
      %1626 = vmatpush2.bf16.xpose.msra.mxu0 0
      %1627 = vmatprep.subr.bf16.mxu0 0
      %1628 = vmatpush2.bf16.xpose.msra.mxu0 0
      %1629 = vmatprep.subr.bf16.mxu0 0
      %1630 = vmatpush2.bf16.xpose.msra.mxu0 0
      %1631 = vmatprep.subr.bf16.mxu0 0
      %1632 = vmatpush2.bf16.xpose.msra.mxu0 0
      %1633 = vmatprep.subr.bf16.mxu0 0
      %1634 = vmatpush2.bf16.xpose.msra.mxu0 0
      %1635 = vmatprep.subr.bf16.mxu0 0
      %1636 = vmatpush2.bf16.xpose.msra.mxu0 0
      %1637 = vmatprep.subr.bf16.mxu0 0
      %1638 = vmatpush2.bf16.xpose.msra.mxu0 0
      %1639 = vmatprep.mubr.bf16.mxu0 0
      %1640 = vmatmul.mubr.bf16.gmra.mxu0 %v1584
      %v1641 = vpop.f32.mrf.mxu0
      %v1642 = vadd.f32 %v1251, %v1641
      %v1643 = vpop.f32.mrf.mxu0
      %v1644 = vpop.f32.mrf.mxu0
      %v1645 = vadd.f32 %v1252, %v1644
      %v1646 = vpop.f32.mrf.mxu0
      %1647 = vmatprep.mubr.bf16.mxu0 0
      %1648 = vmatmul.mubr.bf16.gmra.mxu0 %v1587
      %v1649 = vpop.f32.mrf.mxu0
      %v1650 = vadd.f32 %v1253, %v1649
      %v1651 = vpop.f32.mrf.mxu0
      %v1652 = vpop.f32.mrf.mxu0
      %v1653 = vadd.f32 %v1254, %v1652
      %v1654 = vpop.f32.mrf.mxu0
      %1655 = vmatprep.mubr.bf16.mxu0 0
      %1656 = vmatmul.mubr.bf16.gmra.mxu0 %v1590
      %v1657 = vpop.f32.mrf.mxu0
      %v1658 = vadd.f32 %v1255, %v1657
      %v1659 = vpop.f32.mrf.mxu0
      %v1660 = vpop.f32.mrf.mxu0
      %v1661 = vadd.f32 %v1256, %v1660
      %v1662 = vpop.f32.mrf.mxu0
      %1663 = vmatprep.mubr.bf16.mxu0 0
      %1664 = vmatmul.mubr.bf16.gmra.mxu0 %v1593
      %v1665 = vpop.f32.mrf.mxu0
      %v1666 = vadd.f32 %v1257, %v1665
      %v1667 = vpop.f32.mrf.mxu0
      %v1668 = vpop.f32.mrf.mxu0
      %v1669 = vadd.f32 %v1258, %v1668
      %v1670 = vpop.f32.mrf.mxu0
      %1671 = vdwg.mxu0
      %1672 = vrot.lane.b32.xlu0 %v1156, 96
      %v1673 = vpop.permute.xlu0 %1672
      %1674 = vrot.lane.b32.xlu0 %v1158, 96
      %v1675 = vpop.permute.xlu0 %1674
      %1676 = vrot.lane.b32.xlu0 %v1160, 96
      %v1677 = vpop.permute.xlu0 %1676
      %1678 = vrot.lane.b32.xlu0 %v1162, 96
      %v1679 = vpop.permute.xlu0 %1678
      %v1681 = vsel %vm1291, %v1156, 0
      %v1684 = vsel %vm1291, %v1158, 0
      %v1687 = vsel %vm1291, %v1160, 0
      %v1690 = vsel %vm1291, %v1162, 0
      %v1693 = vsel %vm1291, %v1673, 0
      %v1696 = vsel %vm1291, %v1675, 0
      %v1699 = vsel %vm1291, %v1677, 0
      %v1702 = vsel %vm1291, %v1679, 0
      %1704 = vmatprep.subr.bf16.mxu0 0
      %1705 = vmatpush1.bf16.xpose.msra.mxu0 0
      %1706 = vmatprep.subr.bf16.mxu0 0
      %1707 = vmatpush1.bf16.xpose.msra.mxu0 0
      %1708 = vmatprep.subr.bf16.mxu0 0
      %1709 = vmatpush1.bf16.xpose.msra.mxu0 0
      %1710 = vmatprep.subr.bf16.mxu0 0
      %1711 = vmatpush1.bf16.xpose.msra.mxu0 0
      %1712 = vmatprep.subr.bf16.mxu0 0
      %1713 = vmatpush1.bf16.xpose.msra.mxu0 %v1702
      %1714 = vmatprep.subr.bf16.mxu0 0
      %1715 = vmatpush1.bf16.xpose.msra.mxu0 %v1699
      %1716 = vmatprep.subr.bf16.mxu0 0
      %1717 = vmatpush1.bf16.xpose.msra.mxu0 %v1696
      %1718 = vmatprep.subr.bf16.mxu0 0
      %1719 = vmatpush1.bf16.xpose.msra.mxu0 %v1693
      %1720 = vmatprep.subr.bf16.mxu0 0
      %1721 = vmatpush2.bf16.xpose.msra.mxu0 0
      %1722 = vmatprep.subr.bf16.mxu0 0
      %1723 = vmatpush2.bf16.xpose.msra.mxu0 0
      %1724 = vmatprep.subr.bf16.mxu0 0
      %1725 = vmatpush2.bf16.xpose.msra.mxu0 0
      %1726 = vmatprep.subr.bf16.mxu0 0
      %1727 = vmatpush2.bf16.xpose.msra.mxu0 0
      %1728 = vmatprep.subr.bf16.mxu0 0
      %1729 = vmatpush2.bf16.xpose.msra.mxu0 0
      %1730 = vmatprep.subr.bf16.mxu0 0
      %1731 = vmatpush2.bf16.xpose.msra.mxu0 0
      %1732 = vmatprep.subr.bf16.mxu0 0
      %1733 = vmatpush2.bf16.xpose.msra.mxu0 0
      %1734 = vmatprep.subr.bf16.mxu0 0
      %1735 = vmatpush2.bf16.xpose.msra.mxu0 0
      %1736 = vmatprep.mubr.bf16.mxu0 0
      %1737 = vmatmul.mubr.bf16.gmra.mxu0 %v1681
      %v1738 = vpop.f32.mrf.mxu0
      %v1739 = vadd.f32 %v1259, %v1738
      %v1740 = vpop.f32.mrf.mxu0
      %v1741 = vpop.f32.mrf.mxu0
      %v1742 = vadd.f32 %v1260, %v1741
      %v1743 = vpop.f32.mrf.mxu0
      %1744 = vmatprep.mubr.bf16.mxu0 0
      %1745 = vmatmul.mubr.bf16.gmra.mxu0 %v1684
      %v1746 = vpop.f32.mrf.mxu0
      %v1747 = vadd.f32 %v1261, %v1746
      %v1748 = vpop.f32.mrf.mxu0
      %v1749 = vpop.f32.mrf.mxu0
      %v1750 = vadd.f32 %v1262, %v1749
      %v1751 = vpop.f32.mrf.mxu0
      %1752 = vmatprep.mubr.bf16.mxu0 0
      %1753 = vmatmul.mubr.bf16.gmra.mxu0 %v1687
      %v1754 = vpop.f32.mrf.mxu0
      %v1755 = vadd.f32 %v1263, %v1754
      %v1756 = vpop.f32.mrf.mxu0
      %v1757 = vpop.f32.mrf.mxu0
      %v1758 = vadd.f32 %v1264, %v1757
      %v1759 = vpop.f32.mrf.mxu0
      %1760 = vmatprep.mubr.bf16.mxu0 0
      %1761 = vmatmul.mubr.bf16.gmra.mxu0 %v1690
      %v1762 = vpop.f32.mrf.mxu0
      %v1763 = vadd.f32 %v1265, %v1762
      %v1764 = vpop.f32.mrf.mxu0
      %v1765 = vpop.f32.mrf.mxu0
      %v1766 = vadd.f32 %v1266, %v1765
      %v1767 = vpop.f32.mrf.mxu0
      %1768 = vdwg.mxu0
      %1769 = vrot.lane.b32.xlu0 %v1164, 96
      %v1770 = vpop.permute.xlu0 %1769
      %1771 = vrot.lane.b32.xlu0 %v1166, 96
      %v1772 = vpop.permute.xlu0 %1771
      %1773 = vrot.lane.b32.xlu0 %v1168, 96
      %v1774 = vpop.permute.xlu0 %1773
      %1775 = vrot.lane.b32.xlu0 %v1170, 96
      %v1776 = vpop.permute.xlu0 %1775
      %v1778 = vsel %vm1291, %v1164, 0
      %v1781 = vsel %vm1291, %v1166, 0
      %v1784 = vsel %vm1291, %v1168, 0
      %v1787 = vsel %vm1291, %v1170, 0
      %v1790 = vsel %vm1291, %v1770, 0
      %v1793 = vsel %vm1291, %v1772, 0
      %v1796 = vsel %vm1291, %v1774, 0
      %v1799 = vsel %vm1291, %v1776, 0
      %1801 = vmatprep.subr.bf16.mxu0 0
      %1802 = vmatpush1.bf16.xpose.msra.mxu0 0
      %1803 = vmatprep.subr.bf16.mxu0 0
      %1804 = vmatpush1.bf16.xpose.msra.mxu0 0
      %1805 = vmatprep.subr.bf16.mxu0 0
      %1806 = vmatpush1.bf16.xpose.msra.mxu0 0
      %1807 = vmatprep.subr.bf16.mxu0 0
      %1808 = vmatpush1.bf16.xpose.msra.mxu0 0
      %1809 = vmatprep.subr.bf16.mxu0 0
      %1810 = vmatpush1.bf16.xpose.msra.mxu0 %v1799
      %1811 = vmatprep.subr.bf16.mxu0 0
      %1812 = vmatpush1.bf16.xpose.msra.mxu0 %v1796
      %1813 = vmatprep.subr.bf16.mxu0 0
      %1814 = vmatpush1.bf16.xpose.msra.mxu0 %v1793
      %1815 = vmatprep.subr.bf16.mxu0 0
      %1816 = vmatpush1.bf16.xpose.msra.mxu0 %v1790
      %1817 = vmatprep.subr.bf16.mxu0 0
      %1818 = vmatpush2.bf16.xpose.msra.mxu0 0
      %1819 = vmatprep.subr.bf16.mxu0 0
      %1820 = vmatpush2.bf16.xpose.msra.mxu0 0
      %1821 = vmatprep.subr.bf16.mxu0 0
      %1822 = vmatpush2.bf16.xpose.msra.mxu0 0
      %1823 = vmatprep.subr.bf16.mxu0 0
      %1824 = vmatpush2.bf16.xpose.msra.mxu0 0
      %1825 = vmatprep.subr.bf16.mxu0 0
      %1826 = vmatpush2.bf16.xpose.msra.mxu0 0
      %1827 = vmatprep.subr.bf16.mxu0 0
      %1828 = vmatpush2.bf16.xpose.msra.mxu0 0
      %1829 = vmatprep.subr.bf16.mxu0 0
      %1830 = vmatpush2.bf16.xpose.msra.mxu0 0
      %1831 = vmatprep.subr.bf16.mxu0 0
      %1832 = vmatpush2.bf16.xpose.msra.mxu0 0
      %1833 = vmatprep.mubr.bf16.mxu0 0
      %1834 = vmatmul.mubr.bf16.gmra.mxu0 %v1778
      %v1835 = vpop.f32.mrf.mxu0
      %v1836 = vadd.f32 %v1259, %v1835
      %v1837 = vpop.f32.mrf.mxu0
      %v1838 = vpop.f32.mrf.mxu0
      %v1839 = vadd.f32 %v1260, %v1838
      %v1840 = vpop.f32.mrf.mxu0
      %1841 = vmatprep.mubr.bf16.mxu0 0
      %1842 = vmatmul.mubr.bf16.gmra.mxu0 %v1781
      %v1843 = vpop.f32.mrf.mxu0
      %v1844 = vadd.f32 %v1261, %v1843
      %v1845 = vpop.f32.mrf.mxu0
      %v1846 = vpop.f32.mrf.mxu0
      %v1847 = vadd.f32 %v1262, %v1846
      %v1848 = vpop.f32.mrf.mxu0
      %1849 = vmatprep.mubr.bf16.mxu0 0
      %1850 = vmatmul.mubr.bf16.gmra.mxu0 %v1784
      %v1851 = vpop.f32.mrf.mxu0
      %v1852 = vadd.f32 %v1263, %v1851
      %v1853 = vpop.f32.mrf.mxu0
      %v1854 = vpop.f32.mrf.mxu0
      %v1855 = vadd.f32 %v1264, %v1854
      %v1856 = vpop.f32.mrf.mxu0
      %1857 = vmatprep.mubr.bf16.mxu0 0
      %1858 = vmatmul.mubr.bf16.gmra.mxu0 %v1787
      %v1859 = vpop.f32.mrf.mxu0
      %v1860 = vadd.f32 %v1265, %v1859
      %v1861 = vpop.f32.mrf.mxu0
      %v1862 = vpop.f32.mrf.mxu0
      %v1863 = vadd.f32 %v1266, %v1862
      %v1864 = vpop.f32.mrf.mxu0
      %1865 = vdwg.mxu0
      %1866 = vrot.lane.b32.xlu0 %v1172, 96
      %v1867 = vpop.permute.xlu0 %1866
      %1868 = vrot.lane.b32.xlu0 %v1174, 96
      %v1869 = vpop.permute.xlu0 %1868
      %1870 = vrot.lane.b32.xlu0 %v1176, 96
      %v1871 = vpop.permute.xlu0 %1870
      %1872 = vrot.lane.b32.xlu0 %v1178, 96
      %v1873 = vpop.permute.xlu0 %1872
      %v1875 = vsel %vm1291, %v1172, 0
      %v1878 = vsel %vm1291, %v1174, 0
      %v1881 = vsel %vm1291, %v1176, 0
      %v1884 = vsel %vm1291, %v1178, 0
      %v1887 = vsel %vm1291, %v1867, 0
      %v1890 = vsel %vm1291, %v1869, 0
      %v1893 = vsel %vm1291, %v1871, 0
      %v1896 = vsel %vm1291, %v1873, 0
      %1898 = vmatprep.subr.bf16.mxu0 0
      %1899 = vmatpush1.bf16.xpose.msra.mxu0 0
      %1900 = vmatprep.subr.bf16.mxu0 0
      %1901 = vmatpush1.bf16.xpose.msra.mxu0 0
      %1902 = vmatprep.subr.bf16.mxu0 0
      %1903 = vmatpush1.bf16.xpose.msra.mxu0 0
      %1904 = vmatprep.subr.bf16.mxu0 0
      %1905 = vmatpush1.bf16.xpose.msra.mxu0 0
      %1906 = vmatprep.subr.bf16.mxu0 0
      %1907 = vmatpush1.bf16.xpose.msra.mxu0 %v1896
      %1908 = vmatprep.subr.bf16.mxu0 0
      %1909 = vmatpush1.bf16.xpose.msra.mxu0 %v1893
      %1910 = vmatprep.subr.bf16.mxu0 0
      %1911 = vmatpush1.bf16.xpose.msra.mxu0 %v1890
      %1912 = vmatprep.subr.bf16.mxu0 0
      %1913 = vmatpush1.bf16.xpose.msra.mxu0 %v1887
      %1914 = vmatprep.subr.bf16.mxu0 0
      %1915 = vmatpush2.bf16.xpose.msra.mxu0 0
      %1916 = vmatprep.subr.bf16.mxu0 0
      %1917 = vmatpush2.bf16.xpose.msra.mxu0 0
      %1918 = vmatprep.subr.bf16.mxu0 0
      %1919 = vmatpush2.bf16.xpose.msra.mxu0 0
      %1920 = vmatprep.subr.bf16.mxu0 0
      %1921 = vmatpush2.bf16.xpose.msra.mxu0 0
      %1922 = vmatprep.subr.bf16.mxu0 0
      %1923 = vmatpush2.bf16.xpose.msra.mxu0 0
      %1924 = vmatprep.subr.bf16.mxu0 0
      %1925 = vmatpush2.bf16.xpose.msra.mxu0 0
      %1926 = vmatprep.subr.bf16.mxu0 0
      %1927 = vmatpush2.bf16.xpose.msra.mxu0 0
      %1928 = vmatprep.subr.bf16.mxu0 0
      %1929 = vmatpush2.bf16.xpose.msra.mxu0 0
      %1930 = vmatprep.mubr.bf16.mxu0 0
      %1931 = vmatmul.mubr.bf16.gmra.mxu0 %v1875
      %v1932 = vpop.f32.mrf.mxu0
      %v1933 = vadd.f32 %v1259, %v1932
      %v1934 = vpop.f32.mrf.mxu0
      %v1935 = vpop.f32.mrf.mxu0
      %v1936 = vadd.f32 %v1260, %v1935
      %v1937 = vpop.f32.mrf.mxu0
      %1938 = vmatprep.mubr.bf16.mxu0 0
      %1939 = vmatmul.mubr.bf16.gmra.mxu0 %v1878
      %v1940 = vpop.f32.mrf.mxu0
      %v1941 = vadd.f32 %v1261, %v1940
      %v1942 = vpop.f32.mrf.mxu0
      %v1943 = vpop.f32.mrf.mxu0
      %v1944 = vadd.f32 %v1262, %v1943
      %v1945 = vpop.f32.mrf.mxu0
      %1946 = vmatprep.mubr.bf16.mxu0 0
      %1947 = vmatmul.mubr.bf16.gmra.mxu0 %v1881
      %v1948 = vpop.f32.mrf.mxu0
      %v1949 = vadd.f32 %v1263, %v1948
      %v1950 = vpop.f32.mrf.mxu0
      %v1951 = vpop.f32.mrf.mxu0
      %v1952 = vadd.f32 %v1264, %v1951
      %v1953 = vpop.f32.mrf.mxu0
      %1954 = vmatprep.mubr.bf16.mxu0 0
      %1955 = vmatmul.mubr.bf16.gmra.mxu0 %v1884
      %v1956 = vpop.f32.mrf.mxu0
      %v1957 = vadd.f32 %v1265, %v1956
      %v1958 = vpop.f32.mrf.mxu0
      %v1959 = vpop.f32.mrf.mxu0
      %v1960 = vadd.f32 %v1266, %v1959
      %v1961 = vpop.f32.mrf.mxu0
      %1962 = vdwg.mxu0
      %1963 = vrot.lane.b32.xlu0 %v1180, 96
      %v1964 = vpop.permute.xlu0 %1963
      %1965 = vrot.lane.b32.xlu0 %v1182, 96
      %v1966 = vpop.permute.xlu0 %1965
      %1967 = vrot.lane.b32.xlu0 %v1184, 96
      %v1968 = vpop.permute.xlu0 %1967
      %1969 = vrot.lane.b32.xlu0 %v1186, 96
      %v1970 = vpop.permute.xlu0 %1969
      %v1972 = vsel %vm1291, %v1180, 0
      %v1975 = vsel %vm1291, %v1182, 0
      %v1978 = vsel %vm1291, %v1184, 0
      %v1981 = vsel %vm1291, %v1186, 0
      %v1984 = vsel %vm1291, %v1964, 0
      %v1987 = vsel %vm1291, %v1966, 0
      %v1990 = vsel %vm1291, %v1968, 0
      %v1993 = vsel %vm1291, %v1970, 0
      %1995 = vmatprep.subr.bf16.mxu0 0
      %1996 = vmatpush1.bf16.xpose.msra.mxu0 0
      %1997 = vmatprep.subr.bf16.mxu0 0
      %1998 = vmatpush1.bf16.xpose.msra.mxu0 0
      %1999 = vmatprep.subr.bf16.mxu0 0
      %2000 = vmatpush1.bf16.xpose.msra.mxu0 0
      %2001 = vmatprep.subr.bf16.mxu0 0
      %2002 = vmatpush1.bf16.xpose.msra.mxu0 0
      %2003 = vmatprep.subr.bf16.mxu0 0
      %2004 = vmatpush1.bf16.xpose.msra.mxu0 %v1993
      %2005 = vmatprep.subr.bf16.mxu0 0
      %2006 = vmatpush1.bf16.xpose.msra.mxu0 %v1990
      %2007 = vmatprep.subr.bf16.mxu0 0
      %2008 = vmatpush1.bf16.xpose.msra.mxu0 %v1987
      %2009 = vmatprep.subr.bf16.mxu0 0
      %2010 = vmatpush1.bf16.xpose.msra.mxu0 %v1984
      %2011 = vmatprep.subr.bf16.mxu0 0
      %2012 = vmatpush2.bf16.xpose.msra.mxu0 0
      %2013 = vmatprep.subr.bf16.mxu0 0
      %2014 = vmatpush2.bf16.xpose.msra.mxu0 0
      %2015 = vmatprep.subr.bf16.mxu0 0
      %2016 = vmatpush2.bf16.xpose.msra.mxu0 0
      %2017 = vmatprep.subr.bf16.mxu0 0
      %2018 = vmatpush2.bf16.xpose.msra.mxu0 0
      %2019 = vmatprep.subr.bf16.mxu0 0
      %2020 = vmatpush2.bf16.xpose.msra.mxu0 0
      %2021 = vmatprep.subr.bf16.mxu0 0
      %2022 = vmatpush2.bf16.xpose.msra.mxu0 0
      %2023 = vmatprep.subr.bf16.mxu0 0
      %2024 = vmatpush2.bf16.xpose.msra.mxu0 0
      %2025 = vmatprep.subr.bf16.mxu0 0
      %2026 = vmatpush2.bf16.xpose.msra.mxu0 0
      %2027 = vmatprep.mubr.bf16.mxu0 0
      %2028 = vmatmul.mubr.bf16.gmra.mxu0 %v1972
      %v2029 = vpop.f32.mrf.mxu0
      %v2030 = vadd.f32 %v1259, %v2029
      %v2031 = vpop.f32.mrf.mxu0
      %v2032 = vpop.f32.mrf.mxu0
      %v2033 = vadd.f32 %v1260, %v2032
      %v2034 = vpop.f32.mrf.mxu0
      %2035 = vmatprep.mubr.bf16.mxu0 0
      %2036 = vmatmul.mubr.bf16.gmra.mxu0 %v1975
      %v2037 = vpop.f32.mrf.mxu0
      %v2038 = vadd.f32 %v1261, %v2037
      %v2039 = vpop.f32.mrf.mxu0
      %v2040 = vpop.f32.mrf.mxu0
      %v2041 = vadd.f32 %v1262, %v2040
      %v2042 = vpop.f32.mrf.mxu0
      %2043 = vmatprep.mubr.bf16.mxu0 0
      %2044 = vmatmul.mubr.bf16.gmra.mxu0 %v1978
      %v2045 = vpop.f32.mrf.mxu0
      %v2046 = vadd.f32 %v1263, %v2045
      %v2047 = vpop.f32.mrf.mxu0
      %v2048 = vpop.f32.mrf.mxu0
      %v2049 = vadd.f32 %v1264, %v2048
      %v2050 = vpop.f32.mrf.mxu0
      %2051 = vmatprep.mubr.bf16.mxu0 0
      %2052 = vmatmul.mubr.bf16.gmra.mxu0 %v1981
      %v2053 = vpop.f32.mrf.mxu0
      %v2054 = vadd.f32 %v1265, %v2053
      %v2055 = vpop.f32.mrf.mxu0
      %v2056 = vpop.f32.mrf.mxu0
      %v2057 = vadd.f32 %v1266, %v2056
      %v2058 = vpop.f32.mrf.mxu0
      %2059 = vdwg.mxu0
      %2060 = vrot.lane.b32.xlu0 %v1188, 96
      %v2061 = vpop.permute.xlu0 %2060
      %2062 = vrot.lane.b32.xlu0 %v1190, 96
      %v2063 = vpop.permute.xlu0 %2062
      %2064 = vrot.lane.b32.xlu0 %v1192, 96
      %v2065 = vpop.permute.xlu0 %2064
      %2066 = vrot.lane.b32.xlu0 %v1194, 96
      %v2067 = vpop.permute.xlu0 %2066
      %v2069 = vsel %vm1291, %v1188, 0
      %v2072 = vsel %vm1291, %v1190, 0
      %v2075 = vsel %vm1291, %v1192, 0
      %v2078 = vsel %vm1291, %v1194, 0
      %v2081 = vsel %vm1291, %v2061, 0
      %v2084 = vsel %vm1291, %v2063, 0
      %v2087 = vsel %vm1291, %v2065, 0
      %v2090 = vsel %vm1291, %v2067, 0
      %2092 = vmatprep.subr.bf16.mxu0 0
      %2093 = vmatpush1.bf16.xpose.msra.mxu0 0
      %2094 = vmatprep.subr.bf16.mxu0 0
      %2095 = vmatpush1.bf16.xpose.msra.mxu0 0
      %2096 = vmatprep.subr.bf16.mxu0 0
      %2097 = vmatpush1.bf16.xpose.msra.mxu0 0
      %2098 = vmatprep.subr.bf16.mxu0 0
      %2099 = vmatpush1.bf16.xpose.msra.mxu0 0
      %2100 = vmatprep.subr.bf16.mxu0 0
      %2101 = vmatpush1.bf16.xpose.msra.mxu0 %v2090
      %2102 = vmatprep.subr.bf16.mxu0 0
      %2103 = vmatpush1.bf16.xpose.msra.mxu0 %v2087
      %2104 = vmatprep.subr.bf16.mxu0 0
      %2105 = vmatpush1.bf16.xpose.msra.mxu0 %v2084
      %2106 = vmatprep.subr.bf16.mxu0 0
      %2107 = vmatpush1.bf16.xpose.msra.mxu0 %v2081
      %2108 = vmatprep.subr.bf16.mxu0 0
      %2109 = vmatpush2.bf16.xpose.msra.mxu0 0
      %2110 = vmatprep.subr.bf16.mxu0 0
      %2111 = vmatpush2.bf16.xpose.msra.mxu0 0
      %2112 = vmatprep.subr.bf16.mxu0 0
      %2113 = vmatpush2.bf16.xpose.msra.mxu0 0
      %2114 = vmatprep.subr.bf16.mxu0 0
      %2115 = vmatpush2.bf16.xpose.msra.mxu0 0
      %2116 = vmatprep.subr.bf16.mxu0 0
      %2117 = vmatpush2.bf16.xpose.msra.mxu0 0
      %2118 = vmatprep.subr.bf16.mxu0 0
      %2119 = vmatpush2.bf16.xpose.msra.mxu0 0
      %2120 = vmatprep.subr.bf16.mxu0 0
      %2121 = vmatpush2.bf16.xpose.msra.mxu0 0
      %2122 = vmatprep.subr.bf16.mxu0 0
      %2123 = vmatpush2.bf16.xpose.msra.mxu0 0
      %2124 = vmatprep.mubr.bf16.mxu0 0
      %2125 = vmatmul.mubr.bf16.gmra.mxu0 %v2069
      %v2126 = vpop.f32.mrf.mxu0
      %v2127 = vadd.f32 %v1267, %v2126
      %v2128 = vpop.f32.mrf.mxu0
      %v2129 = vpop.f32.mrf.mxu0
      %v2130 = vadd.f32 %v1268, %v2129
      %v2131 = vpop.f32.mrf.mxu0
      %2132 = vmatprep.mubr.bf16.mxu0 0
      %2133 = vmatmul.mubr.bf16.gmra.mxu0 %v2072
      %v2134 = vpop.f32.mrf.mxu0
      %v2135 = vadd.f32 %v1269, %v2134
      %v2136 = vpop.f32.mrf.mxu0
      %v2137 = vpop.f32.mrf.mxu0
      %v2138 = vadd.f32 %v1270, %v2137
      %v2139 = vpop.f32.mrf.mxu0
      %2140 = vmatprep.mubr.bf16.mxu0 0
      %2141 = vmatmul.mubr.bf16.gmra.mxu0 %v2075
      %v2142 = vpop.f32.mrf.mxu0
      %v2143 = vadd.f32 %v1271, %v2142
      %v2144 = vpop.f32.mrf.mxu0
      %v2145 = vpop.f32.mrf.mxu0
      %v2146 = vadd.f32 %v1272, %v2145
      %v2147 = vpop.f32.mrf.mxu0
      %2148 = vmatprep.mubr.bf16.mxu0 0
      %2149 = vmatmul.mubr.bf16.gmra.mxu0 %v2078
      %v2150 = vpop.f32.mrf.mxu0
      %v2151 = vadd.f32 %v1273, %v2150
      %v2152 = vpop.f32.mrf.mxu0
      %v2153 = vpop.f32.mrf.mxu0
      %v2154 = vadd.f32 %v1274, %v2153
      %v2155 = vpop.f32.mrf.mxu0
      %2156 = vdwg.mxu0
      %2157 = vrot.lane.b32.xlu0 %v1196, 96
      %v2158 = vpop.permute.xlu0 %2157
      %2159 = vrot.lane.b32.xlu0 %v1198, 96
      %v2160 = vpop.permute.xlu0 %2159
      %2161 = vrot.lane.b32.xlu0 %v1200, 96
      %v2162 = vpop.permute.xlu0 %2161
      %2163 = vrot.lane.b32.xlu0 %v1202, 96
      %v2164 = vpop.permute.xlu0 %2163
      %v2166 = vsel %vm1291, %v1196, 0
      %v2169 = vsel %vm1291, %v1198, 0
      %v2172 = vsel %vm1291, %v1200, 0
      %v2175 = vsel %vm1291, %v1202, 0
      %v2178 = vsel %vm1291, %v2158, 0
      %v2181 = vsel %vm1291, %v2160, 0
      %v2184 = vsel %vm1291, %v2162, 0
      %v2187 = vsel %vm1291, %v2164, 0
      %2189 = vmatprep.subr.bf16.mxu0 0
      %2190 = vmatpush1.bf16.xpose.msra.mxu0 0
      %2191 = vmatprep.subr.bf16.mxu0 0
      %2192 = vmatpush1.bf16.xpose.msra.mxu0 0
      %2193 = vmatprep.subr.bf16.mxu0 0
      %2194 = vmatpush1.bf16.xpose.msra.mxu0 0
      %2195 = vmatprep.subr.bf16.mxu0 0
      %2196 = vmatpush1.bf16.xpose.msra.mxu0 0
      %2197 = vmatprep.subr.bf16.mxu0 0
      %2198 = vmatpush1.bf16.xpose.msra.mxu0 %v2187
      %2199 = vmatprep.subr.bf16.mxu0 0
      %2200 = vmatpush1.bf16.xpose.msra.mxu0 %v2184
      %2201 = vmatprep.subr.bf16.mxu0 0
      %2202 = vmatpush1.bf16.xpose.msra.mxu0 %v2181
      %2203 = vmatprep.subr.bf16.mxu0 0
      %2204 = vmatpush1.bf16.xpose.msra.mxu0 %v2178
      %2205 = vmatprep.subr.bf16.mxu0 0
      %2206 = vmatpush2.bf16.xpose.msra.mxu0 0
      %2207 = vmatprep.subr.bf16.mxu0 0
      %2208 = vmatpush2.bf16.xpose.msra.mxu0 0
      %2209 = vmatprep.subr.bf16.mxu0 0
      %2210 = vmatpush2.bf16.xpose.msra.mxu0 0
      %2211 = vmatprep.subr.bf16.mxu0 0
      %2212 = vmatpush2.bf16.xpose.msra.mxu0 0
      %2213 = vmatprep.subr.bf16.mxu0 0
      %2214 = vmatpush2.bf16.xpose.msra.mxu0 0
      %2215 = vmatprep.subr.bf16.mxu0 0
      %2216 = vmatpush2.bf16.xpose.msra.mxu0 0
      %2217 = vmatprep.subr.bf16.mxu0 0
      %2218 = vmatpush2.bf16.xpose.msra.mxu0 0
      %2219 = vmatprep.subr.bf16.mxu0 0
      %2220 = vmatpush2.bf16.xpose.msra.mxu0 0
      %2221 = vmatprep.mubr.bf16.mxu0 0
      %2222 = vmatmul.mubr.bf16.gmra.mxu0 %v2166
      %v2223 = vpop.f32.mrf.mxu0
      %v2224 = vadd.f32 %v1267, %v2223
      %v2225 = vpop.f32.mrf.mxu0
      %v2226 = vpop.f32.mrf.mxu0
      %v2227 = vadd.f32 %v1268, %v2226
      %v2228 = vpop.f32.mrf.mxu0
      %2229 = vmatprep.mubr.bf16.mxu0 0
      %2230 = vmatmul.mubr.bf16.gmra.mxu0 %v2169
      %v2231 = vpop.f32.mrf.mxu0
      %v2232 = vadd.f32 %v1269, %v2231
      %v2233 = vpop.f32.mrf.mxu0
      %v2234 = vpop.f32.mrf.mxu0
      %v2235 = vadd.f32 %v1270, %v2234
      %v2236 = vpop.f32.mrf.mxu0
      %2237 = vmatprep.mubr.bf16.mxu0 0
      %2238 = vmatmul.mubr.bf16.gmra.mxu0 %v2172
      %v2239 = vpop.f32.mrf.mxu0
      %v2240 = vadd.f32 %v1271, %v2239
      %v2241 = vpop.f32.mrf.mxu0
      %v2242 = vpop.f32.mrf.mxu0
      %v2243 = vadd.f32 %v1272, %v2242
      %v2244 = vpop.f32.mrf.mxu0
      %2245 = vmatprep.mubr.bf16.mxu0 0
      %2246 = vmatmul.mubr.bf16.gmra.mxu0 %v2175
      %v2247 = vpop.f32.mrf.mxu0
      %v2248 = vadd.f32 %v1273, %v2247
      %v2249 = vpop.f32.mrf.mxu0
      %v2250 = vpop.f32.mrf.mxu0
      %v2251 = vadd.f32 %v1274, %v2250
      %v2252 = vpop.f32.mrf.mxu0
      %2253 = vdwg.mxu0
      %2254 = vrot.lane.b32.xlu0 %v1204, 96
      %v2255 = vpop.permute.xlu0 %2254
      %2256 = vrot.lane.b32.xlu0 %v1206, 96
      %v2257 = vpop.permute.xlu0 %2256
      %2258 = vrot.lane.b32.xlu0 %v1208, 96
      %v2259 = vpop.permute.xlu0 %2258
      %2260 = vrot.lane.b32.xlu0 %v1210, 96
      %v2261 = vpop.permute.xlu0 %2260
      %v2263 = vsel %vm1291, %v1204, 0
      %v2266 = vsel %vm1291, %v1206, 0
      %v2269 = vsel %vm1291, %v1208, 0
      %v2272 = vsel %vm1291, %v1210, 0
      %v2275 = vsel %vm1291, %v2255, 0
      %v2278 = vsel %vm1291, %v2257, 0
      %v2281 = vsel %vm1291, %v2259, 0
      %v2284 = vsel %vm1291, %v2261, 0
      %2286 = vmatprep.subr.bf16.mxu0 0
      %2287 = vmatpush1.bf16.xpose.msra.mxu0 0
      %2288 = vmatprep.subr.bf16.mxu0 0
      %2289 = vmatpush1.bf16.xpose.msra.mxu0 0
      %2290 = vmatprep.subr.bf16.mxu0 0
      %2291 = vmatpush1.bf16.xpose.msra.mxu0 0
      %2292 = vmatprep.subr.bf16.mxu0 0
      %2293 = vmatpush1.bf16.xpose.msra.mxu0 0
      %2294 = vmatprep.subr.bf16.mxu0 0
      %2295 = vmatpush1.bf16.xpose.msra.mxu0 %v2284
      %2296 = vmatprep.subr.bf16.mxu0 0
      %2297 = vmatpush1.bf16.xpose.msra.mxu0 %v2281
      %2298 = vmatprep.subr.bf16.mxu0 0
      %2299 = vmatpush1.bf16.xpose.msra.mxu0 %v2278
      %2300 = vmatprep.subr.bf16.mxu0 0
      %2301 = vmatpush1.bf16.xpose.msra.mxu0 %v2275
      %2302 = vmatprep.subr.bf16.mxu0 0
      %2303 = vmatpush2.bf16.xpose.msra.mxu0 0
      %2304 = vmatprep.subr.bf16.mxu0 0
      %2305 = vmatpush2.bf16.xpose.msra.mxu0 0
      %2306 = vmatprep.subr.bf16.mxu0 0
      %2307 = vmatpush2.bf16.xpose.msra.mxu0 0
      %2308 = vmatprep.subr.bf16.mxu0 0
      %2309 = vmatpush2.bf16.xpose.msra.mxu0 0
      %2310 = vmatprep.subr.bf16.mxu0 0
      %2311 = vmatpush2.bf16.xpose.msra.mxu0 0
      %2312 = vmatprep.subr.bf16.mxu0 0
      %2313 = vmatpush2.bf16.xpose.msra.mxu0 0
      %2314 = vmatprep.subr.bf16.mxu0 0
      %2315 = vmatpush2.bf16.xpose.msra.mxu0 0
      %2316 = vmatprep.subr.bf16.mxu0 0
      %2317 = vmatpush2.bf16.xpose.msra.mxu0 0
      %2318 = vmatprep.mubr.bf16.mxu0 0
      %2319 = vmatmul.mubr.bf16.gmra.mxu0 %v2263
      %v2320 = vpop.f32.mrf.mxu0
      %v2321 = vadd.f32 %v1267, %v2320
      %v2322 = vpop.f32.mrf.mxu0
      %v2323 = vpop.f32.mrf.mxu0
      %v2324 = vadd.f32 %v1268, %v2323
      %v2325 = vpop.f32.mrf.mxu0
      %2326 = vmatprep.mubr.bf16.mxu0 0
      %2327 = vmatmul.mubr.bf16.gmra.mxu0 %v2266
      %v2328 = vpop.f32.mrf.mxu0
      %v2329 = vadd.f32 %v1269, %v2328
      %v2330 = vpop.f32.mrf.mxu0
      %v2331 = vpop.f32.mrf.mxu0
      %v2332 = vadd.f32 %v1270, %v2331
      %v2333 = vpop.f32.mrf.mxu0
      %2334 = vmatprep.mubr.bf16.mxu0 0
      %2335 = vmatmul.mubr.bf16.gmra.mxu0 %v2269
      %v2336 = vpop.f32.mrf.mxu0
      %v2337 = vadd.f32 %v1271, %v2336
      %v2338 = vpop.f32.mrf.mxu0
      %v2339 = vpop.f32.mrf.mxu0
      %v2340 = vadd.f32 %v1272, %v2339
      %v2341 = vpop.f32.mrf.mxu0
      %2342 = vmatprep.mubr.bf16.mxu0 0
      %2343 = vmatmul.mubr.bf16.gmra.mxu0 %v2272
      %v2344 = vpop.f32.mrf.mxu0
      %v2345 = vadd.f32 %v1273, %v2344
      %v2346 = vpop.f32.mrf.mxu0
      %v2347 = vpop.f32.mrf.mxu0
      %v2348 = vadd.f32 %v1274, %v2347
      %v2349 = vpop.f32.mrf.mxu0
      %2350 = vdwg.mxu0
      %2351 = vrot.lane.b32.xlu0 %v1212, 96
      %v2352 = vpop.permute.xlu0 %2351
      %2353 = vrot.lane.b32.xlu0 %v1214, 96
      %v2354 = vpop.permute.xlu0 %2353
      %2355 = vrot.lane.b32.xlu0 %v1216, 96
      %v2356 = vpop.permute.xlu0 %2355
      %2357 = vrot.lane.b32.xlu0 %v1218, 96
      %v2358 = vpop.permute.xlu0 %2357
      %v2360 = vsel %vm1291, %v1212, 0
      %v2363 = vsel %vm1291, %v1214, 0
      %v2366 = vsel %vm1291, %v1216, 0
      %v2369 = vsel %vm1291, %v1218, 0
      %v2372 = vsel %vm1291, %v2352, 0
      %v2375 = vsel %vm1291, %v2354, 0
      %v2378 = vsel %vm1291, %v2356, 0
      %v2381 = vsel %vm1291, %v2358, 0
      %2383 = vmatprep.subr.bf16.mxu0 0
      %2384 = vmatpush1.bf16.xpose.msra.mxu0 0
      %2385 = vmatprep.subr.bf16.mxu0 0
      %2386 = vmatpush1.bf16.xpose.msra.mxu0 0
      %2387 = vmatprep.subr.bf16.mxu0 0
      %2388 = vmatpush1.bf16.xpose.msra.mxu0 0
      %2389 = vmatprep.subr.bf16.mxu0 0
      %2390 = vmatpush1.bf16.xpose.msra.mxu0 0
      %2391 = vmatprep.subr.bf16.mxu0 0
      %2392 = vmatpush1.bf16.xpose.msra.mxu0 %v2381
      %2393 = vmatprep.subr.bf16.mxu0 0
      %2394 = vmatpush1.bf16.xpose.msra.mxu0 %v2378
      %2395 = vmatprep.subr.bf16.mxu0 0
      %2396 = vmatpush1.bf16.xpose.msra.mxu0 %v2375
      %2397 = vmatprep.subr.bf16.mxu0 0
      %2398 = vmatpush1.bf16.xpose.msra.mxu0 %v2372
      %2399 = vmatprep.subr.bf16.mxu0 0
      %2400 = vmatpush2.bf16.xpose.msra.mxu0 0
      %2401 = vmatprep.subr.bf16.mxu0 0
      %2402 = vmatpush2.bf16.xpose.msra.mxu0 0
      %2403 = vmatprep.subr.bf16.mxu0 0
      %2404 = vmatpush2.bf16.xpose.msra.mxu0 0
      %2405 = vmatprep.subr.bf16.mxu0 0
      %2406 = vmatpush2.bf16.xpose.msra.mxu0 0
      %2407 = vmatprep.subr.bf16.mxu0 0
      %2408 = vmatpush2.bf16.xpose.msra.mxu0 0
      %2409 = vmatprep.subr.bf16.mxu0 0
      %2410 = vmatpush2.bf16.xpose.msra.mxu0 0
      %2411 = vmatprep.subr.bf16.mxu0 0
      %2412 = vmatpush2.bf16.xpose.msra.mxu0 0
      %2413 = vmatprep.subr.bf16.mxu0 0
      %2414 = vmatpush2.bf16.xpose.msra.mxu0 0
      %2415 = vmatprep.mubr.bf16.mxu0 0
      %2416 = vmatmul.mubr.bf16.gmra.mxu0 %v2360
      %v2417 = vpop.f32.mrf.mxu0
      %v2418 = vadd.f32 %v1267, %v2417
      %v2419 = vpop.f32.mrf.mxu0
      %v2420 = vpop.f32.mrf.mxu0
      %v2421 = vadd.f32 %v1268, %v2420
      %v2422 = vpop.f32.mrf.mxu0
      %2423 = vmatprep.mubr.bf16.mxu0 0
      %2424 = vmatmul.mubr.bf16.gmra.mxu0 %v2363
      %v2425 = vpop.f32.mrf.mxu0
      %v2426 = vadd.f32 %v1269, %v2425
      %v2427 = vpop.f32.mrf.mxu0
      %v2428 = vpop.f32.mrf.mxu0
      %v2429 = vadd.f32 %v1270, %v2428
      %v2430 = vpop.f32.mrf.mxu0
      %2431 = vmatprep.mubr.bf16.mxu0 0
      %2432 = vmatmul.mubr.bf16.gmra.mxu0 %v2366
      %v2433 = vpop.f32.mrf.mxu0
      %v2434 = vadd.f32 %v1271, %v2433
      %v2435 = vpop.f32.mrf.mxu0
      %v2436 = vpop.f32.mrf.mxu0
      %v2437 = vadd.f32 %v1272, %v2436
      %v2438 = vpop.f32.mrf.mxu0
      %2439 = vmatprep.mubr.bf16.mxu0 0
      %2440 = vmatmul.mubr.bf16.gmra.mxu0 %v2369
      %v2441 = vpop.f32.mrf.mxu0
      %v2442 = vadd.f32 %v1273, %v2441
      %v2443 = vpop.f32.mrf.mxu0
      %v2444 = vpop.f32.mrf.mxu0
      %v2445 = vadd.f32 %v1274, %v2444
      %v2446 = vpop.f32.mrf.mxu0
      %2447 = vdwg.mxu0
      %2448 = vrot.lane.b32.xlu0 %v1220, 96
      %v2449 = vpop.permute.xlu0 %2448
      %2450 = vrot.lane.b32.xlu0 %v1222, 96
      %v2451 = vpop.permute.xlu0 %2450
      %2452 = vrot.lane.b32.xlu0 %v1224, 96
      %v2453 = vpop.permute.xlu0 %2452
      %2454 = vrot.lane.b32.xlu0 %v1226, 96
      %v2455 = vpop.permute.xlu0 %2454
      %v2457 = vsel %vm1291, %v1220, 0
      %v2460 = vsel %vm1291, %v1222, 0
      %v2463 = vsel %vm1291, %v1224, 0
      %v2466 = vsel %vm1291, %v1226, 0
      %v2469 = vsel %vm1291, %v2449, 0
      %v2472 = vsel %vm1291, %v2451, 0
      %v2475 = vsel %vm1291, %v2453, 0
      %v2478 = vsel %vm1291, %v2455, 0
      %2480 = vmatprep.subr.bf16.mxu0 0
      %2481 = vmatpush1.bf16.xpose.msra.mxu0 0
      %2482 = vmatprep.subr.bf16.mxu0 0
      %2483 = vmatpush1.bf16.xpose.msra.mxu0 0
      %2484 = vmatprep.subr.bf16.mxu0 0
      %2485 = vmatpush1.bf16.xpose.msra.mxu0 0
      %2486 = vmatprep.subr.bf16.mxu0 0
      %2487 = vmatpush1.bf16.xpose.msra.mxu0 0
      %2488 = vmatprep.subr.bf16.mxu0 0
      %2489 = vmatpush1.bf16.xpose.msra.mxu0 %v2478
      %2490 = vmatprep.subr.bf16.mxu0 0
      %2491 = vmatpush1.bf16.xpose.msra.mxu0 %v2475
      %2492 = vmatprep.subr.bf16.mxu0 0
      %2493 = vmatpush1.bf16.xpose.msra.mxu0 %v2472
      %2494 = vmatprep.subr.bf16.mxu0 0
      %2495 = vmatpush1.bf16.xpose.msra.mxu0 %v2469
      %2496 = vmatprep.subr.bf16.mxu0 0
      %2497 = vmatpush2.bf16.xpose.msra.mxu0 0
      %2498 = vmatprep.subr.bf16.mxu0 0
      %2499 = vmatpush2.bf16.xpose.msra.mxu0 0
      %2500 = vmatprep.subr.bf16.mxu0 0
      %2501 = vmatpush2.bf16.xpose.msra.mxu0 0
      %2502 = vmatprep.subr.bf16.mxu0 0
      %2503 = vmatpush2.bf16.xpose.msra.mxu0 0
      %2504 = vmatprep.subr.bf16.mxu0 0
      %2505 = vmatpush2.bf16.xpose.msra.mxu0 0
      %2506 = vmatprep.subr.bf16.mxu0 0
      %2507 = vmatpush2.bf16.xpose.msra.mxu0 0
      %2508 = vmatprep.subr.bf16.mxu0 0
      %2509 = vmatpush2.bf16.xpose.msra.mxu0 0
      %2510 = vmatprep.subr.bf16.mxu0 0
      %2511 = vmatpush2.bf16.xpose.msra.mxu0 0
      %2512 = vmatprep.mubr.bf16.mxu0 0
      %2513 = vmatmul.mubr.bf16.gmra.mxu0 %v2457
      %v2514 = vpop.f32.mrf.mxu0
      %v2515 = vadd.f32 %v1275, %v2514
      %v2516 = vpop.f32.mrf.mxu0
      %v2517 = vpop.f32.mrf.mxu0
      %v2518 = vadd.f32 %v1276, %v2517
      %v2519 = vpop.f32.mrf.mxu0
      %2520 = vmatprep.mubr.bf16.mxu0 0
      %2521 = vmatmul.mubr.bf16.gmra.mxu0 %v2460
      %v2522 = vpop.f32.mrf.mxu0
      %v2523 = vadd.f32 %v1277, %v2522
      %v2524 = vpop.f32.mrf.mxu0
      %v2525 = vpop.f32.mrf.mxu0
      %v2526 = vadd.f32 %v1278, %v2525
      %v2527 = vpop.f32.mrf.mxu0
      %2528 = vmatprep.mubr.bf16.mxu0 0
      %2529 = vmatmul.mubr.bf16.gmra.mxu0 %v2463
      %v2530 = vpop.f32.mrf.mxu0
      %v2531 = vadd.f32 %v1279, %v2530
      %v2532 = vpop.f32.mrf.mxu0
      %v2533 = vpop.f32.mrf.mxu0
      %v2534 = vadd.f32 %v1280, %v2533
      %v2535 = vpop.f32.mrf.mxu0
      %2536 = vmatprep.mubr.bf16.mxu0 0
      %2537 = vmatmul.mubr.bf16.gmra.mxu0 %v2466
      %v2538 = vpop.f32.mrf.mxu0
      %v2539 = vadd.f32 %v1281, %v2538
      %v2540 = vpop.f32.mrf.mxu0
      %v2541 = vpop.f32.mrf.mxu0
      %v2542 = vadd.f32 %v1282, %v2541
      %v2543 = vpop.f32.mrf.mxu0
      %2544 = vdwg.mxu0
      %2545 = vrot.lane.b32.xlu0 %v1228, 96
      %v2546 = vpop.permute.xlu0 %2545
      %2547 = vrot.lane.b32.xlu0 %v1230, 96
      %v2548 = vpop.permute.xlu0 %2547
      %2549 = vrot.lane.b32.xlu0 %v1232, 96
      %v2550 = vpop.permute.xlu0 %2549
      %2551 = vrot.lane.b32.xlu0 %v1234, 96
      %v2552 = vpop.permute.xlu0 %2551
      %v2554 = vsel %vm1291, %v1228, 0
      %v2557 = vsel %vm1291, %v1230, 0
      %v2560 = vsel %vm1291, %v1232, 0
      %v2563 = vsel %vm1291, %v1234, 0
      %v2566 = vsel %vm1291, %v2546, 0
      %v2569 = vsel %vm1291, %v2548, 0
      %v2572 = vsel %vm1291, %v2550, 0
      %v2575 = vsel %vm1291, %v2552, 0
      %2577 = vmatprep.subr.bf16.mxu0 0
      %2578 = vmatpush1.bf16.xpose.msra.mxu0 0
      %2579 = vmatprep.subr.bf16.mxu0 0
      %2580 = vmatpush1.bf16.xpose.msra.mxu0 0
      %2581 = vmatprep.subr.bf16.mxu0 0
      %2582 = vmatpush1.bf16.xpose.msra.mxu0 0
      %2583 = vmatprep.subr.bf16.mxu0 0
      %2584 = vmatpush1.bf16.xpose.msra.mxu0 0
      %2585 = vmatprep.subr.bf16.mxu0 0
      %2586 = vmatpush1.bf16.xpose.msra.mxu0 %v2575
      %2587 = vmatprep.subr.bf16.mxu0 0
      %2588 = vmatpush1.bf16.xpose.msra.mxu0 %v2572
      %2589 = vmatprep.subr.bf16.mxu0 0
      %2590 = vmatpush1.bf16.xpose.msra.mxu0 %v2569
      %2591 = vmatprep.subr.bf16.mxu0 0
      %2592 = vmatpush1.bf16.xpose.msra.mxu0 %v2566
      %2593 = vmatprep.subr.bf16.mxu0 0
      %2594 = vmatpush2.bf16.xpose.msra.mxu0 0
      %2595 = vmatprep.subr.bf16.mxu0 0
      %2596 = vmatpush2.bf16.xpose.msra.mxu0 0
      %2597 = vmatprep.subr.bf16.mxu0 0
      %2598 = vmatpush2.bf16.xpose.msra.mxu0 0
      %2599 = vmatprep.subr.bf16.mxu0 0
      %2600 = vmatpush2.bf16.xpose.msra.mxu0 0
      %2601 = vmatprep.subr.bf16.mxu0 0
      %2602 = vmatpush2.bf16.xpose.msra.mxu0 0
      %2603 = vmatprep.subr.bf16.mxu0 0
      %2604 = vmatpush2.bf16.xpose.msra.mxu0 0
      %2605 = vmatprep.subr.bf16.mxu0 0
      %2606 = vmatpush2.bf16.xpose.msra.mxu0 0
      %2607 = vmatprep.subr.bf16.mxu0 0
      %2608 = vmatpush2.bf16.xpose.msra.mxu0 0
      %2609 = vmatprep.mubr.bf16.mxu0 0
      %2610 = vmatmul.mubr.bf16.gmra.mxu0 %v2554
      %v2611 = vpop.f32.mrf.mxu0
      %v2612 = vadd.f32 %v1275, %v2611
      %v2613 = vpop.f32.mrf.mxu0
      %v2614 = vpop.f32.mrf.mxu0
      %v2615 = vadd.f32 %v1276, %v2614
      %v2616 = vpop.f32.mrf.mxu0
      %2617 = vmatprep.mubr.bf16.mxu0 0
      %2618 = vmatmul.mubr.bf16.gmra.mxu0 %v2557
      %v2619 = vpop.f32.mrf.mxu0
      %v2620 = vadd.f32 %v1277, %v2619
      %v2621 = vpop.f32.mrf.mxu0
      %v2622 = vpop.f32.mrf.mxu0
      %v2623 = vadd.f32 %v1278, %v2622
      %v2624 = vpop.f32.mrf.mxu0
      %2625 = vmatprep.mubr.bf16.mxu0 0
      %2626 = vmatmul.mubr.bf16.gmra.mxu0 %v2560
      %v2627 = vpop.f32.mrf.mxu0
      %v2628 = vadd.f32 %v1279, %v2627
      %v2629 = vpop.f32.mrf.mxu0
      %v2630 = vpop.f32.mrf.mxu0
      %v2631 = vadd.f32 %v1280, %v2630
      %v2632 = vpop.f32.mrf.mxu0
      %2633 = vmatprep.mubr.bf16.mxu0 0
      %2634 = vmatmul.mubr.bf16.gmra.mxu0 %v2563
      %v2635 = vpop.f32.mrf.mxu0
      %v2636 = vadd.f32 %v1281, %v2635
      %v2637 = vpop.f32.mrf.mxu0
      %v2638 = vpop.f32.mrf.mxu0
      %v2639 = vadd.f32 %v1282, %v2638
      %v2640 = vpop.f32.mrf.mxu0
      %2641 = vdwg.mxu0
      %2642 = vrot.lane.b32.xlu0 %v1236, 96
      %v2643 = vpop.permute.xlu0 %2642
      %2644 = vrot.lane.b32.xlu0 %v1238, 96
      %v2645 = vpop.permute.xlu0 %2644
      %2646 = vrot.lane.b32.xlu0 %v1240, 96
      %v2647 = vpop.permute.xlu0 %2646
      %2648 = vrot.lane.b32.xlu0 %v1242, 96
      %v2649 = vpop.permute.xlu0 %2648
      %v2651 = vsel %vm1291, %v1236, 0
      %v2654 = vsel %vm1291, %v1238, 0
      %v2657 = vsel %vm1291, %v1240, 0
      %v2660 = vsel %vm1291, %v1242, 0
      %v2663 = vsel %vm1291, %v2643, 0
      %v2666 = vsel %vm1291, %v2645, 0
      %v2669 = vsel %vm1291, %v2647, 0
      %v2672 = vsel %vm1291, %v2649, 0
      %2674 = vmatprep.subr.bf16.mxu0 0
      %2675 = vmatpush1.bf16.xpose.msra.mxu0 0
      %2676 = vmatprep.subr.bf16.mxu0 0
      %2677 = vmatpush1.bf16.xpose.msra.mxu0 0
      %2678 = vmatprep.subr.bf16.mxu0 0
      %2679 = vmatpush1.bf16.xpose.msra.mxu0 0
      %2680 = vmatprep.subr.bf16.mxu0 0
      %2681 = vmatpush1.bf16.xpose.msra.mxu0 0
      %2682 = vmatprep.subr.bf16.mxu0 0
      %2683 = vmatpush1.bf16.xpose.msra.mxu0 %v2672
      %2684 = vmatprep.subr.bf16.mxu0 0
      %2685 = vmatpush1.bf16.xpose.msra.mxu0 %v2669
      %2686 = vmatprep.subr.bf16.mxu0 0
      %2687 = vmatpush1.bf16.xpose.msra.mxu0 %v2666
      %2688 = vmatprep.subr.bf16.mxu0 0
      %2689 = vmatpush1.bf16.xpose.msra.mxu0 %v2663
      %2690 = vmatprep.subr.bf16.mxu0 0
      %2691 = vmatpush2.bf16.xpose.msra.mxu0 0
      %2692 = vmatprep.subr.bf16.mxu0 0
      %2693 = vmatpush2.bf16.xpose.msra.mxu0 0
      %2694 = vmatprep.subr.bf16.mxu0 0
      %2695 = vmatpush2.bf16.xpose.msra.mxu0 0
      %2696 = vmatprep.subr.bf16.mxu0 0
      %2697 = vmatpush2.bf16.xpose.msra.mxu0 0
      %2698 = vmatprep.subr.bf16.mxu0 0
      %2699 = vmatpush2.bf16.xpose.msra.mxu0 0
      %2700 = vmatprep.subr.bf16.mxu0 0
      %2701 = vmatpush2.bf16.xpose.msra.mxu0 0
      %2702 = vmatprep.subr.bf16.mxu0 0
      %2703 = vmatpush2.bf16.xpose.msra.mxu0 0
      %2704 = vmatprep.subr.bf16.mxu0 0
      %2705 = vmatpush2.bf16.xpose.msra.mxu0 0
      %2706 = vmatprep.mubr.bf16.mxu0 0
      %2707 = vmatmul.mubr.bf16.gmra.mxu0 %v2651
      %v2708 = vpop.f32.mrf.mxu0
      %v2709 = vadd.f32 %v1275, %v2708
      %v2710 = vpop.f32.mrf.mxu0
      %v2711 = vpop.f32.mrf.mxu0
      %v2712 = vadd.f32 %v1276, %v2711
      %v2713 = vpop.f32.mrf.mxu0
      %2714 = vmatprep.mubr.bf16.mxu0 0
      %2715 = vmatmul.mubr.bf16.gmra.mxu0 %v2654
      %v2716 = vpop.f32.mrf.mxu0
      %v2717 = vadd.f32 %v1277, %v2716
      %v2718 = vpop.f32.mrf.mxu0
      %v2719 = vpop.f32.mrf.mxu0
      %v2720 = vadd.f32 %v1278, %v2719
      %v2721 = vpop.f32.mrf.mxu0
      %2722 = vmatprep.mubr.bf16.mxu0 0
      %2723 = vmatmul.mubr.bf16.gmra.mxu0 %v2657
      %v2724 = vpop.f32.mrf.mxu0
      %v2725 = vadd.f32 %v1279, %v2724
      %v2726 = vpop.f32.mrf.mxu0
      %v2727 = vpop.f32.mrf.mxu0
      %v2728 = vadd.f32 %v1280, %v2727
      %v2729 = vpop.f32.mrf.mxu0
      %2730 = vmatprep.mubr.bf16.mxu0 0
      %2731 = vmatmul.mubr.bf16.gmra.mxu0 %v2660
      %v2732 = vpop.f32.mrf.mxu0
      %v2733 = vadd.f32 %v1281, %v2732
      %v2734 = vpop.f32.mrf.mxu0
      %v2735 = vpop.f32.mrf.mxu0
      %v2736 = vadd.f32 %v1282, %v2735
      %v2737 = vpop.f32.mrf.mxu0
      %2738 = vdwg.mxu0
      %2739 = vrot.lane.b32.xlu0 %v1244, 96
      %v2740 = vpop.permute.xlu0 %2739
      %2741 = vrot.lane.b32.xlu0 %v1246, 96
      %v2742 = vpop.permute.xlu0 %2741
      %2743 = vrot.lane.b32.xlu0 %v1248, 96
      %v2744 = vpop.permute.xlu0 %2743
      %2745 = vrot.lane.b32.xlu0 %v1250, 96
      %v2746 = vpop.permute.xlu0 %2745
      %v2748 = vsel %vm1291, %v1244, 0
      %v2751 = vsel %vm1291, %v1246, 0
      %v2754 = vsel %vm1291, %v1248, 0
      %v2757 = vsel %vm1291, %v1250, 0
      %v2760 = vsel %vm1291, %v2740, 0
      %v2763 = vsel %vm1291, %v2742, 0
      %v2766 = vsel %vm1291, %v2744, 0
      %v2769 = vsel %vm1291, %v2746, 0
      %2771 = vmatprep.subr.bf16.mxu0 0
      %2772 = vmatpush1.bf16.xpose.msra.mxu0 0
      %2773 = vmatprep.subr.bf16.mxu0 0
      %2774 = vmatpush1.bf16.xpose.msra.mxu0 0
      %2775 = vmatprep.subr.bf16.mxu0 0
      %2776 = vmatpush1.bf16.xpose.msra.mxu0 0
      %2777 = vmatprep.subr.bf16.mxu0 0
      %2778 = vmatpush1.bf16.xpose.msra.mxu0 0
      %2779 = vmatprep.subr.bf16.mxu0 0
      %2780 = vmatpush1.bf16.xpose.msra.mxu0 %v2769
      %2781 = vmatprep.subr.bf16.mxu0 0
      %2782 = vmatpush1.bf16.xpose.msra.mxu0 %v2766
      %2783 = vmatprep.subr.bf16.mxu0 0
      %2784 = vmatpush1.bf16.xpose.msra.mxu0 %v2763
      %2785 = vmatprep.subr.bf16.mxu0 0
      %2786 = vmatpush1.bf16.xpose.msra.mxu0 %v2760
      %2787 = vmatprep.subr.bf16.mxu0 0
      %2788 = vmatpush2.bf16.xpose.msra.mxu0 0
      %2789 = vmatprep.subr.bf16.mxu0 0
      %2790 = vmatpush2.bf16.xpose.msra.mxu0 0
      %2791 = vmatprep.subr.bf16.mxu0 0
      %2792 = vmatpush2.bf16.xpose.msra.mxu0 0
      %2793 = vmatprep.subr.bf16.mxu0 0
      %2794 = vmatpush2.bf16.xpose.msra.mxu0 0
      %2795 = vmatprep.subr.bf16.mxu0 0
      %2796 = vmatpush2.bf16.xpose.msra.mxu0 0
      %2797 = vmatprep.subr.bf16.mxu0 0
      %2798 = vmatpush2.bf16.xpose.msra.mxu0 0
      %2799 = vmatprep.subr.bf16.mxu0 0
      %2800 = vmatpush2.bf16.xpose.msra.mxu0 0
      %2801 = vmatprep.subr.bf16.mxu0 0
      %2802 = vmatpush2.bf16.xpose.msra.mxu0 0
      %2803 = vmatprep.mubr.bf16.mxu0 0
      %2804 = vmatmul.mubr.bf16.gmra.mxu0 %v2748
      %v2805 = vpop.f32.mrf.mxu0
      %v2806 = vadd.f32 %v1275, %v2805
      %v2807 = vpop.f32.mrf.mxu0
      %v2808 = vpop.f32.mrf.mxu0
      %v2809 = vadd.f32 %v1276, %v2808
      %v2810 = vpop.f32.mrf.mxu0
      %2811 = vmatprep.mubr.bf16.mxu0 0
      %2812 = vmatmul.mubr.bf16.gmra.mxu0 %v2751
      %v2813 = vpop.f32.mrf.mxu0
      %v2814 = vadd.f32 %v1277, %v2813
      %v2815 = vpop.f32.mrf.mxu0
      %v2816 = vpop.f32.mrf.mxu0
      %v2817 = vadd.f32 %v1278, %v2816
      %v2818 = vpop.f32.mrf.mxu0
      %2819 = vmatprep.mubr.bf16.mxu0 0
      %2820 = vmatmul.mubr.bf16.gmra.mxu0 %v2754
      %v2821 = vpop.f32.mrf.mxu0
      %v2822 = vadd.f32 %v1279, %v2821
      %v2823 = vpop.f32.mrf.mxu0
      %v2824 = vpop.f32.mrf.mxu0
      %v2825 = vadd.f32 %v1280, %v2824
      %v2826 = vpop.f32.mrf.mxu0
      %2827 = vmatprep.mubr.bf16.mxu0 0
      %2828 = vmatmul.mubr.bf16.gmra.mxu0 %v2757
      %v2829 = vpop.f32.mrf.mxu0
      %v2830 = vadd.f32 %v1281, %v2829
      %v2831 = vpop.f32.mrf.mxu0
      %v2832 = vpop.f32.mrf.mxu0
      %v2833 = vadd.f32 %v1282, %v2832
      %v2834 = vpop.f32.mrf.mxu0
      %2835 = vdwg.mxu0
      %vm2836 = vcmask 523264
      %v2837 = vsel %vm2836, %v1351, -inf
      %2838 = vmax.xlane.f32.xlu0 %v2837
      %v2839 = vpop.xlane.xlu0 %2838
      %v2840 = vsel %vm2836, %v1354, -inf
      %2841 = vmax.xlane.f32.xlu0 %v2840
      %v2842 = vpop.xlane.xlu0 %2841
      %v2843 = vsel %vm2836, %v1359, -inf
      %2844 = vmax.xlane.f32.xlu0 %v2843
      %v2845 = vpop.xlane.xlu0 %2844
      %v2846 = vsel %vm2836, %v1362, -inf
      %2847 = vmax.xlane.f32.xlu0 %v2846
      %v2848 = vpop.xlane.xlu0 %2847
      %v2849 = vsel %vm2836, %v1367, -inf
      %2850 = vmax.xlane.f32.xlu0 %v2849
      %v2851 = vpop.xlane.xlu0 %2850
      %v2852 = vsel %vm2836, %v1370, -inf
      %2853 = vmax.xlane.f32.xlu0 %v2852
      %v2854 = vpop.xlane.xlu0 %2853
      %v2855 = vsel %vm2836, %v1375, -inf
      %2856 = vmax.xlane.f32.xlu0 %v2855
      %v2857 = vpop.xlane.xlu0 %2856
      %v2858 = vsel %vm2836, %v1378, -inf
      %2859 = vmax.xlane.f32.xlu0 %v2858
      %v2860 = vpop.xlane.xlu0 %2859
      %v2861 = vsel %vm2836, %v1448, -inf
      %2862 = vmax.xlane.f32.xlu0 %v2861
      %v2863 = vpop.xlane.xlu0 %2862
      %v2864 = vsel %vm2836, %v1451, -inf
      %2865 = vmax.xlane.f32.xlu0 %v2864
      %v2866 = vpop.xlane.xlu0 %2865
      %v2867 = vsel %vm2836, %v1456, -inf
      %2868 = vmax.xlane.f32.xlu0 %v2867
      %v2869 = vpop.xlane.xlu0 %2868
      %v2870 = vsel %vm2836, %v1459, -inf
      %2871 = vmax.xlane.f32.xlu0 %v2870
      %v2872 = vpop.xlane.xlu0 %2871
      %v2873 = vsel %vm2836, %v1464, -inf
      %2874 = vmax.xlane.f32.xlu0 %v2873
      %v2875 = vpop.xlane.xlu0 %2874
      %v2876 = vsel %vm2836, %v1467, -inf
      %2877 = vmax.xlane.f32.xlu0 %v2876
      %v2878 = vpop.xlane.xlu0 %2877
      %v2879 = vsel %vm2836, %v1472, -inf
      %2880 = vmax.xlane.f32.xlu0 %v2879
      %v2881 = vpop.xlane.xlu0 %2880
      %v2882 = vsel %vm2836, %v1475, -inf
      %2883 = vmax.xlane.f32.xlu0 %v2882
      %v2884 = vpop.xlane.xlu0 %2883
      %v2885 = vsel %vm2836, %v1545, -inf
      %2886 = vmax.xlane.f32.xlu0 %v2885
      %v2887 = vpop.xlane.xlu0 %2886
      %v2888 = vsel %vm2836, %v1548, -inf
      %2889 = vmax.xlane.f32.xlu0 %v2888
      %v2890 = vpop.xlane.xlu0 %2889
      %v2891 = vsel %vm2836, %v1553, -inf
      %2892 = vmax.xlane.f32.xlu0 %v2891
      %v2893 = vpop.xlane.xlu0 %2892
      %v2894 = vsel %vm2836, %v1556, -inf
      %2895 = vmax.xlane.f32.xlu0 %v2894
      %v2896 = vpop.xlane.xlu0 %2895
      %v2897 = vsel %vm2836, %v1561, -inf
      %2898 = vmax.xlane.f32.xlu0 %v2897
      %v2899 = vpop.xlane.xlu0 %2898
      %v2900 = vsel %vm2836, %v1564, -inf
      %2901 = vmax.xlane.f32.xlu0 %v2900
      %v2902 = vpop.xlane.xlu0 %2901
      %v2903 = vsel %vm2836, %v1569, -inf
      %2904 = vmax.xlane.f32.xlu0 %v2903
      %v2905 = vpop.xlane.xlu0 %2904
      %v2906 = vsel %vm2836, %v1572, -inf
      %2907 = vmax.xlane.f32.xlu0 %v2906
      %v2908 = vpop.xlane.xlu0 %2907
      %v2909 = vsel %vm2836, %v1642, -inf
      %2910 = vmax.xlane.f32.xlu0 %v2909
      %v2911 = vpop.xlane.xlu0 %2910
      %v2912 = vsel %vm2836, %v1645, -inf
      %2913 = vmax.xlane.f32.xlu0 %v2912
      %v2914 = vpop.xlane.xlu0 %2913
      %v2915 = vsel %vm2836, %v1650, -inf
      %2916 = vmax.xlane.f32.xlu0 %v2915
      %v2917 = vpop.xlane.xlu0 %2916
      %v2918 = vsel %vm2836, %v1653, -inf
      %2919 = vmax.xlane.f32.xlu0 %v2918
      %v2920 = vpop.xlane.xlu0 %2919
      %v2921 = vsel %vm2836, %v1658, -inf
      %2922 = vmax.xlane.f32.xlu0 %v2921
      %v2923 = vpop.xlane.xlu0 %2922
      %v2924 = vsel %vm2836, %v1661, -inf
      %2925 = vmax.xlane.f32.xlu0 %v2924
      %v2926 = vpop.xlane.xlu0 %2925
      %v2927 = vsel %vm2836, %v1666, -inf
      %2928 = vmax.xlane.f32.xlu0 %v2927
      %v2929 = vpop.xlane.xlu0 %2928
      %v2930 = vsel %vm2836, %v1669, -inf
      %2931 = vmax.xlane.f32.xlu0 %v2930
      %v2932 = vpop.xlane.xlu0 %2931
      %v2933 = vsel %vm2836, %v1739, -inf
      %2934 = vmax.xlane.f32.xlu0 %v2933
      %v2935 = vpop.xlane.xlu0 %2934
      %v2936 = vsel %vm2836, %v1742, -inf
      %2937 = vmax.xlane.f32.xlu0 %v2936
      %v2938 = vpop.xlane.xlu0 %2937
      %v2939 = vsel %vm2836, %v1747, -inf
      %2940 = vmax.xlane.f32.xlu0 %v2939
      %v2941 = vpop.xlane.xlu0 %2940
      %v2942 = vsel %vm2836, %v1750, -inf
      %2943 = vmax.xlane.f32.xlu0 %v2942
      %v2944 = vpop.xlane.xlu0 %2943
      %v2945 = vsel %vm2836, %v1755, -inf
      %2946 = vmax.xlane.f32.xlu0 %v2945
      %v2947 = vpop.xlane.xlu0 %2946
      %v2948 = vsel %vm2836, %v1758, -inf
      %2949 = vmax.xlane.f32.xlu0 %v2948
      %v2950 = vpop.xlane.xlu0 %2949
      %v2951 = vsel %vm2836, %v1763, -inf
      %2952 = vmax.xlane.f32.xlu0 %v2951
      %v2953 = vpop.xlane.xlu0 %2952
      %v2954 = vsel %vm2836, %v1766, -inf
      %2955 = vmax.xlane.f32.xlu0 %v2954
      %v2956 = vpop.xlane.xlu0 %2955
      %v2957 = vsel %vm2836, %v1836, -inf
      %2958 = vmax.xlane.f32.xlu0 %v2957
      %v2959 = vpop.xlane.xlu0 %2958
      %v2960 = vsel %vm2836, %v1839, -inf
      %2961 = vmax.xlane.f32.xlu0 %v2960
      %v2962 = vpop.xlane.xlu0 %2961
      %v2963 = vsel %vm2836, %v1844, -inf
      %2964 = vmax.xlane.f32.xlu0 %v2963
      %v2965 = vpop.xlane.xlu0 %2964
      %v2966 = vsel %vm2836, %v1847, -inf
      %2967 = vmax.xlane.f32.xlu0 %v2966
      %v2968 = vpop.xlane.xlu0 %2967
      %v2969 = vsel %vm2836, %v1852, -inf
      %2970 = vmax.xlane.f32.xlu0 %v2969
      %v2971 = vpop.xlane.xlu0 %2970
      %v2972 = vsel %vm2836, %v1855, -inf
      %2973 = vmax.xlane.f32.xlu0 %v2972
      %v2974 = vpop.xlane.xlu0 %2973
      %v2975 = vsel %vm2836, %v1860, -inf
      %2976 = vmax.xlane.f32.xlu0 %v2975
      %v2977 = vpop.xlane.xlu0 %2976
      %v2978 = vsel %vm2836, %v1863, -inf
      %2979 = vmax.xlane.f32.xlu0 %v2978
      %v2980 = vpop.xlane.xlu0 %2979
      %v2981 = vsel %vm2836, %v1933, -inf
      %2982 = vmax.xlane.f32.xlu0 %v2981
      %v2983 = vpop.xlane.xlu0 %2982
      %v2984 = vsel %vm2836, %v1936, -inf
      %2985 = vmax.xlane.f32.xlu0 %v2984
      %v2986 = vpop.xlane.xlu0 %2985
      %v2987 = vsel %vm2836, %v1941, -inf
      %2988 = vmax.xlane.f32.xlu0 %v2987
      %v2989 = vpop.xlane.xlu0 %2988
      %v2990 = vsel %vm2836, %v1944, -inf
      %2991 = vmax.xlane.f32.xlu0 %v2990
      %v2992 = vpop.xlane.xlu0 %2991
      %v2993 = vsel %vm2836, %v1949, -inf
      %2994 = vmax.xlane.f32.xlu0 %v2993
      %v2995 = vpop.xlane.xlu0 %2994
      %v2996 = vsel %vm2836, %v1952, -inf
      %2997 = vmax.xlane.f32.xlu0 %v2996
      %v2998 = vpop.xlane.xlu0 %2997
      %v2999 = vsel %vm2836, %v1957, -inf
      %3000 = vmax.xlane.f32.xlu0 %v2999
      %v3001 = vpop.xlane.xlu0 %3000
      %v3002 = vsel %vm2836, %v1960, -inf
      %3003 = vmax.xlane.f32.xlu0 %v3002
      %v3004 = vpop.xlane.xlu0 %3003
      %v3005 = vsel %vm2836, %v2030, -inf
      %3006 = vmax.xlane.f32.xlu0 %v3005
      %v3007 = vpop.xlane.xlu0 %3006
      %v3008 = vsel %vm2836, %v2033, -inf
      %3009 = vmax.xlane.f32.xlu0 %v3008
      %v3010 = vpop.xlane.xlu0 %3009
      %v3011 = vsel %vm2836, %v2038, -inf
      %3012 = vmax.xlane.f32.xlu0 %v3011
      %v3013 = vpop.xlane.xlu0 %3012
      %v3014 = vsel %vm2836, %v2041, -inf
      %3015 = vmax.xlane.f32.xlu0 %v3014
      %v3016 = vpop.xlane.xlu0 %3015
      %v3017 = vsel %vm2836, %v2046, -inf
      %3018 = vmax.xlane.f32.xlu0 %v3017
      %v3019 = vpop.xlane.xlu0 %3018
      %v3020 = vsel %vm2836, %v2049, -inf
      %3021 = vmax.xlane.f32.xlu0 %v3020
      %v3022 = vpop.xlane.xlu0 %3021
      %v3023 = vsel %vm2836, %v2054, -inf
      %3024 = vmax.xlane.f32.xlu0 %v3023
      %v3025 = vpop.xlane.xlu0 %3024
      %v3026 = vsel %vm2836, %v2057, -inf
      %3027 = vmax.xlane.f32.xlu0 %v3026
      %v3028 = vpop.xlane.xlu0 %3027
      %v3029 = vsel %vm2836, %v2127, -inf
      %3030 = vmax.xlane.f32.xlu0 %v3029
      %v3031 = vpop.xlane.xlu0 %3030
      %v3032 = vsel %vm2836, %v2130, -inf
      %3033 = vmax.xlane.f32.xlu0 %v3032
      %v3034 = vpop.xlane.xlu0 %3033
      %v3035 = vsel %vm2836, %v2135, -inf
      %3036 = vmax.xlane.f32.xlu0 %v3035
      %v3037 = vpop.xlane.xlu0 %3036
      %v3038 = vsel %vm2836, %v2138, -inf
      %3039 = vmax.xlane.f32.xlu0 %v3038
      %v3040 = vpop.xlane.xlu0 %3039
      %v3041 = vsel %vm2836, %v2143, -inf
      %3042 = vmax.xlane.f32.xlu0 %v3041
      %v3043 = vpop.xlane.xlu0 %3042
      %v3044 = vsel %vm2836, %v2146, -inf
      %3045 = vmax.xlane.f32.xlu0 %v3044
      %v3046 = vpop.xlane.xlu0 %3045
      %v3047 = vsel %vm2836, %v2151, -inf
      %3048 = vmax.xlane.f32.xlu0 %v3047
      %v3049 = vpop.xlane.xlu0 %3048
      %v3050 = vsel %vm2836, %v2154, -inf
      %3051 = vmax.xlane.f32.xlu0 %v3050
      %v3052 = vpop.xlane.xlu0 %3051
      %v3053 = vsel %vm2836, %v2224, -inf
      %3054 = vmax.xlane.f32.xlu0 %v3053
      %v3055 = vpop.xlane.xlu0 %3054
      %v3056 = vsel %vm2836, %v2227, -inf
      %3057 = vmax.xlane.f32.xlu0 %v3056
      %v3058 = vpop.xlane.xlu0 %3057
      %v3059 = vsel %vm2836, %v2232, -inf
      %3060 = vmax.xlane.f32.xlu0 %v3059
      %v3061 = vpop.xlane.xlu0 %3060
      %v3062 = vsel %vm2836, %v2235, -inf
      %3063 = vmax.xlane.f32.xlu0 %v3062
      %v3064 = vpop.xlane.xlu0 %3063
      %v3065 = vsel %vm2836, %v2240, -inf
      %3066 = vmax.xlane.f32.xlu0 %v3065
      %v3067 = vpop.xlane.xlu0 %3066
      %v3068 = vsel %vm2836, %v2243, -inf
      %3069 = vmax.xlane.f32.xlu0 %v3068
      %v3070 = vpop.xlane.xlu0 %3069
      %v3071 = vsel %vm2836, %v2248, -inf
      %3072 = vmax.xlane.f32.xlu0 %v3071
      %v3073 = vpop.xlane.xlu0 %3072
      %v3074 = vsel %vm2836, %v2251, -inf
      %3075 = vmax.xlane.f32.xlu0 %v3074
      %v3076 = vpop.xlane.xlu0 %3075
      %v3077 = vsel %vm2836, %v2321, -inf
      %3078 = vmax.xlane.f32.xlu0 %v3077
      %v3079 = vpop.xlane.xlu0 %3078
      %v3080 = vsel %vm2836, %v2324, -inf
      %3081 = vmax.xlane.f32.xlu0 %v3080
      %v3082 = vpop.xlane.xlu0 %3081
      %v3083 = vsel %vm2836, %v2329, -inf
      %3084 = vmax.xlane.f32.xlu0 %v3083
      %v3085 = vpop.xlane.xlu0 %3084
      %v3086 = vsel %vm2836, %v2332, -inf
      %3087 = vmax.xlane.f32.xlu0 %v3086
      %v3088 = vpop.xlane.xlu0 %3087
      %v3089 = vsel %vm2836, %v2337, -inf
      %3090 = vmax.xlane.f32.xlu0 %v3089
      %v3091 = vpop.xlane.xlu0 %3090
      %v3092 = vsel %vm2836, %v2340, -inf
      %3093 = vmax.xlane.f32.xlu0 %v3092
      %v3094 = vpop.xlane.xlu0 %3093
      %v3095 = vsel %vm2836, %v2345, -inf
      %3096 = vmax.xlane.f32.xlu0 %v3095
      %v3097 = vpop.xlane.xlu0 %3096
      %v3098 = vsel %vm2836, %v2348, -inf
      %3099 = vmax.xlane.f32.xlu0 %v3098
      %v3100 = vpop.xlane.xlu0 %3099
      %v3101 = vsel %vm2836, %v2418, -inf
      %3102 = vmax.xlane.f32.xlu0 %v3101
      %v3103 = vpop.xlane.xlu0 %3102
      %v3104 = vsel %vm2836, %v2421, -inf
      %3105 = vmax.xlane.f32.xlu0 %v3104
      %v3106 = vpop.xlane.xlu0 %3105
      %v3107 = vsel %vm2836, %v2426, -inf
      %3108 = vmax.xlane.f32.xlu0 %v3107
      %v3109 = vpop.xlane.xlu0 %3108
      %v3110 = vsel %vm2836, %v2429, -inf
      %3111 = vmax.xlane.f32.xlu0 %v3110
      %v3112 = vpop.xlane.xlu0 %3111
      %v3113 = vsel %vm2836, %v2434, -inf
      %3114 = vmax.xlane.f32.xlu0 %v3113
      %v3115 = vpop.xlane.xlu0 %3114
      %v3116 = vsel %vm2836, %v2437, -inf
      %3117 = vmax.xlane.f32.xlu0 %v3116
      %v3118 = vpop.xlane.xlu0 %3117
      %v3119 = vsel %vm2836, %v2442, -inf
      %3120 = vmax.xlane.f32.xlu0 %v3119
      %v3121 = vpop.xlane.xlu0 %3120
      %v3122 = vsel %vm2836, %v2445, -inf
      %3123 = vmax.xlane.f32.xlu0 %v3122
      %v3124 = vpop.xlane.xlu0 %3123
      %v3125 = vsel %vm2836, %v2515, -inf
      %3126 = vmax.xlane.f32.xlu0 %v3125
      %v3127 = vpop.xlane.xlu0 %3126
      %v3128 = vsel %vm2836, %v2518, -inf
      %3129 = vmax.xlane.f32.xlu0 %v3128
      %v3130 = vpop.xlane.xlu0 %3129
      %v3131 = vsel %vm2836, %v2523, -inf
      %3132 = vmax.xlane.f32.xlu0 %v3131
      %v3133 = vpop.xlane.xlu0 %3132
      %v3134 = vsel %vm2836, %v2526, -inf
      %3135 = vmax.xlane.f32.xlu0 %v3134
      %v3136 = vpop.xlane.xlu0 %3135
      %v3137 = vsel %vm2836, %v2531, -inf
      %3138 = vmax.xlane.f32.xlu0 %v3137
      %v3139 = vpop.xlane.xlu0 %3138
      %v3140 = vsel %vm2836, %v2534, -inf
      %3141 = vmax.xlane.f32.xlu0 %v3140
      %v3142 = vpop.xlane.xlu0 %3141
      %v3143 = vsel %vm2836, %v2539, -inf
      %3144 = vmax.xlane.f32.xlu0 %v3143
      %v3145 = vpop.xlane.xlu0 %3144
      %v3146 = vsel %vm2836, %v2542, -inf
      %3147 = vmax.xlane.f32.xlu0 %v3146
      %v3148 = vpop.xlane.xlu0 %3147
      %v3149 = vsel %vm2836, %v2612, -inf
      %3150 = vmax.xlane.f32.xlu0 %v3149
      %v3151 = vpop.xlane.xlu0 %3150
      %v3152 = vsel %vm2836, %v2615, -inf
      %3153 = vmax.xlane.f32.xlu0 %v3152
      %v3154 = vpop.xlane.xlu0 %3153
      %v3155 = vsel %vm2836, %v2620, -inf
      %3156 = vmax.xlane.f32.xlu0 %v3155
      %v3157 = vpop.xlane.xlu0 %3156
      %v3158 = vsel %vm2836, %v2623, -inf
      %3159 = vmax.xlane.f32.xlu0 %v3158
      %v3160 = vpop.xlane.xlu0 %3159
      %v3161 = vsel %vm2836, %v2628, -inf
      %3162 = vmax.xlane.f32.xlu0 %v3161
      %v3163 = vpop.xlane.xlu0 %3162
      %v3164 = vsel %vm2836, %v2631, -inf
      %3165 = vmax.xlane.f32.xlu0 %v3164
      %v3166 = vpop.xlane.xlu0 %3165
      %v3167 = vsel %vm2836, %v2636, -inf
      %3168 = vmax.xlane.f32.xlu0 %v3167
      %v3169 = vpop.xlane.xlu0 %3168
      %v3170 = vsel %vm2836, %v2639, -inf
      %3171 = vmax.xlane.f32.xlu0 %v3170
      %v3172 = vpop.xlane.xlu0 %3171
      %v3173 = vsel %vm2836, %v2709, -inf
      %3174 = vmax.xlane.f32.xlu0 %v3173
      %v3175 = vpop.xlane.xlu0 %3174
      %v3176 = vsel %vm2836, %v2712, -inf
      %3177 = vmax.xlane.f32.xlu0 %v3176
      %v3178 = vpop.xlane.xlu0 %3177
      %v3179 = vsel %vm2836, %v2717, -inf
      %3180 = vmax.xlane.f32.xlu0 %v3179
      %v3181 = vpop.xlane.xlu0 %3180
      %v3182 = vsel %vm2836, %v2720, -inf
      %3183 = vmax.xlane.f32.xlu0 %v3182
      %v3184 = vpop.xlane.xlu0 %3183
      %v3185 = vsel %vm2836, %v2725, -inf
      %3186 = vmax.xlane.f32.xlu0 %v3185
      %v3187 = vpop.xlane.xlu0 %3186
      %v3188 = vsel %vm2836, %v2728, -inf
      %3189 = vmax.xlane.f32.xlu0 %v3188
      %v3190 = vpop.xlane.xlu0 %3189
      %v3191 = vsel %vm2836, %v2733, -inf
      %3192 = vmax.xlane.f32.xlu0 %v3191
      %v3193 = vpop.xlane.xlu0 %3192
      %v3194 = vsel %vm2836, %v2736, -inf
      %3195 = vmax.xlane.f32.xlu0 %v3194
      %v3196 = vpop.xlane.xlu0 %3195
      %v3197 = vsel %vm2836, %v2806, -inf
      %3198 = vmax.xlane.f32.xlu0 %v3197
      %v3199 = vpop.xlane.xlu0 %3198
      %v3200 = vsel %vm2836, %v2809, -inf
      %3201 = vmax.xlane.f32.xlu0 %v3200
      %v3202 = vpop.xlane.xlu0 %3201
      %v3203 = vsel %vm2836, %v2814, -inf
      %3204 = vmax.xlane.f32.xlu0 %v3203
      %v3205 = vpop.xlane.xlu0 %3204
      %v3206 = vsel %vm2836, %v2817, -inf
      %3207 = vmax.xlane.f32.xlu0 %v3206
      %v3208 = vpop.xlane.xlu0 %3207
      %v3209 = vsel %vm2836, %v2822, -inf
      %3210 = vmax.xlane.f32.xlu0 %v3209
      %v3211 = vpop.xlane.xlu0 %3210
      %v3212 = vsel %vm2836, %v2825, -inf
      %3213 = vmax.xlane.f32.xlu0 %v3212
      %v3214 = vpop.xlane.xlu0 %3213
      %v3215 = vsel %vm2836, %v2830, -inf
      %3216 = vmax.xlane.f32.xlu0 %v3215
      %v3217 = vpop.xlane.xlu0 %3216
      %v3218 = vsel %vm2836, %v2833, -inf
      %3219 = vmax.xlane.f32.xlu0 %v3218
      %v3220 = vpop.xlane.xlu0 %3219
      %v3221 = vsub.f32 %v1351, %v2839
      %v3222 = vsub.f32 %v1354, %v2842
      %v3223 = vsub.f32 %v1359, %v2845
      %v3224 = vsub.f32 %v1362, %v2848
      %v3225 = vsub.f32 %v1367, %v2851
      %v3226 = vsub.f32 %v1370, %v2854
      %v3227 = vsub.f32 %v1375, %v2857
      %v3228 = vsub.f32 %v1378, %v2860
      %v3229 = vsub.f32 %v1448, %v2863
      %v3230 = vsub.f32 %v1451, %v2866
      %v3231 = vsub.f32 %v1456, %v2869
      %v3232 = vsub.f32 %v1459, %v2872
      %v3233 = vsub.f32 %v1464, %v2875
      %v3234 = vsub.f32 %v1467, %v2878
      %v3235 = vsub.f32 %v1472, %v2881
      %v3236 = vsub.f32 %v1475, %v2884
      %v3237 = vsub.f32 %v1545, %v2887
      %v3238 = vsub.f32 %v1548, %v2890
      %v3239 = vsub.f32 %v1553, %v2893
      %v3240 = vsub.f32 %v1556, %v2896
      %v3241 = vsub.f32 %v1561, %v2899
      %v3242 = vsub.f32 %v1564, %v2902
      %v3243 = vsub.f32 %v1569, %v2905
      %v3244 = vsub.f32 %v1572, %v2908
      %v3245 = vsub.f32 %v1642, %v2911
      %v3246 = vsub.f32 %v1645, %v2914
      %v3247 = vsub.f32 %v1650, %v2917
      %v3248 = vsub.f32 %v1653, %v2920
      %v3249 = vsub.f32 %v1658, %v2923
      %v3250 = vsub.f32 %v1661, %v2926
      %v3251 = vsub.f32 %v1666, %v2929
      %v3252 = vsub.f32 %v1669, %v2932
      %v3253 = vsub.f32 %v1739, %v2935
      %v3254 = vsub.f32 %v1742, %v2938
      %v3255 = vsub.f32 %v1747, %v2941
      %v3256 = vsub.f32 %v1750, %v2944
      %v3257 = vsub.f32 %v1755, %v2947
      %v3258 = vsub.f32 %v1758, %v2950
      %v3259 = vsub.f32 %v1763, %v2953
      %v3260 = vsub.f32 %v1766, %v2956
      %v3261 = vsub.f32 %v1836, %v2959
      %v3262 = vsub.f32 %v1839, %v2962
      %v3263 = vsub.f32 %v1844, %v2965
      %v3264 = vsub.f32 %v1847, %v2968
      %v3265 = vsub.f32 %v1852, %v2971
      %v3266 = vsub.f32 %v1855, %v2974
      %v3267 = vsub.f32 %v1860, %v2977
      %v3268 = vsub.f32 %v1863, %v2980
      %v3269 = vsub.f32 %v1933, %v2983
      %v3270 = vsub.f32 %v1936, %v2986
      %v3271 = vsub.f32 %v1941, %v2989
      %v3272 = vsub.f32 %v1944, %v2992
      %v3273 = vsub.f32 %v1949, %v2995
      %v3274 = vsub.f32 %v1952, %v2998
      %v3275 = vsub.f32 %v1957, %v3001
      %v3276 = vsub.f32 %v1960, %v3004
      %v3277 = vsub.f32 %v2030, %v3007
      %v3278 = vsub.f32 %v2033, %v3010
      %v3279 = vsub.f32 %v2038, %v3013
      %v3280 = vsub.f32 %v2041, %v3016
      %v3281 = vsub.f32 %v2046, %v3019
      %v3282 = vsub.f32 %v2049, %v3022
      %v3283 = vsub.f32 %v2054, %v3025
      %v3284 = vsub.f32 %v2057, %v3028
      %v3285 = vsub.f32 %v2127, %v3031
      %v3286 = vsub.f32 %v2130, %v3034
      %v3287 = vsub.f32 %v2135, %v3037
      %v3288 = vsub.f32 %v2138, %v3040
      %v3289 = vsub.f32 %v2143, %v3043
      %v3290 = vsub.f32 %v2146, %v3046
      %v3291 = vsub.f32 %v2151, %v3049
      %v3292 = vsub.f32 %v2154, %v3052
      %v3293 = vsub.f32 %v2224, %v3055
      %v3294 = vsub.f32 %v2227, %v3058
      %v3295 = vsub.f32 %v2232, %v3061
      %v3296 = vsub.f32 %v2235, %v3064
      %v3297 = vsub.f32 %v2240, %v3067
      %v3298 = vsub.f32 %v2243, %v3070
      %v3299 = vsub.f32 %v2248, %v3073
      %v3300 = vsub.f32 %v2251, %v3076
      %v3301 = vsub.f32 %v2321, %v3079
      %v3302 = vsub.f32 %v2324, %v3082
      %v3303 = vsub.f32 %v2329, %v3085
      %v3304 = vsub.f32 %v2332, %v3088
      %v3305 = vsub.f32 %v2337, %v3091
      %v3306 = vsub.f32 %v2340, %v3094
      %v3307 = vsub.f32 %v2345, %v3097
      %v3308 = vsub.f32 %v2348, %v3100
      %v3309 = vsub.f32 %v2418, %v3103
      %v3310 = vsub.f32 %v2421, %v3106
      %v3311 = vsub.f32 %v2426, %v3109
      %v3312 = vsub.f32 %v2429, %v3112
      %v3313 = vsub.f32 %v2434, %v3115
      %v3314 = vsub.f32 %v2437, %v3118
      %v3315 = vsub.f32 %v2442, %v3121
      %v3316 = vsub.f32 %v2445, %v3124
      %v3317 = vsub.f32 %v2515, %v3127
      %v3318 = vsub.f32 %v2518, %v3130
      %v3319 = vsub.f32 %v2523, %v3133
      %v3320 = vsub.f32 %v2526, %v3136
      %v3321 = vsub.f32 %v2531, %v3139
      %v3322 = vsub.f32 %v2534, %v3142
      %v3323 = vsub.f32 %v2539, %v3145
      %v3324 = vsub.f32 %v2542, %v3148
      %v3325 = vsub.f32 %v2612, %v3151
      %v3326 = vsub.f32 %v2615, %v3154
      %v3327 = vsub.f32 %v2620, %v3157
      %v3328 = vsub.f32 %v2623, %v3160
      %v3329 = vsub.f32 %v2628, %v3163
      %v3330 = vsub.f32 %v2631, %v3166
      %v3331 = vsub.f32 %v2636, %v3169
      %v3332 = vsub.f32 %v2639, %v3172
      %v3333 = vsub.f32 %v2709, %v3175
      %v3334 = vsub.f32 %v2712, %v3178
      %v3335 = vsub.f32 %v2717, %v3181
      %v3336 = vsub.f32 %v2720, %v3184
      %v3337 = vsub.f32 %v2725, %v3187
      %v3338 = vsub.f32 %v2728, %v3190
      %v3339 = vsub.f32 %v2733, %v3193
      %v3340 = vsub.f32 %v2736, %v3196
      %v3341 = vsub.f32 %v2806, %v3199
      %v3342 = vsub.f32 %v2809, %v3202
      %v3343 = vsub.f32 %v2814, %v3205
      %v3344 = vsub.f32 %v2817, %v3208
      %v3345 = vsub.f32 %v2822, %v3211
      %v3346 = vsub.f32 %v2825, %v3214
      %v3347 = vsub.f32 %v2830, %v3217
      %v3348 = vsub.f32 %v2833, %v3220
      %v3349 = vmul.f32 %v3221, 1.442695
      %v3350 = vpow.pop %v3349
      %v3351 = vmul.f32 %v3222, 1.442695
      %v3352 = vpow.pop %v3351
      %v3353 = vmul.f32 %v3223, 1.442695
      %v3354 = vpow.pop %v3353
      %v3355 = vmul.f32 %v3224, 1.442695
      %v3356 = vpow.pop %v3355
      %v3357 = vmul.f32 %v3225, 1.442695
      %v3358 = vpow.pop %v3357
      %v3359 = vmul.f32 %v3226, 1.442695
      %v3360 = vpow.pop %v3359
      %v3361 = vmul.f32 %v3227, 1.442695
      %v3362 = vpow.pop %v3361
      %v3363 = vmul.f32 %v3228, 1.442695
      %v3364 = vpow.pop %v3363
      %v3365 = vmul.f32 %v3229, 1.442695
      %v3366 = vpow.pop %v3365
      %v3367 = vmul.f32 %v3230, 1.442695
      %v3368 = vpow.pop %v3367
      %v3369 = vmul.f32 %v3231, 1.442695
      %v3370 = vpow.pop %v3369
      %v3371 = vmul.f32 %v3232, 1.442695
      %v3372 = vpow.pop %v3371
      %v3373 = vmul.f32 %v3233, 1.442695
      %v3374 = vpow.pop %v3373
      %v3375 = vmul.f32 %v3234, 1.442695
      %v3376 = vpow.pop %v3375
      %v3377 = vmul.f32 %v3235, 1.442695
      %v3378 = vpow.pop %v3377
      %v3379 = vmul.f32 %v3236, 1.442695
      %v3380 = vpow.pop %v3379
      %v3381 = vmul.f32 %v3237, 1.442695
      %v3382 = vpow.pop %v3381
      %v3383 = vmul.f32 %v3238, 1.442695
      %v3384 = vpow.pop %v3383
      %v3385 = vmul.f32 %v3239, 1.442695
      %v3386 = vpow.pop %v3385
      %v3387 = vmul.f32 %v3240, 1.442695
      %v3388 = vpow.pop %v3387
      %v3389 = vmul.f32 %v3241, 1.442695
      %v3390 = vpow.pop %v3389
      %v3391 = vmul.f32 %v3242, 1.442695
      %v3392 = vpow.pop %v3391
      %v3393 = vmul.f32 %v3243, 1.442695
      %v3394 = vpow.pop %v3393
      %v3395 = vmul.f32 %v3244, 1.442695
      %v3396 = vpow.pop %v3395
      %v3397 = vmul.f32 %v3245, 1.442695
      %v3398 = vpow.pop %v3397
      %v3399 = vmul.f32 %v3246, 1.442695
      %v3400 = vpow.pop %v3399
      %v3401 = vmul.f32 %v3247, 1.442695
      %v3402 = vpow.pop %v3401
      %v3403 = vmul.f32 %v3248, 1.442695
      %v3404 = vpow.pop %v3403
      %v3405 = vmul.f32 %v3249, 1.442695
      %v3406 = vpow.pop %v3405
      %v3407 = vmul.f32 %v3250, 1.442695
      %v3408 = vpow.pop %v3407
      %v3409 = vmul.f32 %v3251, 1.442695
      %v3410 = vpow.pop %v3409
      %v3411 = vmul.f32 %v3252, 1.442695
      %v3412 = vpow.pop %v3411
      %v3413 = vmul.f32 %v3253, 1.442695
      %v3414 = vpow.pop %v3413
      %v3415 = vmul.f32 %v3254, 1.442695
      %v3416 = vpow.pop %v3415
      %v3417 = vmul.f32 %v3255, 1.442695
      %v3418 = vpow.pop %v3417
      %v3419 = vmul.f32 %v3256, 1.442695
      %v3420 = vpow.pop %v3419
      %v3421 = vmul.f32 %v3257, 1.442695
      %v3422 = vpow.pop %v3421
      %v3423 = vmul.f32 %v3258, 1.442695
      %v3424 = vpow.pop %v3423
      %v3425 = vmul.f32 %v3259, 1.442695
      %v3426 = vpow.pop %v3425
      %v3427 = vmul.f32 %v3260, 1.442695
      %v3428 = vpow.pop %v3427
      %v3429 = vmul.f32 %v3261, 1.442695
      %v3430 = vpow.pop %v3429
      %v3431 = vmul.f32 %v3262, 1.442695
      %v3432 = vpow.pop %v3431
      %v3433 = vmul.f32 %v3263, 1.442695
      %v3434 = vpow.pop %v3433
      %v3435 = vmul.f32 %v3264, 1.442695
      %v3436 = vpow.pop %v3435
      %v3437 = vmul.f32 %v3265, 1.442695
      %v3438 = vpow.pop %v3437
      %v3439 = vmul.f32 %v3266, 1.442695
      %v3440 = vpow.pop %v3439
      %v3441 = vmul.f32 %v3267, 1.442695
      %v3442 = vpow.pop %v3441
      %v3443 = vmul.f32 %v3268, 1.442695
      %v3444 = vpow.pop %v3443
      %v3445 = vmul.f32 %v3269, 1.442695
      %v3446 = vpow.pop %v3445
      %v3447 = vmul.f32 %v3270, 1.442695
      %v3448 = vpow.pop %v3447
      %v3449 = vmul.f32 %v3271, 1.442695
      %v3450 = vpow.pop %v3449
      %v3451 = vmul.f32 %v3272, 1.442695
      %v3452 = vpow.pop %v3451
      %v3453 = vmul.f32 %v3273, 1.442695
      %v3454 = vpow.pop %v3453
      %v3455 = vmul.f32 %v3274, 1.442695
      %v3456 = vpow.pop %v3455
      %v3457 = vmul.f32 %v3275, 1.442695
      %v3458 = vpow.pop %v3457
      %v3459 = vmul.f32 %v3276, 1.442695
      %v3460 = vpow.pop %v3459
      %v3461 = vmul.f32 %v3277, 1.442695
      %v3462 = vpow.pop %v3461
      %v3463 = vmul.f32 %v3278, 1.442695
      %v3464 = vpow.pop %v3463
      %v3465 = vmul.f32 %v3279, 1.442695
      %v3466 = vpow.pop %v3465
      %v3467 = vmul.f32 %v3280, 1.442695
      %v3468 = vpow.pop %v3467
      %v3469 = vmul.f32 %v3281, 1.442695
      %v3470 = vpow.pop %v3469
      %v3471 = vmul.f32 %v3282, 1.442695
      %v3472 = vpow.pop %v3471
      %v3473 = vmul.f32 %v3283, 1.442695
      %v3474 = vpow.pop %v3473
      %v3475 = vmul.f32 %v3284, 1.442695
      %v3476 = vpow.pop %v3475
      %v3477 = vmul.f32 %v3285, 1.442695
      %v3478 = vpow.pop %v3477
      %v3479 = vmul.f32 %v3286, 1.442695
      %v3480 = vpow.pop %v3479
      %v3481 = vmul.f32 %v3287, 1.442695
      %v3482 = vpow.pop %v3481
      %v3483 = vmul.f32 %v3288, 1.442695
      %v3484 = vpow.pop %v3483
      %v3485 = vmul.f32 %v3289, 1.442695
      %v3486 = vpow.pop %v3485
      %v3487 = vmul.f32 %v3290, 1.442695
      %v3488 = vpow.pop %v3487
      %v3489 = vmul.f32 %v3291, 1.442695
      %v3490 = vpow.pop %v3489
      %v3491 = vmul.f32 %v3292, 1.442695
      %v3492 = vpow.pop %v3491
      %v3493 = vmul.f32 %v3293, 1.442695
      %v3494 = vpow.pop %v3493
      %v3495 = vmul.f32 %v3294, 1.442695
      %v3496 = vpow.pop %v3495
      %v3497 = vmul.f32 %v3295, 1.442695
      %v3498 = vpow.pop %v3497
      %v3499 = vmul.f32 %v3296, 1.442695
      %v3500 = vpow.pop %v3499
      %v3501 = vmul.f32 %v3297, 1.442695
      %v3502 = vpow.pop %v3501
      %v3503 = vmul.f32 %v3298, 1.442695
      %v3504 = vpow.pop %v3503
      %v3505 = vmul.f32 %v3299, 1.442695
      %v3506 = vpow.pop %v3505
      %v3507 = vmul.f32 %v3300, 1.442695
      %v3508 = vpow.pop %v3507
      %v3509 = vmul.f32 %v3301, 1.442695
      %v3510 = vpow.pop %v3509
      %v3511 = vmul.f32 %v3302, 1.442695
      %v3512 = vpow.pop %v3511
      %v3513 = vmul.f32 %v3303, 1.442695
      %v3514 = vpow.pop %v3513
      %v3515 = vmul.f32 %v3304, 1.442695
      %v3516 = vpow.pop %v3515
      %v3517 = vmul.f32 %v3305, 1.442695
      %v3518 = vpow.pop %v3517
      %v3519 = vmul.f32 %v3306, 1.442695
      %v3520 = vpow.pop %v3519
      %v3521 = vmul.f32 %v3307, 1.442695
      %v3522 = vpow.pop %v3521
      %v3523 = vmul.f32 %v3308, 1.442695
      %v3524 = vpow.pop %v3523
      %v3525 = vmul.f32 %v3309, 1.442695
      %v3526 = vpow.pop %v3525
      %v3527 = vmul.f32 %v3310, 1.442695
      %v3528 = vpow.pop %v3527
      %v3529 = vmul.f32 %v3311, 1.442695
      %v3530 = vpow.pop %v3529
      %v3531 = vmul.f32 %v3312, 1.442695
      %v3532 = vpow.pop %v3531
      %v3533 = vmul.f32 %v3313, 1.442695
      %v3534 = vpow.pop %v3533
      %v3535 = vmul.f32 %v3314, 1.442695
      %v3536 = vpow.pop %v3535
      %v3537 = vmul.f32 %v3315, 1.442695
      %v3538 = vpow.pop %v3537
      %v3539 = vmul.f32 %v3316, 1.442695
      %v3540 = vpow.pop %v3539
      %v3541 = vmul.f32 %v3317, 1.442695
      %v3542 = vpow.pop %v3541
      %v3543 = vmul.f32 %v3318, 1.442695
      %v3544 = vpow.pop %v3543
      %v3545 = vmul.f32 %v3319, 1.442695
      %v3546 = vpow.pop %v3545
      %v3547 = vmul.f32 %v3320, 1.442695
      %v3548 = vpow.pop %v3547
      %v3549 = vmul.f32 %v3321, 1.442695
      %v3550 = vpow.pop %v3549
      %v3551 = vmul.f32 %v3322, 1.442695
      %v3552 = vpow.pop %v3551
      %v3553 = vmul.f32 %v3323, 1.442695
      %v3554 = vpow.pop %v3553
      %v3555 = vmul.f32 %v3324, 1.442695
      %v3556 = vpow.pop %v3555
      %v3557 = vmul.f32 %v3325, 1.442695
      %v3558 = vpow.pop %v3557
      %v3559 = vmul.f32 %v3326, 1.442695
      %v3560 = vpow.pop %v3559
      %v3561 = vmul.f32 %v3327, 1.442695
      %v3562 = vpow.pop %v3561
      %v3563 = vmul.f32 %v3328, 1.442695
      %v3564 = vpow.pop %v3563
      %v3565 = vmul.f32 %v3329, 1.442695
      %v3566 = vpow.pop %v3565
      %v3567 = vmul.f32 %v3330, 1.442695
      %v3568 = vpow.pop %v3567
      %v3569 = vmul.f32 %v3331, 1.442695
      %v3570 = vpow.pop %v3569
      %v3571 = vmul.f32 %v3332, 1.442695
      %v3572 = vpow.pop %v3571
      %v3573 = vmul.f32 %v3333, 1.442695
      %v3574 = vpow.pop %v3573
      %v3575 = vmul.f32 %v3334, 1.442695
      %v3576 = vpow.pop %v3575
      %v3577 = vmul.f32 %v3335, 1.442695
      %v3578 = vpow.pop %v3577
      %v3579 = vmul.f32 %v3336, 1.442695
      %v3580 = vpow.pop %v3579
      %v3581 = vmul.f32 %v3337, 1.442695
      %v3582 = vpow.pop %v3581
      %v3583 = vmul.f32 %v3338, 1.442695
      %v3584 = vpow.pop %v3583
      %v3585 = vmul.f32 %v3339, 1.442695
      %v3586 = vpow.pop %v3585
      %v3587 = vmul.f32 %v3340, 1.442695
      %v3588 = vpow.pop %v3587
      %v3589 = vmul.f32 %v3341, 1.442695
      %v3590 = vpow.pop %v3589
      %v3591 = vmul.f32 %v3342, 1.442695
      %v3592 = vpow.pop %v3591
      %v3593 = vmul.f32 %v3343, 1.442695
      %v3594 = vpow.pop %v3593
      %v3595 = vmul.f32 %v3344, 1.442695
      %v3596 = vpow.pop %v3595
      %v3597 = vmul.f32 %v3345, 1.442695
      %v3598 = vpow.pop %v3597
      %v3599 = vmul.f32 %v3346, 1.442695
      %v3600 = vpow.pop %v3599
      %v3601 = vmul.f32 %v3347, 1.442695
      %v3602 = vpow.pop %v3601
      %v3603 = vmul.f32 %v3348, 1.442695
      %v3604 = vpow.pop %v3603
      %v3605 = vsel %vm2836, %v3350, 0.0
      %3606 = vadd.xlane.f32.xlu0 %v3605
      %v3607 = vpop.xlane.xlu0 %3606
      %v3608 = vsel %vm2836, %v3352, 0.0
      %3609 = vadd.xlane.f32.xlu0 %v3608
      %v3610 = vpop.xlane.xlu0 %3609
      %v3611 = vsel %vm2836, %v3354, 0.0
      %3612 = vadd.xlane.f32.xlu0 %v3611
      %v3613 = vpop.xlane.xlu0 %3612
      %v3614 = vsel %vm2836, %v3356, 0.0
      %3615 = vadd.xlane.f32.xlu0 %v3614
      %v3616 = vpop.xlane.xlu0 %3615
      %v3617 = vsel %vm2836, %v3358, 0.0
      %3618 = vadd.xlane.f32.xlu0 %v3617
      %v3619 = vpop.xlane.xlu0 %3618
      %v3620 = vsel %vm2836, %v3360, 0.0
      %3621 = vadd.xlane.f32.xlu0 %v3620
      %v3622 = vpop.xlane.xlu0 %3621
      %v3623 = vsel %vm2836, %v3362, 0.0
      %3624 = vadd.xlane.f32.xlu0 %v3623
      %v3625 = vpop.xlane.xlu0 %3624
      %v3626 = vsel %vm2836, %v3364, 0.0
      %3627 = vadd.xlane.f32.xlu0 %v3626
      %v3628 = vpop.xlane.xlu0 %3627
      %v3629 = vsel %vm2836, %v3366, 0.0
      %3630 = vadd.xlane.f32.xlu0 %v3629
      %v3631 = vpop.xlane.xlu0 %3630
      %v3632 = vsel %vm2836, %v3368, 0.0
      %3633 = vadd.xlane.f32.xlu0 %v3632
      %v3634 = vpop.xlane.xlu0 %3633
      %v3635 = vsel %vm2836, %v3370, 0.0
      %3636 = vadd.xlane.f32.xlu0 %v3635
      %v3637 = vpop.xlane.xlu0 %3636
      %v3638 = vsel %vm2836, %v3372, 0.0
      %3639 = vadd.xlane.f32.xlu0 %v3638
      %v3640 = vpop.xlane.xlu0 %3639
      %v3641 = vsel %vm2836, %v3374, 0.0
      %3642 = vadd.xlane.f32.xlu0 %v3641
      %v3643 = vpop.xlane.xlu0 %3642
      %v3644 = vsel %vm2836, %v3376, 0.0
      %3645 = vadd.xlane.f32.xlu0 %v3644
      %v3646 = vpop.xlane.xlu0 %3645
      %v3647 = vsel %vm2836, %v3378, 0.0
      %3648 = vadd.xlane.f32.xlu0 %v3647
      %v3649 = vpop.xlane.xlu0 %3648
      %v3650 = vsel %vm2836, %v3380, 0.0
      %3651 = vadd.xlane.f32.xlu0 %v3650
      %v3652 = vpop.xlane.xlu0 %3651
      %v3653 = vsel %vm2836, %v3382, 0.0
      %3654 = vadd.xlane.f32.xlu0 %v3653
      %v3655 = vpop.xlane.xlu0 %3654
      %v3656 = vsel %vm2836, %v3384, 0.0
      %3657 = vadd.xlane.f32.xlu0 %v3656
      %v3658 = vpop.xlane.xlu0 %3657
      %v3659 = vsel %vm2836, %v3386, 0.0
      %3660 = vadd.xlane.f32.xlu0 %v3659
      %v3661 = vpop.xlane.xlu0 %3660
      %v3662 = vsel %vm2836, %v3388, 0.0
      %3663 = vadd.xlane.f32.xlu0 %v3662
      %v3664 = vpop.xlane.xlu0 %3663
      %v3665 = vsel %vm2836, %v3390, 0.0
      %3666 = vadd.xlane.f32.xlu0 %v3665
      %v3667 = vpop.xlane.xlu0 %3666
      %v3668 = vsel %vm2836, %v3392, 0.0
      %3669 = vadd.xlane.f32.xlu0 %v3668
      %v3670 = vpop.xlane.xlu0 %3669
      %v3671 = vsel %vm2836, %v3394, 0.0
      %3672 = vadd.xlane.f32.xlu0 %v3671
      %v3673 = vpop.xlane.xlu0 %3672
      %v3674 = vsel %vm2836, %v3396, 0.0
      %3675 = vadd.xlane.f32.xlu0 %v3674
      %v3676 = vpop.xlane.xlu0 %3675
      %v3677 = vsel %vm2836, %v3398, 0.0
      %3678 = vadd.xlane.f32.xlu0 %v3677
      %v3679 = vpop.xlane.xlu0 %3678
      %v3680 = vsel %vm2836, %v3400, 0.0
      %3681 = vadd.xlane.f32.xlu0 %v3680
      %v3682 = vpop.xlane.xlu0 %3681
      %v3683 = vsel %vm2836, %v3402, 0.0
      %3684 = vadd.xlane.f32.xlu0 %v3683
      %v3685 = vpop.xlane.xlu0 %3684
      %v3686 = vsel %vm2836, %v3404, 0.0
      %3687 = vadd.xlane.f32.xlu0 %v3686
      %v3688 = vpop.xlane.xlu0 %3687
      %v3689 = vsel %vm2836, %v3406, 0.0
      %3690 = vadd.xlane.f32.xlu0 %v3689
      %v3691 = vpop.xlane.xlu0 %3690
      %v3692 = vsel %vm2836, %v3408, 0.0
      %3693 = vadd.xlane.f32.xlu0 %v3692
      %v3694 = vpop.xlane.xlu0 %3693
      %v3695 = vsel %vm2836, %v3410, 0.0
      %3696 = vadd.xlane.f32.xlu0 %v3695
      %v3697 = vpop.xlane.xlu0 %3696
      %v3698 = vsel %vm2836, %v3412, 0.0
      %3699 = vadd.xlane.f32.xlu0 %v3698
      %v3700 = vpop.xlane.xlu0 %3699
      %v3701 = vsel %vm2836, %v3414, 0.0
      %3702 = vadd.xlane.f32.xlu0 %v3701
      %v3703 = vpop.xlane.xlu0 %3702
      %v3704 = vsel %vm2836, %v3416, 0.0
      %3705 = vadd.xlane.f32.xlu0 %v3704
      %v3706 = vpop.xlane.xlu0 %3705
      %v3707 = vsel %vm2836, %v3418, 0.0
      %3708 = vadd.xlane.f32.xlu0 %v3707
      %v3709 = vpop.xlane.xlu0 %3708
      %v3710 = vsel %vm2836, %v3420, 0.0
      %3711 = vadd.xlane.f32.xlu0 %v3710
      %v3712 = vpop.xlane.xlu0 %3711
      %v3713 = vsel %vm2836, %v3422, 0.0
      %3714 = vadd.xlane.f32.xlu0 %v3713
      %v3715 = vpop.xlane.xlu0 %3714
      %v3716 = vsel %vm2836, %v3424, 0.0
      %3717 = vadd.xlane.f32.xlu0 %v3716
      %v3718 = vpop.xlane.xlu0 %3717
      %v3719 = vsel %vm2836, %v3426, 0.0
      %3720 = vadd.xlane.f32.xlu0 %v3719
      %v3721 = vpop.xlane.xlu0 %3720
      %v3722 = vsel %vm2836, %v3428, 0.0
      %3723 = vadd.xlane.f32.xlu0 %v3722
      %v3724 = vpop.xlane.xlu0 %3723
      %v3725 = vsel %vm2836, %v3430, 0.0
      %3726 = vadd.xlane.f32.xlu0 %v3725
      %v3727 = vpop.xlane.xlu0 %3726
      %v3728 = vsel %vm2836, %v3432, 0.0
      %3729 = vadd.xlane.f32.xlu0 %v3728
      %v3730 = vpop.xlane.xlu0 %3729
      %v3731 = vsel %vm2836, %v3434, 0.0
      %3732 = vadd.xlane.f32.xlu0 %v3731
      %v3733 = vpop.xlane.xlu0 %3732
      %v3734 = vsel %vm2836, %v3436, 0.0
      %3735 = vadd.xlane.f32.xlu0 %v3734
      %v3736 = vpop.xlane.xlu0 %3735
      %v3737 = vsel %vm2836, %v3438, 0.0
      %3738 = vadd.xlane.f32.xlu0 %v3737
      %v3739 = vpop.xlane.xlu0 %3738
      %v3740 = vsel %vm2836, %v3440, 0.0
      %3741 = vadd.xlane.f32.xlu0 %v3740
      %v3742 = vpop.xlane.xlu0 %3741
      %v3743 = vsel %vm2836, %v3442, 0.0
      %3744 = vadd.xlane.f32.xlu0 %v3743
      %v3745 = vpop.xlane.xlu0 %3744
      %v3746 = vsel %vm2836, %v3444, 0.0
      %3747 = vadd.xlane.f32.xlu0 %v3746
      %v3748 = vpop.xlane.xlu0 %3747
      %v3749 = vsel %vm2836, %v3446, 0.0
      %3750 = vadd.xlane.f32.xlu0 %v3749
      %v3751 = vpop.xlane.xlu0 %3750
      %v3752 = vsel %vm2836, %v3448, 0.0
      %3753 = vadd.xlane.f32.xlu0 %v3752
      %v3754 = vpop.xlane.xlu0 %3753
      %v3755 = vsel %vm2836, %v3450, 0.0
      %3756 = vadd.xlane.f32.xlu0 %v3755
      %v3757 = vpop.xlane.xlu0 %3756
      %v3758 = vsel %vm2836, %v3452, 0.0
      %3759 = vadd.xlane.f32.xlu0 %v3758
      %v3760 = vpop.xlane.xlu0 %3759
      %v3761 = vsel %vm2836, %v3454, 0.0
      %3762 = vadd.xlane.f32.xlu0 %v3761
      %v3763 = vpop.xlane.xlu0 %3762
      %v3764 = vsel %vm2836, %v3456, 0.0
      %3765 = vadd.xlane.f32.xlu0 %v3764
      %v3766 = vpop.xlane.xlu0 %3765
      %v3767 = vsel %vm2836, %v3458, 0.0
      %3768 = vadd.xlane.f32.xlu0 %v3767
      %v3769 = vpop.xlane.xlu0 %3768
      %v3770 = vsel %vm2836, %v3460, 0.0
      %3771 = vadd.xlane.f32.xlu0 %v3770
      %v3772 = vpop.xlane.xlu0 %3771
      %v3773 = vsel %vm2836, %v3462, 0.0
      %3774 = vadd.xlane.f32.xlu0 %v3773
      %v3775 = vpop.xlane.xlu0 %3774
      %v3776 = vsel %vm2836, %v3464, 0.0
      %3777 = vadd.xlane.f32.xlu0 %v3776
      %v3778 = vpop.xlane.xlu0 %3777
      %v3779 = vsel %vm2836, %v3466, 0.0
      %3780 = vadd.xlane.f32.xlu0 %v3779
      %v3781 = vpop.xlane.xlu0 %3780
      %v3782 = vsel %vm2836, %v3468, 0.0
      %3783 = vadd.xlane.f32.xlu0 %v3782
      %v3784 = vpop.xlane.xlu0 %3783
      %v3785 = vsel %vm2836, %v3470, 0.0
      %3786 = vadd.xlane.f32.xlu0 %v3785
      %v3787 = vpop.xlane.xlu0 %3786
      %v3788 = vsel %vm2836, %v3472, 0.0
      %3789 = vadd.xlane.f32.xlu0 %v3788
      %v3790 = vpop.xlane.xlu0 %3789
      %v3791 = vsel %vm2836, %v3474, 0.0
      %3792 = vadd.xlane.f32.xlu0 %v3791
      %v3793 = vpop.xlane.xlu0 %3792
      %v3794 = vsel %vm2836, %v3476, 0.0
      %3795 = vadd.xlane.f32.xlu0 %v3794
      %v3796 = vpop.xlane.xlu0 %3795
      %v3797 = vsel %vm2836, %v3478, 0.0
      %3798 = vadd.xlane.f32.xlu0 %v3797
      %v3799 = vpop.xlane.xlu0 %3798
      %v3800 = vsel %vm2836, %v3480, 0.0
      %3801 = vadd.xlane.f32.xlu0 %v3800
      %v3802 = vpop.xlane.xlu0 %3801
      %v3803 = vsel %vm2836, %v3482, 0.0
      %3804 = vadd.xlane.f32.xlu0 %v3803
      %v3805 = vpop.xlane.xlu0 %3804
      %v3806 = vsel %vm2836, %v3484, 0.0
      %3807 = vadd.xlane.f32.xlu0 %v3806
      %v3808 = vpop.xlane.xlu0 %3807
      %v3809 = vsel %vm2836, %v3486, 0.0
      %3810 = vadd.xlane.f32.xlu0 %v3809
      %v3811 = vpop.xlane.xlu0 %3810
      %v3812 = vsel %vm2836, %v3488, 0.0
      %3813 = vadd.xlane.f32.xlu0 %v3812
      %v3814 = vpop.xlane.xlu0 %3813
      %v3815 = vsel %vm2836, %v3490, 0.0
      %3816 = vadd.xlane.f32.xlu0 %v3815
      %v3817 = vpop.xlane.xlu0 %3816
      %v3818 = vsel %vm2836, %v3492, 0.0
      %3819 = vadd.xlane.f32.xlu0 %v3818
      %v3820 = vpop.xlane.xlu0 %3819
      %v3821 = vsel %vm2836, %v3494, 0.0
      %3822 = vadd.xlane.f32.xlu0 %v3821
      %v3823 = vpop.xlane.xlu0 %3822
      %v3824 = vsel %vm2836, %v3496, 0.0
      %3825 = vadd.xlane.f32.xlu0 %v3824
      %v3826 = vpop.xlane.xlu0 %3825
      %v3827 = vsel %vm2836, %v3498, 0.0
      %3828 = vadd.xlane.f32.xlu0 %v3827
      %v3829 = vpop.xlane.xlu0 %3828
      %v3830 = vsel %vm2836, %v3500, 0.0
      %3831 = vadd.xlane.f32.xlu0 %v3830
      %v3832 = vpop.xlane.xlu0 %3831
      %v3833 = vsel %vm2836, %v3502, 0.0
      %3834 = vadd.xlane.f32.xlu0 %v3833
      %v3835 = vpop.xlane.xlu0 %3834
      %v3836 = vsel %vm2836, %v3504, 0.0
      %3837 = vadd.xlane.f32.xlu0 %v3836
      %v3838 = vpop.xlane.xlu0 %3837
      %v3839 = vsel %vm2836, %v3506, 0.0
      %3840 = vadd.xlane.f32.xlu0 %v3839
      %v3841 = vpop.xlane.xlu0 %3840
      %v3842 = vsel %vm2836, %v3508, 0.0
      %3843 = vadd.xlane.f32.xlu0 %v3842
      %v3844 = vpop.xlane.xlu0 %3843
      %v3845 = vsel %vm2836, %v3510, 0.0
      %3846 = vadd.xlane.f32.xlu0 %v3845
      %v3847 = vpop.xlane.xlu0 %3846
      %v3848 = vsel %vm2836, %v3512, 0.0
      %3849 = vadd.xlane.f32.xlu0 %v3848
      %v3850 = vpop.xlane.xlu0 %3849
      %v3851 = vsel %vm2836, %v3514, 0.0
      %3852 = vadd.xlane.f32.xlu0 %v3851
      %v3853 = vpop.xlane.xlu0 %3852
      %v3854 = vsel %vm2836, %v3516, 0.0
      %3855 = vadd.xlane.f32.xlu0 %v3854
      %v3856 = vpop.xlane.xlu0 %3855
      %v3857 = vsel %vm2836, %v3518, 0.0
      %3858 = vadd.xlane.f32.xlu0 %v3857
      %v3859 = vpop.xlane.xlu0 %3858
      %v3860 = vsel %vm2836, %v3520, 0.0
      %3861 = vadd.xlane.f32.xlu0 %v3860
      %v3862 = vpop.xlane.xlu0 %3861
      %v3863 = vsel %vm2836, %v3522, 0.0
      %3864 = vadd.xlane.f32.xlu0 %v3863
      %v3865 = vpop.xlane.xlu0 %3864
      %v3866 = vsel %vm2836, %v3524, 0.0
      %3867 = vadd.xlane.f32.xlu0 %v3866
      %v3868 = vpop.xlane.xlu0 %3867
      %v3869 = vsel %vm2836, %v3526, 0.0
      %3870 = vadd.xlane.f32.xlu0 %v3869
      %v3871 = vpop.xlane.xlu0 %3870
      %v3872 = vsel %vm2836, %v3528, 0.0
      %3873 = vadd.xlane.f32.xlu0 %v3872
      %v3874 = vpop.xlane.xlu0 %3873
      %v3875 = vsel %vm2836, %v3530, 0.0
      %3876 = vadd.xlane.f32.xlu0 %v3875
      %v3877 = vpop.xlane.xlu0 %3876
      %v3878 = vsel %vm2836, %v3532, 0.0
      %3879 = vadd.xlane.f32.xlu0 %v3878
      %v3880 = vpop.xlane.xlu0 %3879
      %v3881 = vsel %vm2836, %v3534, 0.0
      %3882 = vadd.xlane.f32.xlu0 %v3881
      %v3883 = vpop.xlane.xlu0 %3882
      %v3884 = vsel %vm2836, %v3536, 0.0
      %3885 = vadd.xlane.f32.xlu0 %v3884
      %v3886 = vpop.xlane.xlu0 %3885
      %v3887 = vsel %vm2836, %v3538, 0.0
      %3888 = vadd.xlane.f32.xlu0 %v3887
      %v3889 = vpop.xlane.xlu0 %3888
      %v3890 = vsel %vm2836, %v3540, 0.0
      %3891 = vadd.xlane.f32.xlu0 %v3890
      %v3892 = vpop.xlane.xlu0 %3891
      %v3893 = vsel %vm2836, %v3542, 0.0
      %3894 = vadd.xlane.f32.xlu0 %v3893
      %v3895 = vpop.xlane.xlu0 %3894
      %v3896 = vsel %vm2836, %v3544, 0.0
      %3897 = vadd.xlane.f32.xlu0 %v3896
      %v3898 = vpop.xlane.xlu0 %3897
      %v3899 = vsel %vm2836, %v3546, 0.0
      %3900 = vadd.xlane.f32.xlu0 %v3899
      %v3901 = vpop.xlane.xlu0 %3900
      %v3902 = vsel %vm2836, %v3548, 0.0
      %3903 = vadd.xlane.f32.xlu0 %v3902
      %v3904 = vpop.xlane.xlu0 %3903
      %v3905 = vsel %vm2836, %v3550, 0.0
      %3906 = vadd.xlane.f32.xlu0 %v3905
      %v3907 = vpop.xlane.xlu0 %3906
      %v3908 = vsel %vm2836, %v3552, 0.0
      %3909 = vadd.xlane.f32.xlu0 %v3908
      %v3910 = vpop.xlane.xlu0 %3909
      %v3911 = vsel %vm2836, %v3554, 0.0
      %3912 = vadd.xlane.f32.xlu0 %v3911
      %v3913 = vpop.xlane.xlu0 %3912
      %v3914 = vsel %vm2836, %v3556, 0.0
      %3915 = vadd.xlane.f32.xlu0 %v3914
      %v3916 = vpop.xlane.xlu0 %3915
      %v3917 = vsel %vm2836, %v3558, 0.0
      %3918 = vadd.xlane.f32.xlu0 %v3917
      %v3919 = vpop.xlane.xlu0 %3918
      %v3920 = vsel %vm2836, %v3560, 0.0
      %3921 = vadd.xlane.f32.xlu0 %v3920
      %v3922 = vpop.xlane.xlu0 %3921
      %v3923 = vsel %vm2836, %v3562, 0.0
      %3924 = vadd.xlane.f32.xlu0 %v3923
      %v3925 = vpop.xlane.xlu0 %3924
      %v3926 = vsel %vm2836, %v3564, 0.0
      %3927 = vadd.xlane.f32.xlu0 %v3926
      %v3928 = vpop.xlane.xlu0 %3927
      %v3929 = vsel %vm2836, %v3566, 0.0
      %3930 = vadd.xlane.f32.xlu0 %v3929
      %v3931 = vpop.xlane.xlu0 %3930
      %v3932 = vsel %vm2836, %v3568, 0.0
      %3933 = vadd.xlane.f32.xlu0 %v3932
      %v3934 = vpop.xlane.xlu0 %3933
      %v3935 = vsel %vm2836, %v3570, 0.0
      %3936 = vadd.xlane.f32.xlu0 %v3935
      %v3937 = vpop.xlane.xlu0 %3936
      %v3938 = vsel %vm2836, %v3572, 0.0
      %3939 = vadd.xlane.f32.xlu0 %v3938
      %v3940 = vpop.xlane.xlu0 %3939
      %v3941 = vsel %vm2836, %v3574, 0.0
      %3942 = vadd.xlane.f32.xlu0 %v3941
      %v3943 = vpop.xlane.xlu0 %3942
      %v3944 = vsel %vm2836, %v3576, 0.0
      %3945 = vadd.xlane.f32.xlu0 %v3944
      %v3946 = vpop.xlane.xlu0 %3945
      %v3947 = vsel %vm2836, %v3578, 0.0
      %3948 = vadd.xlane.f32.xlu0 %v3947
      %v3949 = vpop.xlane.xlu0 %3948
      %v3950 = vsel %vm2836, %v3580, 0.0
      %3951 = vadd.xlane.f32.xlu0 %v3950
      %v3952 = vpop.xlane.xlu0 %3951
      %v3953 = vsel %vm2836, %v3582, 0.0
      %3954 = vadd.xlane.f32.xlu0 %v3953
      %v3955 = vpop.xlane.xlu0 %3954
      %v3956 = vsel %vm2836, %v3584, 0.0
      %3957 = vadd.xlane.f32.xlu0 %v3956
      %v3958 = vpop.xlane.xlu0 %3957
      %v3959 = vsel %vm2836, %v3586, 0.0
      %3960 = vadd.xlane.f32.xlu0 %v3959
      %v3961 = vpop.xlane.xlu0 %3960
      %v3962 = vsel %vm2836, %v3588, 0.0
      %3963 = vadd.xlane.f32.xlu0 %v3962
      %v3964 = vpop.xlane.xlu0 %3963
      %v3965 = vsel %vm2836, %v3590, 0.0
      %3966 = vadd.xlane.f32.xlu0 %v3965
      %v3967 = vpop.xlane.xlu0 %3966
      %v3968 = vsel %vm2836, %v3592, 0.0
      %3969 = vadd.xlane.f32.xlu0 %v3968
      %v3970 = vpop.xlane.xlu0 %3969
      %v3971 = vsel %vm2836, %v3594, 0.0
      %3972 = vadd.xlane.f32.xlu0 %v3971
      %v3973 = vpop.xlane.xlu0 %3972
      %v3974 = vsel %vm2836, %v3596, 0.0
      %3975 = vadd.xlane.f32.xlu0 %v3974
      %v3976 = vpop.xlane.xlu0 %3975
      %v3977 = vsel %vm2836, %v3598, 0.0
      %3978 = vadd.xlane.f32.xlu0 %v3977
      %v3979 = vpop.xlane.xlu0 %3978
      %v3980 = vsel %vm2836, %v3600, 0.0
      %3981 = vadd.xlane.f32.xlu0 %v3980
      %v3982 = vpop.xlane.xlu0 %3981
      %v3983 = vsel %vm2836, %v3602, 0.0
      %3984 = vadd.xlane.f32.xlu0 %v3983
      %v3985 = vpop.xlane.xlu0 %3984
      %v3986 = vsel %vm2836, %v3604, 0.0
      %3987 = vadd.xlane.f32.xlu0 %v3986
      %v3988 = vpop.xlane.xlu0 %3987
      %v3989 = vrcp.pop %v3607
      %v3990 = vrcp.pop %v3610
      %v3991 = vrcp.pop %v3613
      %v3992 = vrcp.pop %v3616
      %v3993 = vrcp.pop %v3619
      %v3994 = vrcp.pop %v3622
      %v3995 = vrcp.pop %v3625
      %v3996 = vrcp.pop %v3628
      %v3997 = vrcp.pop %v3631
      %v3998 = vrcp.pop %v3634
      %v3999 = vrcp.pop %v3637
      %v4000 = vrcp.pop %v3640
      %v4001 = vrcp.pop %v3643
      %v4002 = vrcp.pop %v3646
      %v4003 = vrcp.pop %v3649
      %v4004 = vrcp.pop %v3652
      %v4005 = vrcp.pop %v3655
      %v4006 = vrcp.pop %v3658
      %v4007 = vrcp.pop %v3661
      %v4008 = vrcp.pop %v3664
      %v4009 = vrcp.pop %v3667
      %v4010 = vrcp.pop %v3670
      %v4011 = vrcp.pop %v3673
      %v4012 = vrcp.pop %v3676
      %v4013 = vrcp.pop %v3679
      %v4014 = vrcp.pop %v3682
      %v4015 = vrcp.pop %v3685
      %v4016 = vrcp.pop %v3688
      %v4017 = vrcp.pop %v3691
      %v4018 = vrcp.pop %v3694
      %v4019 = vrcp.pop %v3697
      %v4020 = vrcp.pop %v3700
      %v4021 = vrcp.pop %v3703
      %v4022 = vrcp.pop %v3706
      %v4023 = vrcp.pop %v3709
      %v4024 = vrcp.pop %v3712
      %v4025 = vrcp.pop %v3715
      %v4026 = vrcp.pop %v3718
      %v4027 = vrcp.pop %v3721
      %v4028 = vrcp.pop %v3724
      %v4029 = vrcp.pop %v3727
      %v4030 = vrcp.pop %v3730
      %v4031 = vrcp.pop %v3733
      %v4032 = vrcp.pop %v3736
      %v4033 = vrcp.pop %v3739
      %v4034 = vrcp.pop %v3742
      %v4035 = vrcp.pop %v3745
      %v4036 = vrcp.pop %v3748
      %v4037 = vrcp.pop %v3751
      %v4038 = vrcp.pop %v3754
      %v4039 = vrcp.pop %v3757
      %v4040 = vrcp.pop %v3760
      %v4041 = vrcp.pop %v3763
      %v4042 = vrcp.pop %v3766
      %v4043 = vrcp.pop %v3769
      %v4044 = vrcp.pop %v3772
      %v4045 = vrcp.pop %v3775
      %v4046 = vrcp.pop %v3778
      %v4047 = vrcp.pop %v3781
      %v4048 = vrcp.pop %v3784
      %v4049 = vrcp.pop %v3787
      %v4050 = vrcp.pop %v3790
      %v4051 = vrcp.pop %v3793
      %v4052 = vrcp.pop %v3796
      %v4053 = vrcp.pop %v3799
      %v4054 = vrcp.pop %v3802
      %v4055 = vrcp.pop %v3805
      %v4056 = vrcp.pop %v3808
      %v4057 = vrcp.pop %v3811
      %v4058 = vrcp.pop %v3814
      %v4059 = vrcp.pop %v3817
      %v4060 = vrcp.pop %v3820
      %v4061 = vrcp.pop %v3823
      %v4062 = vrcp.pop %v3826
      %v4063 = vrcp.pop %v3829
      %v4064 = vrcp.pop %v3832
      %v4065 = vrcp.pop %v3835
      %v4066 = vrcp.pop %v3838
      %v4067 = vrcp.pop %v3841
      %v4068 = vrcp.pop %v3844
      %v4069 = vrcp.pop %v3847
      %v4070 = vrcp.pop %v3850
      %v4071 = vrcp.pop %v3853
      %v4072 = vrcp.pop %v3856
      %v4073 = vrcp.pop %v3859
      %v4074 = vrcp.pop %v3862
      %v4075 = vrcp.pop %v3865
      %v4076 = vrcp.pop %v3868
      %v4077 = vrcp.pop %v3871
      %v4078 = vrcp.pop %v3874
      %v4079 = vrcp.pop %v3877
      %v4080 = vrcp.pop %v3880
      %v4081 = vrcp.pop %v3883
      %v4082 = vrcp.pop %v3886
      %v4083 = vrcp.pop %v3889
      %v4084 = vrcp.pop %v3892
      %v4085 = vrcp.pop %v3895
      %v4086 = vrcp.pop %v3898
      %v4087 = vrcp.pop %v3901
      %v4088 = vrcp.pop %v3904
      %v4089 = vrcp.pop %v3907
      %v4090 = vrcp.pop %v3910
      %v4091 = vrcp.pop %v3913
      %v4092 = vrcp.pop %v3916
      %v4093 = vrcp.pop %v3919
      %v4094 = vrcp.pop %v3922
      %v4095 = vrcp.pop %v3925
      %v4096 = vrcp.pop %v3928
      %v4097 = vrcp.pop %v3931
      %v4098 = vrcp.pop %v3934
      %v4099 = vrcp.pop %v3937
      %v4100 = vrcp.pop %v3940
      %v4101 = vrcp.pop %v3943
      %v4102 = vrcp.pop %v3946
      %v4103 = vrcp.pop %v3949
      %v4104 = vrcp.pop %v3952
      %v4105 = vrcp.pop %v3955
      %v4106 = vrcp.pop %v3958
      %v4107 = vrcp.pop %v3961
      %v4108 = vrcp.pop %v3964
      %v4109 = vrcp.pop %v3967
      %v4110 = vrcp.pop %v3970
      %v4111 = vrcp.pop %v3973
      %v4112 = vrcp.pop %v3976
      %v4113 = vrcp.pop %v3979
      %v4114 = vrcp.pop %v3982
      %v4115 = vrcp.pop %v3985
      %v4116 = vrcp.pop %v3988
      %v4117 = vmul.f32 %v3350, %v3989
      %v4118 = vmul.f32 %v3352, %v3990
      %v4119 = vmul.f32 %v3354, %v3991
      %v4120 = vmul.f32 %v3356, %v3992
      %v4121 = vmul.f32 %v3358, %v3993
      %v4122 = vmul.f32 %v3360, %v3994
      %v4123 = vmul.f32 %v3362, %v3995
      %v4124 = vmul.f32 %v3364, %v3996
      %v4125 = vmul.f32 %v3366, %v3997
      %v4126 = vmul.f32 %v3368, %v3998
      %v4127 = vmul.f32 %v3370, %v3999
      %v4128 = vmul.f32 %v3372, %v4000
      %v4129 = vmul.f32 %v3374, %v4001
      %v4130 = vmul.f32 %v3376, %v4002
      %v4131 = vmul.f32 %v3378, %v4003
      %v4132 = vmul.f32 %v3380, %v4004
      %v4133 = vmul.f32 %v3382, %v4005
      %v4134 = vmul.f32 %v3384, %v4006
      %v4135 = vmul.f32 %v3386, %v4007
      %v4136 = vmul.f32 %v3388, %v4008
      %v4137 = vmul.f32 %v3390, %v4009
      %v4138 = vmul.f32 %v3392, %v4010
      %v4139 = vmul.f32 %v3394, %v4011
      %v4140 = vmul.f32 %v3396, %v4012
      %v4141 = vmul.f32 %v3398, %v4013
      %v4142 = vmul.f32 %v3400, %v4014
      %v4143 = vmul.f32 %v3402, %v4015
      %v4144 = vmul.f32 %v3404, %v4016
      %v4145 = vmul.f32 %v3406, %v4017
      %v4146 = vmul.f32 %v3408, %v4018
      %v4147 = vmul.f32 %v3410, %v4019
      %v4148 = vmul.f32 %v3412, %v4020
      %v4149 = vmul.f32 %v3414, %v4021
      %v4150 = vmul.f32 %v3416, %v4022
      %v4151 = vmul.f32 %v3418, %v4023
      %v4152 = vmul.f32 %v3420, %v4024
      %v4153 = vmul.f32 %v3422, %v4025
      %v4154 = vmul.f32 %v3424, %v4026
      %v4155 = vmul.f32 %v3426, %v4027
      %v4156 = vmul.f32 %v3428, %v4028
      %v4157 = vmul.f32 %v3430, %v4029
      %v4158 = vmul.f32 %v3432, %v4030
      %v4159 = vmul.f32 %v3434, %v4031
      %v4160 = vmul.f32 %v3436, %v4032
      %v4161 = vmul.f32 %v3438, %v4033
      %v4162 = vmul.f32 %v3440, %v4034
      %v4163 = vmul.f32 %v3442, %v4035
      %v4164 = vmul.f32 %v3444, %v4036
      %v4165 = vmul.f32 %v3446, %v4037
      %v4166 = vmul.f32 %v3448, %v4038
      %v4167 = vmul.f32 %v3450, %v4039
      %v4168 = vmul.f32 %v3452, %v4040
      %v4169 = vmul.f32 %v3454, %v4041
      %v4170 = vmul.f32 %v3456, %v4042
      %v4171 = vmul.f32 %v3458, %v4043
      %v4172 = vmul.f32 %v3460, %v4044
      %v4173 = vmul.f32 %v3462, %v4045
      %v4174 = vmul.f32 %v3464, %v4046
      %v4175 = vmul.f32 %v3466, %v4047
      %v4176 = vmul.f32 %v3468, %v4048
      %v4177 = vmul.f32 %v3470, %v4049
      %v4178 = vmul.f32 %v3472, %v4050
      %v4179 = vmul.f32 %v3474, %v4051
      %v4180 = vmul.f32 %v3476, %v4052
      %v4181 = vmul.f32 %v3478, %v4053
      %v4182 = vmul.f32 %v3480, %v4054
      %v4183 = vmul.f32 %v3482, %v4055
      %v4184 = vmul.f32 %v3484, %v4056
      %v4185 = vmul.f32 %v3486, %v4057
      %v4186 = vmul.f32 %v3488, %v4058
      %v4187 = vmul.f32 %v3490, %v4059
      %v4188 = vmul.f32 %v3492, %v4060
      %v4189 = vmul.f32 %v3494, %v4061
      %v4190 = vmul.f32 %v3496, %v4062
      %v4191 = vmul.f32 %v3498, %v4063
      %v4192 = vmul.f32 %v3500, %v4064
      %v4193 = vmul.f32 %v3502, %v4065
      %v4194 = vmul.f32 %v3504, %v4066
      %v4195 = vmul.f32 %v3506, %v4067
      %v4196 = vmul.f32 %v3508, %v4068
      %v4197 = vmul.f32 %v3510, %v4069
      %v4198 = vmul.f32 %v3512, %v4070
      %v4199 = vmul.f32 %v3514, %v4071
      %v4200 = vmul.f32 %v3516, %v4072
      %v4201 = vmul.f32 %v3518, %v4073
      %v4202 = vmul.f32 %v3520, %v4074
      %v4203 = vmul.f32 %v3522, %v4075
      %v4204 = vmul.f32 %v3524, %v4076
      %v4205 = vmul.f32 %v3526, %v4077
      %v4206 = vmul.f32 %v3528, %v4078
      %v4207 = vmul.f32 %v3530, %v4079
      %v4208 = vmul.f32 %v3532, %v4080
      %v4209 = vmul.f32 %v3534, %v4081
      %v4210 = vmul.f32 %v3536, %v4082
      %v4211 = vmul.f32 %v3538, %v4083
      %v4212 = vmul.f32 %v3540, %v4084
      %v4213 = vmul.f32 %v3542, %v4085
      %v4214 = vmul.f32 %v3544, %v4086
      %v4215 = vmul.f32 %v3546, %v4087
      %v4216 = vmul.f32 %v3548, %v4088
      %v4217 = vmul.f32 %v3550, %v4089
      %v4218 = vmul.f32 %v3552, %v4090
      %v4219 = vmul.f32 %v3554, %v4091
      %v4220 = vmul.f32 %v3556, %v4092
      %v4221 = vmul.f32 %v3558, %v4093
      %v4222 = vmul.f32 %v3560, %v4094
      %v4223 = vmul.f32 %v3562, %v4095
      %v4224 = vmul.f32 %v3564, %v4096
      %v4225 = vmul.f32 %v3566, %v4097
      %v4226 = vmul.f32 %v3568, %v4098
      %v4227 = vmul.f32 %v3570, %v4099
      %v4228 = vmul.f32 %v3572, %v4100
      %v4229 = vmul.f32 %v3574, %v4101
      %v4230 = vmul.f32 %v3576, %v4102
      %v4231 = vmul.f32 %v3578, %v4103
      %v4232 = vmul.f32 %v3580, %v4104
      %v4233 = vmul.f32 %v3582, %v4105
      %v4234 = vmul.f32 %v3584, %v4106
      %v4235 = vmul.f32 %v3586, %v4107
      %v4236 = vmul.f32 %v3588, %v4108
      %v4237 = vmul.f32 %v3590, %v4109
      %v4238 = vmul.f32 %v3592, %v4110
      %v4239 = vmul.f32 %v3594, %v4111
      %v4240 = vmul.f32 %v3596, %v4112
      %v4241 = vmul.f32 %v3598, %v4113
      %v4242 = vmul.f32 %v3600, %v4114
      %v4243 = vmul.f32 %v3602, %v4115
      %v4244 = vmul.f32 %v3604, %v4116
      %v4245 = vpack.c.bf16 %v4118, %v4117
      %v4246 = vpack.c.bf16 %v4120, %v4119
      %v4247 = vpack.c.bf16 %v4122, %v4121
      %v4248 = vpack.c.bf16 %v4124, %v4123
      %v4249 = vpack.c.bf16 %v4126, %v4125
      %v4250 = vpack.c.bf16 %v4128, %v4127
      %v4251 = vpack.c.bf16 %v4130, %v4129
      %v4252 = vpack.c.bf16 %v4132, %v4131
      %v4253 = vpack.c.bf16 %v4134, %v4133
      %v4254 = vpack.c.bf16 %v4136, %v4135
      %v4255 = vpack.c.bf16 %v4138, %v4137
      %v4256 = vpack.c.bf16 %v4140, %v4139
      %v4257 = vpack.c.bf16 %v4142, %v4141
      %v4258 = vpack.c.bf16 %v4144, %v4143
      %v4259 = vpack.c.bf16 %v4146, %v4145
      %v4260 = vpack.c.bf16 %v4148, %v4147
      %v4261 = vpack.c.bf16 %v4150, %v4149
      %v4262 = vpack.c.bf16 %v4152, %v4151
      %v4263 = vpack.c.bf16 %v4154, %v4153
      %v4264 = vpack.c.bf16 %v4156, %v4155
      %v4265 = vpack.c.bf16 %v4158, %v4157
      %v4266 = vpack.c.bf16 %v4160, %v4159
      %v4267 = vpack.c.bf16 %v4162, %v4161
      %v4268 = vpack.c.bf16 %v4164, %v4163
      %v4269 = vpack.c.bf16 %v4166, %v4165
      %v4270 = vpack.c.bf16 %v4168, %v4167
      %v4271 = vpack.c.bf16 %v4170, %v4169
      %v4272 = vpack.c.bf16 %v4172, %v4171
      %v4273 = vpack.c.bf16 %v4174, %v4173
      %v4274 = vpack.c.bf16 %v4176, %v4175
      %v4275 = vpack.c.bf16 %v4178, %v4177
      %v4276 = vpack.c.bf16 %v4180, %v4179
      %v4277 = vpack.c.bf16 %v4182, %v4181
      %v4278 = vpack.c.bf16 %v4184, %v4183
      %v4279 = vpack.c.bf16 %v4186, %v4185
      %v4280 = vpack.c.bf16 %v4188, %v4187
      %v4281 = vpack.c.bf16 %v4190, %v4189
      %v4282 = vpack.c.bf16 %v4192, %v4191
      %v4283 = vpack.c.bf16 %v4194, %v4193
      %v4284 = vpack.c.bf16 %v4196, %v4195
      %v4285 = vpack.c.bf16 %v4198, %v4197
      %v4286 = vpack.c.bf16 %v4200, %v4199
      %v4287 = vpack.c.bf16 %v4202, %v4201
      %v4288 = vpack.c.bf16 %v4204, %v4203
      %v4289 = vpack.c.bf16 %v4206, %v4205
      %v4290 = vpack.c.bf16 %v4208, %v4207
      %v4291 = vpack.c.bf16 %v4210, %v4209
      %v4292 = vpack.c.bf16 %v4212, %v4211
      %v4293 = vpack.c.bf16 %v4214, %v4213
      %v4294 = vpack.c.bf16 %v4216, %v4215
      %v4295 = vpack.c.bf16 %v4218, %v4217
      %v4296 = vpack.c.bf16 %v4220, %v4219
      %v4297 = vpack.c.bf16 %v4222, %v4221
      %v4298 = vpack.c.bf16 %v4224, %v4223
      %v4299 = vpack.c.bf16 %v4226, %v4225
      %v4300 = vpack.c.bf16 %v4228, %v4227
      %v4301 = vpack.c.bf16 %v4230, %v4229
      %v4302 = vpack.c.bf16 %v4232, %v4231
      %v4303 = vpack.c.bf16 %v4234, %v4233
      %v4304 = vpack.c.bf16 %v4236, %v4235
      %v4305 = vpack.c.bf16 %v4238, %v4237
      %v4306 = vpack.c.bf16 %v4240, %v4239
      %v4307 = vpack.c.bf16 %v4242, %v4241
      %v4308 = vpack.c.bf16 %v4244, %v4243
      %4309 = vrot.lane.b32.xlu0 %v1123, 64
      %v4310 = vpop.permute.xlu0 %4309
      %4311 = vrot.lane.b32.xlu0 %v1124, 64
      %v4312 = vpop.permute.xlu0 %4311
      %4313 = vrot.lane.b32.xlu0 %v1125, 64
      %v4314 = vpop.permute.xlu0 %4313
      %4315 = vrot.lane.b32.xlu0 %v1126, 64
      %v4316 = vpop.permute.xlu0 %4315
      %v4322 = vsel %vm2836, %v4245, 0
      %v4325 = vsel %vm2836, %v4246, 0
      %v4328 = vsel %vm2836, %v4247, 0
      %v4331 = vsel %vm2836, %v4248, 0
      %4333 = vmatprep.subr.bf16.mxu0 0
      %4334 = vmatpush1.bf16.msra.mxu0 0
      %4335 = vmatprep.subr.bf16.mxu0 0
      %4336 = vmatpush1.bf16.msra.mxu0 0
      %4337 = vmatprep.subr.bf16.mxu0 0
      %4338 = vmatpush1.bf16.msra.mxu0 0
      %4339 = vmatprep.subr.bf16.mxu0 0
      %4340 = vmatpush1.bf16.msra.mxu0 0
      %4341 = vmatprep.subr.bf16.mxu0 0
      %4342 = vmatpush1.bf16.msra.mxu0 %v4316
      %4343 = vmatprep.subr.bf16.mxu0 0
      %4344 = vmatpush1.bf16.msra.mxu0 %v4314
      %4345 = vmatprep.subr.bf16.mxu0 0
      %4346 = vmatpush1.bf16.msra.mxu0 %v4312
      %4347 = vmatprep.subr.bf16.mxu0 0
      %4348 = vmatpush1.bf16.msra.mxu0 %v4310
      %4349 = vmatprep.subr.bf16.mxu0 0
      %4350 = vmatpush2.bf16.msra.mxu0 0
      %4351 = vmatprep.subr.bf16.mxu0 0
      %4352 = vmatpush2.bf16.msra.mxu0 0
      %4353 = vmatprep.subr.bf16.mxu0 0
      %4354 = vmatpush2.bf16.msra.mxu0 0
      %4355 = vmatprep.subr.bf16.mxu0 0
      %4356 = vmatpush2.bf16.msra.mxu0 0
      %4357 = vmatprep.subr.bf16.mxu0 0
      %4358 = vmatpush2.bf16.msra.mxu0 0
      %4359 = vmatprep.subr.bf16.mxu0 0
      %4360 = vmatpush2.bf16.msra.mxu0 0
      %4361 = vmatprep.subr.bf16.mxu0 0
      %4362 = vmatpush2.bf16.msra.mxu0 0
      %4363 = vmatprep.subr.bf16.mxu0 0
      %4364 = vmatpush2.bf16.msra.mxu0 0
      %4365 = vmatprep.mubr.bf16.mxu0 0
      %4366 = vmatmul.mubr.bf16.gmra.mxu0 %v4322
      %v4367 = vpop.f32.mrf.mxu0
      %v4368 = vadd.f32 0.0, %v4367
      %v4369 = vpop.f32.mrf.mxu0
      %v4370 = vpop.f32.mrf.mxu0
      %v4371 = vadd.f32 0.0, %v4370
      %v4372 = vpop.f32.mrf.mxu0
      %4373 = vmatprep.mubr.bf16.mxu0 0
      %4374 = vmatmul.mubr.bf16.gmra.mxu0 %v4325
      %v4375 = vpop.f32.mrf.mxu0
      %v4376 = vadd.f32 0.0, %v4375
      %v4377 = vpop.f32.mrf.mxu0
      %v4378 = vpop.f32.mrf.mxu0
      %v4379 = vadd.f32 0.0, %v4378
      %v4380 = vpop.f32.mrf.mxu0
      %4381 = vmatprep.mubr.bf16.mxu0 0
      %4382 = vmatmul.mubr.bf16.gmra.mxu0 %v4328
      %v4383 = vpop.f32.mrf.mxu0
      %v4384 = vadd.f32 0.0, %v4383
      %v4385 = vpop.f32.mrf.mxu0
      %v4386 = vpop.f32.mrf.mxu0
      %v4387 = vadd.f32 0.0, %v4386
      %v4388 = vpop.f32.mrf.mxu0
      %4389 = vmatprep.mubr.bf16.mxu0 0
      %4390 = vmatmul.mubr.bf16.gmra.mxu0 %v4331
      %v4391 = vpop.f32.mrf.mxu0
      %v4392 = vadd.f32 0.0, %v4391
      %v4393 = vpop.f32.mrf.mxu0
      %v4394 = vpop.f32.mrf.mxu0
      %v4395 = vadd.f32 0.0, %v4394
      %v4396 = vpop.f32.mrf.mxu0
      %4397 = vdwg.mxu0
      %4398 = vrot.lane.b32.xlu0 %v1127, 64
      %v4399 = vpop.permute.xlu0 %4398
      %4400 = vrot.lane.b32.xlu0 %v1128, 64
      %v4401 = vpop.permute.xlu0 %4400
      %4402 = vrot.lane.b32.xlu0 %v1129, 64
      %v4403 = vpop.permute.xlu0 %4402
      %4404 = vrot.lane.b32.xlu0 %v1130, 64
      %v4405 = vpop.permute.xlu0 %4404
      %v4411 = vsel %vm2836, %v4249, 0
      %v4414 = vsel %vm2836, %v4250, 0
      %v4417 = vsel %vm2836, %v4251, 0
      %v4420 = vsel %vm2836, %v4252, 0
      %4422 = vmatprep.subr.bf16.mxu0 0
      %4423 = vmatpush1.bf16.msra.mxu0 0
      %4424 = vmatprep.subr.bf16.mxu0 0
      %4425 = vmatpush1.bf16.msra.mxu0 0
      %4426 = vmatprep.subr.bf16.mxu0 0
      %4427 = vmatpush1.bf16.msra.mxu0 0
      %4428 = vmatprep.subr.bf16.mxu0 0
      %4429 = vmatpush1.bf16.msra.mxu0 0
      %4430 = vmatprep.subr.bf16.mxu0 0
      %4431 = vmatpush1.bf16.msra.mxu0 %v4405
      %4432 = vmatprep.subr.bf16.mxu0 0
      %4433 = vmatpush1.bf16.msra.mxu0 %v4403
      %4434 = vmatprep.subr.bf16.mxu0 0
      %4435 = vmatpush1.bf16.msra.mxu0 %v4401
      %4436 = vmatprep.subr.bf16.mxu0 0
      %4437 = vmatpush1.bf16.msra.mxu0 %v4399
      %4438 = vmatprep.subr.bf16.mxu0 0
      %4439 = vmatpush2.bf16.msra.mxu0 0
      %4440 = vmatprep.subr.bf16.mxu0 0
      %4441 = vmatpush2.bf16.msra.mxu0 0
      %4442 = vmatprep.subr.bf16.mxu0 0
      %4443 = vmatpush2.bf16.msra.mxu0 0
      %4444 = vmatprep.subr.bf16.mxu0 0
      %4445 = vmatpush2.bf16.msra.mxu0 0
      %4446 = vmatprep.subr.bf16.mxu0 0
      %4447 = vmatpush2.bf16.msra.mxu0 0
      %4448 = vmatprep.subr.bf16.mxu0 0
      %4449 = vmatpush2.bf16.msra.mxu0 0
      %4450 = vmatprep.subr.bf16.mxu0 0
      %4451 = vmatpush2.bf16.msra.mxu0 0
      %4452 = vmatprep.subr.bf16.mxu0 0
      %4453 = vmatpush2.bf16.msra.mxu0 0
      %4454 = vmatprep.mubr.bf16.mxu0 0
      %4455 = vmatmul.mubr.bf16.gmra.mxu0 %v4411
      %v4456 = vpop.f32.mrf.mxu0
      %v4457 = vadd.f32 0.0, %v4456
      %v4458 = vpop.f32.mrf.mxu0
      %v4459 = vpop.f32.mrf.mxu0
      %v4460 = vadd.f32 0.0, %v4459
      %v4461 = vpop.f32.mrf.mxu0
      %4462 = vmatprep.mubr.bf16.mxu0 0
      %4463 = vmatmul.mubr.bf16.gmra.mxu0 %v4414
      %v4464 = vpop.f32.mrf.mxu0
      %v4465 = vadd.f32 0.0, %v4464
      %v4466 = vpop.f32.mrf.mxu0
      %v4467 = vpop.f32.mrf.mxu0
      %v4468 = vadd.f32 0.0, %v4467
      %v4469 = vpop.f32.mrf.mxu0
      %4470 = vmatprep.mubr.bf16.mxu0 0
      %4471 = vmatmul.mubr.bf16.gmra.mxu0 %v4417
      %v4472 = vpop.f32.mrf.mxu0
      %v4473 = vadd.f32 0.0, %v4472
      %v4474 = vpop.f32.mrf.mxu0
      %v4475 = vpop.f32.mrf.mxu0
      %v4476 = vadd.f32 0.0, %v4475
      %v4477 = vpop.f32.mrf.mxu0
      %4478 = vmatprep.mubr.bf16.mxu0 0
      %4479 = vmatmul.mubr.bf16.gmra.mxu0 %v4420
      %v4480 = vpop.f32.mrf.mxu0
      %v4481 = vadd.f32 0.0, %v4480
      %v4482 = vpop.f32.mrf.mxu0
      %v4483 = vpop.f32.mrf.mxu0
      %v4484 = vadd.f32 0.0, %v4483
      %v4485 = vpop.f32.mrf.mxu0
      %4486 = vdwg.mxu0
      %4487 = vrot.lane.b32.xlu0 %v1131, 64
      %v4488 = vpop.permute.xlu0 %4487
      %4489 = vrot.lane.b32.xlu0 %v1132, 64
      %v4490 = vpop.permute.xlu0 %4489
      %4491 = vrot.lane.b32.xlu0 %v1133, 64
      %v4492 = vpop.permute.xlu0 %4491
      %4493 = vrot.lane.b32.xlu0 %v1134, 64
      %v4494 = vpop.permute.xlu0 %4493
      %v4500 = vsel %vm2836, %v4253, 0
      %v4503 = vsel %vm2836, %v4254, 0
      %v4506 = vsel %vm2836, %v4255, 0
      %v4509 = vsel %vm2836, %v4256, 0
      %4511 = vmatprep.subr.bf16.mxu0 0
      %4512 = vmatpush1.bf16.msra.mxu0 0
      %4513 = vmatprep.subr.bf16.mxu0 0
      %4514 = vmatpush1.bf16.msra.mxu0 0
      %4515 = vmatprep.subr.bf16.mxu0 0
      %4516 = vmatpush1.bf16.msra.mxu0 0
      %4517 = vmatprep.subr.bf16.mxu0 0
      %4518 = vmatpush1.bf16.msra.mxu0 0
      %4519 = vmatprep.subr.bf16.mxu0 0
      %4520 = vmatpush1.bf16.msra.mxu0 %v4494
      %4521 = vmatprep.subr.bf16.mxu0 0
      %4522 = vmatpush1.bf16.msra.mxu0 %v4492
      %4523 = vmatprep.subr.bf16.mxu0 0
      %4524 = vmatpush1.bf16.msra.mxu0 %v4490
      %4525 = vmatprep.subr.bf16.mxu0 0
      %4526 = vmatpush1.bf16.msra.mxu0 %v4488
      %4527 = vmatprep.subr.bf16.mxu0 0
      %4528 = vmatpush2.bf16.msra.mxu0 0
      %4529 = vmatprep.subr.bf16.mxu0 0
      %4530 = vmatpush2.bf16.msra.mxu0 0
      %4531 = vmatprep.subr.bf16.mxu0 0
      %4532 = vmatpush2.bf16.msra.mxu0 0
      %4533 = vmatprep.subr.bf16.mxu0 0
      %4534 = vmatpush2.bf16.msra.mxu0 0
      %4535 = vmatprep.subr.bf16.mxu0 0
      %4536 = vmatpush2.bf16.msra.mxu0 0
      %4537 = vmatprep.subr.bf16.mxu0 0
      %4538 = vmatpush2.bf16.msra.mxu0 0
      %4539 = vmatprep.subr.bf16.mxu0 0
      %4540 = vmatpush2.bf16.msra.mxu0 0
      %4541 = vmatprep.subr.bf16.mxu0 0
      %4542 = vmatpush2.bf16.msra.mxu0 0
      %4543 = vmatprep.mubr.bf16.mxu0 0
      %4544 = vmatmul.mubr.bf16.gmra.mxu0 %v4500
      %v4545 = vpop.f32.mrf.mxu0
      %v4546 = vadd.f32 0.0, %v4545
      %v4547 = vpop.f32.mrf.mxu0
      %v4548 = vpop.f32.mrf.mxu0
      %v4549 = vadd.f32 0.0, %v4548
      %v4550 = vpop.f32.mrf.mxu0
      %4551 = vmatprep.mubr.bf16.mxu0 0
      %4552 = vmatmul.mubr.bf16.gmra.mxu0 %v4503
      %v4553 = vpop.f32.mrf.mxu0
      %v4554 = vadd.f32 0.0, %v4553
      %v4555 = vpop.f32.mrf.mxu0
      %v4556 = vpop.f32.mrf.mxu0
      %v4557 = vadd.f32 0.0, %v4556
      %v4558 = vpop.f32.mrf.mxu0
      %4559 = vmatprep.mubr.bf16.mxu0 0
      %4560 = vmatmul.mubr.bf16.gmra.mxu0 %v4506
      %v4561 = vpop.f32.mrf.mxu0
      %v4562 = vadd.f32 0.0, %v4561
      %v4563 = vpop.f32.mrf.mxu0
      %v4564 = vpop.f32.mrf.mxu0
      %v4565 = vadd.f32 0.0, %v4564
      %v4566 = vpop.f32.mrf.mxu0
      %4567 = vmatprep.mubr.bf16.mxu0 0
      %4568 = vmatmul.mubr.bf16.gmra.mxu0 %v4509
      %v4569 = vpop.f32.mrf.mxu0
      %v4570 = vadd.f32 0.0, %v4569
      %v4571 = vpop.f32.mrf.mxu0
      %v4572 = vpop.f32.mrf.mxu0
      %v4573 = vadd.f32 0.0, %v4572
      %v4574 = vpop.f32.mrf.mxu0
      %4575 = vdwg.mxu0
      %4576 = vrot.lane.b32.xlu0 %v1135, 64
      %v4577 = vpop.permute.xlu0 %4576
      %4578 = vrot.lane.b32.xlu0 %v1136, 64
      %v4579 = vpop.permute.xlu0 %4578
      %4580 = vrot.lane.b32.xlu0 %v1137, 64
      %v4581 = vpop.permute.xlu0 %4580
      %4582 = vrot.lane.b32.xlu0 %v1138, 64
      %v4583 = vpop.permute.xlu0 %4582
      %v4589 = vsel %vm2836, %v4257, 0
      %v4592 = vsel %vm2836, %v4258, 0
      %v4595 = vsel %vm2836, %v4259, 0
      %v4598 = vsel %vm2836, %v4260, 0
      %4600 = vmatprep.subr.bf16.mxu0 0
      %4601 = vmatpush1.bf16.msra.mxu0 0
      %4602 = vmatprep.subr.bf16.mxu0 0
      %4603 = vmatpush1.bf16.msra.mxu0 0
      %4604 = vmatprep.subr.bf16.mxu0 0
      %4605 = vmatpush1.bf16.msra.mxu0 0
      %4606 = vmatprep.subr.bf16.mxu0 0
      %4607 = vmatpush1.bf16.msra.mxu0 0
      %4608 = vmatprep.subr.bf16.mxu0 0
      %4609 = vmatpush1.bf16.msra.mxu0 %v4583
      %4610 = vmatprep.subr.bf16.mxu0 0
      %4611 = vmatpush1.bf16.msra.mxu0 %v4581
      %4612 = vmatprep.subr.bf16.mxu0 0
      %4613 = vmatpush1.bf16.msra.mxu0 %v4579
      %4614 = vmatprep.subr.bf16.mxu0 0
      %4615 = vmatpush1.bf16.msra.mxu0 %v4577
      %4616 = vmatprep.subr.bf16.mxu0 0
      %4617 = vmatpush2.bf16.msra.mxu0 0
      %4618 = vmatprep.subr.bf16.mxu0 0
      %4619 = vmatpush2.bf16.msra.mxu0 0
      %4620 = vmatprep.subr.bf16.mxu0 0
      %4621 = vmatpush2.bf16.msra.mxu0 0
      %4622 = vmatprep.subr.bf16.mxu0 0
      %4623 = vmatpush2.bf16.msra.mxu0 0
      %4624 = vmatprep.subr.bf16.mxu0 0
      %4625 = vmatpush2.bf16.msra.mxu0 0
      %4626 = vmatprep.subr.bf16.mxu0 0
      %4627 = vmatpush2.bf16.msra.mxu0 0
      %4628 = vmatprep.subr.bf16.mxu0 0
      %4629 = vmatpush2.bf16.msra.mxu0 0
      %4630 = vmatprep.subr.bf16.mxu0 0
      %4631 = vmatpush2.bf16.msra.mxu0 0
      %4632 = vmatprep.mubr.bf16.mxu0 0
      %4633 = vmatmul.mubr.bf16.gmra.mxu0 %v4589
      %v4634 = vpop.f32.mrf.mxu0
      %v4635 = vadd.f32 0.0, %v4634
      %v4636 = vpop.f32.mrf.mxu0
      %v4637 = vpop.f32.mrf.mxu0
      %v4638 = vadd.f32 0.0, %v4637
      %v4639 = vpop.f32.mrf.mxu0
      %4640 = vmatprep.mubr.bf16.mxu0 0
      %4641 = vmatmul.mubr.bf16.gmra.mxu0 %v4592
      %v4642 = vpop.f32.mrf.mxu0
      %v4643 = vadd.f32 0.0, %v4642
      %v4644 = vpop.f32.mrf.mxu0
      %v4645 = vpop.f32.mrf.mxu0
      %v4646 = vadd.f32 0.0, %v4645
      %v4647 = vpop.f32.mrf.mxu0
      %4648 = vmatprep.mubr.bf16.mxu0 0
      %4649 = vmatmul.mubr.bf16.gmra.mxu0 %v4595
      %v4650 = vpop.f32.mrf.mxu0
      %v4651 = vadd.f32 0.0, %v4650
      %v4652 = vpop.f32.mrf.mxu0
      %v4653 = vpop.f32.mrf.mxu0
      %v4654 = vadd.f32 0.0, %v4653
      %v4655 = vpop.f32.mrf.mxu0
      %4656 = vmatprep.mubr.bf16.mxu0 0
      %4657 = vmatmul.mubr.bf16.gmra.mxu0 %v4598
      %v4658 = vpop.f32.mrf.mxu0
      %v4659 = vadd.f32 0.0, %v4658
      %v4660 = vpop.f32.mrf.mxu0
      %v4661 = vpop.f32.mrf.mxu0
      %v4662 = vadd.f32 0.0, %v4661
      %v4663 = vpop.f32.mrf.mxu0
      %4664 = vdwg.mxu0
      %4665 = vrot.lane.b32.xlu0 %v1156, 64
      %v4666 = vpop.permute.xlu0 %4665
      %4667 = vrot.lane.b32.xlu0 %v1158, 64
      %v4668 = vpop.permute.xlu0 %4667
      %4669 = vrot.lane.b32.xlu0 %v1160, 64
      %v4670 = vpop.permute.xlu0 %4669
      %4671 = vrot.lane.b32.xlu0 %v1162, 64
      %v4672 = vpop.permute.xlu0 %4671
      %v4678 = vsel %vm2836, %v4261, 0
      %v4681 = vsel %vm2836, %v4262, 0
      %v4684 = vsel %vm2836, %v4263, 0
      %v4687 = vsel %vm2836, %v4264, 0
      %4689 = vmatprep.subr.bf16.mxu0 0
      %4690 = vmatpush1.bf16.msra.mxu0 0
      %4691 = vmatprep.subr.bf16.mxu0 0
      %4692 = vmatpush1.bf16.msra.mxu0 0
      %4693 = vmatprep.subr.bf16.mxu0 0
      %4694 = vmatpush1.bf16.msra.mxu0 0
      %4695 = vmatprep.subr.bf16.mxu0 0
      %4696 = vmatpush1.bf16.msra.mxu0 0
      %4697 = vmatprep.subr.bf16.mxu0 0
      %4698 = vmatpush1.bf16.msra.mxu0 %v4672
      %4699 = vmatprep.subr.bf16.mxu0 0
      %4700 = vmatpush1.bf16.msra.mxu0 %v4670
      %4701 = vmatprep.subr.bf16.mxu0 0
      %4702 = vmatpush1.bf16.msra.mxu0 %v4668
      %4703 = vmatprep.subr.bf16.mxu0 0
      %4704 = vmatpush1.bf16.msra.mxu0 %v4666
      %4705 = vmatprep.subr.bf16.mxu0 0
      %4706 = vmatpush2.bf16.msra.mxu0 0
      %4707 = vmatprep.subr.bf16.mxu0 0
      %4708 = vmatpush2.bf16.msra.mxu0 0
      %4709 = vmatprep.subr.bf16.mxu0 0
      %4710 = vmatpush2.bf16.msra.mxu0 0
      %4711 = vmatprep.subr.bf16.mxu0 0
      %4712 = vmatpush2.bf16.msra.mxu0 0
      %4713 = vmatprep.subr.bf16.mxu0 0
      %4714 = vmatpush2.bf16.msra.mxu0 0
      %4715 = vmatprep.subr.bf16.mxu0 0
      %4716 = vmatpush2.bf16.msra.mxu0 0
      %4717 = vmatprep.subr.bf16.mxu0 0
      %4718 = vmatpush2.bf16.msra.mxu0 0
      %4719 = vmatprep.subr.bf16.mxu0 0
      %4720 = vmatpush2.bf16.msra.mxu0 0
      %4721 = vmatprep.mubr.bf16.mxu0 0
      %4722 = vmatmul.mubr.bf16.gmra.mxu0 %v4678
      %v4723 = vpop.f32.mrf.mxu0
      %v4724 = vadd.f32 0.0, %v4723
      %v4725 = vpop.f32.mrf.mxu0
      %v4726 = vpop.f32.mrf.mxu0
      %v4727 = vadd.f32 0.0, %v4726
      %v4728 = vpop.f32.mrf.mxu0
      %4729 = vmatprep.mubr.bf16.mxu0 0
      %4730 = vmatmul.mubr.bf16.gmra.mxu0 %v4681
      %v4731 = vpop.f32.mrf.mxu0
      %v4732 = vadd.f32 0.0, %v4731
      %v4733 = vpop.f32.mrf.mxu0
      %v4734 = vpop.f32.mrf.mxu0
      %v4735 = vadd.f32 0.0, %v4734
      %v4736 = vpop.f32.mrf.mxu0
      %4737 = vmatprep.mubr.bf16.mxu0 0
      %4738 = vmatmul.mubr.bf16.gmra.mxu0 %v4684
      %v4739 = vpop.f32.mrf.mxu0
      %v4740 = vadd.f32 0.0, %v4739
      %v4741 = vpop.f32.mrf.mxu0
      %v4742 = vpop.f32.mrf.mxu0
      %v4743 = vadd.f32 0.0, %v4742
      %v4744 = vpop.f32.mrf.mxu0
      %4745 = vmatprep.mubr.bf16.mxu0 0
      %4746 = vmatmul.mubr.bf16.gmra.mxu0 %v4687
      %v4747 = vpop.f32.mrf.mxu0
      %v4748 = vadd.f32 0.0, %v4747
      %v4749 = vpop.f32.mrf.mxu0
      %v4750 = vpop.f32.mrf.mxu0
      %v4751 = vadd.f32 0.0, %v4750
      %v4752 = vpop.f32.mrf.mxu0
      %4753 = vdwg.mxu0
      %4754 = vrot.lane.b32.xlu0 %v1164, 64
      %v4755 = vpop.permute.xlu0 %4754
      %4756 = vrot.lane.b32.xlu0 %v1166, 64
      %v4757 = vpop.permute.xlu0 %4756
      %4758 = vrot.lane.b32.xlu0 %v1168, 64
      %v4759 = vpop.permute.xlu0 %4758
      %4760 = vrot.lane.b32.xlu0 %v1170, 64
      %v4761 = vpop.permute.xlu0 %4760
      %v4767 = vsel %vm2836, %v4265, 0
      %v4770 = vsel %vm2836, %v4266, 0
      %v4773 = vsel %vm2836, %v4267, 0
      %v4776 = vsel %vm2836, %v4268, 0
      %4778 = vmatprep.subr.bf16.mxu0 0
      %4779 = vmatpush1.bf16.msra.mxu0 0
      %4780 = vmatprep.subr.bf16.mxu0 0
      %4781 = vmatpush1.bf16.msra.mxu0 0
      %4782 = vmatprep.subr.bf16.mxu0 0
      %4783 = vmatpush1.bf16.msra.mxu0 0
      %4784 = vmatprep.subr.bf16.mxu0 0
      %4785 = vmatpush1.bf16.msra.mxu0 0
      %4786 = vmatprep.subr.bf16.mxu0 0
      %4787 = vmatpush1.bf16.msra.mxu0 %v4761
      %4788 = vmatprep.subr.bf16.mxu0 0
      %4789 = vmatpush1.bf16.msra.mxu0 %v4759
      %4790 = vmatprep.subr.bf16.mxu0 0
      %4791 = vmatpush1.bf16.msra.mxu0 %v4757
      %4792 = vmatprep.subr.bf16.mxu0 0
      %4793 = vmatpush1.bf16.msra.mxu0 %v4755
      %4794 = vmatprep.subr.bf16.mxu0 0
      %4795 = vmatpush2.bf16.msra.mxu0 0
      %4796 = vmatprep.subr.bf16.mxu0 0
      %4797 = vmatpush2.bf16.msra.mxu0 0
      %4798 = vmatprep.subr.bf16.mxu0 0
      %4799 = vmatpush2.bf16.msra.mxu0 0
      %4800 = vmatprep.subr.bf16.mxu0 0
      %4801 = vmatpush2.bf16.msra.mxu0 0
      %4802 = vmatprep.subr.bf16.mxu0 0
      %4803 = vmatpush2.bf16.msra.mxu0 0
      %4804 = vmatprep.subr.bf16.mxu0 0
      %4805 = vmatpush2.bf16.msra.mxu0 0
      %4806 = vmatprep.subr.bf16.mxu0 0
      %4807 = vmatpush2.bf16.msra.mxu0 0
      %4808 = vmatprep.subr.bf16.mxu0 0
      %4809 = vmatpush2.bf16.msra.mxu0 0
      %4810 = vmatprep.mubr.bf16.mxu0 0
      %4811 = vmatmul.mubr.bf16.gmra.mxu0 %v4767
      %v4812 = vpop.f32.mrf.mxu0
      %v4813 = vadd.f32 0.0, %v4812
      %v4814 = vpop.f32.mrf.mxu0
      %v4815 = vpop.f32.mrf.mxu0
      %v4816 = vadd.f32 0.0, %v4815
      %v4817 = vpop.f32.mrf.mxu0
      %4818 = vmatprep.mubr.bf16.mxu0 0
      %4819 = vmatmul.mubr.bf16.gmra.mxu0 %v4770
      %v4820 = vpop.f32.mrf.mxu0
      %v4821 = vadd.f32 0.0, %v4820
      %v4822 = vpop.f32.mrf.mxu0
      %v4823 = vpop.f32.mrf.mxu0
      %v4824 = vadd.f32 0.0, %v4823
      %v4825 = vpop.f32.mrf.mxu0
      %4826 = vmatprep.mubr.bf16.mxu0 0
      %4827 = vmatmul.mubr.bf16.gmra.mxu0 %v4773
      %v4828 = vpop.f32.mrf.mxu0
      %v4829 = vadd.f32 0.0, %v4828
      %v4830 = vpop.f32.mrf.mxu0
      %v4831 = vpop.f32.mrf.mxu0
      %v4832 = vadd.f32 0.0, %v4831
      %v4833 = vpop.f32.mrf.mxu0
      %4834 = vmatprep.mubr.bf16.mxu0 0
      %4835 = vmatmul.mubr.bf16.gmra.mxu0 %v4776
      %v4836 = vpop.f32.mrf.mxu0
      %v4837 = vadd.f32 0.0, %v4836
      %v4838 = vpop.f32.mrf.mxu0
      %v4839 = vpop.f32.mrf.mxu0
      %v4840 = vadd.f32 0.0, %v4839
      %v4841 = vpop.f32.mrf.mxu0
      %4842 = vdwg.mxu0
      %4843 = vrot.lane.b32.xlu0 %v1172, 64
      %v4844 = vpop.permute.xlu0 %4843
      %4845 = vrot.lane.b32.xlu0 %v1174, 64
      %v4846 = vpop.permute.xlu0 %4845
      %4847 = vrot.lane.b32.xlu0 %v1176, 64
      %v4848 = vpop.permute.xlu0 %4847
      %4849 = vrot.lane.b32.xlu0 %v1178, 64
      %v4850 = vpop.permute.xlu0 %4849
      %v4856 = vsel %vm2836, %v4269, 0
      %v4859 = vsel %vm2836, %v4270, 0
      %v4862 = vsel %vm2836, %v4271, 0
      %v4865 = vsel %vm2836, %v4272, 0
      %4867 = vmatprep.subr.bf16.mxu0 0
      %4868 = vmatpush1.bf16.msra.mxu0 0
      %4869 = vmatprep.subr.bf16.mxu0 0
      %4870 = vmatpush1.bf16.msra.mxu0 0
      %4871 = vmatprep.subr.bf16.mxu0 0
      %4872 = vmatpush1.bf16.msra.mxu0 0
      %4873 = vmatprep.subr.bf16.mxu0 0
      %4874 = vmatpush1.bf16.msra.mxu0 0
      %4875 = vmatprep.subr.bf16.mxu0 0
      %4876 = vmatpush1.bf16.msra.mxu0 %v4850
      %4877 = vmatprep.subr.bf16.mxu0 0
      %4878 = vmatpush1.bf16.msra.mxu0 %v4848
      %4879 = vmatprep.subr.bf16.mxu0 0
      %4880 = vmatpush1.bf16.msra.mxu0 %v4846
      %4881 = vmatprep.subr.bf16.mxu0 0
      %4882 = vmatpush1.bf16.msra.mxu0 %v4844
      %4883 = vmatprep.subr.bf16.mxu0 0
      %4884 = vmatpush2.bf16.msra.mxu0 0
      %4885 = vmatprep.subr.bf16.mxu0 0
      %4886 = vmatpush2.bf16.msra.mxu0 0
      %4887 = vmatprep.subr.bf16.mxu0 0
      %4888 = vmatpush2.bf16.msra.mxu0 0
      %4889 = vmatprep.subr.bf16.mxu0 0
      %4890 = vmatpush2.bf16.msra.mxu0 0
      %4891 = vmatprep.subr.bf16.mxu0 0
      %4892 = vmatpush2.bf16.msra.mxu0 0
      %4893 = vmatprep.subr.bf16.mxu0 0
      %4894 = vmatpush2.bf16.msra.mxu0 0
      %4895 = vmatprep.subr.bf16.mxu0 0
      %4896 = vmatpush2.bf16.msra.mxu0 0
      %4897 = vmatprep.subr.bf16.mxu0 0
      %4898 = vmatpush2.bf16.msra.mxu0 0
      %4899 = vmatprep.mubr.bf16.mxu0 0
      %4900 = vmatmul.mubr.bf16.gmra.mxu0 %v4856
      %v4901 = vpop.f32.mrf.mxu0
      %v4902 = vadd.f32 0.0, %v4901
      %v4903 = vpop.f32.mrf.mxu0
      %v4904 = vpop.f32.mrf.mxu0
      %v4905 = vadd.f32 0.0, %v4904
      %v4906 = vpop.f32.mrf.mxu0
      %4907 = vmatprep.mubr.bf16.mxu0 0
      %4908 = vmatmul.mubr.bf16.gmra.mxu0 %v4859
      %v4909 = vpop.f32.mrf.mxu0
      %v4910 = vadd.f32 0.0, %v4909
      %v4911 = vpop.f32.mrf.mxu0
      %v4912 = vpop.f32.mrf.mxu0
      %v4913 = vadd.f32 0.0, %v4912
      %v4914 = vpop.f32.mrf.mxu0
      %4915 = vmatprep.mubr.bf16.mxu0 0
      %4916 = vmatmul.mubr.bf16.gmra.mxu0 %v4862
      %v4917 = vpop.f32.mrf.mxu0
      %v4918 = vadd.f32 0.0, %v4917
      %v4919 = vpop.f32.mrf.mxu0
      %v4920 = vpop.f32.mrf.mxu0
      %v4921 = vadd.f32 0.0, %v4920
      %v4922 = vpop.f32.mrf.mxu0
      %4923 = vmatprep.mubr.bf16.mxu0 0
      %4924 = vmatmul.mubr.bf16.gmra.mxu0 %v4865
      %v4925 = vpop.f32.mrf.mxu0
      %v4926 = vadd.f32 0.0, %v4925
      %v4927 = vpop.f32.mrf.mxu0
      %v4928 = vpop.f32.mrf.mxu0
      %v4929 = vadd.f32 0.0, %v4928
      %v4930 = vpop.f32.mrf.mxu0
      %4931 = vdwg.mxu0
      %4932 = vrot.lane.b32.xlu0 %v1180, 64
      %v4933 = vpop.permute.xlu0 %4932
      %4934 = vrot.lane.b32.xlu0 %v1182, 64
      %v4935 = vpop.permute.xlu0 %4934
      %4936 = vrot.lane.b32.xlu0 %v1184, 64
      %v4937 = vpop.permute.xlu0 %4936
      %4938 = vrot.lane.b32.xlu0 %v1186, 64
      %v4939 = vpop.permute.xlu0 %4938
      %v4945 = vsel %vm2836, %v4273, 0
      %v4948 = vsel %vm2836, %v4274, 0
      %v4951 = vsel %vm2836, %v4275, 0
      %v4954 = vsel %vm2836, %v4276, 0
      %4956 = vmatprep.subr.bf16.mxu0 0
      %4957 = vmatpush1.bf16.msra.mxu0 0
      %4958 = vmatprep.subr.bf16.mxu0 0
      %4959 = vmatpush1.bf16.msra.mxu0 0
      %4960 = vmatprep.subr.bf16.mxu0 0
      %4961 = vmatpush1.bf16.msra.mxu0 0
      %4962 = vmatprep.subr.bf16.mxu0 0
      %4963 = vmatpush1.bf16.msra.mxu0 0
      %4964 = vmatprep.subr.bf16.mxu0 0
      %4965 = vmatpush1.bf16.msra.mxu0 %v4939
      %4966 = vmatprep.subr.bf16.mxu0 0
      %4967 = vmatpush1.bf16.msra.mxu0 %v4937
      %4968 = vmatprep.subr.bf16.mxu0 0
      %4969 = vmatpush1.bf16.msra.mxu0 %v4935
      %4970 = vmatprep.subr.bf16.mxu0 0
      %4971 = vmatpush1.bf16.msra.mxu0 %v4933
      %4972 = vmatprep.subr.bf16.mxu0 0
      %4973 = vmatpush2.bf16.msra.mxu0 0
      %4974 = vmatprep.subr.bf16.mxu0 0
      %4975 = vmatpush2.bf16.msra.mxu0 0
      %4976 = vmatprep.subr.bf16.mxu0 0
      %4977 = vmatpush2.bf16.msra.mxu0 0
      %4978 = vmatprep.subr.bf16.mxu0 0
      %4979 = vmatpush2.bf16.msra.mxu0 0
      %4980 = vmatprep.subr.bf16.mxu0 0
      %4981 = vmatpush2.bf16.msra.mxu0 0
      %4982 = vmatprep.subr.bf16.mxu0 0
      %4983 = vmatpush2.bf16.msra.mxu0 0
      %4984 = vmatprep.subr.bf16.mxu0 0
      %4985 = vmatpush2.bf16.msra.mxu0 0
      %4986 = vmatprep.subr.bf16.mxu0 0
      %4987 = vmatpush2.bf16.msra.mxu0 0
      %4988 = vmatprep.mubr.bf16.mxu0 0
      %4989 = vmatmul.mubr.bf16.gmra.mxu0 %v4945
      %v4990 = vpop.f32.mrf.mxu0
      %v4991 = vadd.f32 0.0, %v4990
      %v4992 = vpop.f32.mrf.mxu0
      %v4993 = vpop.f32.mrf.mxu0
      %v4994 = vadd.f32 0.0, %v4993
      %v4995 = vpop.f32.mrf.mxu0
      %4996 = vmatprep.mubr.bf16.mxu0 0
      %4997 = vmatmul.mubr.bf16.gmra.mxu0 %v4948
      %v4998 = vpop.f32.mrf.mxu0
      %v4999 = vadd.f32 0.0, %v4998
      %v5000 = vpop.f32.mrf.mxu0
      %v5001 = vpop.f32.mrf.mxu0
      %v5002 = vadd.f32 0.0, %v5001
      %v5003 = vpop.f32.mrf.mxu0
      %5004 = vmatprep.mubr.bf16.mxu0 0
      %5005 = vmatmul.mubr.bf16.gmra.mxu0 %v4951
      %v5006 = vpop.f32.mrf.mxu0
      %v5007 = vadd.f32 0.0, %v5006
      %v5008 = vpop.f32.mrf.mxu0
      %v5009 = vpop.f32.mrf.mxu0
      %v5010 = vadd.f32 0.0, %v5009
      %v5011 = vpop.f32.mrf.mxu0
      %5012 = vmatprep.mubr.bf16.mxu0 0
      %5013 = vmatmul.mubr.bf16.gmra.mxu0 %v4954
      %v5014 = vpop.f32.mrf.mxu0
      %v5015 = vadd.f32 0.0, %v5014
      %v5016 = vpop.f32.mrf.mxu0
      %v5017 = vpop.f32.mrf.mxu0
      %v5018 = vadd.f32 0.0, %v5017
      %v5019 = vpop.f32.mrf.mxu0
      %5020 = vdwg.mxu0
      %5021 = vrot.lane.b32.xlu0 %v1188, 64
      %v5022 = vpop.permute.xlu0 %5021
      %5023 = vrot.lane.b32.xlu0 %v1190, 64
      %v5024 = vpop.permute.xlu0 %5023
      %5025 = vrot.lane.b32.xlu0 %v1192, 64
      %v5026 = vpop.permute.xlu0 %5025
      %5027 = vrot.lane.b32.xlu0 %v1194, 64
      %v5028 = vpop.permute.xlu0 %5027
      %v5034 = vsel %vm2836, %v4277, 0
      %v5037 = vsel %vm2836, %v4278, 0
      %v5040 = vsel %vm2836, %v4279, 0
      %v5043 = vsel %vm2836, %v4280, 0
      %5045 = vmatprep.subr.bf16.mxu0 0
      %5046 = vmatpush1.bf16.msra.mxu0 0
      %5047 = vmatprep.subr.bf16.mxu0 0
      %5048 = vmatpush1.bf16.msra.mxu0 0
      %5049 = vmatprep.subr.bf16.mxu0 0
      %5050 = vmatpush1.bf16.msra.mxu0 0
      %5051 = vmatprep.subr.bf16.mxu0 0
      %5052 = vmatpush1.bf16.msra.mxu0 0
      %5053 = vmatprep.subr.bf16.mxu0 0
      %5054 = vmatpush1.bf16.msra.mxu0 %v5028
      %5055 = vmatprep.subr.bf16.mxu0 0
      %5056 = vmatpush1.bf16.msra.mxu0 %v5026
      %5057 = vmatprep.subr.bf16.mxu0 0
      %5058 = vmatpush1.bf16.msra.mxu0 %v5024
      %5059 = vmatprep.subr.bf16.mxu0 0
      %5060 = vmatpush1.bf16.msra.mxu0 %v5022
      %5061 = vmatprep.subr.bf16.mxu0 0
      %5062 = vmatpush2.bf16.msra.mxu0 0
      %5063 = vmatprep.subr.bf16.mxu0 0
      %5064 = vmatpush2.bf16.msra.mxu0 0
      %5065 = vmatprep.subr.bf16.mxu0 0
      %5066 = vmatpush2.bf16.msra.mxu0 0
      %5067 = vmatprep.subr.bf16.mxu0 0
      %5068 = vmatpush2.bf16.msra.mxu0 0
      %5069 = vmatprep.subr.bf16.mxu0 0
      %5070 = vmatpush2.bf16.msra.mxu0 0
      %5071 = vmatprep.subr.bf16.mxu0 0
      %5072 = vmatpush2.bf16.msra.mxu0 0
      %5073 = vmatprep.subr.bf16.mxu0 0
      %5074 = vmatpush2.bf16.msra.mxu0 0
      %5075 = vmatprep.subr.bf16.mxu0 0
      %5076 = vmatpush2.bf16.msra.mxu0 0
      %5077 = vmatprep.mubr.bf16.mxu0 0
      %5078 = vmatmul.mubr.bf16.gmra.mxu0 %v5034
      %v5079 = vpop.f32.mrf.mxu0
      %v5080 = vadd.f32 0.0, %v5079
      %v5081 = vpop.f32.mrf.mxu0
      %v5082 = vpop.f32.mrf.mxu0
      %v5083 = vadd.f32 0.0, %v5082
      %v5084 = vpop.f32.mrf.mxu0
      %5085 = vmatprep.mubr.bf16.mxu0 0
      %5086 = vmatmul.mubr.bf16.gmra.mxu0 %v5037
      %v5087 = vpop.f32.mrf.mxu0
      %v5088 = vadd.f32 0.0, %v5087
      %v5089 = vpop.f32.mrf.mxu0
      %v5090 = vpop.f32.mrf.mxu0
      %v5091 = vadd.f32 0.0, %v5090
      %v5092 = vpop.f32.mrf.mxu0
      %5093 = vmatprep.mubr.bf16.mxu0 0
      %5094 = vmatmul.mubr.bf16.gmra.mxu0 %v5040
      %v5095 = vpop.f32.mrf.mxu0
      %v5096 = vadd.f32 0.0, %v5095
      %v5097 = vpop.f32.mrf.mxu0
      %v5098 = vpop.f32.mrf.mxu0
      %v5099 = vadd.f32 0.0, %v5098
      %v5100 = vpop.f32.mrf.mxu0
      %5101 = vmatprep.mubr.bf16.mxu0 0
      %5102 = vmatmul.mubr.bf16.gmra.mxu0 %v5043
      %v5103 = vpop.f32.mrf.mxu0
      %v5104 = vadd.f32 0.0, %v5103
      %v5105 = vpop.f32.mrf.mxu0
      %v5106 = vpop.f32.mrf.mxu0
      %v5107 = vadd.f32 0.0, %v5106
      %v5108 = vpop.f32.mrf.mxu0
      %5109 = vdwg.mxu0
      %5110 = vrot.lane.b32.xlu0 %v1196, 64
      %v5111 = vpop.permute.xlu0 %5110
      %5112 = vrot.lane.b32.xlu0 %v1198, 64
      %v5113 = vpop.permute.xlu0 %5112
      %5114 = vrot.lane.b32.xlu0 %v1200, 64
      %v5115 = vpop.permute.xlu0 %5114
      %5116 = vrot.lane.b32.xlu0 %v1202, 64
      %v5117 = vpop.permute.xlu0 %5116
      %v5123 = vsel %vm2836, %v4281, 0
      %v5126 = vsel %vm2836, %v4282, 0
      %v5129 = vsel %vm2836, %v4283, 0
      %v5132 = vsel %vm2836, %v4284, 0
      %5134 = vmatprep.subr.bf16.mxu0 0
      %5135 = vmatpush1.bf16.msra.mxu0 0
      %5136 = vmatprep.subr.bf16.mxu0 0
      %5137 = vmatpush1.bf16.msra.mxu0 0
      %5138 = vmatprep.subr.bf16.mxu0 0
      %5139 = vmatpush1.bf16.msra.mxu0 0
      %5140 = vmatprep.subr.bf16.mxu0 0
      %5141 = vmatpush1.bf16.msra.mxu0 0
      %5142 = vmatprep.subr.bf16.mxu0 0
      %5143 = vmatpush1.bf16.msra.mxu0 %v5117
      %5144 = vmatprep.subr.bf16.mxu0 0
      %5145 = vmatpush1.bf16.msra.mxu0 %v5115
      %5146 = vmatprep.subr.bf16.mxu0 0
      %5147 = vmatpush1.bf16.msra.mxu0 %v5113
      %5148 = vmatprep.subr.bf16.mxu0 0
      %5149 = vmatpush1.bf16.msra.mxu0 %v5111
      %5150 = vmatprep.subr.bf16.mxu0 0
      %5151 = vmatpush2.bf16.msra.mxu0 0
      %5152 = vmatprep.subr.bf16.mxu0 0
      %5153 = vmatpush2.bf16.msra.mxu0 0
      %5154 = vmatprep.subr.bf16.mxu0 0
      %5155 = vmatpush2.bf16.msra.mxu0 0
      %5156 = vmatprep.subr.bf16.mxu0 0
      %5157 = vmatpush2.bf16.msra.mxu0 0
      %5158 = vmatprep.subr.bf16.mxu0 0
      %5159 = vmatpush2.bf16.msra.mxu0 0
      %5160 = vmatprep.subr.bf16.mxu0 0
      %5161 = vmatpush2.bf16.msra.mxu0 0
      %5162 = vmatprep.subr.bf16.mxu0 0
      %5163 = vmatpush2.bf16.msra.mxu0 0
      %5164 = vmatprep.subr.bf16.mxu0 0
      %5165 = vmatpush2.bf16.msra.mxu0 0
      %5166 = vmatprep.mubr.bf16.mxu0 0
      %5167 = vmatmul.mubr.bf16.gmra.mxu0 %v5123
      %v5168 = vpop.f32.mrf.mxu0
      %v5169 = vadd.f32 0.0, %v5168
      %v5170 = vpop.f32.mrf.mxu0
      %v5171 = vpop.f32.mrf.mxu0
      %v5172 = vadd.f32 0.0, %v5171
      %v5173 = vpop.f32.mrf.mxu0
      %5174 = vmatprep.mubr.bf16.mxu0 0
      %5175 = vmatmul.mubr.bf16.gmra.mxu0 %v5126
      %v5176 = vpop.f32.mrf.mxu0
      %v5177 = vadd.f32 0.0, %v5176
      %v5178 = vpop.f32.mrf.mxu0
      %v5179 = vpop.f32.mrf.mxu0
      %v5180 = vadd.f32 0.0, %v5179
      %v5181 = vpop.f32.mrf.mxu0
      %5182 = vmatprep.mubr.bf16.mxu0 0
      %5183 = vmatmul.mubr.bf16.gmra.mxu0 %v5129
      %v5184 = vpop.f32.mrf.mxu0
      %v5185 = vadd.f32 0.0, %v5184
      %v5186 = vpop.f32.mrf.mxu0
      %v5187 = vpop.f32.mrf.mxu0
      %v5188 = vadd.f32 0.0, %v5187
      %v5189 = vpop.f32.mrf.mxu0
      %5190 = vmatprep.mubr.bf16.mxu0 0
      %5191 = vmatmul.mubr.bf16.gmra.mxu0 %v5132
      %v5192 = vpop.f32.mrf.mxu0
      %v5193 = vadd.f32 0.0, %v5192
      %v5194 = vpop.f32.mrf.mxu0
      %v5195 = vpop.f32.mrf.mxu0
      %v5196 = vadd.f32 0.0, %v5195
      %v5197 = vpop.f32.mrf.mxu0
      %5198 = vdwg.mxu0
      %5199 = vrot.lane.b32.xlu0 %v1204, 64
      %v5200 = vpop.permute.xlu0 %5199
      %5201 = vrot.lane.b32.xlu0 %v1206, 64
      %v5202 = vpop.permute.xlu0 %5201
      %5203 = vrot.lane.b32.xlu0 %v1208, 64
      %v5204 = vpop.permute.xlu0 %5203
      %5205 = vrot.lane.b32.xlu0 %v1210, 64
      %v5206 = vpop.permute.xlu0 %5205
      %v5212 = vsel %vm2836, %v4285, 0
      %v5215 = vsel %vm2836, %v4286, 0
      %v5218 = vsel %vm2836, %v4287, 0
      %v5221 = vsel %vm2836, %v4288, 0
      %5223 = vmatprep.subr.bf16.mxu0 0
      %5224 = vmatpush1.bf16.msra.mxu0 0
      %5225 = vmatprep.subr.bf16.mxu0 0
      %5226 = vmatpush1.bf16.msra.mxu0 0
      %5227 = vmatprep.subr.bf16.mxu0 0
      %5228 = vmatpush1.bf16.msra.mxu0 0
      %5229 = vmatprep.subr.bf16.mxu0 0
      %5230 = vmatpush1.bf16.msra.mxu0 0
      %5231 = vmatprep.subr.bf16.mxu0 0
      %5232 = vmatpush1.bf16.msra.mxu0 %v5206
      %5233 = vmatprep.subr.bf16.mxu0 0
      %5234 = vmatpush1.bf16.msra.mxu0 %v5204
      %5235 = vmatprep.subr.bf16.mxu0 0
      %5236 = vmatpush1.bf16.msra.mxu0 %v5202
      %5237 = vmatprep.subr.bf16.mxu0 0
      %5238 = vmatpush1.bf16.msra.mxu0 %v5200
      %5239 = vmatprep.subr.bf16.mxu0 0
      %5240 = vmatpush2.bf16.msra.mxu0 0
      %5241 = vmatprep.subr.bf16.mxu0 0
      %5242 = vmatpush2.bf16.msra.mxu0 0
      %5243 = vmatprep.subr.bf16.mxu0 0
      %5244 = vmatpush2.bf16.msra.mxu0 0
      %5245 = vmatprep.subr.bf16.mxu0 0
      %5246 = vmatpush2.bf16.msra.mxu0 0
      %5247 = vmatprep.subr.bf16.mxu0 0
      %5248 = vmatpush2.bf16.msra.mxu0 0
      %5249 = vmatprep.subr.bf16.mxu0 0
      %5250 = vmatpush2.bf16.msra.mxu0 0
      %5251 = vmatprep.subr.bf16.mxu0 0
      %5252 = vmatpush2.bf16.msra.mxu0 0
      %5253 = vmatprep.subr.bf16.mxu0 0
      %5254 = vmatpush2.bf16.msra.mxu0 0
      %5255 = vmatprep.mubr.bf16.mxu0 0
      %5256 = vmatmul.mubr.bf16.gmra.mxu0 %v5212
      %v5257 = vpop.f32.mrf.mxu0
      %v5258 = vadd.f32 0.0, %v5257
      %v5259 = vpop.f32.mrf.mxu0
      %v5260 = vpop.f32.mrf.mxu0
      %v5261 = vadd.f32 0.0, %v5260
      %v5262 = vpop.f32.mrf.mxu0
      %5263 = vmatprep.mubr.bf16.mxu0 0
      %5264 = vmatmul.mubr.bf16.gmra.mxu0 %v5215
      %v5265 = vpop.f32.mrf.mxu0
      %v5266 = vadd.f32 0.0, %v5265
      %v5267 = vpop.f32.mrf.mxu0
      %v5268 = vpop.f32.mrf.mxu0
      %v5269 = vadd.f32 0.0, %v5268
      %v5270 = vpop.f32.mrf.mxu0
      %5271 = vmatprep.mubr.bf16.mxu0 0
      %5272 = vmatmul.mubr.bf16.gmra.mxu0 %v5218
      %v5273 = vpop.f32.mrf.mxu0
      %v5274 = vadd.f32 0.0, %v5273
      %v5275 = vpop.f32.mrf.mxu0
      %v5276 = vpop.f32.mrf.mxu0
      %v5277 = vadd.f32 0.0, %v5276
      %v5278 = vpop.f32.mrf.mxu0
      %5279 = vmatprep.mubr.bf16.mxu0 0
      %5280 = vmatmul.mubr.bf16.gmra.mxu0 %v5221
      %v5281 = vpop.f32.mrf.mxu0
      %v5282 = vadd.f32 0.0, %v5281
      %v5283 = vpop.f32.mrf.mxu0
      %v5284 = vpop.f32.mrf.mxu0
      %v5285 = vadd.f32 0.0, %v5284
      %v5286 = vpop.f32.mrf.mxu0
      %5287 = vdwg.mxu0
      %5288 = vrot.lane.b32.xlu0 %v1212, 64
      %v5289 = vpop.permute.xlu0 %5288
      %5290 = vrot.lane.b32.xlu0 %v1214, 64
      %v5291 = vpop.permute.xlu0 %5290
      %5292 = vrot.lane.b32.xlu0 %v1216, 64
      %v5293 = vpop.permute.xlu0 %5292
      %5294 = vrot.lane.b32.xlu0 %v1218, 64
      %v5295 = vpop.permute.xlu0 %5294
      %v5301 = vsel %vm2836, %v4289, 0
      %v5304 = vsel %vm2836, %v4290, 0
      %v5307 = vsel %vm2836, %v4291, 0
      %v5310 = vsel %vm2836, %v4292, 0
      %5312 = vmatprep.subr.bf16.mxu0 0
      %5313 = vmatpush1.bf16.msra.mxu0 0
      %5314 = vmatprep.subr.bf16.mxu0 0
      %5315 = vmatpush1.bf16.msra.mxu0 0
      %5316 = vmatprep.subr.bf16.mxu0 0
      %5317 = vmatpush1.bf16.msra.mxu0 0
      %5318 = vmatprep.subr.bf16.mxu0 0
      %5319 = vmatpush1.bf16.msra.mxu0 0
      %5320 = vmatprep.subr.bf16.mxu0 0
      %5321 = vmatpush1.bf16.msra.mxu0 %v5295
      %5322 = vmatprep.subr.bf16.mxu0 0
      %5323 = vmatpush1.bf16.msra.mxu0 %v5293
      %5324 = vmatprep.subr.bf16.mxu0 0
      %5325 = vmatpush1.bf16.msra.mxu0 %v5291
      %5326 = vmatprep.subr.bf16.mxu0 0
      %5327 = vmatpush1.bf16.msra.mxu0 %v5289
      %5328 = vmatprep.subr.bf16.mxu0 0
      %5329 = vmatpush2.bf16.msra.mxu0 0
      %5330 = vmatprep.subr.bf16.mxu0 0
      %5331 = vmatpush2.bf16.msra.mxu0 0
      %5332 = vmatprep.subr.bf16.mxu0 0
      %5333 = vmatpush2.bf16.msra.mxu0 0
      %5334 = vmatprep.subr.bf16.mxu0 0
      %5335 = vmatpush2.bf16.msra.mxu0 0
      %5336 = vmatprep.subr.bf16.mxu0 0
      %5337 = vmatpush2.bf16.msra.mxu0 0
      %5338 = vmatprep.subr.bf16.mxu0 0
      %5339 = vmatpush2.bf16.msra.mxu0 0
      %5340 = vmatprep.subr.bf16.mxu0 0
      %5341 = vmatpush2.bf16.msra.mxu0 0
      %5342 = vmatprep.subr.bf16.mxu0 0
      %5343 = vmatpush2.bf16.msra.mxu0 0
      %5344 = vmatprep.mubr.bf16.mxu0 0
      %5345 = vmatmul.mubr.bf16.gmra.mxu0 %v5301
      %v5346 = vpop.f32.mrf.mxu0
      %v5347 = vadd.f32 0.0, %v5346
      %v5348 = vpop.f32.mrf.mxu0
      %v5349 = vpop.f32.mrf.mxu0
      %v5350 = vadd.f32 0.0, %v5349
      %v5351 = vpop.f32.mrf.mxu0
      %5352 = vmatprep.mubr.bf16.mxu0 0
      %5353 = vmatmul.mubr.bf16.gmra.mxu0 %v5304
      %v5354 = vpop.f32.mrf.mxu0
      %v5355 = vadd.f32 0.0, %v5354
      %v5356 = vpop.f32.mrf.mxu0
      %v5357 = vpop.f32.mrf.mxu0
      %v5358 = vadd.f32 0.0, %v5357
      %v5359 = vpop.f32.mrf.mxu0
      %5360 = vmatprep.mubr.bf16.mxu0 0
      %5361 = vmatmul.mubr.bf16.gmra.mxu0 %v5307
      %v5362 = vpop.f32.mrf.mxu0
      %v5363 = vadd.f32 0.0, %v5362
      %v5364 = vpop.f32.mrf.mxu0
      %v5365 = vpop.f32.mrf.mxu0
      %v5366 = vadd.f32 0.0, %v5365
      %v5367 = vpop.f32.mrf.mxu0
      %5368 = vmatprep.mubr.bf16.mxu0 0
      %5369 = vmatmul.mubr.bf16.gmra.mxu0 %v5310
      %v5370 = vpop.f32.mrf.mxu0
      %v5371 = vadd.f32 0.0, %v5370
      %v5372 = vpop.f32.mrf.mxu0
      %v5373 = vpop.f32.mrf.mxu0
      %v5374 = vadd.f32 0.0, %v5373
      %v5375 = vpop.f32.mrf.mxu0
      %5376 = vdwg.mxu0
      %5377 = vrot.lane.b32.xlu0 %v1220, 64
      %v5378 = vpop.permute.xlu0 %5377
      %5379 = vrot.lane.b32.xlu0 %v1222, 64
      %v5380 = vpop.permute.xlu0 %5379
      %5381 = vrot.lane.b32.xlu0 %v1224, 64
      %v5382 = vpop.permute.xlu0 %5381
      %5383 = vrot.lane.b32.xlu0 %v1226, 64
      %v5384 = vpop.permute.xlu0 %5383
      %v5390 = vsel %vm2836, %v4293, 0
      %v5393 = vsel %vm2836, %v4294, 0
      %v5396 = vsel %vm2836, %v4295, 0
      %v5399 = vsel %vm2836, %v4296, 0
      %5401 = vmatprep.subr.bf16.mxu0 0
      %5402 = vmatpush1.bf16.msra.mxu0 0
      %5403 = vmatprep.subr.bf16.mxu0 0
      %5404 = vmatpush1.bf16.msra.mxu0 0
      %5405 = vmatprep.subr.bf16.mxu0 0
      %5406 = vmatpush1.bf16.msra.mxu0 0
      %5407 = vmatprep.subr.bf16.mxu0 0
      %5408 = vmatpush1.bf16.msra.mxu0 0
      %5409 = vmatprep.subr.bf16.mxu0 0
      %5410 = vmatpush1.bf16.msra.mxu0 %v5384
      %5411 = vmatprep.subr.bf16.mxu0 0
      %5412 = vmatpush1.bf16.msra.mxu0 %v5382
      %5413 = vmatprep.subr.bf16.mxu0 0
      %5414 = vmatpush1.bf16.msra.mxu0 %v5380
      %5415 = vmatprep.subr.bf16.mxu0 0
      %5416 = vmatpush1.bf16.msra.mxu0 %v5378
      %5417 = vmatprep.subr.bf16.mxu0 0
      %5418 = vmatpush2.bf16.msra.mxu0 0
      %5419 = vmatprep.subr.bf16.mxu0 0
      %5420 = vmatpush2.bf16.msra.mxu0 0
      %5421 = vmatprep.subr.bf16.mxu0 0
      %5422 = vmatpush2.bf16.msra.mxu0 0
      %5423 = vmatprep.subr.bf16.mxu0 0
      %5424 = vmatpush2.bf16.msra.mxu0 0
      %5425 = vmatprep.subr.bf16.mxu0 0
      %5426 = vmatpush2.bf16.msra.mxu0 0
      %5427 = vmatprep.subr.bf16.mxu0 0
      %5428 = vmatpush2.bf16.msra.mxu0 0
      %5429 = vmatprep.subr.bf16.mxu0 0
      %5430 = vmatpush2.bf16.msra.mxu0 0
      %5431 = vmatprep.subr.bf16.mxu0 0
      %5432 = vmatpush2.bf16.msra.mxu0 0
      %5433 = vmatprep.mubr.bf16.mxu0 0
      %5434 = vmatmul.mubr.bf16.gmra.mxu0 %v5390
      %v5435 = vpop.f32.mrf.mxu0
      %v5436 = vadd.f32 0.0, %v5435
      %v5437 = vpop.f32.mrf.mxu0
      %v5438 = vpop.f32.mrf.mxu0
      %v5439 = vadd.f32 0.0, %v5438
      %v5440 = vpop.f32.mrf.mxu0
      %5441 = vmatprep.mubr.bf16.mxu0 0
      %5442 = vmatmul.mubr.bf16.gmra.mxu0 %v5393
      %v5443 = vpop.f32.mrf.mxu0
      %v5444 = vadd.f32 0.0, %v5443
      %v5445 = vpop.f32.mrf.mxu0
      %v5446 = vpop.f32.mrf.mxu0
      %v5447 = vadd.f32 0.0, %v5446
      %v5448 = vpop.f32.mrf.mxu0
      %5449 = vmatprep.mubr.bf16.mxu0 0
      %5450 = vmatmul.mubr.bf16.gmra.mxu0 %v5396
      %v5451 = vpop.f32.mrf.mxu0
      %v5452 = vadd.f32 0.0, %v5451
      %v5453 = vpop.f32.mrf.mxu0
      %v5454 = vpop.f32.mrf.mxu0
      %v5455 = vadd.f32 0.0, %v5454
      %v5456 = vpop.f32.mrf.mxu0
      %5457 = vmatprep.mubr.bf16.mxu0 0
      %5458 = vmatmul.mubr.bf16.gmra.mxu0 %v5399
      %v5459 = vpop.f32.mrf.mxu0
      %v5460 = vadd.f32 0.0, %v5459
      %v5461 = vpop.f32.mrf.mxu0
      %v5462 = vpop.f32.mrf.mxu0
      %v5463 = vadd.f32 0.0, %v5462
      %v5464 = vpop.f32.mrf.mxu0
      %5465 = vdwg.mxu0
      %5466 = vrot.lane.b32.xlu0 %v1228, 64
      %v5467 = vpop.permute.xlu0 %5466
      %5468 = vrot.lane.b32.xlu0 %v1230, 64
      %v5469 = vpop.permute.xlu0 %5468
      %5470 = vrot.lane.b32.xlu0 %v1232, 64
      %v5471 = vpop.permute.xlu0 %5470
      %5472 = vrot.lane.b32.xlu0 %v1234, 64
      %v5473 = vpop.permute.xlu0 %5472
      %v5479 = vsel %vm2836, %v4297, 0
      %v5482 = vsel %vm2836, %v4298, 0
      %v5485 = vsel %vm2836, %v4299, 0
      %v5488 = vsel %vm2836, %v4300, 0
      %5490 = vmatprep.subr.bf16.mxu0 0
      %5491 = vmatpush1.bf16.msra.mxu0 0
      %5492 = vmatprep.subr.bf16.mxu0 0
      %5493 = vmatpush1.bf16.msra.mxu0 0
      %5494 = vmatprep.subr.bf16.mxu0 0
      %5495 = vmatpush1.bf16.msra.mxu0 0
      %5496 = vmatprep.subr.bf16.mxu0 0
      %5497 = vmatpush1.bf16.msra.mxu0 0
      %5498 = vmatprep.subr.bf16.mxu0 0
      %5499 = vmatpush1.bf16.msra.mxu0 %v5473
      %5500 = vmatprep.subr.bf16.mxu0 0
      %5501 = vmatpush1.bf16.msra.mxu0 %v5471
      %5502 = vmatprep.subr.bf16.mxu0 0
      %5503 = vmatpush1.bf16.msra.mxu0 %v5469
      %5504 = vmatprep.subr.bf16.mxu0 0
      %5505 = vmatpush1.bf16.msra.mxu0 %v5467
      %5506 = vmatprep.subr.bf16.mxu0 0
      %5507 = vmatpush2.bf16.msra.mxu0 0
      %5508 = vmatprep.subr.bf16.mxu0 0
      %5509 = vmatpush2.bf16.msra.mxu0 0
      %5510 = vmatprep.subr.bf16.mxu0 0
      %5511 = vmatpush2.bf16.msra.mxu0 0
      %5512 = vmatprep.subr.bf16.mxu0 0
      %5513 = vmatpush2.bf16.msra.mxu0 0
      %5514 = vmatprep.subr.bf16.mxu0 0
      %5515 = vmatpush2.bf16.msra.mxu0 0
      %5516 = vmatprep.subr.bf16.mxu0 0
      %5517 = vmatpush2.bf16.msra.mxu0 0
      %5518 = vmatprep.subr.bf16.mxu0 0
      %5519 = vmatpush2.bf16.msra.mxu0 0
      %5520 = vmatprep.subr.bf16.mxu0 0
      %5521 = vmatpush2.bf16.msra.mxu0 0
      %5522 = vmatprep.mubr.bf16.mxu0 0
      %5523 = vmatmul.mubr.bf16.gmra.mxu0 %v5479
      %v5524 = vpop.f32.mrf.mxu0
      %v5525 = vadd.f32 0.0, %v5524
      %v5526 = vpop.f32.mrf.mxu0
      %v5527 = vpop.f32.mrf.mxu0
      %v5528 = vadd.f32 0.0, %v5527
      %v5529 = vpop.f32.mrf.mxu0
      %5530 = vmatprep.mubr.bf16.mxu0 0
      %5531 = vmatmul.mubr.bf16.gmra.mxu0 %v5482
      %v5532 = vpop.f32.mrf.mxu0
      %v5533 = vadd.f32 0.0, %v5532
      %v5534 = vpop.f32.mrf.mxu0
      %v5535 = vpop.f32.mrf.mxu0
      %v5536 = vadd.f32 0.0, %v5535
      %v5537 = vpop.f32.mrf.mxu0
      %5538 = vmatprep.mubr.bf16.mxu0 0
      %5539 = vmatmul.mubr.bf16.gmra.mxu0 %v5485
      %v5540 = vpop.f32.mrf.mxu0
      %v5541 = vadd.f32 0.0, %v5540
      %v5542 = vpop.f32.mrf.mxu0
      %v5543 = vpop.f32.mrf.mxu0
      %v5544 = vadd.f32 0.0, %v5543
      %v5545 = vpop.f32.mrf.mxu0
      %5546 = vmatprep.mubr.bf16.mxu0 0
      %5547 = vmatmul.mubr.bf16.gmra.mxu0 %v5488
      %v5548 = vpop.f32.mrf.mxu0
      %v5549 = vadd.f32 0.0, %v5548
      %v5550 = vpop.f32.mrf.mxu0
      %v5551 = vpop.f32.mrf.mxu0
      %v5552 = vadd.f32 0.0, %v5551
      %v5553 = vpop.f32.mrf.mxu0
      %5554 = vdwg.mxu0
      %5555 = vrot.lane.b32.xlu0 %v1236, 64
      %v5556 = vpop.permute.xlu0 %5555
      %5557 = vrot.lane.b32.xlu0 %v1238, 64
      %v5558 = vpop.permute.xlu0 %5557
      %5559 = vrot.lane.b32.xlu0 %v1240, 64
      %v5560 = vpop.permute.xlu0 %5559
      %5561 = vrot.lane.b32.xlu0 %v1242, 64
      %v5562 = vpop.permute.xlu0 %5561
      %v5568 = vsel %vm2836, %v4301, 0
      %v5571 = vsel %vm2836, %v4302, 0
      %v5574 = vsel %vm2836, %v4303, 0
      %v5577 = vsel %vm2836, %v4304, 0
      %5579 = vmatprep.subr.bf16.mxu0 0
      %5580 = vmatpush1.bf16.msra.mxu0 0
      %5581 = vmatprep.subr.bf16.mxu0 0
      %5582 = vmatpush1.bf16.msra.mxu0 0
      %5583 = vmatprep.subr.bf16.mxu0 0
      %5584 = vmatpush1.bf16.msra.mxu0 0
      %5585 = vmatprep.subr.bf16.mxu0 0
      %5586 = vmatpush1.bf16.msra.mxu0 0
      %5587 = vmatprep.subr.bf16.mxu0 0
      %5588 = vmatpush1.bf16.msra.mxu0 %v5562
      %5589 = vmatprep.subr.bf16.mxu0 0
      %5590 = vmatpush1.bf16.msra.mxu0 %v5560
      %5591 = vmatprep.subr.bf16.mxu0 0
      %5592 = vmatpush1.bf16.msra.mxu0 %v5558
      %5593 = vmatprep.subr.bf16.mxu0 0
      %5594 = vmatpush1.bf16.msra.mxu0 %v5556
      %5595 = vmatprep.subr.bf16.mxu0 0
      %5596 = vmatpush2.bf16.msra.mxu0 0
      %5597 = vmatprep.subr.bf16.mxu0 0
      %5598 = vmatpush2.bf16.msra.mxu0 0
      %5599 = vmatprep.subr.bf16.mxu0 0
      %5600 = vmatpush2.bf16.msra.mxu0 0
      %5601 = vmatprep.subr.bf16.mxu0 0
      %5602 = vmatpush2.bf16.msra.mxu0 0
      %5603 = vmatprep.subr.bf16.mxu0 0
      %5604 = vmatpush2.bf16.msra.mxu0 0
      %5605 = vmatprep.subr.bf16.mxu0 0
      %5606 = vmatpush2.bf16.msra.mxu0 0
      %5607 = vmatprep.subr.bf16.mxu0 0
      %5608 = vmatpush2.bf16.msra.mxu0 0
      %5609 = vmatprep.subr.bf16.mxu0 0
      %5610 = vmatpush2.bf16.msra.mxu0 0
      %5611 = vmatprep.mubr.bf16.mxu0 0
      %5612 = vmatmul.mubr.bf16.gmra.mxu0 %v5568
      %v5613 = vpop.f32.mrf.mxu0
      %v5614 = vadd.f32 0.0, %v5613
      %v5615 = vpop.f32.mrf.mxu0
      %v5616 = vpop.f32.mrf.mxu0
      %v5617 = vadd.f32 0.0, %v5616
      %v5618 = vpop.f32.mrf.mxu0
      %5619 = vmatprep.mubr.bf16.mxu0 0
      %5620 = vmatmul.mubr.bf16.gmra.mxu0 %v5571
      %v5621 = vpop.f32.mrf.mxu0
      %v5622 = vadd.f32 0.0, %v5621
      %v5623 = vpop.f32.mrf.mxu0
      %v5624 = vpop.f32.mrf.mxu0
      %v5625 = vadd.f32 0.0, %v5624
      %v5626 = vpop.f32.mrf.mxu0
      %5627 = vmatprep.mubr.bf16.mxu0 0
      %5628 = vmatmul.mubr.bf16.gmra.mxu0 %v5574
      %v5629 = vpop.f32.mrf.mxu0
      %v5630 = vadd.f32 0.0, %v5629
      %v5631 = vpop.f32.mrf.mxu0
      %v5632 = vpop.f32.mrf.mxu0
      %v5633 = vadd.f32 0.0, %v5632
      %v5634 = vpop.f32.mrf.mxu0
      %5635 = vmatprep.mubr.bf16.mxu0 0
      %5636 = vmatmul.mubr.bf16.gmra.mxu0 %v5577
      %v5637 = vpop.f32.mrf.mxu0
      %v5638 = vadd.f32 0.0, %v5637
      %v5639 = vpop.f32.mrf.mxu0
      %v5640 = vpop.f32.mrf.mxu0
      %v5641 = vadd.f32 0.0, %v5640
      %v5642 = vpop.f32.mrf.mxu0
      %5643 = vdwg.mxu0
      %5644 = vrot.lane.b32.xlu0 %v1244, 64
      %v5645 = vpop.permute.xlu0 %5644
      %5646 = vrot.lane.b32.xlu0 %v1246, 64
      %v5647 = vpop.permute.xlu0 %5646
      %5648 = vrot.lane.b32.xlu0 %v1248, 64
      %v5649 = vpop.permute.xlu0 %5648
      %5650 = vrot.lane.b32.xlu0 %v1250, 64
      %v5651 = vpop.permute.xlu0 %5650
      %v5657 = vsel %vm2836, %v4305, 0
      %v5660 = vsel %vm2836, %v4306, 0
      %v5663 = vsel %vm2836, %v4307, 0
      %v5666 = vsel %vm2836, %v4308, 0
      %5668 = vmatprep.subr.bf16.mxu0 0
      %5669 = vmatpush1.bf16.msra.mxu0 0
      %5670 = vmatprep.subr.bf16.mxu0 0
      %5671 = vmatpush1.bf16.msra.mxu0 0
      %5672 = vmatprep.subr.bf16.mxu0 0
      %5673 = vmatpush1.bf16.msra.mxu0 0
      %5674 = vmatprep.subr.bf16.mxu0 0
      %5675 = vmatpush1.bf16.msra.mxu0 0
      %5676 = vmatprep.subr.bf16.mxu0 0
      %5677 = vmatpush1.bf16.msra.mxu0 %v5651
      %5678 = vmatprep.subr.bf16.mxu0 0
      %5679 = vmatpush1.bf16.msra.mxu0 %v5649
      %5680 = vmatprep.subr.bf16.mxu0 0
      %5681 = vmatpush1.bf16.msra.mxu0 %v5647
      %5682 = vmatprep.subr.bf16.mxu0 0
      %5683 = vmatpush1.bf16.msra.mxu0 %v5645
      %5684 = vmatprep.subr.bf16.mxu0 0
      %5685 = vmatpush2.bf16.msra.mxu0 0
      %5686 = vmatprep.subr.bf16.mxu0 0
      %5687 = vmatpush2.bf16.msra.mxu0 0
      %5688 = vmatprep.subr.bf16.mxu0 0
      %5689 = vmatpush2.bf16.msra.mxu0 0
      %5690 = vmatprep.subr.bf16.mxu0 0
      %5691 = vmatpush2.bf16.msra.mxu0 0
      %5692 = vmatprep.subr.bf16.mxu0 0
      %5693 = vmatpush2.bf16.msra.mxu0 0
      %5694 = vmatprep.subr.bf16.mxu0 0
      %5695 = vmatpush2.bf16.msra.mxu0 0
      %5696 = vmatprep.subr.bf16.mxu0 0
      %5697 = vmatpush2.bf16.msra.mxu0 0
      %5698 = vmatprep.subr.bf16.mxu0 0
      %5699 = vmatpush2.bf16.msra.mxu0 0
      %5700 = vmatprep.mubr.bf16.mxu0 0
      %5701 = vmatmul.mubr.bf16.gmra.mxu0 %v5657
      %v5702 = vpop.f32.mrf.mxu0
      %v5703 = vadd.f32 0.0, %v5702
      %v5704 = vpop.f32.mrf.mxu0
      %v5705 = vpop.f32.mrf.mxu0
      %v5706 = vadd.f32 0.0, %v5705
      %v5707 = vpop.f32.mrf.mxu0
      %5708 = vmatprep.mubr.bf16.mxu0 0
      %5709 = vmatmul.mubr.bf16.gmra.mxu0 %v5660
      %v5710 = vpop.f32.mrf.mxu0
      %v5711 = vadd.f32 0.0, %v5710
      %v5712 = vpop.f32.mrf.mxu0
      %v5713 = vpop.f32.mrf.mxu0
      %v5714 = vadd.f32 0.0, %v5713
      %v5715 = vpop.f32.mrf.mxu0
      %5716 = vmatprep.mubr.bf16.mxu0 0
      %5717 = vmatmul.mubr.bf16.gmra.mxu0 %v5663
      %v5718 = vpop.f32.mrf.mxu0
      %v5719 = vadd.f32 0.0, %v5718
      %v5720 = vpop.f32.mrf.mxu0
      %v5721 = vpop.f32.mrf.mxu0
      %v5722 = vadd.f32 0.0, %v5721
      %v5723 = vpop.f32.mrf.mxu0
      %5724 = vmatprep.mubr.bf16.mxu0 0
      %5725 = vmatmul.mubr.bf16.gmra.mxu0 %v5666
      %v5726 = vpop.f32.mrf.mxu0
      %v5727 = vadd.f32 0.0, %v5726
      %v5728 = vpop.f32.mrf.mxu0
      %v5729 = vpop.f32.mrf.mxu0
      %v5730 = vadd.f32 0.0, %v5729
      %v5731 = vpop.f32.mrf.mxu0
      %5732 = vdwg.mxu0
      %5765 = vrot.lane.b32.xlu0 %v4724, 8
      %v5766 = vpop.permute.xlu0 %5765
      %5767 = vrot.lane.b32.xlu0 %v4727, 8
      %v5768 = vpop.permute.xlu0 %5767
      %5769 = vrot.lane.b32.xlu0 %v4732, 8
      %v5770 = vpop.permute.xlu0 %5769
      %5771 = vrot.lane.b32.xlu0 %v4735, 8
      %v5772 = vpop.permute.xlu0 %5771
      %5773 = vrot.lane.b32.xlu0 %v4740, 8
      %v5774 = vpop.permute.xlu0 %5773
      %5775 = vrot.lane.b32.xlu0 %v4743, 8
      %v5776 = vpop.permute.xlu0 %5775
      %5777 = vrot.lane.b32.xlu0 %v4748, 8
      %v5778 = vpop.permute.xlu0 %5777
      %5779 = vrot.lane.b32.xlu0 %v4751, 8
      %v5780 = vpop.permute.xlu0 %5779
      %5781 = vrot.lane.b32.xlu0 %v4813, 8
      %v5782 = vpop.permute.xlu0 %5781
      %5783 = vrot.lane.b32.xlu0 %v4816, 8
      %v5784 = vpop.permute.xlu0 %5783
      %5785 = vrot.lane.b32.xlu0 %v4821, 8
      %v5786 = vpop.permute.xlu0 %5785
      %5787 = vrot.lane.b32.xlu0 %v4824, 8
      %v5788 = vpop.permute.xlu0 %5787
      %5789 = vrot.lane.b32.xlu0 %v4829, 8
      %v5790 = vpop.permute.xlu0 %5789
      %5791 = vrot.lane.b32.xlu0 %v4832, 8
      %v5792 = vpop.permute.xlu0 %5791
      %5793 = vrot.lane.b32.xlu0 %v4837, 8
      %v5794 = vpop.permute.xlu0 %5793
      %5795 = vrot.lane.b32.xlu0 %v4840, 8
      %v5796 = vpop.permute.xlu0 %5795
      %5797 = vrot.lane.b32.xlu0 %v4902, 8
      %v5798 = vpop.permute.xlu0 %5797
      %5799 = vrot.lane.b32.xlu0 %v4905, 8
      %v5800 = vpop.permute.xlu0 %5799
      %5801 = vrot.lane.b32.xlu0 %v4910, 8
      %v5802 = vpop.permute.xlu0 %5801
      %5803 = vrot.lane.b32.xlu0 %v4913, 8
      %v5804 = vpop.permute.xlu0 %5803
      %5805 = vrot.lane.b32.xlu0 %v4918, 8
      %v5806 = vpop.permute.xlu0 %5805
      %5807 = vrot.lane.b32.xlu0 %v4921, 8
      %v5808 = vpop.permute.xlu0 %5807
      %5809 = vrot.lane.b32.xlu0 %v4926, 8
      %v5810 = vpop.permute.xlu0 %5809
      %5811 = vrot.lane.b32.xlu0 %v4929, 8
      %v5812 = vpop.permute.xlu0 %5811
      %5813 = vrot.lane.b32.xlu0 %v4991, 8
      %v5814 = vpop.permute.xlu0 %5813
      %5815 = vrot.lane.b32.xlu0 %v4994, 8
      %v5816 = vpop.permute.xlu0 %5815
      %5817 = vrot.lane.b32.xlu0 %v4999, 8
      %v5818 = vpop.permute.xlu0 %5817
      %5819 = vrot.lane.b32.xlu0 %v5002, 8
      %v5820 = vpop.permute.xlu0 %5819
      %5821 = vrot.lane.b32.xlu0 %v5007, 8
      %v5822 = vpop.permute.xlu0 %5821
      %5823 = vrot.lane.b32.xlu0 %v5010, 8
      %v5824 = vpop.permute.xlu0 %5823
      %5825 = vrot.lane.b32.xlu0 %v5015, 8
      %v5826 = vpop.permute.xlu0 %5825
      %5827 = vrot.lane.b32.xlu0 %v5018, 8
      %v5828 = vpop.permute.xlu0 %5827
      %5893 = vrot.lane.b32.xlu0 %v5080, 16
      %v5894 = vpop.permute.xlu0 %5893
      %5895 = vrot.lane.b32.xlu0 %v5083, 16
      %v5896 = vpop.permute.xlu0 %5895
      %5897 = vrot.lane.b32.xlu0 %v5088, 16
      %v5898 = vpop.permute.xlu0 %5897
      %5899 = vrot.lane.b32.xlu0 %v5091, 16
      %v5900 = vpop.permute.xlu0 %5899
      %5901 = vrot.lane.b32.xlu0 %v5096, 16
      %v5902 = vpop.permute.xlu0 %5901
      %5903 = vrot.lane.b32.xlu0 %v5099, 16
      %v5904 = vpop.permute.xlu0 %5903
      %5905 = vrot.lane.b32.xlu0 %v5104, 16
      %v5906 = vpop.permute.xlu0 %5905
      %5907 = vrot.lane.b32.xlu0 %v5107, 16
      %v5908 = vpop.permute.xlu0 %5907
      %5909 = vrot.lane.b32.xlu0 %v5169, 16
      %v5910 = vpop.permute.xlu0 %5909
      %5911 = vrot.lane.b32.xlu0 %v5172, 16
      %v5912 = vpop.permute.xlu0 %5911
      %5913 = vrot.lane.b32.xlu0 %v5177, 16
      %v5914 = vpop.permute.xlu0 %5913
      %5915 = vrot.lane.b32.xlu0 %v5180, 16
      %v5916 = vpop.permute.xlu0 %5915
      %5917 = vrot.lane.b32.xlu0 %v5185, 16
      %v5918 = vpop.permute.xlu0 %5917
      %5919 = vrot.lane.b32.xlu0 %v5188, 16
      %v5920 = vpop.permute.xlu0 %5919
      %5921 = vrot.lane.b32.xlu0 %v5193, 16
      %v5922 = vpop.permute.xlu0 %5921
      %5923 = vrot.lane.b32.xlu0 %v5196, 16
      %v5924 = vpop.permute.xlu0 %5923
      %5925 = vrot.lane.b32.xlu0 %v5258, 16
      %v5926 = vpop.permute.xlu0 %5925
      %5927 = vrot.lane.b32.xlu0 %v5261, 16
      %v5928 = vpop.permute.xlu0 %5927
      %5929 = vrot.lane.b32.xlu0 %v5266, 16
      %v5930 = vpop.permute.xlu0 %5929
      %5931 = vrot.lane.b32.xlu0 %v5269, 16
      %v5932 = vpop.permute.xlu0 %5931
      %5933 = vrot.lane.b32.xlu0 %v5274, 16
      %v5934 = vpop.permute.xlu0 %5933
      %5935 = vrot.lane.b32.xlu0 %v5277, 16
      %v5936 = vpop.permute.xlu0 %5935
      %5937 = vrot.lane.b32.xlu0 %v5282, 16
      %v5938 = vpop.permute.xlu0 %5937
      %5939 = vrot.lane.b32.xlu0 %v5285, 16
      %v5940 = vpop.permute.xlu0 %5939
      %5941 = vrot.lane.b32.xlu0 %v5347, 16
      %v5942 = vpop.permute.xlu0 %5941
      %5943 = vrot.lane.b32.xlu0 %v5350, 16
      %v5944 = vpop.permute.xlu0 %5943
      %5945 = vrot.lane.b32.xlu0 %v5355, 16
      %v5946 = vpop.permute.xlu0 %5945
      %5947 = vrot.lane.b32.xlu0 %v5358, 16
      %v5948 = vpop.permute.xlu0 %5947
      %5949 = vrot.lane.b32.xlu0 %v5363, 16
      %v5950 = vpop.permute.xlu0 %5949
      %5951 = vrot.lane.b32.xlu0 %v5366, 16
      %v5952 = vpop.permute.xlu0 %5951
      %5953 = vrot.lane.b32.xlu0 %v5371, 16
      %v5954 = vpop.permute.xlu0 %5953
      %5955 = vrot.lane.b32.xlu0 %v5374, 16
      %v5956 = vpop.permute.xlu0 %5955
      %6021 = vrot.lane.b32.xlu0 %v5436, 24
      %v6022 = vpop.permute.xlu0 %6021
      %6023 = vrot.lane.b32.xlu0 %v5439, 24
      %v6024 = vpop.permute.xlu0 %6023
      %6025 = vrot.lane.b32.xlu0 %v5444, 24
      %v6026 = vpop.permute.xlu0 %6025
      %6027 = vrot.lane.b32.xlu0 %v5447, 24
      %v6028 = vpop.permute.xlu0 %6027
      %6029 = vrot.lane.b32.xlu0 %v5452, 24
      %v6030 = vpop.permute.xlu0 %6029
      %6031 = vrot.lane.b32.xlu0 %v5455, 24
      %v6032 = vpop.permute.xlu0 %6031
      %6033 = vrot.lane.b32.xlu0 %v5460, 24
      %v6034 = vpop.permute.xlu0 %6033
      %6035 = vrot.lane.b32.xlu0 %v5463, 24
      %v6036 = vpop.permute.xlu0 %6035
      %6037 = vrot.lane.b32.xlu0 %v5525, 24
      %v6038 = vpop.permute.xlu0 %6037
      %6039 = vrot.lane.b32.xlu0 %v5528, 24
      %v6040 = vpop.permute.xlu0 %6039
      %6041 = vrot.lane.b32.xlu0 %v5533, 24
      %v6042 = vpop.permute.xlu0 %6041
      %6043 = vrot.lane.b32.xlu0 %v5536, 24
      %v6044 = vpop.permute.xlu0 %6043
      %6045 = vrot.lane.b32.xlu0 %v5541, 24
      %v6046 = vpop.permute.xlu0 %6045
      %6047 = vrot.lane.b32.xlu0 %v5544, 24
      %v6048 = vpop.permute.xlu0 %6047
      %6049 = vrot.lane.b32.xlu0 %v5549, 24
      %v6050 = vpop.permute.xlu0 %6049
      %6051 = vrot.lane.b32.xlu0 %v5552, 24
      %v6052 = vpop.permute.xlu0 %6051
      %6053 = vrot.lane.b32.xlu0 %v5614, 24
      %v6054 = vpop.permute.xlu0 %6053
      %6055 = vrot.lane.b32.xlu0 %v5617, 24
      %v6056 = vpop.permute.xlu0 %6055
      %6057 = vrot.lane.b32.xlu0 %v5622, 24
      %v6058 = vpop.permute.xlu0 %6057
      %6059 = vrot.lane.b32.xlu0 %v5625, 24
      %v6060 = vpop.permute.xlu0 %6059
      %6061 = vrot.lane.b32.xlu0 %v5630, 24
      %v6062 = vpop.permute.xlu0 %6061
      %6063 = vrot.lane.b32.xlu0 %v5633, 24
      %v6064 = vpop.permute.xlu0 %6063
      %6065 = vrot.lane.b32.xlu0 %v5638, 24
      %v6066 = vpop.permute.xlu0 %6065
      %6067 = vrot.lane.b32.xlu0 %v5641, 24
      %v6068 = vpop.permute.xlu0 %6067
      %6069 = vrot.lane.b32.xlu0 %v5703, 24
      %v6070 = vpop.permute.xlu0 %6069
      %6071 = vrot.lane.b32.xlu0 %v5706, 24
      %v6072 = vpop.permute.xlu0 %6071
      %6073 = vrot.lane.b32.xlu0 %v5711, 24
      %v6074 = vpop.permute.xlu0 %6073
      %6075 = vrot.lane.b32.xlu0 %v5714, 24
      %v6076 = vpop.permute.xlu0 %6075
      %6077 = vrot.lane.b32.xlu0 %v5719, 24
      %v6078 = vpop.permute.xlu0 %6077
      %6079 = vrot.lane.b32.xlu0 %v5722, 24
      %v6080 = vpop.permute.xlu0 %6079
      %6081 = vrot.lane.b32.xlu0 %v5727, 24
      %v6082 = vpop.permute.xlu0 %6081
      %6083 = vrot.lane.b32.xlu0 %v5730, 24
      %v6084 = vpop.permute.xlu0 %6083
      %v6117 = vsel %vm1291, %v4368, %v5766
      %v6118 = vsel %vm1291, %v4371, %v5768
      %v6119 = vsel %vm1291, %v4376, %v5770
      %v6120 = vsel %vm1291, %v4379, %v5772
      %v6121 = vsel %vm1291, %v4384, %v5774
      %v6122 = vsel %vm1291, %v4387, %v5776
      %v6123 = vsel %vm1291, %v4392, %v5778
      %v6124 = vsel %vm1291, %v4395, %v5780
      %v6125 = vsel %vm1291, %v4457, %v5782
      %v6126 = vsel %vm1291, %v4460, %v5784
      %v6127 = vsel %vm1291, %v4465, %v5786
      %v6128 = vsel %vm1291, %v4468, %v5788
      %v6129 = vsel %vm1291, %v4473, %v5790
      %v6130 = vsel %vm1291, %v4476, %v5792
      %v6131 = vsel %vm1291, %v4481, %v5794
      %v6132 = vsel %vm1291, %v4484, %v5796
      %v6133 = vsel %vm1291, %v4546, %v5798
      %v6134 = vsel %vm1291, %v4549, %v5800
      %v6135 = vsel %vm1291, %v4554, %v5802
      %v6136 = vsel %vm1291, %v4557, %v5804
      %v6137 = vsel %vm1291, %v4562, %v5806
      %v6138 = vsel %vm1291, %v4565, %v5808
      %v6139 = vsel %vm1291, %v4570, %v5810
      %v6140 = vsel %vm1291, %v4573, %v5812
      %v6141 = vsel %vm1291, %v4635, %v5814
      %v6142 = vsel %vm1291, %v4638, %v5816
      %v6143 = vsel %vm1291, %v4643, %v5818
      %v6144 = vsel %vm1291, %v4646, %v5820
      %v6145 = vsel %vm1291, %v4651, %v5822
      %v6146 = vsel %vm1291, %v4654, %v5824
      %v6147 = vsel %vm1291, %v4659, %v5826
      %v6148 = vsel %vm1291, %v4662, %v5828
      %vm6149 = vcmask 130048
      %v6150 = vsel %vm6149, %v6117, %v5894
      %v6151 = vsel %vm6149, %v6118, %v5896
      %v6152 = vsel %vm6149, %v6119, %v5898
      %v6153 = vsel %vm6149, %v6120, %v5900
      %v6154 = vsel %vm6149, %v6121, %v5902
      %v6155 = vsel %vm6149, %v6122, %v5904
      %v6156 = vsel %vm6149, %v6123, %v5906
      %v6157 = vsel %vm6149, %v6124, %v5908
      %v6158 = vsel %vm6149, %v6125, %v5910
      %v6159 = vsel %vm6149, %v6126, %v5912
      %v6160 = vsel %vm6149, %v6127, %v5914
      %v6161 = vsel %vm6149, %v6128, %v5916
      %v6162 = vsel %vm6149, %v6129, %v5918
      %v6163 = vsel %vm6149, %v6130, %v5920
      %v6164 = vsel %vm6149, %v6131, %v5922
      %v6165 = vsel %vm6149, %v6132, %v5924
      %v6166 = vsel %vm6149, %v6133, %v5926
      %v6167 = vsel %vm6149, %v6134, %v5928
      %v6168 = vsel %vm6149, %v6135, %v5930
      %v6169 = vsel %vm6149, %v6136, %v5932
      %v6170 = vsel %vm6149, %v6137, %v5934
      %v6171 = vsel %vm6149, %v6138, %v5936
      %v6172 = vsel %vm6149, %v6139, %v5938
      %v6173 = vsel %vm6149, %v6140, %v5940
      %v6174 = vsel %vm6149, %v6141, %v5942
      %v6175 = vsel %vm6149, %v6142, %v5944
      %v6176 = vsel %vm6149, %v6143, %v5946
      %v6177 = vsel %vm6149, %v6144, %v5948
      %v6178 = vsel %vm6149, %v6145, %v5950
      %v6179 = vsel %vm6149, %v6146, %v5952
      %v6180 = vsel %vm6149, %v6147, %v5954
      %v6181 = vsel %vm6149, %v6148, %v5956
      %vm6182 = vcmask 195584
      %v6183 = vsel %vm6182, %v6150, %v6022
      %v6184 = vsel %vm6182, %v6151, %v6024
      %v6185 = vsel %vm6182, %v6152, %v6026
      %v6186 = vsel %vm6182, %v6153, %v6028
      %v6187 = vsel %vm6182, %v6154, %v6030
      %v6188 = vsel %vm6182, %v6155, %v6032
      %v6189 = vsel %vm6182, %v6156, %v6034
      %v6190 = vsel %vm6182, %v6157, %v6036
      %v6191 = vsel %vm6182, %v6158, %v6038
      %v6192 = vsel %vm6182, %v6159, %v6040
      %v6193 = vsel %vm6182, %v6160, %v6042
      %v6194 = vsel %vm6182, %v6161, %v6044
      %v6195 = vsel %vm6182, %v6162, %v6046
      %v6196 = vsel %vm6182, %v6163, %v6048
      %v6197 = vsel %vm6182, %v6164, %v6050
      %v6198 = vsel %vm6182, %v6165, %v6052
      %v6199 = vsel %vm6182, %v6166, %v6054
      %v6200 = vsel %vm6182, %v6167, %v6056
      %v6201 = vsel %vm6182, %v6168, %v6058
      %v6202 = vsel %vm6182, %v6169, %v6060
      %v6203 = vsel %vm6182, %v6170, %v6062
      %v6204 = vsel %vm6182, %v6171, %v6064
      %v6205 = vsel %vm6182, %v6172, %v6066
      %v6206 = vsel %vm6182, %v6173, %v6068
      %v6207 = vsel %vm6182, %v6174, %v6070
      %v6208 = vsel %vm6182, %v6175, %v6072
      %v6209 = vsel %vm6182, %v6176, %v6074
      %v6210 = vsel %vm6182, %v6177, %v6076
      %v6211 = vsel %vm6182, %v6178, %v6078
      %v6212 = vsel %vm6182, %v6179, %v6080
      %v6213 = vsel %vm6182, %v6180, %v6082
      %v6214 = vsel %vm6182, %v6181, %v6084
      %v6215 = vpack.c.bf16 %v6184, %v6183
      %v6216 = vpack.c.bf16 %v6186, %v6185
      %v6217 = vpack.c.bf16 %v6188, %v6187
      %v6218 = vpack.c.bf16 %v6190, %v6189
      %v6219 = vpack.c.bf16 %v6192, %v6191
      %v6220 = vpack.c.bf16 %v6194, %v6193
      %v6221 = vpack.c.bf16 %v6196, %v6195
      %v6222 = vpack.c.bf16 %v6198, %v6197
      %v6223 = vpack.c.bf16 %v6200, %v6199
      %v6224 = vpack.c.bf16 %v6202, %v6201
      %v6225 = vpack.c.bf16 %v6204, %v6203
      %v6226 = vpack.c.bf16 %v6206, %v6205
      %v6227 = vpack.c.bf16 %v6208, %v6207
      %v6228 = vpack.c.bf16 %v6210, %v6209
      %v6229 = vpack.c.bf16 %v6212, %v6211
      %v6230 = vpack.c.bf16 %v6214, %v6213
      %v6231 = vld [vmem:[%s4] sm:$0xf]
      %v6232 = vld [vmem:[%s4 + $0x4] sm:$0xf]
      %v6233 = vld [vmem:[%s4 + $0x8] sm:$0xf]
      %v6234 = vld [vmem:[%s4 + $0xc] sm:$0xf]
      %v6239 = vunpack.c.l.b16 %v6231
      %v6240 = vunpack.c.l.b16 %v6232
      %v6241 = vunpack.c.l.b16 %v6233
      %v6242 = vunpack.c.l.b16 %v6234
      %v6243 = vpack.c.b16 %v6240, %v6239
      %v6244 = vpack.c.b16 %v6242, %v6241
      %v6248 = vsel %vm393, %v6215, 0
      %v6251 = vsel %vm393, %v6216, 0
      %v6254 = vsel %vm393, %v6217, 0
      %v6257 = vsel %vm393, %v6218, 0
      %v6260 = vsel %vm393, %v6219, 0
      %v6263 = vsel %vm393, %v6220, 0
      %v6266 = vsel %vm393, %v6221, 0
      %v6269 = vsel %vm393, %v6222, 0
      %v6272 = vsel %vm393, %v6223, 0
      %v6275 = vsel %vm393, %v6224, 0
      %v6278 = vsel %vm393, %v6225, 0
      %v6281 = vsel %vm393, %v6226, 0
      %v6284 = vsel %vm393, %v6227, 0
      %v6287 = vsel %vm393, %v6228, 0
      %v6290 = vsel %vm393, %v6229, 0
      %v6293 = vsel %vm393, %v6230, 0
      %6295 = vmatprep.subr.bf16.mxu0 0
      %6296 = vmatpush1.bf16.msra.mxu0 0
      %6297 = vmatprep.subr.bf16.mxu0 0
      %6298 = vmatpush1.bf16.msra.mxu0 0
      %6299 = vmatprep.subr.bf16.mxu0 0
      %6300 = vmatpush1.bf16.msra.mxu0 0
      %6301 = vmatprep.subr.bf16.mxu0 0
      %6302 = vmatpush1.bf16.msra.mxu0 0
      %6303 = vmatprep.subr.bf16.mxu0 0
      %6304 = vmatpush1.bf16.msra.mxu0 0
      %6305 = vmatprep.subr.bf16.mxu0 0
      %6306 = vmatpush1.bf16.msra.mxu0 0
      %6307 = vmatprep.subr.bf16.mxu0 0
      %6308 = vmatpush1.bf16.msra.mxu0 %v6244
      %6309 = vmatprep.subr.bf16.mxu0 0
      %6310 = vmatpush1.bf16.msra.mxu0 %v6243
      %6311 = vmatprep.subr.bf16.mxu0 0
      %6312 = vmatpush2.bf16.msra.mxu0 0
      %6313 = vmatprep.subr.bf16.mxu0 0
      %6314 = vmatpush2.bf16.msra.mxu0 0
      %6315 = vmatprep.subr.bf16.mxu0 0
      %6316 = vmatpush2.bf16.msra.mxu0 0
      %6317 = vmatprep.subr.bf16.mxu0 0
      %6318 = vmatpush2.bf16.msra.mxu0 0
      %6319 = vmatprep.subr.bf16.mxu0 0
      %6320 = vmatpush2.bf16.msra.mxu0 0
      %6321 = vmatprep.subr.bf16.mxu0 0
      %6322 = vmatpush2.bf16.msra.mxu0 0
      %6323 = vmatprep.subr.bf16.mxu0 0
      %6324 = vmatpush2.bf16.msra.mxu0 0
      %6325 = vmatprep.subr.bf16.mxu0 0
      %6326 = vmatpush2.bf16.msra.mxu0 0
      %6327 = vmatprep.mubr.bf16.mxu0 0
      %6328 = vmatmul.mubr.bf16.gmra.mxu0 %v6248
      %v6329 = vpop.f32.mrf.mxu0
      %v6330 = vadd.f32 0.0, %v6329
      %v6331 = vpop.f32.mrf.mxu0
      %v6332 = vpop.f32.mrf.mxu0
      %v6333 = vadd.f32 0.0, %v6332
      %v6334 = vpop.f32.mrf.mxu0
      %6335 = vmatprep.mubr.bf16.mxu0 0
      %6336 = vmatmul.mubr.bf16.gmra.mxu0 %v6251
      %v6337 = vpop.f32.mrf.mxu0
      %v6338 = vadd.f32 0.0, %v6337
      %v6339 = vpop.f32.mrf.mxu0
      %v6340 = vpop.f32.mrf.mxu0
      %v6341 = vadd.f32 0.0, %v6340
      %v6342 = vpop.f32.mrf.mxu0
      %6343 = vmatprep.mubr.bf16.mxu0 0
      %6344 = vmatmul.mubr.bf16.gmra.mxu0 %v6254
      %v6345 = vpop.f32.mrf.mxu0
      %v6346 = vadd.f32 0.0, %v6345
      %v6347 = vpop.f32.mrf.mxu0
      %v6348 = vpop.f32.mrf.mxu0
      %v6349 = vadd.f32 0.0, %v6348
      %v6350 = vpop.f32.mrf.mxu0
      %6351 = vmatprep.mubr.bf16.mxu0 0
      %6352 = vmatmul.mubr.bf16.gmra.mxu0 %v6257
      %v6353 = vpop.f32.mrf.mxu0
      %v6354 = vadd.f32 0.0, %v6353
      %v6355 = vpop.f32.mrf.mxu0
      %v6356 = vpop.f32.mrf.mxu0
      %v6357 = vadd.f32 0.0, %v6356
      %v6358 = vpop.f32.mrf.mxu0
      %6359 = vmatprep.mubr.bf16.mxu0 0
      %6360 = vmatmul.mubr.bf16.gmra.mxu0 %v6260
      %v6361 = vpop.f32.mrf.mxu0
      %v6362 = vadd.f32 0.0, %v6361
      %v6363 = vpop.f32.mrf.mxu0
      %v6364 = vpop.f32.mrf.mxu0
      %v6365 = vadd.f32 0.0, %v6364
      %v6366 = vpop.f32.mrf.mxu0
      %6367 = vmatprep.mubr.bf16.mxu0 0
      %6368 = vmatmul.mubr.bf16.gmra.mxu0 %v6263
      %v6369 = vpop.f32.mrf.mxu0
      %v6370 = vadd.f32 0.0, %v6369
      %v6371 = vpop.f32.mrf.mxu0
      %v6372 = vpop.f32.mrf.mxu0
      %v6373 = vadd.f32 0.0, %v6372
      %v6374 = vpop.f32.mrf.mxu0
      %6375 = vmatprep.mubr.bf16.mxu0 0
      %6376 = vmatmul.mubr.bf16.gmra.mxu0 %v6266
      %v6377 = vpop.f32.mrf.mxu0
      %v6378 = vadd.f32 0.0, %v6377
      %v6379 = vpop.f32.mrf.mxu0
      %v6380 = vpop.f32.mrf.mxu0
      %v6381 = vadd.f32 0.0, %v6380
      %v6382 = vpop.f32.mrf.mxu0
      %6383 = vmatprep.mubr.bf16.mxu0 0
      %6384 = vmatmul.mubr.bf16.gmra.mxu0 %v6269
      %v6385 = vpop.f32.mrf.mxu0
      %v6386 = vadd.f32 0.0, %v6385
      %v6387 = vpop.f32.mrf.mxu0
      %v6388 = vpop.f32.mrf.mxu0
      %v6389 = vadd.f32 0.0, %v6388
      %v6390 = vpop.f32.mrf.mxu0
      %6391 = vmatprep.mubr.bf16.mxu0 0
      %6392 = vmatmul.mubr.bf16.gmra.mxu0 %v6272
      %v6393 = vpop.f32.mrf.mxu0
      %v6394 = vadd.f32 0.0, %v6393
      %v6395 = vpop.f32.mrf.mxu0
      %v6396 = vpop.f32.mrf.mxu0
      %v6397 = vadd.f32 0.0, %v6396
      %v6398 = vpop.f32.mrf.mxu0
      %6399 = vmatprep.mubr.bf16.mxu0 0
      %6400 = vmatmul.mubr.bf16.gmra.mxu0 %v6275
      %v6401 = vpop.f32.mrf.mxu0
      %v6402 = vadd.f32 0.0, %v6401
      %v6403 = vpop.f32.mrf.mxu0
      %v6404 = vpop.f32.mrf.mxu0
      %v6405 = vadd.f32 0.0, %v6404
      %v6406 = vpop.f32.mrf.mxu0
      %6407 = vmatprep.mubr.bf16.mxu0 0
      %6408 = vmatmul.mubr.bf16.gmra.mxu0 %v6278
      %v6409 = vpop.f32.mrf.mxu0
      %v6410 = vadd.f32 0.0, %v6409
      %v6411 = vpop.f32.mrf.mxu0
      %v6412 = vpop.f32.mrf.mxu0
      %v6413 = vadd.f32 0.0, %v6412
      %v6414 = vpop.f32.mrf.mxu0
      %6415 = vmatprep.mubr.bf16.mxu0 0
      %6416 = vmatmul.mubr.bf16.gmra.mxu0 %v6281
      %v6417 = vpop.f32.mrf.mxu0
      %v6418 = vadd.f32 0.0, %v6417
      %v6419 = vpop.f32.mrf.mxu0
      %v6420 = vpop.f32.mrf.mxu0
      %v6421 = vadd.f32 0.0, %v6420
      %v6422 = vpop.f32.mrf.mxu0
      %6423 = vmatprep.mubr.bf16.mxu0 0
      %6424 = vmatmul.mubr.bf16.gmra.mxu0 %v6284
      %v6425 = vpop.f32.mrf.mxu0
      %v6426 = vadd.f32 0.0, %v6425
      %v6427 = vpop.f32.mrf.mxu0
      %v6428 = vpop.f32.mrf.mxu0
      %v6429 = vadd.f32 0.0, %v6428
      %v6430 = vpop.f32.mrf.mxu0
      %6431 = vmatprep.mubr.bf16.mxu0 0
      %6432 = vmatmul.mubr.bf16.gmra.mxu0 %v6287
      %v6433 = vpop.f32.mrf.mxu0
      %v6434 = vadd.f32 0.0, %v6433
      %v6435 = vpop.f32.mrf.mxu0
      %v6436 = vpop.f32.mrf.mxu0
      %v6437 = vadd.f32 0.0, %v6436
      %v6438 = vpop.f32.mrf.mxu0
      %6439 = vmatprep.mubr.bf16.mxu0 0
      %6440 = vmatmul.mubr.bf16.gmra.mxu0 %v6290
      %v6441 = vpop.f32.mrf.mxu0
      %v6442 = vadd.f32 0.0, %v6441
      %v6443 = vpop.f32.mrf.mxu0
      %v6444 = vpop.f32.mrf.mxu0
      %v6445 = vadd.f32 0.0, %v6444
      %v6446 = vpop.f32.mrf.mxu0
      %6447 = vmatprep.mubr.bf16.mxu0 0
      %6448 = vmatmul.mubr.bf16.gmra.mxu0 %v6293
      %v6449 = vpop.f32.mrf.mxu0
      %v6450 = vadd.f32 0.0, %v6449
      %v6451 = vpop.f32.mrf.mxu0
      %v6452 = vpop.f32.mrf.mxu0
      %v6453 = vadd.f32 0.0, %v6452
      %v6454 = vpop.f32.mrf.mxu0
      %6455 = vdwg.mxu0
      %v6456 = vadd.f32 %v361, %v6330
      %v6457 = vadd.f32 %v363, %v6333
      %v6458 = vadd.f32 %v365, %v6338
      %v6459 = vadd.f32 %v367, %v6341
      %v6460 = vadd.f32 %v369, %v6346
      %v6461 = vadd.f32 %v371, %v6349
      %v6462 = vadd.f32 %v373, %v6354
      %v6463 = vadd.f32 %v375, %v6357
      %v6464 = vadd.f32 %v362, %v6362
      %v6465 = vadd.f32 %v364, %v6365
      %v6466 = vadd.f32 %v366, %v6370
      %v6467 = vadd.f32 %v368, %v6373
      %v6468 = vadd.f32 %v370, %v6378
      %v6469 = vadd.f32 %v372, %v6381
      %v6470 = vadd.f32 %v374, %v6386
      %v6471 = vadd.f32 %v376, %v6389
      %v6472 = vadd.f32 %v377, %v6394
      %v6473 = vadd.f32 %v379, %v6397
      %v6474 = vadd.f32 %v381, %v6402
      %v6475 = vadd.f32 %v383, %v6405
      %v6476 = vadd.f32 %v385, %v6410
      %v6477 = vadd.f32 %v387, %v6413
      %v6478 = vadd.f32 %v389, %v6418
      %v6479 = vadd.f32 %v391, %v6421
      %v6480 = vadd.f32 %v378, %v6426
      %v6481 = vadd.f32 %v380, %v6429
      %v6482 = vadd.f32 %v382, %v6434
      %v6483 = vadd.f32 %v384, %v6437
      %v6484 = vadd.f32 %v386, %v6442
      %v6485 = vadd.f32 %v388, %v6445
      %v6486 = vadd.f32 %v390, %v6450
      %v6487 = vadd.f32 %v392, %v6453
      %v6488 = vld [vmem:[%s5] sm:$0x1]
      %v6490 = vlaneseq
      %v6491 = vshrl.u32 %v6490, 7
      %v6492 = vsub.s32 0, %v6491
      %v6493 = vrot.slane %v6488, %v6492
      %v6495 = vadd.f32 %v6456, %v6493
      %v6496 = vadd.f32 %v6457, %v6493
      %v6497 = vadd.f32 %v6458, %v6493
      %v6498 = vadd.f32 %v6459, %v6493
      %v6499 = vadd.f32 %v6460, %v6493
      %v6500 = vadd.f32 %v6461, %v6493
      %v6501 = vadd.f32 %v6462, %v6493
      %v6502 = vadd.f32 %v6463, %v6493
      %v6503 = vadd.f32 %v6464, %v6493
      %v6504 = vadd.f32 %v6465, %v6493
      %v6505 = vadd.f32 %v6466, %v6493
      %v6506 = vadd.f32 %v6467, %v6493
      %v6507 = vadd.f32 %v6468, %v6493
      %v6508 = vadd.f32 %v6469, %v6493
      %v6509 = vadd.f32 %v6470, %v6493
      %v6510 = vadd.f32 %v6471, %v6493
      %v6511 = vadd.f32 %v6472, %v6493
      %v6512 = vadd.f32 %v6473, %v6493
      %v6513 = vadd.f32 %v6474, %v6493
      %v6514 = vadd.f32 %v6475, %v6493
      %v6515 = vadd.f32 %v6476, %v6493
      %v6516 = vadd.f32 %v6477, %v6493
      %v6517 = vadd.f32 %v6478, %v6493
      %v6518 = vadd.f32 %v6479, %v6493
      %v6519 = vadd.f32 %v6480, %v6493
      %v6520 = vadd.f32 %v6481, %v6493
      %v6521 = vadd.f32 %v6482, %v6493
      %v6522 = vadd.f32 %v6483, %v6493
      %v6523 = vadd.f32 %v6484, %v6493
      %v6524 = vadd.f32 %v6485, %v6493
      %v6525 = vadd.f32 %v6486, %v6493
      %v6526 = vadd.f32 %v6487, %v6493
      %v6527 = vsel %vm393, %v6495, 0.0
      %6528 = vadd.xlane.f32.xlu0 %v6527
      %v6529 = vpop.xlane.xlu0 %6528
      %v6530 = vsel %vm393, %v6496, 0.0
      %6531 = vadd.xlane.f32.xlu0 %v6530
      %v6532 = vpop.xlane.xlu0 %6531
      %v6533 = vsel %vm393, %v6497, 0.0
      %6534 = vadd.xlane.f32.xlu0 %v6533
      %v6535 = vpop.xlane.xlu0 %6534
      %v6536 = vsel %vm393, %v6498, 0.0
      %6537 = vadd.xlane.f32.xlu0 %v6536
      %v6538 = vpop.xlane.xlu0 %6537
      %v6539 = vsel %vm393, %v6499, 0.0
      %6540 = vadd.xlane.f32.xlu0 %v6539
      %v6541 = vpop.xlane.xlu0 %6540
      %v6542 = vsel %vm393, %v6500, 0.0
      %6543 = vadd.xlane.f32.xlu0 %v6542
      %v6544 = vpop.xlane.xlu0 %6543
      %v6545 = vsel %vm393, %v6501, 0.0
      %6546 = vadd.xlane.f32.xlu0 %v6545
      %v6547 = vpop.xlane.xlu0 %6546
      %v6548 = vsel %vm393, %v6502, 0.0
      %6549 = vadd.xlane.f32.xlu0 %v6548
      %v6550 = vpop.xlane.xlu0 %6549
      %v6551 = vsel %vm393, %v6503, 0.0
      %6552 = vadd.xlane.f32.xlu0 %v6551
      %v6553 = vpop.xlane.xlu0 %6552
      %v6554 = vsel %vm393, %v6504, 0.0
      %6555 = vadd.xlane.f32.xlu0 %v6554
      %v6556 = vpop.xlane.xlu0 %6555
      %v6557 = vsel %vm393, %v6505, 0.0
      %6558 = vadd.xlane.f32.xlu0 %v6557
      %v6559 = vpop.xlane.xlu0 %6558
      %v6560 = vsel %vm393, %v6506, 0.0
      %6561 = vadd.xlane.f32.xlu0 %v6560
      %v6562 = vpop.xlane.xlu0 %6561
      %v6563 = vsel %vm393, %v6507, 0.0
      %6564 = vadd.xlane.f32.xlu0 %v6563
      %v6565 = vpop.xlane.xlu0 %6564
      %v6566 = vsel %vm393, %v6508, 0.0
      %6567 = vadd.xlane.f32.xlu0 %v6566
      %v6568 = vpop.xlane.xlu0 %6567
      %v6569 = vsel %vm393, %v6509, 0.0
      %6570 = vadd.xlane.f32.xlu0 %v6569
      %v6571 = vpop.xlane.xlu0 %6570
      %v6572 = vsel %vm393, %v6510, 0.0
      %6573 = vadd.xlane.f32.xlu0 %v6572
      %v6574 = vpop.xlane.xlu0 %6573
      %v6575 = vsel %vm393, %v6511, 0.0
      %6576 = vadd.xlane.f32.xlu0 %v6575
      %v6577 = vpop.xlane.xlu0 %6576
      %v6578 = vsel %vm393, %v6512, 0.0
      %6579 = vadd.xlane.f32.xlu0 %v6578
      %v6580 = vpop.xlane.xlu0 %6579
      %v6581 = vsel %vm393, %v6513, 0.0
      %6582 = vadd.xlane.f32.xlu0 %v6581
      %v6583 = vpop.xlane.xlu0 %6582
      %v6584 = vsel %vm393, %v6514, 0.0
      %6585 = vadd.xlane.f32.xlu0 %v6584
      %v6586 = vpop.xlane.xlu0 %6585
      %v6587 = vsel %vm393, %v6515, 0.0
      %6588 = vadd.xlane.f32.xlu0 %v6587
      %v6589 = vpop.xlane.xlu0 %6588
      %v6590 = vsel %vm393, %v6516, 0.0
      %6591 = vadd.xlane.f32.xlu0 %v6590
      %v6592 = vpop.xlane.xlu0 %6591
      %v6593 = vsel %vm393, %v6517, 0.0
      %6594 = vadd.xlane.f32.xlu0 %v6593
      %v6595 = vpop.xlane.xlu0 %6594
      %v6596 = vsel %vm393, %v6518, 0.0
      %6597 = vadd.xlane.f32.xlu0 %v6596
      %v6598 = vpop.xlane.xlu0 %6597
      %v6599 = vsel %vm393, %v6519, 0.0
      %6600 = vadd.xlane.f32.xlu0 %v6599
      %v6601 = vpop.xlane.xlu0 %6600
      %v6602 = vsel %vm393, %v6520, 0.0
      %6603 = vadd.xlane.f32.xlu0 %v6602
      %v6604 = vpop.xlane.xlu0 %6603
      %v6605 = vsel %vm393, %v6521, 0.0
      %6606 = vadd.xlane.f32.xlu0 %v6605
      %v6607 = vpop.xlane.xlu0 %6606
      %v6608 = vsel %vm393, %v6522, 0.0
      %6609 = vadd.xlane.f32.xlu0 %v6608
      %v6610 = vpop.xlane.xlu0 %6609
      %v6611 = vsel %vm393, %v6523, 0.0
      %6612 = vadd.xlane.f32.xlu0 %v6611
      %v6613 = vpop.xlane.xlu0 %6612
      %v6614 = vsel %vm393, %v6524, 0.0
      %6615 = vadd.xlane.f32.xlu0 %v6614
      %v6616 = vpop.xlane.xlu0 %6615
      %v6617 = vsel %vm393, %v6525, 0.0
      %6618 = vadd.xlane.f32.xlu0 %v6617
      %v6619 = vpop.xlane.xlu0 %6618
      %v6620 = vsel %vm393, %v6526, 0.0
      %6621 = vadd.xlane.f32.xlu0 %v6620
      %v6622 = vpop.xlane.xlu0 %6621
      %v6623 = vmul.f32 %v6529, %v490
      %v6624 = vmul.f32 %v6532, %v490
      %v6625 = vmul.f32 %v6535, %v490
      %v6626 = vmul.f32 %v6538, %v490
      %v6627 = vmul.f32 %v6541, %v490
      %v6628 = vmul.f32 %v6544, %v490
      %v6629 = vmul.f32 %v6547, %v490
      %v6630 = vmul.f32 %v6550, %v490
      %v6631 = vmul.f32 %v6553, %v490
      %v6632 = vmul.f32 %v6556, %v490
      %v6633 = vmul.f32 %v6559, %v490
      %v6634 = vmul.f32 %v6562, %v490
      %v6635 = vmul.f32 %v6565, %v490
      %v6636 = vmul.f32 %v6568, %v490
      %v6637 = vmul.f32 %v6571, %v490
      %v6638 = vmul.f32 %v6574, %v490
      %v6639 = vmul.f32 %v6577, %v490
      %v6640 = vmul.f32 %v6580, %v490
      %v6641 = vmul.f32 %v6583, %v490
      %v6642 = vmul.f32 %v6586, %v490
      %v6643 = vmul.f32 %v6589, %v490
      %v6644 = vmul.f32 %v6592, %v490
      %v6645 = vmul.f32 %v6595, %v490
      %v6646 = vmul.f32 %v6598, %v490
      %v6647 = vmul.f32 %v6601, %v490
      %v6648 = vmul.f32 %v6604, %v490
      %v6649 = vmul.f32 %v6607, %v490
      %v6650 = vmul.f32 %v6610, %v490
      %v6651 = vmul.f32 %v6613, %v490
      %v6652 = vmul.f32 %v6616, %v490
      %v6653 = vmul.f32 %v6619, %v490
      %v6654 = vmul.f32 %v6622, %v490
      %v6655 = vmul.f32 %v6495, %v6495
      %v6656 = vmul.f32 %v6496, %v6496
      %v6657 = vmul.f32 %v6497, %v6497
      %v6658 = vmul.f32 %v6498, %v6498
      %v6659 = vmul.f32 %v6499, %v6499
      %v6660 = vmul.f32 %v6500, %v6500
      %v6661 = vmul.f32 %v6501, %v6501
      %v6662 = vmul.f32 %v6502, %v6502
      %v6663 = vmul.f32 %v6503, %v6503
      %v6664 = vmul.f32 %v6504, %v6504
      %v6665 = vmul.f32 %v6505, %v6505
      %v6666 = vmul.f32 %v6506, %v6506
      %v6667 = vmul.f32 %v6507, %v6507
      %v6668 = vmul.f32 %v6508, %v6508
      %v6669 = vmul.f32 %v6509, %v6509
      %v6670 = vmul.f32 %v6510, %v6510
      %v6671 = vmul.f32 %v6511, %v6511
      %v6672 = vmul.f32 %v6512, %v6512
      %v6673 = vmul.f32 %v6513, %v6513
      %v6674 = vmul.f32 %v6514, %v6514
      %v6675 = vmul.f32 %v6515, %v6515
      %v6676 = vmul.f32 %v6516, %v6516
      %v6677 = vmul.f32 %v6517, %v6517
      %v6678 = vmul.f32 %v6518, %v6518
      %v6679 = vmul.f32 %v6519, %v6519
      %v6680 = vmul.f32 %v6520, %v6520
      %v6681 = vmul.f32 %v6521, %v6521
      %v6682 = vmul.f32 %v6522, %v6522
      %v6683 = vmul.f32 %v6523, %v6523
      %v6684 = vmul.f32 %v6524, %v6524
      %v6685 = vmul.f32 %v6525, %v6525
      %v6686 = vmul.f32 %v6526, %v6526
      %v6687 = vsel %vm393, %v6655, 0.0
      %6688 = vadd.xlane.f32.xlu0 %v6687
      %v6689 = vpop.xlane.xlu0 %6688
      %v6690 = vsel %vm393, %v6656, 0.0
      %6691 = vadd.xlane.f32.xlu0 %v6690
      %v6692 = vpop.xlane.xlu0 %6691
      %v6693 = vsel %vm393, %v6657, 0.0
      %6694 = vadd.xlane.f32.xlu0 %v6693
      %v6695 = vpop.xlane.xlu0 %6694
      %v6696 = vsel %vm393, %v6658, 0.0
      %6697 = vadd.xlane.f32.xlu0 %v6696
      %v6698 = vpop.xlane.xlu0 %6697
      %v6699 = vsel %vm393, %v6659, 0.0
      %6700 = vadd.xlane.f32.xlu0 %v6699
      %v6701 = vpop.xlane.xlu0 %6700
      %v6702 = vsel %vm393, %v6660, 0.0
      %6703 = vadd.xlane.f32.xlu0 %v6702
      %v6704 = vpop.xlane.xlu0 %6703
      %v6705 = vsel %vm393, %v6661, 0.0
      %6706 = vadd.xlane.f32.xlu0 %v6705
      %v6707 = vpop.xlane.xlu0 %6706
      %v6708 = vsel %vm393, %v6662, 0.0
      %6709 = vadd.xlane.f32.xlu0 %v6708
      %v6710 = vpop.xlane.xlu0 %6709
      %v6711 = vsel %vm393, %v6663, 0.0
      %6712 = vadd.xlane.f32.xlu0 %v6711
      %v6713 = vpop.xlane.xlu0 %6712
      %v6714 = vsel %vm393, %v6664, 0.0
      %6715 = vadd.xlane.f32.xlu0 %v6714
      %v6716 = vpop.xlane.xlu0 %6715
      %v6717 = vsel %vm393, %v6665, 0.0
      %6718 = vadd.xlane.f32.xlu0 %v6717
      %v6719 = vpop.xlane.xlu0 %6718
      %v6720 = vsel %vm393, %v6666, 0.0
      %6721 = vadd.xlane.f32.xlu0 %v6720
      %v6722 = vpop.xlane.xlu0 %6721
      %v6723 = vsel %vm393, %v6667, 0.0
      %6724 = vadd.xlane.f32.xlu0 %v6723
      %v6725 = vpop.xlane.xlu0 %6724
      %v6726 = vsel %vm393, %v6668, 0.0
      %6727 = vadd.xlane.f32.xlu0 %v6726
      %v6728 = vpop.xlane.xlu0 %6727
      %v6729 = vsel %vm393, %v6669, 0.0
      %6730 = vadd.xlane.f32.xlu0 %v6729
      %v6731 = vpop.xlane.xlu0 %6730
      %v6732 = vsel %vm393, %v6670, 0.0
      %6733 = vadd.xlane.f32.xlu0 %v6732
      %v6734 = vpop.xlane.xlu0 %6733
      %v6735 = vsel %vm393, %v6671, 0.0
      %6736 = vadd.xlane.f32.xlu0 %v6735
      %v6737 = vpop.xlane.xlu0 %6736
      %v6738 = vsel %vm393, %v6672, 0.0
      %6739 = vadd.xlane.f32.xlu0 %v6738
      %v6740 = vpop.xlane.xlu0 %6739
      %v6741 = vsel %vm393, %v6673, 0.0
      %6742 = vadd.xlane.f32.xlu0 %v6741
      %v6743 = vpop.xlane.xlu0 %6742
      %v6744 = vsel %vm393, %v6674, 0.0
      %6745 = vadd.xlane.f32.xlu0 %v6744
      %v6746 = vpop.xlane.xlu0 %6745
      %v6747 = vsel %vm393, %v6675, 0.0
      %6748 = vadd.xlane.f32.xlu0 %v6747
      %v6749 = vpop.xlane.xlu0 %6748
      %v6750 = vsel %vm393, %v6676, 0.0
      %6751 = vadd.xlane.f32.xlu0 %v6750
      %v6752 = vpop.xlane.xlu0 %6751
      %v6753 = vsel %vm393, %v6677, 0.0
      %6754 = vadd.xlane.f32.xlu0 %v6753
      %v6755 = vpop.xlane.xlu0 %6754
      %v6756 = vsel %vm393, %v6678, 0.0
      %6757 = vadd.xlane.f32.xlu0 %v6756
      %v6758 = vpop.xlane.xlu0 %6757
      %v6759 = vsel %vm393, %v6679, 0.0
      %6760 = vadd.xlane.f32.xlu0 %v6759
      %v6761 = vpop.xlane.xlu0 %6760
      %v6762 = vsel %vm393, %v6680, 0.0
      %6763 = vadd.xlane.f32.xlu0 %v6762
      %v6764 = vpop.xlane.xlu0 %6763
      %v6765 = vsel %vm393, %v6681, 0.0
      %6766 = vadd.xlane.f32.xlu0 %v6765
      %v6767 = vpop.xlane.xlu0 %6766
      %v6768 = vsel %vm393, %v6682, 0.0
      %6769 = vadd.xlane.f32.xlu0 %v6768
      %v6770 = vpop.xlane.xlu0 %6769
      %v6771 = vsel %vm393, %v6683, 0.0
      %6772 = vadd.xlane.f32.xlu0 %v6771
      %v6773 = vpop.xlane.xlu0 %6772
      %v6774 = vsel %vm393, %v6684, 0.0
      %6775 = vadd.xlane.f32.xlu0 %v6774
      %v6776 = vpop.xlane.xlu0 %6775
      %v6777 = vsel %vm393, %v6685, 0.0
      %6778 = vadd.xlane.f32.xlu0 %v6777
      %v6779 = vpop.xlane.xlu0 %6778
      %v6780 = vsel %vm393, %v6686, 0.0
      %6781 = vadd.xlane.f32.xlu0 %v6780
      %v6782 = vpop.xlane.xlu0 %6781
      %v6783 = vmul.f32 %v6689, %v490
      %v6784 = vmul.f32 %v6692, %v490
      %v6785 = vmul.f32 %v6695, %v490
      %v6786 = vmul.f32 %v6698, %v490
      %v6787 = vmul.f32 %v6701, %v490
      %v6788 = vmul.f32 %v6704, %v490
      %v6789 = vmul.f32 %v6707, %v490
      %v6790 = vmul.f32 %v6710, %v490
      %v6791 = vmul.f32 %v6713, %v490
      %v6792 = vmul.f32 %v6716, %v490
      %v6793 = vmul.f32 %v6719, %v490
      %v6794 = vmul.f32 %v6722, %v490
      %v6795 = vmul.f32 %v6725, %v490
      %v6796 = vmul.f32 %v6728, %v490
      %v6797 = vmul.f32 %v6731, %v490
      %v6798 = vmul.f32 %v6734, %v490
      %v6799 = vmul.f32 %v6737, %v490
      %v6800 = vmul.f32 %v6740, %v490
      %v6801 = vmul.f32 %v6743, %v490
      %v6802 = vmul.f32 %v6746, %v490
      %v6803 = vmul.f32 %v6749, %v490
      %v6804 = vmul.f32 %v6752, %v490
      %v6805 = vmul.f32 %v6755, %v490
      %v6806 = vmul.f32 %v6758, %v490
      %v6807 = vmul.f32 %v6761, %v490
      %v6808 = vmul.f32 %v6764, %v490
      %v6809 = vmul.f32 %v6767, %v490
      %v6810 = vmul.f32 %v6770, %v490
      %v6811 = vmul.f32 %v6773, %v490
      %v6812 = vmul.f32 %v6776, %v490
      %v6813 = vmul.f32 %v6779, %v490
      %v6814 = vmul.f32 %v6782, %v490
      %v6815 = vsub.f32 %v6495, %v6623
      %v6816 = vsub.f32 %v6496, %v6624
      %v6817 = vsub.f32 %v6497, %v6625
      %v6818 = vsub.f32 %v6498, %v6626
      %v6819 = vsub.f32 %v6499, %v6627
      %v6820 = vsub.f32 %v6500, %v6628
      %v6821 = vsub.f32 %v6501, %v6629
      %v6822 = vsub.f32 %v6502, %v6630
      %v6823 = vsub.f32 %v6503, %v6631
      %v6824 = vsub.f32 %v6504, %v6632
      %v6825 = vsub.f32 %v6505, %v6633
      %v6826 = vsub.f32 %v6506, %v6634
      %v6827 = vsub.f32 %v6507, %v6635
      %v6828 = vsub.f32 %v6508, %v6636
      %v6829 = vsub.f32 %v6509, %v6637
      %v6830 = vsub.f32 %v6510, %v6638
      %v6831 = vsub.f32 %v6511, %v6639
      %v6832 = vsub.f32 %v6512, %v6640
      %v6833 = vsub.f32 %v6513, %v6641
      %v6834 = vsub.f32 %v6514, %v6642
      %v6835 = vsub.f32 %v6515, %v6643
      %v6836 = vsub.f32 %v6516, %v6644
      %v6837 = vsub.f32 %v6517, %v6645
      %v6838 = vsub.f32 %v6518, %v6646
      %v6839 = vsub.f32 %v6519, %v6647
      %v6840 = vsub.f32 %v6520, %v6648
      %v6841 = vsub.f32 %v6521, %v6649
      %v6842 = vsub.f32 %v6522, %v6650
      %v6843 = vsub.f32 %v6523, %v6651
      %v6844 = vsub.f32 %v6524, %v6652
      %v6845 = vsub.f32 %v6525, %v6653
      %v6846 = vsub.f32 %v6526, %v6654
      %v6847 = vmul.f32 %v6623, %v6623
      %v6848 = vmul.f32 %v6624, %v6624
      %v6849 = vmul.f32 %v6625, %v6625
      %v6850 = vmul.f32 %v6626, %v6626
      %v6851 = vmul.f32 %v6627, %v6627
      %v6852 = vmul.f32 %v6628, %v6628
      %v6853 = vmul.f32 %v6629, %v6629
      %v6854 = vmul.f32 %v6630, %v6630
      %v6855 = vmul.f32 %v6631, %v6631
      %v6856 = vmul.f32 %v6632, %v6632
      %v6857 = vmul.f32 %v6633, %v6633
      %v6858 = vmul.f32 %v6634, %v6634
      %v6859 = vmul.f32 %v6635, %v6635
      %v6860 = vmul.f32 %v6636, %v6636
      %v6861 = vmul.f32 %v6637, %v6637
      %v6862 = vmul.f32 %v6638, %v6638
      %v6863 = vmul.f32 %v6639, %v6639
      %v6864 = vmul.f32 %v6640, %v6640
      %v6865 = vmul.f32 %v6641, %v6641
      %v6866 = vmul.f32 %v6642, %v6642
      %v6867 = vmul.f32 %v6643, %v6643
      %v6868 = vmul.f32 %v6644, %v6644
      %v6869 = vmul.f32 %v6645, %v6645
      %v6870 = vmul.f32 %v6646, %v6646
      %v6871 = vmul.f32 %v6647, %v6647
      %v6872 = vmul.f32 %v6648, %v6648
      %v6873 = vmul.f32 %v6649, %v6649
      %v6874 = vmul.f32 %v6650, %v6650
      %v6875 = vmul.f32 %v6651, %v6651
      %v6876 = vmul.f32 %v6652, %v6652
      %v6877 = vmul.f32 %v6653, %v6653
      %v6878 = vmul.f32 %v6654, %v6654
      %v6879 = vsub.f32 %v6783, %v6847
      %v6880 = vsub.f32 %v6784, %v6848
      %v6881 = vsub.f32 %v6785, %v6849
      %v6882 = vsub.f32 %v6786, %v6850
      %v6883 = vsub.f32 %v6787, %v6851
      %v6884 = vsub.f32 %v6788, %v6852
      %v6885 = vsub.f32 %v6789, %v6853
      %v6886 = vsub.f32 %v6790, %v6854
      %v6887 = vsub.f32 %v6791, %v6855
      %v6888 = vsub.f32 %v6792, %v6856
      %v6889 = vsub.f32 %v6793, %v6857
      %v6890 = vsub.f32 %v6794, %v6858
      %v6891 = vsub.f32 %v6795, %v6859
      %v6892 = vsub.f32 %v6796, %v6860
      %v6893 = vsub.f32 %v6797, %v6861
      %v6894 = vsub.f32 %v6798, %v6862
      %v6895 = vsub.f32 %v6799, %v6863
      %v6896 = vsub.f32 %v6800, %v6864
      %v6897 = vsub.f32 %v6801, %v6865
      %v6898 = vsub.f32 %v6802, %v6866
      %v6899 = vsub.f32 %v6803, %v6867
      %v6900 = vsub.f32 %v6804, %v6868
      %v6901 = vsub.f32 %v6805, %v6869
      %v6902 = vsub.f32 %v6806, %v6870
      %v6903 = vsub.f32 %v6807, %v6871
      %v6904 = vsub.f32 %v6808, %v6872
      %v6905 = vsub.f32 %v6809, %v6873
      %v6906 = vsub.f32 %v6810, %v6874
      %v6907 = vsub.f32 %v6811, %v6875
      %v6908 = vsub.f32 %v6812, %v6876
      %v6909 = vsub.f32 %v6813, %v6877
      %v6910 = vsub.f32 %v6814, %v6878
      %v6911 = vadd.f32 %v6879, 1e-05
      %v6912 = vadd.f32 %v6880, 1e-05
      %v6913 = vadd.f32 %v6881, 1e-05
      %v6914 = vadd.f32 %v6882, 1e-05
      %v6915 = vadd.f32 %v6883, 1e-05
      %v6916 = vadd.f32 %v6884, 1e-05
      %v6917 = vadd.f32 %v6885, 1e-05
      %v6918 = vadd.f32 %v6886, 1e-05
      %v6919 = vadd.f32 %v6887, 1e-05
      %v6920 = vadd.f32 %v6888, 1e-05
      %v6921 = vadd.f32 %v6889, 1e-05
      %v6922 = vadd.f32 %v6890, 1e-05
      %v6923 = vadd.f32 %v6891, 1e-05
      %v6924 = vadd.f32 %v6892, 1e-05
      %v6925 = vadd.f32 %v6893, 1e-05
      %v6926 = vadd.f32 %v6894, 1e-05
      %v6927 = vadd.f32 %v6895, 1e-05
      %v6928 = vadd.f32 %v6896, 1e-05
      %v6929 = vadd.f32 %v6897, 1e-05
      %v6930 = vadd.f32 %v6898, 1e-05
      %v6931 = vadd.f32 %v6899, 1e-05
      %v6932 = vadd.f32 %v6900, 1e-05
      %v6933 = vadd.f32 %v6901, 1e-05
      %v6934 = vadd.f32 %v6902, 1e-05
      %v6935 = vadd.f32 %v6903, 1e-05
      %v6936 = vadd.f32 %v6904, 1e-05
      %v6937 = vadd.f32 %v6905, 1e-05
      %v6938 = vadd.f32 %v6906, 1e-05
      %v6939 = vadd.f32 %v6907, 1e-05
      %v6940 = vadd.f32 %v6908, 1e-05
      %v6941 = vadd.f32 %v6909, 1e-05
      %v6942 = vadd.f32 %v6910, 1e-05
      %v6943 = vrsqrt.pop %v6911
      %v6944 = vrsqrt.pop %v6912
      %v6945 = vrsqrt.pop %v6913
      %v6946 = vrsqrt.pop %v6914
      %v6947 = vrsqrt.pop %v6915
      %v6948 = vrsqrt.pop %v6916
      %v6949 = vrsqrt.pop %v6917
      %v6950 = vrsqrt.pop %v6918
      %v6951 = vrsqrt.pop %v6919
      %v6952 = vrsqrt.pop %v6920
      %v6953 = vrsqrt.pop %v6921
      %v6954 = vrsqrt.pop %v6922
      %v6955 = vrsqrt.pop %v6923
      %v6956 = vrsqrt.pop %v6924
      %v6957 = vrsqrt.pop %v6925
      %v6958 = vrsqrt.pop %v6926
      %v6959 = vrsqrt.pop %v6927
      %v6960 = vrsqrt.pop %v6928
      %v6961 = vrsqrt.pop %v6929
      %v6962 = vrsqrt.pop %v6930
      %v6963 = vrsqrt.pop %v6931
      %v6964 = vrsqrt.pop %v6932
      %v6965 = vrsqrt.pop %v6933
      %v6966 = vrsqrt.pop %v6934
      %v6967 = vrsqrt.pop %v6935
      %v6968 = vrsqrt.pop %v6936
      %v6969 = vrsqrt.pop %v6937
      %v6970 = vrsqrt.pop %v6938
      %v6971 = vrsqrt.pop %v6939
      %v6972 = vrsqrt.pop %v6940
      %v6973 = vrsqrt.pop %v6941
      %v6974 = vrsqrt.pop %v6942
      %v6975 = vmul.f32 %v6815, %v6943
      %v6976 = vmul.f32 %v6816, %v6944
      %v6977 = vmul.f32 %v6817, %v6945
      %v6978 = vmul.f32 %v6818, %v6946
      %v6979 = vmul.f32 %v6819, %v6947
      %v6980 = vmul.f32 %v6820, %v6948
      %v6981 = vmul.f32 %v6821, %v6949
      %v6982 = vmul.f32 %v6822, %v6950
      %v6983 = vmul.f32 %v6823, %v6951
      %v6984 = vmul.f32 %v6824, %v6952
      %v6985 = vmul.f32 %v6825, %v6953
      %v6986 = vmul.f32 %v6826, %v6954
      %v6987 = vmul.f32 %v6827, %v6955
      %v6988 = vmul.f32 %v6828, %v6956
      %v6989 = vmul.f32 %v6829, %v6957
      %v6990 = vmul.f32 %v6830, %v6958
      %v6991 = vmul.f32 %v6831, %v6959
      %v6992 = vmul.f32 %v6832, %v6960
      %v6993 = vmul.f32 %v6833, %v6961
      %v6994 = vmul.f32 %v6834, %v6962
      %v6995 = vmul.f32 %v6835, %v6963
      %v6996 = vmul.f32 %v6836, %v6964
      %v6997 = vmul.f32 %v6837, %v6965
      %v6998 = vmul.f32 %v6838, %v6966
      %v6999 = vmul.f32 %v6839, %v6967
      %v7000 = vmul.f32 %v6840, %v6968
      %v7001 = vmul.f32 %v6841, %v6969
      %v7002 = vmul.f32 %v6842, %v6970
      %v7003 = vmul.f32 %v6843, %v6971
      %v7004 = vmul.f32 %v6844, %v6972
      %v7005 = vmul.f32 %v6845, %v6973
      %v7006 = vmul.f32 %v6846, %v6974
      %v7007 = vpack.c.bf16 %v6976, %v6975
      %v7008 = vpack.c.bf16 %v6978, %v6977
      %v7009 = vpack.c.bf16 %v6980, %v6979
      %v7010 = vpack.c.bf16 %v6982, %v6981
      %v7011 = vpack.c.bf16 %v6984, %v6983
      %v7012 = vpack.c.bf16 %v6986, %v6985
      %v7013 = vpack.c.bf16 %v6988, %v6987
      %v7014 = vpack.c.bf16 %v6990, %v6989
      %v7015 = vpack.c.bf16 %v6992, %v6991
      %v7016 = vpack.c.bf16 %v6994, %v6993
      %v7017 = vpack.c.bf16 %v6996, %v6995
      %v7018 = vpack.c.bf16 %v6998, %v6997
      %v7019 = vpack.c.bf16 %v7000, %v6999
      %v7020 = vpack.c.bf16 %v7002, %v7001
      %v7021 = vpack.c.bf16 %v7004, %v7003
      %v7022 = vpack.c.bf16 %v7006, %v7005
      %v7023 = vld [vmem:[%s6] sm:$0xf]
      %v7024 = vld [vmem:[%s6 + $0x4] sm:$0xf]
      %v7025 = vld [vmem:[%s6 + $0x8] sm:$0xf]
      %v7026 = vld [vmem:[%s6 + $0xc] sm:$0xf]
      %v7027 = vld [vmem:[%s7] sm:$0x1]
      %v7029 = vlaneseq
      %v7030 = vshrl.u32 %v7029, 7
      %v7031 = vsub.s32 0, %v7030
      %v7032 = vrot.slane %v7027, %v7031
      %v7038 = vunpack.c.l.b16 %v7023
      %v7039 = vunpack.c.l.b16 %v7024
      %v7040 = vunpack.c.l.b16 %v7025
      %v7041 = vunpack.c.l.b16 %v7026
      %v7042 = vpack.c.b16 %v7039, %v7038
      %v7043 = vpack.c.b16 %v7041, %v7040
      %v7047 = vsel %vm393, %v7007, 0
      %v7050 = vsel %vm393, %v7008, 0
      %v7053 = vsel %vm393, %v7009, 0
      %v7056 = vsel %vm393, %v7010, 0
      %v7059 = vsel %vm393, %v7011, 0
      %v7062 = vsel %vm393, %v7012, 0
      %v7065 = vsel %vm393, %v7013, 0
      %v7068 = vsel %vm393, %v7014, 0
      %v7071 = vsel %vm393, %v7015, 0
      %v7074 = vsel %vm393, %v7016, 0
      %v7077 = vsel %vm393, %v7017, 0
      %v7080 = vsel %vm393, %v7018, 0
      %v7083 = vsel %vm393, %v7019, 0
      %v7086 = vsel %vm393, %v7020, 0
      %v7089 = vsel %vm393, %v7021, 0
      %v7092 = vsel %vm393, %v7022, 0
      %7094 = vmatprep.subr.bf16.mxu0 0
      %7095 = vmatpush1.bf16.msra.mxu0 0
      %7096 = vmatprep.subr.bf16.mxu0 0
      %7097 = vmatpush1.bf16.msra.mxu0 0
      %7098 = vmatprep.subr.bf16.mxu0 0
      %7099 = vmatpush1.bf16.msra.mxu0 0
      %7100 = vmatprep.subr.bf16.mxu0 0
      %7101 = vmatpush1.bf16.msra.mxu0 0
      %7102 = vmatprep.subr.bf16.mxu0 0
      %7103 = vmatpush1.bf16.msra.mxu0 0
      %7104 = vmatprep.subr.bf16.mxu0 0
      %7105 = vmatpush1.bf16.msra.mxu0 0
      %7106 = vmatprep.subr.bf16.mxu0 0
      %7107 = vmatpush1.bf16.msra.mxu0 %v7043
      %7108 = vmatprep.subr.bf16.mxu0 0
      %7109 = vmatpush1.bf16.msra.mxu0 %v7042
      %7110 = vmatprep.subr.bf16.mxu0 0
      %7111 = vmatpush2.bf16.msra.mxu0 0
      %7112 = vmatprep.subr.bf16.mxu0 0
      %7113 = vmatpush2.bf16.msra.mxu0 0
      %7114 = vmatprep.subr.bf16.mxu0 0
      %7115 = vmatpush2.bf16.msra.mxu0 0
      %7116 = vmatprep.subr.bf16.mxu0 0
      %7117 = vmatpush2.bf16.msra.mxu0 0
      %7118 = vmatprep.subr.bf16.mxu0 0
      %7119 = vmatpush2.bf16.msra.mxu0 0
      %7120 = vmatprep.subr.bf16.mxu0 0
      %7121 = vmatpush2.bf16.msra.mxu0 0
      %7122 = vmatprep.subr.bf16.mxu0 0
      %7123 = vmatpush2.bf16.msra.mxu0 0
      %7124 = vmatprep.subr.bf16.mxu0 0
      %7125 = vmatpush2.bf16.msra.mxu0 0
      %7126 = vmatprep.mubr.bf16.mxu0 0
      %7127 = vmatmul.mubr.bf16.gmra.mxu0 %v7047
      %v7128 = vpop.f32.mrf.mxu0
      %v7129 = vadd.f32 %v7032, %v7128
      %v7130 = vpop.f32.mrf.mxu0
      %v7131 = vpop.f32.mrf.mxu0
      %v7132 = vadd.f32 %v7032, %v7131
      %v7133 = vpop.f32.mrf.mxu0
      %7134 = vmatprep.mubr.bf16.mxu0 0
      %7135 = vmatmul.mubr.bf16.gmra.mxu0 %v7050
      %v7136 = vpop.f32.mrf.mxu0
      %v7137 = vadd.f32 %v7032, %v7136
      %v7138 = vpop.f32.mrf.mxu0
      %v7139 = vpop.f32.mrf.mxu0
      %v7140 = vadd.f32 %v7032, %v7139
      %v7141 = vpop.f32.mrf.mxu0
      %7142 = vmatprep.mubr.bf16.mxu0 0
      %7143 = vmatmul.mubr.bf16.gmra.mxu0 %v7053
      %v7144 = vpop.f32.mrf.mxu0
      %v7145 = vadd.f32 %v7032, %v7144
      %v7146 = vpop.f32.mrf.mxu0
      %v7147 = vpop.f32.mrf.mxu0
      %v7148 = vadd.f32 %v7032, %v7147
      %v7149 = vpop.f32.mrf.mxu0
      %7150 = vmatprep.mubr.bf16.mxu0 0
      %7151 = vmatmul.mubr.bf16.gmra.mxu0 %v7056
      %v7152 = vpop.f32.mrf.mxu0
      %v7153 = vadd.f32 %v7032, %v7152
      %v7154 = vpop.f32.mrf.mxu0
      %v7155 = vpop.f32.mrf.mxu0
      %v7156 = vadd.f32 %v7032, %v7155
      %v7157 = vpop.f32.mrf.mxu0
      %7158 = vmatprep.mubr.bf16.mxu0 0
      %7159 = vmatmul.mubr.bf16.gmra.mxu0 %v7059
      %v7160 = vpop.f32.mrf.mxu0
      %v7161 = vadd.f32 %v7032, %v7160
      %v7162 = vpop.f32.mrf.mxu0
      %v7163 = vpop.f32.mrf.mxu0
      %v7164 = vadd.f32 %v7032, %v7163
      %v7165 = vpop.f32.mrf.mxu0
      %7166 = vmatprep.mubr.bf16.mxu0 0
      %7167 = vmatmul.mubr.bf16.gmra.mxu0 %v7062
      %v7168 = vpop.f32.mrf.mxu0
      %v7169 = vadd.f32 %v7032, %v7168
      %v7170 = vpop.f32.mrf.mxu0
      %v7171 = vpop.f32.mrf.mxu0
      %v7172 = vadd.f32 %v7032, %v7171
      %v7173 = vpop.f32.mrf.mxu0
      %7174 = vmatprep.mubr.bf16.mxu0 0
      %7175 = vmatmul.mubr.bf16.gmra.mxu0 %v7065
      %v7176 = vpop.f32.mrf.mxu0
      %v7177 = vadd.f32 %v7032, %v7176
      %v7178 = vpop.f32.mrf.mxu0
      %v7179 = vpop.f32.mrf.mxu0
      %v7180 = vadd.f32 %v7032, %v7179
      %v7181 = vpop.f32.mrf.mxu0
      %7182 = vmatprep.mubr.bf16.mxu0 0
      %7183 = vmatmul.mubr.bf16.gmra.mxu0 %v7068
      %v7184 = vpop.f32.mrf.mxu0
      %v7185 = vadd.f32 %v7032, %v7184
      %v7186 = vpop.f32.mrf.mxu0
      %v7187 = vpop.f32.mrf.mxu0
      %v7188 = vadd.f32 %v7032, %v7187
      %v7189 = vpop.f32.mrf.mxu0
      %7190 = vmatprep.mubr.bf16.mxu0 0
      %7191 = vmatmul.mubr.bf16.gmra.mxu0 %v7071
      %v7192 = vpop.f32.mrf.mxu0
      %v7193 = vadd.f32 %v7032, %v7192
      %v7194 = vpop.f32.mrf.mxu0
      %v7195 = vpop.f32.mrf.mxu0
      %v7196 = vadd.f32 %v7032, %v7195
      %v7197 = vpop.f32.mrf.mxu0
      %7198 = vmatprep.mubr.bf16.mxu0 0
      %7199 = vmatmul.mubr.bf16.gmra.mxu0 %v7074
      %v7200 = vpop.f32.mrf.mxu0
      %v7201 = vadd.f32 %v7032, %v7200
      %v7202 = vpop.f32.mrf.mxu0
      %v7203 = vpop.f32.mrf.mxu0
      %v7204 = vadd.f32 %v7032, %v7203
      %v7205 = vpop.f32.mrf.mxu0
      %7206 = vmatprep.mubr.bf16.mxu0 0
      %7207 = vmatmul.mubr.bf16.gmra.mxu0 %v7077
      %v7208 = vpop.f32.mrf.mxu0
      %v7209 = vadd.f32 %v7032, %v7208
      %v7210 = vpop.f32.mrf.mxu0
      %v7211 = vpop.f32.mrf.mxu0
      %v7212 = vadd.f32 %v7032, %v7211
      %v7213 = vpop.f32.mrf.mxu0
      %7214 = vmatprep.mubr.bf16.mxu0 0
      %7215 = vmatmul.mubr.bf16.gmra.mxu0 %v7080
      %v7216 = vpop.f32.mrf.mxu0
      %v7217 = vadd.f32 %v7032, %v7216
      %v7218 = vpop.f32.mrf.mxu0
      %v7219 = vpop.f32.mrf.mxu0
      %v7220 = vadd.f32 %v7032, %v7219
      %v7221 = vpop.f32.mrf.mxu0
      %7222 = vmatprep.mubr.bf16.mxu0 0
      %7223 = vmatmul.mubr.bf16.gmra.mxu0 %v7083
      %v7224 = vpop.f32.mrf.mxu0
      %v7225 = vadd.f32 %v7032, %v7224
      %v7226 = vpop.f32.mrf.mxu0
      %v7227 = vpop.f32.mrf.mxu0
      %v7228 = vadd.f32 %v7032, %v7227
      %v7229 = vpop.f32.mrf.mxu0
      %7230 = vmatprep.mubr.bf16.mxu0 0
      %7231 = vmatmul.mubr.bf16.gmra.mxu0 %v7086
      %v7232 = vpop.f32.mrf.mxu0
      %v7233 = vadd.f32 %v7032, %v7232
      %v7234 = vpop.f32.mrf.mxu0
      %v7235 = vpop.f32.mrf.mxu0
      %v7236 = vadd.f32 %v7032, %v7235
      %v7237 = vpop.f32.mrf.mxu0
      %7238 = vmatprep.mubr.bf16.mxu0 0
      %7239 = vmatmul.mubr.bf16.gmra.mxu0 %v7089
      %v7240 = vpop.f32.mrf.mxu0
      %v7241 = vadd.f32 %v7032, %v7240
      %v7242 = vpop.f32.mrf.mxu0
      %v7243 = vpop.f32.mrf.mxu0
      %v7244 = vadd.f32 %v7032, %v7243
      %v7245 = vpop.f32.mrf.mxu0
      %7246 = vmatprep.mubr.bf16.mxu0 0
      %7247 = vmatmul.mubr.bf16.gmra.mxu0 %v7092
      %v7248 = vpop.f32.mrf.mxu0
      %v7249 = vadd.f32 %v7032, %v7248
      %v7250 = vpop.f32.mrf.mxu0
      %v7251 = vpop.f32.mrf.mxu0
      %v7252 = vadd.f32 %v7032, %v7251
      %v7253 = vpop.f32.mrf.mxu0
      %7254 = vdwg.mxu0
      %v7255 = vmul.f32 %v7129, 0.5
      %v7256 = vmul.f32 %v7132, 0.5
      %v7257 = vmul.f32 %v7137, 0.5
      %v7258 = vmul.f32 %v7140, 0.5
      %v7259 = vmul.f32 %v7145, 0.5
      %v7260 = vmul.f32 %v7148, 0.5
      %v7261 = vmul.f32 %v7153, 0.5
      %v7262 = vmul.f32 %v7156, 0.5
      %v7263 = vmul.f32 %v7161, 0.5
      %v7264 = vmul.f32 %v7164, 0.5
      %v7265 = vmul.f32 %v7169, 0.5
      %v7266 = vmul.f32 %v7172, 0.5
      %v7267 = vmul.f32 %v7177, 0.5
      %v7268 = vmul.f32 %v7180, 0.5
      %v7269 = vmul.f32 %v7185, 0.5
      %v7270 = vmul.f32 %v7188, 0.5
      %v7271 = vmul.f32 %v7193, 0.5
      %v7272 = vmul.f32 %v7196, 0.5
      %v7273 = vmul.f32 %v7201, 0.5
      %v7274 = vmul.f32 %v7204, 0.5
      %v7275 = vmul.f32 %v7209, 0.5
      %v7276 = vmul.f32 %v7212, 0.5
      %v7277 = vmul.f32 %v7217, 0.5
      %v7278 = vmul.f32 %v7220, 0.5
      %v7279 = vmul.f32 %v7225, 0.5
      %v7280 = vmul.f32 %v7228, 0.5
      %v7281 = vmul.f32 %v7233, 0.5
      %v7282 = vmul.f32 %v7236, 0.5
      %v7283 = vmul.f32 %v7241, 0.5
      %v7284 = vmul.f32 %v7244, 0.5
      %v7285 = vmul.f32 %v7249, 0.5
      %v7286 = vmul.f32 %v7252, 0.5
      %v7287 = vmul.f32 %v7129, %v7129
      %v7288 = vmul.f32 %v7132, %v7132
      %v7289 = vmul.f32 %v7137, %v7137
      %v7290 = vmul.f32 %v7140, %v7140
      %v7291 = vmul.f32 %v7145, %v7145
      %v7292 = vmul.f32 %v7148, %v7148
      %v7293 = vmul.f32 %v7153, %v7153
      %v7294 = vmul.f32 %v7156, %v7156
      %v7295 = vmul.f32 %v7161, %v7161
      %v7296 = vmul.f32 %v7164, %v7164
      %v7297 = vmul.f32 %v7169, %v7169
      %v7298 = vmul.f32 %v7172, %v7172
      %v7299 = vmul.f32 %v7177, %v7177
      %v7300 = vmul.f32 %v7180, %v7180
      %v7301 = vmul.f32 %v7185, %v7185
      %v7302 = vmul.f32 %v7188, %v7188
      %v7303 = vmul.f32 %v7193, %v7193
      %v7304 = vmul.f32 %v7196, %v7196
      %v7305 = vmul.f32 %v7201, %v7201
      %v7306 = vmul.f32 %v7204, %v7204
      %v7307 = vmul.f32 %v7209, %v7209
      %v7308 = vmul.f32 %v7212, %v7212
      %v7309 = vmul.f32 %v7217, %v7217
      %v7310 = vmul.f32 %v7220, %v7220
      %v7311 = vmul.f32 %v7225, %v7225
      %v7312 = vmul.f32 %v7228, %v7228
      %v7313 = vmul.f32 %v7233, %v7233
      %v7314 = vmul.f32 %v7236, %v7236
      %v7315 = vmul.f32 %v7241, %v7241
      %v7316 = vmul.f32 %v7244, %v7244
      %v7317 = vmul.f32 %v7249, %v7249
      %v7318 = vmul.f32 %v7252, %v7252
      %v7319 = vmul.f32 %v7287, %v7129
      %v7320 = vmul.f32 %v7288, %v7132
      %v7321 = vmul.f32 %v7289, %v7137
      %v7322 = vmul.f32 %v7290, %v7140
      %v7323 = vmul.f32 %v7291, %v7145
      %v7324 = vmul.f32 %v7292, %v7148
      %v7325 = vmul.f32 %v7293, %v7153
      %v7326 = vmul.f32 %v7294, %v7156
      %v7327 = vmul.f32 %v7295, %v7161
      %v7328 = vmul.f32 %v7296, %v7164
      %v7329 = vmul.f32 %v7297, %v7169
      %v7330 = vmul.f32 %v7298, %v7172
      %v7331 = vmul.f32 %v7299, %v7177
      %v7332 = vmul.f32 %v7300, %v7180
      %v7333 = vmul.f32 %v7301, %v7185
      %v7334 = vmul.f32 %v7302, %v7188
      %v7335 = vmul.f32 %v7303, %v7193
      %v7336 = vmul.f32 %v7304, %v7196
      %v7337 = vmul.f32 %v7305, %v7201
      %v7338 = vmul.f32 %v7306, %v7204
      %v7339 = vmul.f32 %v7307, %v7209
      %v7340 = vmul.f32 %v7308, %v7212
      %v7341 = vmul.f32 %v7309, %v7217
      %v7342 = vmul.f32 %v7310, %v7220
      %v7343 = vmul.f32 %v7311, %v7225
      %v7344 = vmul.f32 %v7312, %v7228
      %v7345 = vmul.f32 %v7313, %v7233
      %v7346 = vmul.f32 %v7314, %v7236
      %v7347 = vmul.f32 %v7315, %v7241
      %v7348 = vmul.f32 %v7316, %v7244
      %v7349 = vmul.f32 %v7317, %v7249
      %v7350 = vmul.f32 %v7318, %v7252
      %v7351 = vmul.f32 %v7319, 0.044715
      %v7352 = vmul.f32 %v7320, 0.044715
      %v7353 = vmul.f32 %v7321, 0.044715
      %v7354 = vmul.f32 %v7322, 0.044715
      %v7355 = vmul.f32 %v7323, 0.044715
      %v7356 = vmul.f32 %v7324, 0.044715
      %v7357 = vmul.f32 %v7325, 0.044715
      %v7358 = vmul.f32 %v7326, 0.044715
      %v7359 = vmul.f32 %v7327, 0.044715
      %v7360 = vmul.f32 %v7328, 0.044715
      %v7361 = vmul.f32 %v7329, 0.044715
      %v7362 = vmul.f32 %v7330, 0.044715
      %v7363 = vmul.f32 %v7331, 0.044715
      %v7364 = vmul.f32 %v7332, 0.044715
      %v7365 = vmul.f32 %v7333, 0.044715
      %v7366 = vmul.f32 %v7334, 0.044715
      %v7367 = vmul.f32 %v7335, 0.044715
      %v7368 = vmul.f32 %v7336, 0.044715
      %v7369 = vmul.f32 %v7337, 0.044715
      %v7370 = vmul.f32 %v7338, 0.044715
      %v7371 = vmul.f32 %v7339, 0.044715
      %v7372 = vmul.f32 %v7340, 0.044715
      %v7373 = vmul.f32 %v7341, 0.044715
      %v7374 = vmul.f32 %v7342, 0.044715
      %v7375 = vmul.f32 %v7343, 0.044715
      %v7376 = vmul.f32 %v7344, 0.044715
      %v7377 = vmul.f32 %v7345, 0.044715
      %v7378 = vmul.f32 %v7346, 0.044715
      %v7379 = vmul.f32 %v7347, 0.044715
      %v7380 = vmul.f32 %v7348, 0.044715
      %v7381 = vmul.f32 %v7349, 0.044715
      %v7382 = vmul.f32 %v7350, 0.044715
      %v7383 = vadd.f32 %v7129, %v7351
      %v7384 = vadd.f32 %v7132, %v7352
      %v7385 = vadd.f32 %v7137, %v7353
      %v7386 = vadd.f32 %v7140, %v7354
      %v7387 = vadd.f32 %v7145, %v7355
      %v7388 = vadd.f32 %v7148, %v7356
      %v7389 = vadd.f32 %v7153, %v7357
      %v7390 = vadd.f32 %v7156, %v7358
      %v7391 = vadd.f32 %v7161, %v7359
      %v7392 = vadd.f32 %v7164, %v7360
      %v7393 = vadd.f32 %v7169, %v7361
      %v7394 = vadd.f32 %v7172, %v7362
      %v7395 = vadd.f32 %v7177, %v7363
      %v7396 = vadd.f32 %v7180, %v7364
      %v7397 = vadd.f32 %v7185, %v7365
      %v7398 = vadd.f32 %v7188, %v7366
      %v7399 = vadd.f32 %v7193, %v7367
      %v7400 = vadd.f32 %v7196, %v7368
      %v7401 = vadd.f32 %v7201, %v7369
      %v7402 = vadd.f32 %v7204, %v7370
      %v7403 = vadd.f32 %v7209, %v7371
      %v7404 = vadd.f32 %v7212, %v7372
      %v7405 = vadd.f32 %v7217, %v7373
      %v7406 = vadd.f32 %v7220, %v7374
      %v7407 = vadd.f32 %v7225, %v7375
      %v7408 = vadd.f32 %v7228, %v7376
      %v7409 = vadd.f32 %v7233, %v7377
      %v7410 = vadd.f32 %v7236, %v7378
      %v7411 = vadd.f32 %v7241, %v7379
      %v7412 = vadd.f32 %v7244, %v7380
      %v7413 = vadd.f32 %v7249, %v7381
      %v7414 = vadd.f32 %v7252, %v7382
      %v7415 = vmul.f32 %v7383, 0.7978846
      %v7416 = vmul.f32 %v7384, 0.7978846
      %v7417 = vmul.f32 %v7385, 0.7978846
      %v7418 = vmul.f32 %v7386, 0.7978846
      %v7419 = vmul.f32 %v7387, 0.7978846
      %v7420 = vmul.f32 %v7388, 0.7978846
      %v7421 = vmul.f32 %v7389, 0.7978846
      %v7422 = vmul.f32 %v7390, 0.7978846
      %v7423 = vmul.f32 %v7391, 0.7978846
      %v7424 = vmul.f32 %v7392, 0.7978846
      %v7425 = vmul.f32 %v7393, 0.7978846
      %v7426 = vmul.f32 %v7394, 0.7978846
      %v7427 = vmul.f32 %v7395, 0.7978846
      %v7428 = vmul.f32 %v7396, 0.7978846
      %v7429 = vmul.f32 %v7397, 0.7978846
      %v7430 = vmul.f32 %v7398, 0.7978846
      %v7431 = vmul.f32 %v7399, 0.7978846
      %v7432 = vmul.f32 %v7400, 0.7978846
      %v7433 = vmul.f32 %v7401, 0.7978846
      %v7434 = vmul.f32 %v7402, 0.7978846
      %v7435 = vmul.f32 %v7403, 0.7978846
      %v7436 = vmul.f32 %v7404, 0.7978846
      %v7437 = vmul.f32 %v7405, 0.7978846
      %v7438 = vmul.f32 %v7406, 0.7978846
      %v7439 = vmul.f32 %v7407, 0.7978846
      %v7440 = vmul.f32 %v7408, 0.7978846
      %v7441 = vmul.f32 %v7409, 0.7978846
      %v7442 = vmul.f32 %v7410, 0.7978846
      %v7443 = vmul.f32 %v7411, 0.7978846
      %v7444 = vmul.f32 %v7412, 0.7978846
      %v7445 = vmul.f32 %v7413, 0.7978846
      %v7446 = vmul.f32 %v7414, 0.7978846
      %v7447 = vtanh.pop %v7415
      %v7448 = vtanh.pop %v7416
      %v7449 = vtanh.pop %v7417
      %v7450 = vtanh.pop %v7418
      %v7451 = vtanh.pop %v7419
      %v7452 = vtanh.pop %v7420
      %v7453 = vtanh.pop %v7421
      %v7454 = vtanh.pop %v7422
      %v7455 = vtanh.pop %v7423
      %v7456 = vtanh.pop %v7424
      %v7457 = vtanh.pop %v7425
      %v7458 = vtanh.pop %v7426
      %v7459 = vtanh.pop %v7427
      %v7460 = vtanh.pop %v7428
      %v7461 = vtanh.pop %v7429
      %v7462 = vtanh.pop %v7430
      %v7463 = vtanh.pop %v7431
      %v7464 = vtanh.pop %v7432
      %v7465 = vtanh.pop %v7433
      %v7466 = vtanh.pop %v7434
      %v7467 = vtanh.pop %v7435
      %v7468 = vtanh.pop %v7436
      %v7469 = vtanh.pop %v7437
      %v7470 = vtanh.pop %v7438
      %v7471 = vtanh.pop %v7439
      %v7472 = vtanh.pop %v7440
      %v7473 = vtanh.pop %v7441
      %v7474 = vtanh.pop %v7442
      %v7475 = vtanh.pop %v7443
      %v7476 = vtanh.pop %v7444
      %v7477 = vtanh.pop %v7445
      %v7478 = vtanh.pop %v7446
      %v7479 = vadd.f32 %v7447, 1.0
      %v7480 = vadd.f32 %v7448, 1.0
      %v7481 = vadd.f32 %v7449, 1.0
      %v7482 = vadd.f32 %v7450, 1.0
      %v7483 = vadd.f32 %v7451, 1.0
      %v7484 = vadd.f32 %v7452, 1.0
      %v7485 = vadd.f32 %v7453, 1.0
      %v7486 = vadd.f32 %v7454, 1.0
      %v7487 = vadd.f32 %v7455, 1.0
      %v7488 = vadd.f32 %v7456, 1.0
      %v7489 = vadd.f32 %v7457, 1.0
      %v7490 = vadd.f32 %v7458, 1.0
      %v7491 = vadd.f32 %v7459, 1.0
      %v7492 = vadd.f32 %v7460, 1.0
      %v7493 = vadd.f32 %v7461, 1.0
      %v7494 = vadd.f32 %v7462, 1.0
      %v7495 = vadd.f32 %v7463, 1.0
      %v7496 = vadd.f32 %v7464, 1.0
      %v7497 = vadd.f32 %v7465, 1.0
      %v7498 = vadd.f32 %v7466, 1.0
      %v7499 = vadd.f32 %v7467, 1.0
      %v7500 = vadd.f32 %v7468, 1.0
      %v7501 = vadd.f32 %v7469, 1.0
      %v7502 = vadd.f32 %v7470, 1.0
      %v7503 = vadd.f32 %v7471, 1.0
      %v7504 = vadd.f32 %v7472, 1.0
      %v7505 = vadd.f32 %v7473, 1.0
      %v7506 = vadd.f32 %v7474, 1.0
      %v7507 = vadd.f32 %v7475, 1.0
      %v7508 = vadd.f32 %v7476, 1.0
      %v7509 = vadd.f32 %v7477, 1.0
      %v7510 = vadd.f32 %v7478, 1.0
      %v7511 = vmul.f32 %v7255, %v7479
      %v7512 = vmul.f32 %v7256, %v7480
      %v7513 = vmul.f32 %v7257, %v7481
      %v7514 = vmul.f32 %v7258, %v7482
      %v7515 = vmul.f32 %v7259, %v7483
      %v7516 = vmul.f32 %v7260, %v7484
      %v7517 = vmul.f32 %v7261, %v7485
      %v7518 = vmul.f32 %v7262, %v7486
      %v7519 = vmul.f32 %v7263, %v7487
      %v7520 = vmul.f32 %v7264, %v7488
      %v7521 = vmul.f32 %v7265, %v7489
      %v7522 = vmul.f32 %v7266, %v7490
      %v7523 = vmul.f32 %v7267, %v7491
      %v7524 = vmul.f32 %v7268, %v7492
      %v7525 = vmul.f32 %v7269, %v7493
      %v7526 = vmul.f32 %v7270, %v7494
      %v7527 = vmul.f32 %v7271, %v7495
      %v7528 = vmul.f32 %v7272, %v7496
      %v7529 = vmul.f32 %v7273, %v7497
      %v7530 = vmul.f32 %v7274, %v7498
      %v7531 = vmul.f32 %v7275, %v7499
      %v7532 = vmul.f32 %v7276, %v7500
      %v7533 = vmul.f32 %v7277, %v7501
      %v7534 = vmul.f32 %v7278, %v7502
      %v7535 = vmul.f32 %v7279, %v7503
      %v7536 = vmul.f32 %v7280, %v7504
      %v7537 = vmul.f32 %v7281, %v7505
      %v7538 = vmul.f32 %v7282, %v7506
      %v7539 = vmul.f32 %v7283, %v7507
      %v7540 = vmul.f32 %v7284, %v7508
      %v7541 = vmul.f32 %v7285, %v7509
      %v7542 = vmul.f32 %v7286, %v7510
      %v7543 = vpack.c.bf16 %v7512, %v7511
      %v7544 = vpack.c.bf16 %v7514, %v7513
      %v7545 = vpack.c.bf16 %v7516, %v7515
      %v7546 = vpack.c.bf16 %v7518, %v7517
      %v7547 = vpack.c.bf16 %v7520, %v7519
      %v7548 = vpack.c.bf16 %v7522, %v7521
      %v7549 = vpack.c.bf16 %v7524, %v7523
      %v7550 = vpack.c.bf16 %v7526, %v7525
      %v7551 = vpack.c.bf16 %v7528, %v7527
      %v7552 = vpack.c.bf16 %v7530, %v7529
      %v7553 = vpack.c.bf16 %v7532, %v7531
      %v7554 = vpack.c.bf16 %v7534, %v7533
      %v7555 = vpack.c.bf16 %v7536, %v7535
      %v7556 = vpack.c.bf16 %v7538, %v7537
      %v7557 = vpack.c.bf16 %v7540, %v7539
      %v7558 = vpack.c.bf16 %v7542, %v7541
      %v7559 = vld [vmem:[%s8] sm:$0xf]
      %v7560 = vld [vmem:[%s8 + $0x4] sm:$0xf]
      %v7561 = vld [vmem:[%s8 + $0x8] sm:$0xf]
      %v7562 = vld [vmem:[%s8 + $0xc] sm:$0xf]
      %v7563 = vld [vmem:[%s8 + $0x10] sm:$0xf]
      %v7564 = vld [vmem:[%s8 + $0x14] sm:$0xf]
      %v7565 = vld [vmem:[%s8 + $0x18] sm:$0xf]
      %v7566 = vld [vmem:[%s8 + $0x1c] sm:$0xf]
      %v7567 = vld [vmem:[%s8 + $0x20] sm:$0xf]
      %v7568 = vld [vmem:[%s8 + $0x24] sm:$0xf]
      %v7569 = vld [vmem:[%s8 + $0x28] sm:$0xf]
      %v7570 = vld [vmem:[%s8 + $0x2c] sm:$0xf]
      %v7571 = vld [vmem:[%s8 + $0x30] sm:$0xf]
      %v7572 = vld [vmem:[%s8 + $0x34] sm:$0xf]
      %v7573 = vld [vmem:[%s8 + $0x38] sm:$0xf]
      %v7574 = vld [vmem:[%s8 + $0x3c] sm:$0xf]
      %v7575 = vld [vmem:[%s9] sm:$0x1]
      %v7577 = vlaneseq
      %v7578 = vshrl.u32 %v7577, 7
      %v7579 = vsub.s32 0, %v7578
      %v7580 = vrot.slane %v7575, %v7579
      %v7598 = vunpack.c.l.b16 %v7559
      %v7599 = vunpack.c.l.b16 %v7560
      %v7600 = vunpack.c.l.b16 %v7561
      %v7601 = vunpack.c.l.b16 %v7562
      %v7602 = vunpack.c.l.b16 %v7563
      %v7603 = vunpack.c.l.b16 %v7564
      %v7604 = vunpack.c.l.b16 %v7565
      %v7605 = vunpack.c.l.b16 %v7566
      %v7606 = vunpack.c.l.b16 %v7567
      %v7607 = vunpack.c.l.b16 %v7568
      %v7608 = vunpack.c.l.b16 %v7569
      %v7609 = vunpack.c.l.b16 %v7570
      %v7610 = vunpack.c.l.b16 %v7571
      %v7611 = vunpack.c.l.b16 %v7572
      %v7612 = vunpack.c.l.b16 %v7573
      %v7613 = vunpack.c.l.b16 %v7574
      %v7614 = vpack.c.b16 %v7599, %v7598
      %v7615 = vpack.c.b16 %v7601, %v7600
      %v7616 = vpack.c.b16 %v7603, %v7602
      %v7617 = vpack.c.b16 %v7605, %v7604
      %v7618 = vpack.c.b16 %v7607, %v7606
      %v7619 = vpack.c.b16 %v7609, %v7608
      %v7620 = vpack.c.b16 %v7611, %v7610
      %v7621 = vpack.c.b16 %v7613, %v7612
      %7630 = vmatprep.subr.bf16.mxu0 0
      %7631 = vmatpush1.bf16.msra.mxu0 %v7621
      %7632 = vmatprep.subr.bf16.mxu0 0
      %7633 = vmatpush1.bf16.msra.mxu0 %v7620
      %7634 = vmatprep.subr.bf16.mxu0 0
      %7635 = vmatpush1.bf16.msra.mxu0 %v7619
      %7636 = vmatprep.subr.bf16.mxu0 0
      %7637 = vmatpush1.bf16.msra.mxu0 %v7618
      %7638 = vmatprep.subr.bf16.mxu0 0
      %7639 = vmatpush1.bf16.msra.mxu0 %v7617
      %7640 = vmatprep.subr.bf16.mxu0 0
      %7641 = vmatpush1.bf16.msra.mxu0 %v7616
      %7642 = vmatprep.subr.bf16.mxu0 0
      %7643 = vmatpush1.bf16.msra.mxu0 %v7615
      %7644 = vmatprep.subr.bf16.mxu0 0
      %7645 = vmatpush1.bf16.msra.mxu0 %v7614
      %7646 = vmatprep.subr.bf16.mxu0 0
      %7647 = vmatpush2.bf16.msra.mxu0 0
      %7648 = vmatprep.subr.bf16.mxu0 0
      %7649 = vmatpush2.bf16.msra.mxu0 0
      %7650 = vmatprep.subr.bf16.mxu0 0
      %7651 = vmatpush2.bf16.msra.mxu0 0
      %7652 = vmatprep.subr.bf16.mxu0 0
      %7653 = vmatpush2.bf16.msra.mxu0 0
      %7654 = vmatprep.subr.bf16.mxu0 0
      %7655 = vmatpush2.bf16.msra.mxu0 0
      %7656 = vmatprep.subr.bf16.mxu0 0
      %7657 = vmatpush2.bf16.msra.mxu0 0
      %7658 = vmatprep.subr.bf16.mxu0 0
      %7659 = vmatpush2.bf16.msra.mxu0 0
      %7660 = vmatprep.subr.bf16.mxu0 0
      %7661 = vmatpush2.bf16.msra.mxu0 0
      %7662 = vmatprep.mubr.bf16.mxu0 0
      %7663 = vmatmul.mubr.bf16.gmra.mxu0 %v7543
      %v7664 = vpop.f32.mrf.mxu0
      %v7665 = vadd.f32 %v7580, %v7664
      %v7666 = vpop.f32.mrf.mxu0
      %v7667 = vpop.f32.mrf.mxu0
      %v7668 = vadd.f32 %v7580, %v7667
      %v7669 = vpop.f32.mrf.mxu0
      %7670 = vmatprep.mubr.bf16.mxu0 0
      %7671 = vmatmul.mubr.bf16.gmra.mxu0 %v7544
      %v7672 = vpop.f32.mrf.mxu0
      %v7673 = vadd.f32 %v7580, %v7672
      %v7674 = vpop.f32.mrf.mxu0
      %v7675 = vpop.f32.mrf.mxu0
      %v7676 = vadd.f32 %v7580, %v7675
      %v7677 = vpop.f32.mrf.mxu0
      %7678 = vmatprep.mubr.bf16.mxu0 0
      %7679 = vmatmul.mubr.bf16.gmra.mxu0 %v7545
      %v7680 = vpop.f32.mrf.mxu0
      %v7681 = vadd.f32 %v7580, %v7680
      %v7682 = vpop.f32.mrf.mxu0
      %v7683 = vpop.f32.mrf.mxu0
      %v7684 = vadd.f32 %v7580, %v7683
      %v7685 = vpop.f32.mrf.mxu0
      %7686 = vmatprep.mubr.bf16.mxu0 0
      %7687 = vmatmul.mubr.bf16.gmra.mxu0 %v7546
      %v7688 = vpop.f32.mrf.mxu0
      %v7689 = vadd.f32 %v7580, %v7688
      %v7690 = vpop.f32.mrf.mxu0
      %v7691 = vpop.f32.mrf.mxu0
      %v7692 = vadd.f32 %v7580, %v7691
      %v7693 = vpop.f32.mrf.mxu0
      %7694 = vmatprep.mubr.bf16.mxu0 0
      %7695 = vmatmul.mubr.bf16.gmra.mxu0 %v7547
      %v7696 = vpop.f32.mrf.mxu0
      %v7697 = vadd.f32 %v7580, %v7696
      %v7698 = vpop.f32.mrf.mxu0
      %v7699 = vpop.f32.mrf.mxu0
      %v7700 = vadd.f32 %v7580, %v7699
      %v7701 = vpop.f32.mrf.mxu0
      %7702 = vmatprep.mubr.bf16.mxu0 0
      %7703 = vmatmul.mubr.bf16.gmra.mxu0 %v7548
      %v7704 = vpop.f32.mrf.mxu0
      %v7705 = vadd.f32 %v7580, %v7704
      %v7706 = vpop.f32.mrf.mxu0
      %v7707 = vpop.f32.mrf.mxu0
      %v7708 = vadd.f32 %v7580, %v7707
      %v7709 = vpop.f32.mrf.mxu0
      %7710 = vmatprep.mubr.bf16.mxu0 0
      %7711 = vmatmul.mubr.bf16.gmra.mxu0 %v7549
      %v7712 = vpop.f32.mrf.mxu0
      %v7713 = vadd.f32 %v7580, %v7712
      %v7714 = vpop.f32.mrf.mxu0
      %v7715 = vpop.f32.mrf.mxu0
      %v7716 = vadd.f32 %v7580, %v7715
      %v7717 = vpop.f32.mrf.mxu0
      %7718 = vmatprep.mubr.bf16.mxu0 0
      %7719 = vmatmul.mubr.bf16.gmra.mxu0 %v7550
      %v7720 = vpop.f32.mrf.mxu0
      %v7721 = vadd.f32 %v7580, %v7720
      %v7722 = vpop.f32.mrf.mxu0
      %v7723 = vpop.f32.mrf.mxu0
      %v7724 = vadd.f32 %v7580, %v7723
      %v7725 = vpop.f32.mrf.mxu0
      %7726 = vmatprep.mubr.bf16.mxu0 0
      %7727 = vmatmul.mubr.bf16.gmra.mxu0 %v7551
      %v7728 = vpop.f32.mrf.mxu0
      %v7729 = vadd.f32 %v7580, %v7728
      %v7730 = vpop.f32.mrf.mxu0
      %v7731 = vpop.f32.mrf.mxu0
      %v7732 = vadd.f32 %v7580, %v7731
      %v7733 = vpop.f32.mrf.mxu0
      %7734 = vmatprep.mubr.bf16.mxu0 0
      %7735 = vmatmul.mubr.bf16.gmra.mxu0 %v7552
      %v7736 = vpop.f32.mrf.mxu0
      %v7737 = vadd.f32 %v7580, %v7736
      %v7738 = vpop.f32.mrf.mxu0
      %v7739 = vpop.f32.mrf.mxu0
      %v7740 = vadd.f32 %v7580, %v7739
      %v7741 = vpop.f32.mrf.mxu0
      %7742 = vmatprep.mubr.bf16.mxu0 0
      %7743 = vmatmul.mubr.bf16.gmra.mxu0 %v7553
      %v7744 = vpop.f32.mrf.mxu0
      %v7745 = vadd.f32 %v7580, %v7744
      %v7746 = vpop.f32.mrf.mxu0
      %v7747 = vpop.f32.mrf.mxu0
      %v7748 = vadd.f32 %v7580, %v7747
      %v7749 = vpop.f32.mrf.mxu0
      %7750 = vmatprep.mubr.bf16.mxu0 0
      %7751 = vmatmul.mubr.bf16.gmra.mxu0 %v7554
      %v7752 = vpop.f32.mrf.mxu0
      %v7753 = vadd.f32 %v7580, %v7752
      %v7754 = vpop.f32.mrf.mxu0
      %v7755 = vpop.f32.mrf.mxu0
      %v7756 = vadd.f32 %v7580, %v7755
      %v7757 = vpop.f32.mrf.mxu0
      %7758 = vmatprep.mubr.bf16.mxu0 0
      %7759 = vmatmul.mubr.bf16.gmra.mxu0 %v7555
      %v7760 = vpop.f32.mrf.mxu0
      %v7761 = vadd.f32 %v7580, %v7760
      %v7762 = vpop.f32.mrf.mxu0
      %v7763 = vpop.f32.mrf.mxu0
      %v7764 = vadd.f32 %v7580, %v7763
      %v7765 = vpop.f32.mrf.mxu0
      %7766 = vmatprep.mubr.bf16.mxu0 0
      %7767 = vmatmul.mubr.bf16.gmra.mxu0 %v7556
      %v7768 = vpop.f32.mrf.mxu0
      %v7769 = vadd.f32 %v7580, %v7768
      %v7770 = vpop.f32.mrf.mxu0
      %v7771 = vpop.f32.mrf.mxu0
      %v7772 = vadd.f32 %v7580, %v7771
      %v7773 = vpop.f32.mrf.mxu0
      %7774 = vmatprep.mubr.bf16.mxu0 0
      %7775 = vmatmul.mubr.bf16.gmra.mxu0 %v7557
      %v7776 = vpop.f32.mrf.mxu0
      %v7777 = vadd.f32 %v7580, %v7776
      %v7778 = vpop.f32.mrf.mxu0
      %v7779 = vpop.f32.mrf.mxu0
      %v7780 = vadd.f32 %v7580, %v7779
      %v7781 = vpop.f32.mrf.mxu0
      %7782 = vmatprep.mubr.bf16.mxu0 0
      %7783 = vmatmul.mubr.bf16.gmra.mxu0 %v7558
      %v7784 = vpop.f32.mrf.mxu0
      %v7785 = vadd.f32 %v7580, %v7784
      %v7786 = vpop.f32.mrf.mxu0
      %v7787 = vpop.f32.mrf.mxu0
      %v7788 = vadd.f32 %v7580, %v7787
      %v7789 = vpop.f32.mrf.mxu0
      %7790 = vdwg.mxu0
      %v7791 = vadd.f32 %v6495, %v7665
      %v7792 = vadd.f32 %v6496, %v7668
      %v7793 = vadd.f32 %v6497, %v7673
      %v7794 = vadd.f32 %v6498, %v7676
      %v7795 = vadd.f32 %v6499, %v7681
      %v7796 = vadd.f32 %v6500, %v7684
      %v7797 = vadd.f32 %v6501, %v7689
      %v7798 = vadd.f32 %v6502, %v7692
      %v7799 = vadd.f32 %v6503, %v7697
      %v7800 = vadd.f32 %v6504, %v7700
      %v7801 = vadd.f32 %v6505, %v7705
      %v7802 = vadd.f32 %v6506, %v7708
      %v7803 = vadd.f32 %v6507, %v7713
      %v7804 = vadd.f32 %v6508, %v7716
      %v7805 = vadd.f32 %v6509, %v7721
      %v7806 = vadd.f32 %v6510, %v7724
      %v7807 = vadd.f32 %v6511, %v7729
      %v7808 = vadd.f32 %v6512, %v7732
      %v7809 = vadd.f32 %v6513, %v7737
      %v7810 = vadd.f32 %v6514, %v7740
      %v7811 = vadd.f32 %v6515, %v7745
      %v7812 = vadd.f32 %v6516, %v7748
      %v7813 = vadd.f32 %v6517, %v7753
      %v7814 = vadd.f32 %v6518, %v7756
      %v7815 = vadd.f32 %v6519, %v7761
      %v7816 = vadd.f32 %v6520, %v7764
      %v7817 = vadd.f32 %v6521, %v7769
      %v7818 = vadd.f32 %v6522, %v7772
      %v7819 = vadd.f32 %v6523, %v7777
      %v7820 = vadd.f32 %v6524, %v7780
      %v7821 = vadd.f32 %v6525, %v7785
      %v7822 = vadd.f32 %v6526, %v7788
      %7823 = vst.msk [vmem:[%s359] sm:$0xff] %vm393, %v7791
      %7824 = vst.msk [vmem:[%s359 + $0x10] sm:$0xff] %vm393, %v7792
      %7825 = vst.msk [vmem:[%s359 + $0x20] sm:$0xff] %vm393, %v7793
      %7826 = vst.msk [vmem:[%s359 + $0x30] sm:$0xff] %vm393, %v7794
      %7827 = vst.msk [vmem:[%s359 + $0x40] sm:$0xff] %vm393, %v7795
      %7828 = vst.msk [vmem:[%s359 + $0x50] sm:$0xff] %vm393, %v7796
      %7829 = vst.msk [vmem:[%s359 + $0x60] sm:$0xff] %vm393, %v7797
      %7830 = vst.msk [vmem:[%s359 + $0x70] sm:$0xff] %vm393, %v7798
      %7831 = vst.msk [vmem:[%s359 + $0x8] sm:$0xff] %vm393, %v7799
      %7832 = vst.msk [vmem:[%s359 + $0x18] sm:$0xff] %vm393, %v7800
      %7833 = vst.msk [vmem:[%s359 + $0x28] sm:$0xff] %vm393, %v7801
      %7834 = vst.msk [vmem:[%s359 + $0x38] sm:$0xff] %vm393, %v7802
      %7835 = vst.msk [vmem:[%s359 + $0x48] sm:$0xff] %vm393, %v7803
      %7836 = vst.msk [vmem:[%s359 + $0x58] sm:$0xff] %vm393, %v7804
      %7837 = vst.msk [vmem:[%s359 + $0x68] sm:$0xff] %vm393, %v7805
      %7838 = vst.msk [vmem:[%s359 + $0x78] sm:$0xff] %vm393, %v7806
      %s7839 = scalar_lea.vmem %s359, 128
      %7840 = vst.msk [vmem:[%s7839] sm:$0xff] %vm393, %v7807
      %7841 = vst.msk [vmem:[%s7839 + $0x10] sm:$0xff] %vm393, %v7808
      %7842 = vst.msk [vmem:[%s7839 + $0x20] sm:$0xff] %vm393, %v7809
      %7843 = vst.msk [vmem:[%s7839 + $0x30] sm:$0xff] %vm393, %v7810
      %7844 = vst.msk [vmem:[%s7839 + $0x40] sm:$0xff] %vm393, %v7811
      %7845 = vst.msk [vmem:[%s7839 + $0x50] sm:$0xff] %vm393, %v7812
      %7846 = vst.msk [vmem:[%s7839 + $0x60] sm:$0xff] %vm393, %v7813
      %7847 = vst.msk [vmem:[%s7839 + $0x70] sm:$0xff] %vm393, %v7814
      %7848 = vst.msk [vmem:[%s7839 + $0x8] sm:$0xff] %vm393, %v7815
      %7849 = vst.msk [vmem:[%s7839 + $0x18] sm:$0xff] %vm393, %v7816
      %7850 = vst.msk [vmem:[%s7839 + $0x28] sm:$0xff] %vm393, %v7817
      %7851 = vst.msk [vmem:[%s7839 + $0x38] sm:$0xff] %vm393, %v7818
      %7852 = vst.msk [vmem:[%s7839 + $0x48] sm:$0xff] %vm393, %v7819
      %7853 = vst.msk [vmem:[%s7839 + $0x58] sm:$0xff] %vm393, %v7820
      %7854 = vst.msk [vmem:[%s7839 + $0x68] sm:$0xff] %vm393, %v7821
      %7855 = vst.msk [vmem:[%s7839 + $0x78] sm:$0xff] %vm393, %v7822
      %p7856 = scmp.lt.s32.totalorder %s21, 1
      %s7857 = scalar_select %p7856, %s21, 1
      %s7858 = smul.addr %s7857, 32
      %s7859 = smul.addr %s7858, 8
      %s7860 = scalar_lea.vmem %s10, %s7859
      // Predicated region
      $region61: #{lewin_block.1} parent=59 // pred_check
        %p7861 = pneg %p254
      $region62: #{lewin_block.1} parent=59 // pred_check_branch
        %7863 = sbr.rel (%p7861) target = $region64
      $region63: #{lewin_block.1} parent=59 // pred_region
        _
      $region64: #{lewin_block.1} parent=59 // pred_fallthru
        _
    $region60: #{lewin_block.1} parent=5 // pred_fallthru
      _
    %p7864 = scmp.le.s32.totalorder 2, %s16
    // Predicated region
    $region65: #{lewin_block.1} parent=5 // pred_check
      %p7865 = pneg %p7864
    $region66: #{lewin_block.1} parent=5 // pred_check_branch
      %7867 = sbr.rel (%p7865) target = $region68
    $region67: #{lewin_block.1} parent=5 // pred_region
      %s7868 = ssub.s32 %s16, 2
      // Predicated region
      $region69: #{lewin_block.1} parent=67 // pred_check
        %p7869 = pneg %p260
      $region70: #{lewin_block.1} parent=67 // pred_check_branch
        %7871 = sbr.rel (%p7869) target = $region72
      $region71: #{lewin_block.1} parent=67 // pred_region
        %p7872 = scmp.lt.s32.totalorder %s22, 1
        %s7873 = scalar_select %p7872, %s22, 1
        %s7874 = smul.addr %s7873, 32
        %s7875 = smul.addr %s7874, 8
        %s7876 = scalar_lea.vmem %s10, %s7875
      $region72: #{lewin_block.1} parent=67 // pred_fallthru
        _
    $region68: #{lewin_block.1} parent=5 // pred_fallthru
      _
  $region6: #{lewin_block.1} parent=0 // loop_footer
    %s20 = sadd.s32 1, %s16
  $region7: #{lewin_block.1} parent=0 // loop_footer_branch
    %15 = sbr.rel target = $region3
  $region8: #{lewin_block.1} parent=0 // loop_exit
    _

</llo_original>
